<compile_context>
chip_gen: v6e
topology: v6e:2x2x1
jax: 0.10.0
libtpu: 0.0.40
codegen_flags: <defaults>
</compile_context>

<pallas_src>
import jax
import jax.numpy as jnp
from jax.experimental import pallas as pl
from jax.experimental.pallas import tpu as pltpu

# ---- hyperparameters from bigramv2.py ----
N_EMBD = 384
N_HEAD = 6
HEAD_SIZE = N_EMBD // N_HEAD          # 64
N_LAYER = 6
BLOCK_SIZE = 256                      # max context length
VOCAB_SIZE = 65                       # len(chars) for the tiny-shakespeare charset
VOCAB_PAD = 128                       # padded vocab for lane-dense lm-head output
LN_EPS = 1e-5
ATTN_SCALE = float(N_EMBD) ** -0.5    # torch code: C ** -0.5 with C = n_embd
NEG_INF = jnp.float32(-1e30)
VMEM_LIMIT_BYTES = 48 * 1024 * 1024   # safe on v7x (64 MiB physical), ample headroom on v5e/v6e
BATCH_BLOCK = 4                       # Bb: batch rows per grid step (amortizes weight DMA)


def _layernorm(x, gamma, beta):
    mean = jnp.mean(x, axis=-1, keepdims=True)
    var = jnp.mean((x - mean) ** 2, axis=-1, keepdims=True)
    return (x - mean) * jax.lax.rsqrt(var + LN_EPS) * gamma + beta


# ----------------------------------------------------------------------------
# Fused kernel: all transformer blocks + final LN + lm_head.  grid = (B//Bb, L).
#   x_acc  (VMEM f32, (Bb,T,C))  carries the activation across the layer axis.
#   sa_acc (VMEM bf16, (Bb,T,C)) collects per-head-pair attention outputs.
# ----------------------------------------------------------------------------
def fused_transformer_kernel(mask_ref, x_ref,
                             ln1_g_ref, ln1_b_ref,
                             wqkv_ref,
                             wproj_ref, bproj_ref,
                             ln2_g_ref, ln2_b_ref,
                             w1_ref, b1_ref, w2_ref, b2_ref,
                             lnf_g_ref, lnf_b_ref, wlm_ref, blm_ref,
                             o_ref,
                             x_acc, sa_acc):
    layer = pl.program_id(1)

    @pl.when(layer == 0)
    def _():
        x_acc[...] = x_ref[...]                    # fresh activation for this batch block

    x = x_acc[...]                                 # (Bb, T, C) f32
    Bb, T, C = x.shape
    BT = Bb * T
    mask = mask_ref[...]                           # (T, T) f32 additive causal mask

    # ---- multi-head causal self-attention (pre-LN) ----
    xf = x.reshape(BT, C)
    xn = _layernorm(xf, ln1_g_ref[0, 0], ln1_b_ref[0, 0]).astype(jnp.bfloat16)
    # attention scale is pre-folded into the q columns of wqkv (init_params)
    qkv = jnp.dot(xn, wqkv_ref[0], preferred_element_type=jnp.float32)   # (BT, 3C) f32
    qkv = qkv.reshape(Bb, T, 3 * C)

    # heads in pairs: two 64-wide heads -> one 128-lane-dense store into bf16 scratch
    for hp in range(N_HEAD // 2):                  # static unroll; big temporaries live in VMEM
        pair_outs = []
        for h in (2 * hp, 2 * hp + 1):
            lo = h * HEAD_SIZE
            qh = qkv[:, :, lo:lo + HEAD_SIZE].astype(jnp.bfloat16)            # (Bb,T,64)
            kh = qkv[:, :, C + lo:C + lo + HEAD_SIZE].astype(jnp.bfloat16)
            vh = qkv[:, :, 2 * C + lo:2 * C + lo + HEAD_SIZE].astype(jnp.bfloat16)
            wei = jax.lax.dot_general(qh, kh, (((2,), (2,)), ((0,), (0,))),
                                      preferred_element_type=jnp.float32)    # (Bb,T,T)
            wei = wei + mask[None]
            m = jnp.max(wei, axis=-1, keepdims=True)
            e = jnp.exp(wei - m)
            p = e * pl.reciprocal(jnp.sum(e, axis=-1, keepdims=True), approx=True)
            pair_outs.append(
                jax.lax.dot_general(p.astype(jnp.bfloat16), vh,
                                    (((2,), (1,)), ((0,), (0,))),
                                    preferred_element_type=jnp.float32))      # (Bb,T,64)
        pair = jnp.concatenate(pair_outs, axis=-1).astype(jnp.bfloat16)       # (Bb,T,128)
        sa_acc[:, :, hp * 128:(hp + 1) * 128] = pair                          # lane-dense store

    sa = jnp.dot(sa_acc[...].reshape(BT, C), wproj_ref[0],
                 preferred_element_type=jnp.float32) + bproj_ref[0, 0]
    x1 = xf + sa                                   # dropout(proj): identity (eval)

    # ---- feed-forward (pre-LN) ----
    xn2 = _layernorm(x1, ln2_g_ref[0, 0], ln2_b_ref[0, 0]).astype(jnp.bfloat16)
    h1 = jnp.dot(xn2, w1_ref[0], preferred_element_type=jnp.float32) + b1_ref[0, 0]
    h1 = jnp.maximum(h1, 0.0).astype(jnp.bfloat16)  # ReLU in f32, bf16 for next matmul
    ff = jnp.dot(h1, w2_ref[0], preferred_element_type=jnp.float32) + b2_ref[0, 0]
    x2 = x1 + ff                                    # dropout(ffwd): identity (eval)

    x_acc[...] = x2.reshape(Bb, T, C)

    # ---- fused final LayerNorm + lm_head on the last layer step ----
    @pl.when(layer == pl.num_programs(1) - 1)
    def _():
        xnf = _layernorm(x2, lnf_g_ref[0], lnf_b_ref[0]).astype(jnp.bfloat16)
        logits = jnp.dot(xnf, wlm_ref[...],
                         preferred_element_type=jnp.float32) + blm_ref[0]     # (BT, 128)
        o_ref[...] = logits.reshape(Bb, T, VOCAB_PAD)


# ----------------------------------------------------------------------------
# pallas_call wrapper
# ----------------------------------------------------------------------------
def transformer_forward(x, mask, params, Bb):
    B, T, C = x.shape
    L = params["wqkv"].shape[0]
    assert B % Bb == 0

    layer_ws = [params["ln1_g"], params["ln1_b"],
                params["wqkv"],
                params["wproj"], params["bproj"],
                params["ln2_g"], params["ln2_b"],
                params["w1"], params["b1"], params["w2"], params["b2"]]
    head_ws = [params["lnf_g"], params["lnf_b"], params["w_lm"], params["b_lm"]]

    def layer_spec(arr):                           # one layer slice per grid step (prefetched)
        return pl.BlockSpec((1,) + arr.shape[1:], lambda b, l: (l, 0, 0))

    def const_spec(arr):                           # resident across the whole grid
        return pl.BlockSpec(arr.shape, lambda b, l, nd=arr.ndim: (0,) * nd)

    in_specs = ([const_spec(mask),
                 pl.BlockSpec((Bb, T, C), lambda b, l: (b, 0, 0))]
                + [layer_spec(w) for w in layer_ws]
                + [const_spec(w) for w in head_ws])

    return pl.pallas_call(
        fused_transformer_kernel,
        out_shape=jax.ShapeDtypeStruct((B, T, VOCAB_PAD), jnp.float32),
        grid=(B // Bb, L),
        in_specs=in_specs,
        out_specs=pl.BlockSpec((Bb, T, VOCAB_PAD), lambda b, l: (b, 0, 0)),
        scratch_shapes=[pltpu.VMEM((Bb, T, C), jnp.float32),    # activation carry
                        pltpu.VMEM((Bb, T, C), jnp.bfloat16)],  # attention head outputs
        compiler_params=pltpu.CompilerParams(
            dimension_semantics=("parallel", "arbitrary"),
            vmem_limit_bytes=VMEM_LIMIT_BYTES),
    )(mask, x, *layer_ws, *head_ws)


# ----------------------------------------------------------------------------
# Parameter init (deterministic, synthetic) and full forward (targets=None path)
# ----------------------------------------------------------------------------
def init_params(key):
    def normal(k, shape, scale=0.02):
        return (scale * jax.random.normal(k, shape)).astype(jnp.float32)

    keys = iter(jax.random.split(key, 4 * N_LAYER + 8))

    params = {
        "tok": normal(next(keys), (VOCAB_SIZE, N_EMBD)),
        "pos": normal(next(keys), (BLOCK_SIZE, N_EMBD)),
        "lnf_g": jnp.ones((1, N_EMBD), jnp.float32),
        "lnf_b": jnp.zeros((1, N_EMBD), jnp.float32),
    }
    w_lm = normal(next(keys), (N_EMBD, VOCAB_SIZE))
    b_lm = normal(next(keys), (1, VOCAB_SIZE))
    params["w_lm"] = jnp.pad(w_lm, ((0, 0), (0, VOCAB_PAD - VOCAB_SIZE))
                             ).astype(jnp.bfloat16)                        # (C, 128) bf16
    params["b_lm"] = jnp.pad(b_lm, ((0, 0), (0, VOCAB_PAD - VOCAB_SIZE)))  # (1, 128) f32

    wqkv, wproj, w1, w2 = [], [], [], []
    for _ in range(N_LAYER):
        wqkv_f = normal(next(keys), (N_EMBD, 3 * N_EMBD))
        # fold the attention scale (n_embd**-0.5, as in the torch code) into q columns
        wqkv_f = wqkv_f.at[:, :N_EMBD].multiply(ATTN_SCALE)
        wqkv.append(wqkv_f.astype(jnp.bfloat16))
        wproj.append(normal(next(keys), (N_EMBD, N_EMBD)).astype(jnp.bfloat16))
        w1.append(normal(next(keys), (N_EMBD, 4 * N_EMBD)).astype(jnp.bfloat16))
        w2.append(normal(next(keys), (4 * N_EMBD, N_EMBD)).astype(jnp.bfloat16))

    params.update({
        "wqkv": jnp.stack(wqkv),                                  # (L, C, 3C) bf16
        "wproj": jnp.stack(wproj),                                # (L, C, C)  bf16
        "w1": jnp.stack(w1),                                      # (L, C, 4C) bf16
        "w2": jnp.stack(w2),                                      # (L, 4C, C) bf16
        "ln1_g": jnp.ones((N_LAYER, 1, N_EMBD), jnp.float32),
        "ln1_b": jnp.zeros((N_LAYER, 1, N_EMBD), jnp.float32),
        "ln2_g": jnp.ones((N_LAYER, 1, N_EMBD), jnp.float32),
        "ln2_b": jnp.zeros((N_LAYER, 1, N_EMBD), jnp.float32),
        "bproj": jnp.zeros((N_LAYER, 1, N_EMBD), jnp.float32),
        "b1": jnp.zeros((N_LAYER, 1, 4 * N_EMBD), jnp.float32),
        "b2": jnp.zeros((N_LAYER, 1, N_EMBD), jnp.float32),
    })
    return params


@jax.jit
def bigram_forward(idx, params):
    # idx: (B, T) int32 token ids.  Embedding gathers + add are glue (plain JAX);
    # the entire transformer stack + lm head runs as one fused Pallas kernel.
    B, T = idx.shape
    T_pad = max(8, ((T + 7) // 8) * 8)              # keep (8,128) tiling rule happy
    if T_pad != T:
        idx = jnp.pad(idx, ((0, 0), (0, T_pad - T)))

    Bb = min(B, BATCH_BLOCK)                        # batch rows per grid step
    B_pad = ((B + Bb - 1) // Bb) * Bb               # batch padded to a multiple of Bb
    # NOTE(v7x): for full dual-TensorCore utilization, prefer B such that
    # B_pad // Bb is a multiple of 2 (the layer axis is serial).

    tok_emb = jnp.take(params["tok"], idx, axis=0)              # (B, T_pad, C)
    pos_emb = params["pos"][:T_pad]                              # (T_pad, C)
    x = tok_emb + pos_emb[None, :, :]
    if B_pad != B:
        x = jnp.pad(x, ((0, B_pad - B), (0, 0), (0, 0)))

    # additive causal mask, built once and kept resident in the kernel
    row = jax.lax.broadcasted_iota(jnp.int32, (T_pad, T_pad), 0)
    col = jax.lax.broadcasted_iota(jnp.int32, (T_pad, T_pad), 1)
    mask = jnp.where(row >= col, jnp.float32(0.0), NEG_INF)

    logits = transformer_forward(x, mask, params, Bb)            # (B_pad, T_pad, 128)
    return logits[:B, :T, :VOCAB_SIZE]                           # (B, T, vocab_size)


if __name__ == "__main__":
    key = jax.random.PRNGKey(0)
    pkey, dkey = jax.random.split(key)
    params = init_params(pkey)

    B, T = 2, 16                                                 # small, T <= block_size
    idx = jax.random.randint(dkey, (B, T), 0, VOCAB_SIZE, dtype=jnp.int32)

    logits = bigram_forward(idx, params)
    logits = jax.block_until_ready(logits)

    assert logits.shape == (B, T, VOCAB_SIZE), logits.shape
    assert logits.dtype == jnp.float32
    assert bool(jnp.all(jnp.isfinite(logits)))
    print("KERNEL_OK")
</pallas_src>

<mosaic_0001>
module attributes {stable_mosaic.version = 11 : i64} {
  func.func @fused_transformer_kernel(%arg0: i32, %arg1: i32, %arg2: memref<16x16xf32, #tpu.memory_space<vmem>>, %arg3: memref<2x16x384xf32, #tpu.memory_space<vmem>>, %arg4: memref<1x1x384xf32, #tpu.memory_space<vmem>>, %arg5: memref<1x1x384xf32, #tpu.memory_space<vmem>>, %arg6: memref<1x384x1152xbf16, #tpu.memory_space<vmem>>, %arg7: memref<1x384x384xbf16, #tpu.memory_space<vmem>>, %arg8: memref<1x1x384xf32, #tpu.memory_space<vmem>>, %arg9: memref<1x1x384xf32, #tpu.memory_space<vmem>>, %arg10: memref<1x1x384xf32, #tpu.memory_space<vmem>>, %arg11: memref<1x384x1536xbf16, #tpu.memory_space<vmem>>, %arg12: memref<1x1x1536xf32, #tpu.memory_space<vmem>>, %arg13: memref<1x1536x384xbf16, #tpu.memory_space<vmem>>, %arg14: memref<1x1x384xf32, #tpu.memory_space<vmem>>, %arg15: memref<1x384xf32, #tpu.memory_space<vmem>>, %arg16: memref<1x384xf32, #tpu.memory_space<vmem>>, %arg17: memref<384x128xbf16, #tpu.memory_space<vmem>>, %arg18: memref<1x128xf32, #tpu.memory_space<vmem>>, %arg19: memref<2x16x128xf32, #tpu.memory_space<vmem>>, %arg20: memref<2x16x384xf32, #tpu.memory_space<vmem>>, %arg21: memref<2x16x384xbf16, #tpu.memory_space<vmem>>) attributes {dimension_semantics = [#tpu.dimension_semantics<parallel>, #tpu.dimension_semantics<arbitrary>], iteration_bounds = array<i64: 1, 6>, scalar_prefetch = 0 : i64, scratch_operands = 2 : i64, tpu.core_type = #tpu.core_type<tc>, window_params = [{pipeline_mode = #tpu.pipeline_mode<synchronous>, transform_indices = @transform_0, window_bounds = array<i64: 16, 16>}, {transform_indices = @transform_1, window_bounds = array<i64: 2, 16, 384>}, {transform_indices = @transform_2, window_bounds = array<i64: 1, 1, 384>}, {transform_indices = @transform_3, window_bounds = array<i64: 1, 1, 384>}, {transform_indices = @transform_4, window_bounds = array<i64: 1, 384, 1152>}, {transform_indices = @transform_5, window_bounds = array<i64: 1, 384, 384>}, {transform_indices = @transform_6, window_bounds = array<i64: 1, 1, 384>}, {transform_indices = @transform_7, window_bounds = array<i64: 1, 1, 384>}, {transform_indices = @transform_8, window_bounds = array<i64: 1, 1, 384>}, {transform_indices = @transform_9, window_bounds = array<i64: 1, 384, 1536>}, {transform_indices = @transform_10, window_bounds = array<i64: 1, 1, 1536>}, {transform_indices = @transform_11, window_bounds = array<i64: 1, 1536, 384>}, {transform_indices = @transform_12, window_bounds = array<i64: 1, 1, 384>}, {pipeline_mode = #tpu.pipeline_mode<synchronous>, transform_indices = @transform_13, window_bounds = array<i64: 1, 384>}, {pipeline_mode = #tpu.pipeline_mode<synchronous>, transform_indices = @transform_14, window_bounds = array<i64: 1, 384>}, {pipeline_mode = #tpu.pipeline_mode<synchronous>, transform_indices = @transform_15, window_bounds = array<i64: 384, 128>}, {pipeline_mode = #tpu.pipeline_mode<synchronous>, transform_indices = @transform_16, window_bounds = array<i64: 1, 128>}, {transform_indices = @transform_17, window_bounds = array<i64: 2, 16, 128>}]} {
    %c0_i32 = arith.constant 0 : i32
    %0 = arith.cmpi eq, %arg1, %c0_i32 : i32
    %1 = arith.extui %0 : i1 to i32
    %c0_i32_0 = arith.constant 0 : i32
    %2 = arith.cmpi ne, %1, %c0_i32_0 : i32
    scf.if %2 {
      %c0_90 = arith.constant 0 : index
      %c0_91 = arith.constant 0 : index
      %c0_92 = arith.constant 0 : index
      %245 = vector.load %arg3[%c0_90, %c0_91, %c0_92] : memref<2x16x384xf32, #tpu.memory_space<vmem>>, vector<2x16x384xf32>
      %c0_93 = arith.constant 0 : index
      %c0_94 = arith.constant 0 : index
      %c0_95 = arith.constant 0 : index
      %246 = vector.load %arg20[%c0_93, %c0_94, %c0_95] : memref<2x16x384xf32, #tpu.memory_space<vmem>>, vector<2x16x384xf32>
      tpu.vector_store %arg20[%c0_93, %c0_94, %c0_95], %245 {strides = array<i32>} : memref<2x16x384xf32, #tpu.memory_space<vmem>>, vector<2x16x384xf32>,
    } else {
    }
    %c0 = arith.constant 0 : index
    %c0_1 = arith.constant 0 : index
    %c0_2 = arith.constant 0 : index
    %3 = vector.load %arg20[%c0, %c0_1, %c0_2] : memref<2x16x384xf32, #tpu.memory_space<vmem>>, vector<2x16x384xf32>
    %c0_3 = arith.constant 0 : index
    %c0_4 = arith.constant 0 : index
    %4 = vector.load %arg2[%c0_3, %c0_4] : memref<16x16xf32, #tpu.memory_space<vmem>>, vector<16x16xf32>
    %5 = vector.shape_cast %3 : vector<2x16x384xf32> to vector<32x384xf32>
    %c0_5 = arith.constant 0 : index
    %c0_6 = arith.constant 0 : index
    %c0_7 = arith.constant 0 : index
    %6 = vector.load %arg4[%c0_5, %c0_6, %c0_7] : memref<1x1x384xf32, #tpu.memory_space<vmem>>, vector<1x1x384xf32>
    %7 = vector.shape_cast %6 : vector<1x1x384xf32> to vector<384xf32>
    %c0_8 = arith.constant 0 : index
    %c0_9 = arith.constant 0 : index
    %c0_10 = arith.constant 0 : index
    %8 = vector.load %arg5[%c0_8, %c0_9, %c0_10] : memref<1x1x384xf32, #tpu.memory_space<vmem>>, vector<1x1x384xf32>
    %9 = vector.shape_cast %8 : vector<1x1x384xf32> to vector<384xf32>
    %cst = arith.constant dense<0.000000e+00> : vector<32xf32>
    %10 = vector.multi_reduction <add>, %5, %cst [1] : vector<32x384xf32> to vector<32xf32>
    %11 = vector.shape_cast %10 : vector<32xf32> to vector<32x1xf32>
    %cst_11 = arith.constant 3.840000e+02 : f32
    %12 = vector.broadcast %cst_11 : f32 to vector<32x1xf32>
    %13 = arith.divf %11, %12 : vector<32x1xf32>
    %14 = vector.broadcast %13 : vector<32x1xf32> to vector<32x384xf32>
    %15 = arith.subf %5, %14 : vector<32x384xf32>
    %16 = arith.mulf %15, %15 : vector<32x384xf32>
    %cst_12 = arith.constant dense<0.000000e+00> : vector<32xf32>
    %17 = vector.multi_reduction <add>, %16, %cst_12 [1] : vector<32x384xf32> to vector<32xf32>
    %18 = vector.shape_cast %17 : vector<32xf32> to vector<32x1xf32>
    %cst_13 = arith.constant 3.840000e+02 : f32
    %19 = vector.broadcast %cst_13 : f32 to vector<32x1xf32>
    %20 = arith.divf %18, %19 : vector<32x1xf32>
    %21 = vector.broadcast %13 : vector<32x1xf32> to vector<32x384xf32>
    %22 = arith.subf %5, %21 : vector<32x384xf32>
    %cst_14 = arith.constant 9.99999974E-6 : f32
    %23 = vector.broadcast %cst_14 : f32 to vector<32x1xf32>
    %24 = arith.addf %20, %23 : vector<32x1xf32>
    %25 = math.rsqrt %24 : vector<32x1xf32>
    %26 = vector.broadcast %25 : vector<32x1xf32> to vector<32x384xf32>
    %27 = arith.mulf %22, %26 : vector<32x384xf32>
    %28 = vector.shape_cast %7 : vector<384xf32> to vector<1x384xf32>
    %29 = vector.broadcast %28 : vector<1x384xf32> to vector<32x384xf32>
    %30 = arith.mulf %27, %29 : vector<32x384xf32>
    %31 = vector.shape_cast %9 : vector<384xf32> to vector<1x384xf32>
    %32 = vector.broadcast %31 : vector<1x384xf32> to vector<32x384xf32>
    %33 = arith.addf %30, %32 : vector<32x384xf32>
    %34 = arith.truncf %33 : vector<32x384xf32> to vector<32x384xbf16>
    %c0_15 = arith.constant 0 : index
    %c0_16 = arith.constant 0 : index
    %c0_17 = arith.constant 0 : index
    %35 = vector.load %arg6[%c0_15, %c0_16, %c0_17] : memref<1x384x1152xbf16, #tpu.memory_space<vmem>>, vector<1x384x1152xbf16>
    %36 = vector.shape_cast %35 : vector<1x384x1152xbf16> to vector<384x1152xbf16>
    %cst_18 = arith.constant dense<0.000000e+00> : vector<32x1152xf32>
    %37 = tpu.matmul %34, %36, %cst_18 {dimension_numbers = #tpu.dot_dimension_numbers<[1], [0], [0], [1], [0, 0, 1, 1], [], []>} : vector<32x384xbf16>, vector<384x1152xbf16>, vector<32x1152xf32> -> vector<32x1152xf32>
    %38 = vector.shape_cast %37 : vector<32x1152xf32> to vector<2x16x1152xf32>
    %39 = vector.extract_strided_slice %38 {offsets = [0, 0, 0], sizes = [2, 16, 64], strides = [1, 1, 1]} : vector<2x16x1152xf32> to vector<2x16x64xf32>
    %40 = arith.truncf %39 : vector<2x16x64xf32> to vector<2x16x64xbf16>
    %41 = vector.extract_strided_slice %38 {offsets = [0, 0, 384], sizes = [2, 16, 64], strides = [1, 1, 1]} : vector<2x16x1152xf32> to vector<2x16x64xf32>
    %42 = arith.truncf %41 : vector<2x16x64xf32> to vector<2x16x64xbf16>
    %43 = vector.extract_strided_slice %38 {offsets = [0, 0, 768], sizes = [2, 16, 64], strides = [1, 1, 1]} : vector<2x16x1152xf32> to vector<2x16x64xf32>
    %44 = arith.truncf %43 : vector<2x16x64xf32> to vector<2x16x64xbf16>
    %cst_19 = arith.constant dense<0.000000e+00> : vector<2x16x16xf32>
    %45 = tpu.matmul %40, %42, %cst_19 {dimension_numbers = #tpu.dot_dimension_numbers<[2], [2], [1], [1], [0, 0, 0, 1, 1, 1], [0], [0]>} : vector<2x16x64xbf16>, vector<2x16x64xbf16>, vector<2x16x16xf32> -> vector<2x16x16xf32>
    %46 = vector.shape_cast %4 : vector<16x16xf32> to vector<1x16x16xf32>
    %47 = vector.broadcast %46 : vector<1x16x16xf32> to vector<2x16x16xf32>
    %48 = arith.addf %45, %47 : vector<2x16x16xf32>
    %cst_20 = arith.constant dense<0xFF800000> : vector<2x16xf32>
    %49 = vector.multi_reduction <maximumf>, %48, %cst_20 [2] : vector<2x16x16xf32> to vector<2x16xf32>
    %50 = vector.shape_cast %49 : vector<2x16xf32> to vector<2x16x1xf32>
    %51 = vector.broadcast %50 : vector<2x16x1xf32> to vector<2x16x16xf32>
    %52 = arith.subf %48, %51 : vector<2x16x16xf32>
    %53 = math.exp %52 : vector<2x16x16xf32>
    %cst_21 = arith.constant dense<0.000000e+00> : vector<2x16xf32>
    %54 = vector.multi_reduction <add>, %53, %cst_21 [2] : vector<2x16x16xf32> to vector<2x16xf32>
    %55 = vector.shape_cast %54 : vector<2x16xf32> to vector<2x16x1xf32>
    %56 = tpu.reciprocal %55 {approx = true} : vector<2x16x1xf32> -> vector<2x16x1xf32>
    %57 = vector.broadcast %56 : vector<2x16x1xf32> to vector<2x16x16xf32>
    %58 = arith.mulf %53, %57 : vector<2x16x16xf32>
    %59 = arith.truncf %58 : vector<2x16x16xf32> to vector<2x16x16xbf16>
    %cst_22 = arith.constant dense<0.000000e+00> : vector<2x16x64xf32>
    %60 = tpu.matmul %59, %44, %cst_22 {dimension_numbers = #tpu.dot_dimension_numbers<[2], [1], [1], [2], [0, 0, 0, 1, 1, 2], [0], [0]>} : vector<2x16x16xbf16>, vector<2x16x64xbf16>, vector<2x16x64xf32> -> vector<2x16x64xf32>
    %61 = vector.extract_strided_slice %38 {offsets = [0, 0, 64], sizes = [2, 16, 64], strides = [1, 1, 1]} : vector<2x16x1152xf32> to vector<2x16x64xf32>
    %62 = arith.truncf %61 : vector<2x16x64xf32> to vector<2x16x64xbf16>
    %63 = vector.extract_strided_slice %38 {offsets = [0, 0, 448], sizes = [2, 16, 64], strides = [1, 1, 1]} : vector<2x16x1152xf32> to vector<2x16x64xf32>
    %64 = arith.truncf %63 : vector<2x16x64xf32> to vector<2x16x64xbf16>
    %65 = vector.extract_strided_slice %38 {offsets = [0, 0, 832], sizes = [2, 16, 64], strides = [1, 1, 1]} : vector<2x16x1152xf32> to vector<2x16x64xf32>
    %66 = arith.truncf %65 : vector<2x16x64xf32> to vector<2x16x64xbf16>
    %cst_23 = arith.constant dense<0.000000e+00> : vector<2x16x16xf32>
    %67 = tpu.matmul %62, %64, %cst_23 {dimension_numbers = #tpu.dot_dimension_numbers<[2], [2], [1], [1], [0, 0, 0, 1, 1, 1], [0], [0]>} : vector<2x16x64xbf16>, vector<2x16x64xbf16>, vector<2x16x16xf32> -> vector<2x16x16xf32>
    %68 = vector.shape_cast %4 : vector<16x16xf32> to vector<1x16x16xf32>
    %69 = vector.broadcast %68 : vector<1x16x16xf32> to vector<2x16x16xf32>
    %70 = arith.addf %67, %69 : vector<2x16x16xf32>
    %cst_24 = arith.constant dense<0xFF800000> : vector<2x16xf32>
    %71 = vector.multi_reduction <maximumf>, %70, %cst_24 [2] : vector<2x16x16xf32> to vector<2x16xf32>
    %72 = vector.shape_cast %71 : vector<2x16xf32> to vector<2x16x1xf32>
    %73 = vector.broadcast %72 : vector<2x16x1xf32> to vector<2x16x16xf32>
    %74 = arith.subf %70, %73 : vector<2x16x16xf32>
    %75 = math.exp %74 : vector<2x16x16xf32>
    %cst_25 = arith.constant dense<0.000000e+00> : vector<2x16xf32>
    %76 = vector.multi_reduction <add>, %75, %cst_25 [2] : vector<2x16x16xf32> to vector<2x16xf32>
    %77 = vector.shape_cast %76 : vector<2x16xf32> to vector<2x16x1xf32>
    %78 = tpu.reciprocal %77 {approx = true} : vector<2x16x1xf32> -> vector<2x16x1xf32>
    %79 = vector.broadcast %78 : vector<2x16x1xf32> to vector<2x16x16xf32>
    %80 = arith.mulf %75, %79 : vector<2x16x16xf32>
    %81 = arith.truncf %80 : vector<2x16x16xf32> to vector<2x16x16xbf16>
    %cst_26 = arith.constant dense<0.000000e+00> : vector<2x16x64xf32>
    %82 = tpu.matmul %81, %66, %cst_26 {dimension_numbers = #tpu.dot_dimension_numbers<[2], [1], [1], [2], [0, 0, 0, 1, 1, 2], [0], [0]>} : vector<2x16x16xbf16>, vector<2x16x64xbf16>, vector<2x16x64xf32> -> vector<2x16x64xf32>
    %83 = tpu.concatenate %60, %82 in 2 : vector<2x16x64xf32>, vector<2x16x64xf32> -> vector<2x16x128xf32>
    %84 = arith.truncf %83 : vector<2x16x128xf32> to vector<2x16x128xbf16>
    %c0_27 = arith.constant 0 : index
    %c0_28 = arith.constant 0 : index
    %c0_29 = arith.constant 0 : index
    %85 = vector.load %arg21[%c0_27, %c0_28, %c0_29] : memref<2x16x384xbf16, #tpu.memory_space<vmem>>, vector<2x16x128xbf16>
    tpu.vector_store %arg21[%c0_27, %c0_28, %c0_29], %84 {strides = array<i32>} : memref<2x16x384xbf16, #tpu.memory_space<vmem>>, vector<2x16x128xbf16>,
    %86 = vector.extract_strided_slice %38 {offsets = [0, 0, 128], sizes = [2, 16, 64], strides = [1, 1, 1]} : vector<2x16x1152xf32> to vector<2x16x64xf32>
    %87 = arith.truncf %86 : vector<2x16x64xf32> to vector<2x16x64xbf16>
    %88 = vector.extract_strided_slice %38 {offsets = [0, 0, 512], sizes = [2, 16, 64], strides = [1, 1, 1]} : vector<2x16x1152xf32> to vector<2x16x64xf32>
    %89 = arith.truncf %88 : vector<2x16x64xf32> to vector<2x16x64xbf16>
    %90 = vector.extract_strided_slice %38 {offsets = [0, 0, 896], sizes = [2, 16, 64], strides = [1, 1, 1]} : vector<2x16x1152xf32> to vector<2x16x64xf32>
    %91 = arith.truncf %90 : vector<2x16x64xf32> to vector<2x16x64xbf16>
    %cst_30 = arith.constant dense<0.000000e+00> : vector<2x16x16xf32>
    %92 = tpu.matmul %87, %89, %cst_30 {dimension_numbers = #tpu.dot_dimension_numbers<[2], [2], [1], [1], [0, 0, 0, 1, 1, 1], [0], [0]>} : vector<2x16x64xbf16>, vector<2x16x64xbf16>, vector<2x16x16xf32> -> vector<2x16x16xf32>
    %93 = vector.shape_cast %4 : vector<16x16xf32> to vector<1x16x16xf32>
    %94 = vector.broadcast %93 : vector<1x16x16xf32> to vector<2x16x16xf32>
    %95 = arith.addf %92, %94 : vector<2x16x16xf32>
    %cst_31 = arith.constant dense<0xFF800000> : vector<2x16xf32>
    %96 = vector.multi_reduction <maximumf>, %95, %cst_31 [2] : vector<2x16x16xf32> to vector<2x16xf32>
    %97 = vector.shape_cast %96 : vector<2x16xf32> to vector<2x16x1xf32>
    %98 = vector.broadcast %97 : vector<2x16x1xf32> to vector<2x16x16xf32>
    %99 = arith.subf %95, %98 : vector<2x16x16xf32>
    %100 = math.exp %99 : vector<2x16x16xf32>
    %cst_32 = arith.constant dense<0.000000e+00> : vector<2x16xf32>
    %101 = vector.multi_reduction <add>, %100, %cst_32 [2] : vector<2x16x16xf32> to vector<2x16xf32>
    %102 = vector.shape_cast %101 : vector<2x16xf32> to vector<2x16x1xf32>
    %103 = tpu.reciprocal %102 {approx = true} : vector<2x16x1xf32> -> vector<2x16x1xf32>
    %104 = vector.broadcast %103 : vector<2x16x1xf32> to vector<2x16x16xf32>
    %105 = arith.mulf %100, %104 : vector<2x16x16xf32>
    %106 = arith.truncf %105 : vector<2x16x16xf32> to vector<2x16x16xbf16>
    %cst_33 = arith.constant dense<0.000000e+00> : vector<2x16x64xf32>
    %107 = tpu.matmul %106, %91, %cst_33 {dimension_numbers = #tpu.dot_dimension_numbers<[2], [1], [1], [2], [0, 0, 0, 1, 1, 2], [0], [0]>} : vector<2x16x16xbf16>, vector<2x16x64xbf16>, vector<2x16x64xf32> -> vector<2x16x64xf32>
    %108 = vector.extract_strided_slice %38 {offsets = [0, 0, 192], sizes = [2, 16, 64], strides = [1, 1, 1]} : vector<2x16x1152xf32> to vector<2x16x64xf32>
    %109 = arith.truncf %108 : vector<2x16x64xf32> to vector<2x16x64xbf16>
    %110 = vector.extract_strided_slice %38 {offsets = [0, 0, 576], sizes = [2, 16, 64], strides = [1, 1, 1]} : vector<2x16x1152xf32> to vector<2x16x64xf32>
    %111 = arith.truncf %110 : vector<2x16x64xf32> to vector<2x16x64xbf16>
    %112 = vector.extract_strided_slice %38 {offsets = [0, 0, 960], sizes = [2, 16, 64], strides = [1, 1, 1]} : vector<2x16x1152xf32> to vector<2x16x64xf32>
    %113 = arith.truncf %112 : vector<2x16x64xf32> to vector<2x16x64xbf16>
    %cst_34 = arith.constant dense<0.000000e+00> : vector<2x16x16xf32>
    %114 = tpu.matmul %109, %111, %cst_34 {dimension_numbers = #tpu.dot_dimension_numbers<[2], [2], [1], [1], [0, 0, 0, 1, 1, 1], [0], [0]>} : vector<2x16x64xbf16>, vector<2x16x64xbf16>, vector<2x16x16xf32> -> vector<2x16x16xf32>
    %115 = vector.shape_cast %4 : vector<16x16xf32> to vector<1x16x16xf32>
    %116 = vector.broadcast %115 : vector<1x16x16xf32> to vector<2x16x16xf32>
    %117 = arith.addf %114, %116 : vector<2x16x16xf32>
    %cst_35 = arith.constant dense<0xFF800000> : vector<2x16xf32>
    %118 = vector.multi_reduction <maximumf>, %117, %cst_35 [2] : vector<2x16x16xf32> to vector<2x16xf32>
    %119 = vector.shape_cast %118 : vector<2x16xf32> to vector<2x16x1xf32>
    %120 = vector.broadcast %119 : vector<2x16x1xf32> to vector<2x16x16xf32>
    %121 = arith.subf %117, %120 : vector<2x16x16xf32>
    %122 = math.exp %121 : vector<2x16x16xf32>
    %cst_36 = arith.constant dense<0.000000e+00> : vector<2x16xf32>
    %123 = vector.multi_reduction <add>, %122, %cst_36 [2] : vector<2x16x16xf32> to vector<2x16xf32>
    %124 = vector.shape_cast %123 : vector<2x16xf32> to vector<2x16x1xf32>
    %125 = tpu.reciprocal %124 {approx = true} : vector<2x16x1xf32> -> vector<2x16x1xf32>
    %126 = vector.broadcast %125 : vector<2x16x1xf32> to vector<2x16x16xf32>
    %127 = arith.mulf %122, %126 : vector<2x16x16xf32>
    %128 = arith.truncf %127 : vector<2x16x16xf32> to vector<2x16x16xbf16>
    %cst_37 = arith.constant dense<0.000000e+00> : vector<2x16x64xf32>
    %129 = tpu.matmul %128, %113, %cst_37 {dimension_numbers = #tpu.dot_dimension_numbers<[2], [1], [1], [2], [0, 0, 0, 1, 1, 2], [0], [0]>} : vector<2x16x16xbf16>, vector<2x16x64xbf16>, vector<2x16x64xf32> -> vector<2x16x64xf32>
    %130 = tpu.concatenate %107, %129 in 2 : vector<2x16x64xf32>, vector<2x16x64xf32> -> vector<2x16x128xf32>
    %131 = arith.truncf %130 : vector<2x16x128xf32> to vector<2x16x128xbf16>
    %c0_38 = arith.constant 0 : index
    %c0_39 = arith.constant 0 : index
    %c128 = arith.constant 128 : index
    %132 = vector.load %arg21[%c0_38, %c0_39, %c128] : memref<2x16x384xbf16, #tpu.memory_space<vmem>>, vector<2x16x128xbf16>
    tpu.vector_store %arg21[%c0_38, %c0_39, %c128], %131 {strides = array<i32>} : memref<2x16x384xbf16, #tpu.memory_space<vmem>>, vector<2x16x128xbf16>,
    %133 = vector.extract_strided_slice %38 {offsets = [0, 0, 256], sizes = [2, 16, 64], strides = [1, 1, 1]} : vector<2x16x1152xf32> to vector<2x16x64xf32>
    %134 = arith.truncf %133 : vector<2x16x64xf32> to vector<2x16x64xbf16>
    %135 = vector.extract_strided_slice %38 {offsets = [0, 0, 640], sizes = [2, 16, 64], strides = [1, 1, 1]} : vector<2x16x1152xf32> to vector<2x16x64xf32>
    %136 = arith.truncf %135 : vector<2x16x64xf32> to vector<2x16x64xbf16>
    %137 = vector.extract_strided_slice %38 {offsets = [0, 0, 1024], sizes = [2, 16, 64], strides = [1, 1, 1]} : vector<2x16x1152xf32> to vector<2x16x64xf32>
    %138 = arith.truncf %137 : vector<2x16x64xf32> to vector<2x16x64xbf16>
    %cst_40 = arith.constant dense<0.000000e+00> : vector<2x16x16xf32>
    %139 = tpu.matmul %134, %136, %cst_40 {dimension_numbers = #tpu.dot_dimension_numbers<[2], [2], [1], [1], [0, 0, 0, 1, 1, 1], [0], [0]>} : vector<2x16x64xbf16>, vector<2x16x64xbf16>, vector<2x16x16xf32> -> vector<2x16x16xf32>
    %140 = vector.shape_cast %4 : vector<16x16xf32> to vector<1x16x16xf32>
    %141 = vector.broadcast %140 : vector<1x16x16xf32> to vector<2x16x16xf32>
    %142 = arith.addf %139, %141 : vector<2x16x16xf32>
    %cst_41 = arith.constant dense<0xFF800000> : vector<2x16xf32>
    %143 = vector.multi_reduction <maximumf>, %142, %cst_41 [2] : vector<2x16x16xf32> to vector<2x16xf32>
    %144 = vector.shape_cast %143 : vector<2x16xf32> to vector<2x16x1xf32>
    %145 = vector.broadcast %144 : vector<2x16x1xf32> to vector<2x16x16xf32>
    %146 = arith.subf %142, %145 : vector<2x16x16xf32>
    %147 = math.exp %146 : vector<2x16x16xf32>
    %cst_42 = arith.constant dense<0.000000e+00> : vector<2x16xf32>
    %148 = vector.multi_reduction <add>, %147, %cst_42 [2] : vector<2x16x16xf32> to vector<2x16xf32>
    %149 = vector.shape_cast %148 : vector<2x16xf32> to vector<2x16x1xf32>
    %150 = tpu.reciprocal %149 {approx = true} : vector<2x16x1xf32> -> vector<2x16x1xf32>
    %151 = vector.broadcast %150 : vector<2x16x1xf32> to vector<2x16x16xf32>
    %152 = arith.mulf %147, %151 : vector<2x16x16xf32>
    %153 = arith.truncf %152 : vector<2x16x16xf32> to vector<2x16x16xbf16>
    %cst_43 = arith.constant dense<0.000000e+00> : vector<2x16x64xf32>
    %154 = tpu.matmul %153, %138, %cst_43 {dimension_numbers = #tpu.dot_dimension_numbers<[2], [1], [1], [2], [0, 0, 0, 1, 1, 2], [0], [0]>} : vector<2x16x16xbf16>, vector<2x16x64xbf16>, vector<2x16x64xf32> -> vector<2x16x64xf32>
    %155 = vector.extract_strided_slice %38 {offsets = [0, 0, 320], sizes = [2, 16, 64], strides = [1, 1, 1]} : vector<2x16x1152xf32> to vector<2x16x64xf32>
    %156 = arith.truncf %155 : vector<2x16x64xf32> to vector<2x16x64xbf16>
    %157 = vector.extract_strided_slice %38 {offsets = [0, 0, 704], sizes = [2, 16, 64], strides = [1, 1, 1]} : vector<2x16x1152xf32> to vector<2x16x64xf32>
    %158 = arith.truncf %157 : vector<2x16x64xf32> to vector<2x16x64xbf16>
    %159 = vector.extract_strided_slice %38 {offsets = [0, 0, 1088], sizes = [2, 16, 64], strides = [1, 1, 1]} : vector<2x16x1152xf32> to vector<2x16x64xf32>
    %160 = arith.truncf %159 : vector<2x16x64xf32> to vector<2x16x64xbf16>
    %cst_44 = arith.constant dense<0.000000e+00> : vector<2x16x16xf32>
    %161 = tpu.matmul %156, %158, %cst_44 {dimension_numbers = #tpu.dot_dimension_numbers<[2], [2], [1], [1], [0, 0, 0, 1, 1, 1], [0], [0]>} : vector<2x16x64xbf16>, vector<2x16x64xbf16>, vector<2x16x16xf32> -> vector<2x16x16xf32>
    %162 = vector.shape_cast %4 : vector<16x16xf32> to vector<1x16x16xf32>
    %163 = vector.broadcast %162 : vector<1x16x16xf32> to vector<2x16x16xf32>
    %164 = arith.addf %161, %163 : vector<2x16x16xf32>
    %cst_45 = arith.constant dense<0xFF800000> : vector<2x16xf32>
    %165 = vector.multi_reduction <maximumf>, %164, %cst_45 [2] : vector<2x16x16xf32> to vector<2x16xf32>
    %166 = vector.shape_cast %165 : vector<2x16xf32> to vector<2x16x1xf32>
    %167 = vector.broadcast %166 : vector<2x16x1xf32> to vector<2x16x16xf32>
    %168 = arith.subf %164, %167 : vector<2x16x16xf32>
    %169 = math.exp %168 : vector<2x16x16xf32>
    %cst_46 = arith.constant dense<0.000000e+00> : vector<2x16xf32>
    %170 = vector.multi_reduction <add>, %169, %cst_46 [2] : vector<2x16x16xf32> to vector<2x16xf32>
    %171 = vector.shape_cast %170 : vector<2x16xf32> to vector<2x16x1xf32>
    %172 = tpu.reciprocal %171 {approx = true} : vector<2x16x1xf32> -> vector<2x16x1xf32>
    %173 = vector.broadcast %172 : vector<2x16x1xf32> to vector<2x16x16xf32>
    %174 = arith.mulf %169, %173 : vector<2x16x16xf32>
    %175 = arith.truncf %174 : vector<2x16x16xf32> to vector<2x16x16xbf16>
    %cst_47 = arith.constant dense<0.000000e+00> : vector<2x16x64xf32>
    %176 = tpu.matmul %175, %160, %cst_47 {dimension_numbers = #tpu.dot_dimension_numbers<[2], [1], [1], [2], [0, 0, 0, 1, 1, 2], [0], [0]>} : vector<2x16x16xbf16>, vector<2x16x64xbf16>, vector<2x16x64xf32> -> vector<2x16x64xf32>
    %177 = tpu.concatenate %154, %176 in 2 : vector<2x16x64xf32>, vector<2x16x64xf32> -> vector<2x16x128xf32>
    %178 = arith.truncf %177 : vector<2x16x128xf32> to vector<2x16x128xbf16>
    %c0_48 = arith.constant 0 : index
    %c0_49 = arith.constant 0 : index
    %c256 = arith.constant 256 : index
    %179 = vector.load %arg21[%c0_48, %c0_49, %c256] : memref<2x16x384xbf16, #tpu.memory_space<vmem>>, vector<2x16x128xbf16>
    tpu.vector_store %arg21[%c0_48, %c0_49, %c256], %178 {strides = array<i32>} : memref<2x16x384xbf16, #tpu.memory_space<vmem>>, vector<2x16x128xbf16>,
    %c0_50 = arith.constant 0 : index
    %c0_51 = arith.constant 0 : index
    %c0_52 = arith.constant 0 : index
    %180 = vector.load %arg21[%c0_50, %c0_51, %c0_52] : memref<2x16x384xbf16, #tpu.memory_space<vmem>>, vector<2x16x384xbf16>
    %181 = vector.shape_cast %180 : vector<2x16x384xbf16> to vector<32x384xbf16>
    %c0_53 = arith.constant 0 : index
    %c0_54 = arith.constant 0 : index
    %c0_55 = arith.constant 0 : index
    %182 = vector.load %arg7[%c0_53, %c0_54, %c0_55] : memref<1x384x384xbf16, #tpu.memory_space<vmem>>, vector<1x384x384xbf16>
    %183 = vector.shape_cast %182 : vector<1x384x384xbf16> to vector<384x384xbf16>
    %cst_56 = arith.constant dense<0.000000e+00> : vector<32x384xf32>
    %184 = tpu.matmul %181, %183, %cst_56 {dimension_numbers = #tpu.dot_dimension_numbers<[1], [0], [0], [1], [0, 0, 1, 1], [], []>} : vector<32x384xbf16>, vector<384x384xbf16>, vector<32x384xf32> -> vector<32x384xf32>
    %c0_57 = arith.constant 0 : index
    %c0_58 = arith.constant 0 : index
    %c0_59 = arith.constant 0 : index
    %185 = vector.load %arg8[%c0_57, %c0_58, %c0_59] : memref<1x1x384xf32, #tpu.memory_space<vmem>>, vector<1x1x384xf32>
    %186 = vector.shape_cast %185 : vector<1x1x384xf32> to vector<384xf32>
    %187 = vector.shape_cast %186 : vector<384xf32> to vector<1x384xf32>
    %188 = vector.broadcast %187 : vector<1x384xf32> to vector<32x384xf32>
    %189 = arith.addf %184, %188 : vector<32x384xf32>
    %190 = arith.addf %5, %189 : vector<32x384xf32>
    %c0_60 = arith.constant 0 : index
    %c0_61 = arith.constant 0 : index
    %c0_62 = arith.constant 0 : index
    %191 = vector.load %arg9[%c0_60, %c0_61, %c0_62] : memref<1x1x384xf32, #tpu.memory_space<vmem>>, vector<1x1x384xf32>
    %192 = vector.shape_cast %191 : vector<1x1x384xf32> to vector<384xf32>
    %c0_63 = arith.constant 0 : index
    %c0_64 = arith.constant 0 : index
    %c0_65 = arith.constant 0 : index
    %193 = vector.load %arg10[%c0_63, %c0_64, %c0_65] : memref<1x1x384xf32, #tpu.memory_space<vmem>>, vector<1x1x384xf32>
    %194 = vector.shape_cast %193 : vector<1x1x384xf32> to vector<384xf32>
    %cst_66 = arith.constant dense<0.000000e+00> : vector<32xf32>
    %195 = vector.multi_reduction <add>, %190, %cst_66 [1] : vector<32x384xf32> to vector<32xf32>
    %196 = vector.shape_cast %195 : vector<32xf32> to vector<32x1xf32>
    %cst_67 = arith.constant 3.840000e+02 : f32
    %197 = vector.broadcast %cst_67 : f32 to vector<32x1xf32>
    %198 = arith.divf %196, %197 : vector<32x1xf32>
    %199 = vector.broadcast %198 : vector<32x1xf32> to vector<32x384xf32>
    %200 = arith.subf %190, %199 : vector<32x384xf32>
    %201 = arith.mulf %200, %200 : vector<32x384xf32>
    %cst_68 = arith.constant dense<0.000000e+00> : vector<32xf32>
    %202 = vector.multi_reduction <add>, %201, %cst_68 [1] : vector<32x384xf32> to vector<32xf32>
    %203 = vector.shape_cast %202 : vector<32xf32> to vector<32x1xf32>
    %cst_69 = arith.constant 3.840000e+02 : f32
    %204 = vector.broadcast %cst_69 : f32 to vector<32x1xf32>
    %205 = arith.divf %203, %204 : vector<32x1xf32>
    %206 = vector.broadcast %198 : vector<32x1xf32> to vector<32x384xf32>
    %207 = arith.subf %190, %206 : vector<32x384xf32>
    %cst_70 = arith.constant 9.99999974E-6 : f32
    %208 = vector.broadcast %cst_70 : f32 to vector<32x1xf32>
    %209 = arith.addf %205, %208 : vector<32x1xf32>
    %210 = math.rsqrt %209 : vector<32x1xf32>
    %211 = vector.broadcast %210 : vector<32x1xf32> to vector<32x384xf32>
    %212 = arith.mulf %207, %211 : vector<32x384xf32>
    %213 = vector.shape_cast %192 : vector<384xf32> to vector<1x384xf32>
    %214 = vector.broadcast %213 : vector<1x384xf32> to vector<32x384xf32>
    %215 = arith.mulf %212, %214 : vector<32x384xf32>
    %216 = vector.shape_cast %194 : vector<384xf32> to vector<1x384xf32>
    %217 = vector.broadcast %216 : vector<1x384xf32> to vector<32x384xf32>
    %218 = arith.addf %215, %217 : vector<32x384xf32>
    %219 = arith.truncf %218 : vector<32x384xf32> to vector<32x384xbf16>
    %c0_71 = arith.constant 0 : index
    %c0_72 = arith.constant 0 : index
    %c0_73 = arith.constant 0 : index
    %220 = vector.load %arg11[%c0_71, %c0_72, %c0_73] : memref<1x384x1536xbf16, #tpu.memory_space<vmem>>, vector<1x384x1536xbf16>
    %221 = vector.shape_cast %220 : vector<1x384x1536xbf16> to vector<384x1536xbf16>
    %cst_74 = arith.constant dense<0.000000e+00> : vector<32x1536xf32>
    %222 = tpu.matmul %219, %221, %cst_74 {dimension_numbers = #tpu.dot_dimension_numbers<[1], [0], [0], [1], [0, 0, 1, 1], [], []>} : vector<32x384xbf16>, vector<384x1536xbf16>, vector<32x1536xf32> -> vector<32x1536xf32>
    %c0_75 = arith.constant 0 : index
    %c0_76 = arith.constant 0 : index
    %c0_77 = arith.constant 0 : index
    %223 = vector.load %arg12[%c0_75, %c0_76, %c0_77] : memref<1x1x1536xf32, #tpu.memory_space<vmem>>, vector<1x1x1536xf32>
    %224 = vector.shape_cast %223 : vector<1x1x1536xf32> to vector<1536xf32>
    %225 = vector.shape_cast %224 : vector<1536xf32> to vector<1x1536xf32>
    %226 = vector.broadcast %225 : vector<1x1536xf32> to vector<32x1536xf32>
    %227 = arith.addf %222, %226 : vector<32x1536xf32>
    %cst_78 = arith.constant 0.000000e+00 : f32
    %228 = vector.broadcast %cst_78 : f32 to vector<32x1536xf32>
    %229 = arith.maximumf %227, %228 : vector<32x1536xf32>
    %230 = arith.truncf %229 : vector<32x1536xf32> to vector<32x1536xbf16>
    %c0_79 = arith.constant 0 : index
    %c0_80 = arith.constant 0 : index
    %c0_81 = arith.constant 0 : index
    %231 = vector.load %arg13[%c0_79, %c0_80, %c0_81] : memref<1x1536x384xbf16, #tpu.memory_space<vmem>>, vector<1x1536x384xbf16>
    %232 = vector.shape_cast %231 : vector<1x1536x384xbf16> to vector<1536x384xbf16>
    %cst_82 = arith.constant dense<0.000000e+00> : vector<32x384xf32>
    %233 = tpu.matmul %230, %232, %cst_82 {dimension_numbers = #tpu.dot_dimension_numbers<[1], [0], [0], [1], [0, 0, 1, 1], [], []>} : vector<32x1536xbf16>, vector<1536x384xbf16>, vector<32x384xf32> -> vector<32x384xf32>
    %c0_83 = arith.constant 0 : index
    %c0_84 = arith.constant 0 : index
    %c0_85 = arith.constant 0 : index
    %234 = vector.load %arg14[%c0_83, %c0_84, %c0_85] : memref<1x1x384xf32, #tpu.memory_space<vmem>>, vector<1x1x384xf32>
    %235 = vector.shape_cast %234 : vector<1x1x384xf32> to vector<384xf32>
    %236 = vector.shape_cast %235 : vector<384xf32> to vector<1x384xf32>
    %237 = vector.broadcast %236 : vector<1x384xf32> to vector<32x384xf32>
    %238 = arith.addf %233, %237 : vector<32x384xf32>
    %239 = arith.addf %190, %238 : vector<32x384xf32>
    %240 = vector.shape_cast %239 : vector<32x384xf32> to vector<2x16x384xf32>
    %c0_86 = arith.constant 0 : index
    %c0_87 = arith.constant 0 : index
    %c0_88 = arith.constant 0 : index
    %241 = vector.load %arg20[%c0_86, %c0_87, %c0_88] : memref<2x16x384xf32, #tpu.memory_space<vmem>>, vector<2x16x384xf32>
    tpu.vector_store %arg20[%c0_86, %c0_87, %c0_88], %240 {strides = array<i32>} : memref<2x16x384xf32, #tpu.memory_space<vmem>>, vector<2x16x384xf32>,
    %c5_i32 = arith.constant 5 : i32
    %242 = arith.cmpi eq, %arg1, %c5_i32 : i32
    %243 = arith.extui %242 : i1 to i32
    %c0_i32_89 = arith.constant 0 : i32
    %244 = arith.cmpi ne, %243, %c0_i32_89 : i32
    scf.if %244 {
      %c0_90 = arith.constant 0 : index
      %c0_91 = arith.constant 0 : index
      %245 = vector.load %arg15[%c0_90, %c0_91] : memref<1x384xf32, #tpu.memory_space<vmem>>, vector<1x384xf32>
      %246 = vector.shape_cast %245 : vector<1x384xf32> to vector<384xf32>
      %c0_92 = arith.constant 0 : index
      %c0_93 = arith.constant 0 : index
      %247 = vector.load %arg16[%c0_92, %c0_93] : memref<1x384xf32, #tpu.memory_space<vmem>>, vector<1x384xf32>
      %248 = vector.shape_cast %247 : vector<1x384xf32> to vector<384xf32>
      %cst_94 = arith.constant dense<0.000000e+00> : vector<32xf32>
      %249 = vector.multi_reduction <add>, %239, %cst_94 [1] : vector<32x384xf32> to vector<32xf32>
      %250 = vector.shape_cast %249 : vector<32xf32> to vector<32x1xf32>
      %cst_95 = arith.constant 3.840000e+02 : f32
      %251 = vector.broadcast %cst_95 : f32 to vector<32x1xf32>
      %252 = arith.divf %250, %251 : vector<32x1xf32>
      %253 = vector.broadcast %252 : vector<32x1xf32> to vector<32x384xf32>
      %254 = arith.subf %239, %253 : vector<32x384xf32>
      %255 = arith.mulf %254, %254 : vector<32x384xf32>
      %cst_96 = arith.constant dense<0.000000e+00> : vector<32xf32>
      %256 = vector.multi_reduction <add>, %255, %cst_96 [1] : vector<32x384xf32> to vector<32xf32>
      %257 = vector.shape_cast %256 : vector<32xf32> to vector<32x1xf32>
      %cst_97 = arith.constant 3.840000e+02 : f32
      %258 = vector.broadcast %cst_97 : f32 to vector<32x1xf32>
      %259 = arith.divf %257, %258 : vector<32x1xf32>
      %260 = vector.broadcast %252 : vector<32x1xf32> to vector<32x384xf32>
      %261 = arith.subf %239, %260 : vector<32x384xf32>
      %cst_98 = arith.constant 9.99999974E-6 : f32
      %262 = vector.broadcast %cst_98 : f32 to vector<32x1xf32>
      %263 = arith.addf %259, %262 : vector<32x1xf32>
      %264 = math.rsqrt %263 : vector<32x1xf32>
      %265 = vector.broadcast %264 : vector<32x1xf32> to vector<32x384xf32>
      %266 = arith.mulf %261, %265 : vector<32x384xf32>
      %267 = vector.shape_cast %246 : vector<384xf32> to vector<1x384xf32>
      %268 = vector.broadcast %267 : vector<1x384xf32> to vector<32x384xf32>
      %269 = arith.mulf %266, %268 : vector<32x384xf32>
      %270 = vector.shape_cast %248 : vector<384xf32> to vector<1x384xf32>
      %271 = vector.broadcast %270 : vector<1x384xf32> to vector<32x384xf32>
      %272 = arith.addf %269, %271 : vector<32x384xf32>
      %273 = arith.truncf %272 : vector<32x384xf32> to vector<32x384xbf16>
      %c0_99 = arith.constant 0 : index
      %c0_100 = arith.constant 0 : index
      %274 = vector.load %arg17[%c0_99, %c0_100] : memref<384x128xbf16, #tpu.memory_space<vmem>>, vector<384x128xbf16>
      %cst_101 = arith.constant dense<0.000000e+00> : vector<32x128xf32>
      %275 = tpu.matmul %273, %274, %cst_101 {dimension_numbers = #tpu.dot_dimension_numbers<[1], [0], [0], [1], [0, 0, 1, 1], [], []>} : vector<32x384xbf16>, vector<384x128xbf16>, vector<32x128xf32> -> vector<32x128xf32>
      %c0_102 = arith.constant 0 : index
      %c0_103 = arith.constant 0 : index
      %276 = vector.load %arg18[%c0_102, %c0_103] : memref<1x128xf32, #tpu.memory_space<vmem>>, vector<1x128xf32>
      %277 = vector.shape_cast %276 : vector<1x128xf32> to vector<128xf32>
      %278 = vector.shape_cast %277 : vector<128xf32> to vector<1x128xf32>
      %279 = vector.broadcast %278 : vector<1x128xf32> to vector<32x128xf32>
      %280 = arith.addf %275, %279 : vector<32x128xf32>
      %281 = vector.shape_cast %280 : vector<32x128xf32> to vector<2x16x128xf32>
      %c0_104 = arith.constant 0 : index
      %c0_105 = arith.constant 0 : index
      %c0_106 = arith.constant 0 : index
      %282 = vector.load %arg19[%c0_104, %c0_105, %c0_106] : memref<2x16x128xf32, #tpu.memory_space<vmem>>, vector<2x16x128xf32>
      tpu.vector_store %arg19[%c0_104, %c0_105, %c0_106], %281 {strides = array<i32>} : memref<2x16x128xf32, #tpu.memory_space<vmem>>, vector<2x16x128xf32>,
    } else {
    }
    return
  }
  func.func @transform_0(%arg0: i32, %arg1: i32) -> (i32, i32) {
    %c0_i32 = arith.constant 0 : i32
    %c0_i32_0 = arith.constant 0 : i32
    %c0_i32_1 = arith.constant 0 : i32
    return %c0_i32, %c0_i32_0 : i32, i32
  }
  func.func @transform_1(%arg0: i32, %arg1: i32) -> (i32, i32, i32) {
    %c0_i32 = arith.constant 0 : i32
    %c0_i32_0 = arith.constant 0 : i32
    %c0_i32_1 = arith.constant 0 : i32
    return %arg0, %c0_i32, %c0_i32_0 : i32, i32, i32
  }
  func.func @transform_2(%arg0: i32, %arg1: i32) -> (i32, i32, i32) {
    %c0_i32 = arith.constant 0 : i32
    %c0_i32_0 = arith.constant 0 : i32
    %c0_i32_1 = arith.constant 0 : i32
    return %arg1, %c0_i32, %c0_i32_0 : i32, i32, i32
  }
  func.func @transform_3(%arg0: i32, %arg1: i32) -> (i32, i32, i32) {
    %c0_i32 = arith.constant 0 : i32
    %c0_i32_0 = arith.constant 0 : i32
    %c0_i32_1 = arith.constant 0 : i32
    return %arg1, %c0_i32, %c0_i32_0 : i32, i32, i32
  }
  func.func @transform_4(%arg0: i32, %arg1: i32) -> (i32, i32, i32) {
    %c0_i32 = arith.constant 0 : i32
    %c0_i32_0 = arith.constant 0 : i32
    %c0_i32_1 = arith.constant 0 : i32
    return %arg1, %c0_i32, %c0_i32_0 : i32, i32, i32
  }
  func.func @transform_5(%arg0: i32, %arg1: i32) -> (i32, i32, i32) {
    %c0_i32 = arith.constant 0 : i32
    %c0_i32_0 = arith.constant 0 : i32
    %c0_i32_1 = arith.constant 0 : i32
    return %arg1, %c0_i32, %c0_i32_0 : i32, i32, i32
  }
  func.func @transform_6(%arg0: i32, %arg1: i32) -> (i32, i32, i32) {
    %c0_i32 = arith.constant 0 : i32
    %c0_i32_0 = arith.constant 0 : i32
    %c0_i32_1 = arith.constant 0 : i32
    return %arg1, %c0_i32, %c0_i32_0 : i32, i32, i32
  }
  func.func @transform_7(%arg0: i32, %arg1: i32) -> (i32, i32, i32) {
    %c0_i32 = arith.constant 0 : i32
    %c0_i32_0 = arith.constant 0 : i32
    %c0_i32_1 = arith.constant 0 : i32
    return %arg1, %c0_i32, %c0_i32_0 : i32, i32, i32
  }
  func.func @transform_8(%arg0: i32, %arg1: i32) -> (i32, i32, i32) {
    %c0_i32 = arith.constant 0 : i32
    %c0_i32_0 = arith.constant 0 : i32
    %c0_i32_1 = arith.constant 0 : i32
    return %arg1, %c0_i32, %c0_i32_0 : i32, i32, i32
  }
  func.func @transform_9(%arg0: i32, %arg1: i32) -> (i32, i32, i32) {
    %c0_i32 = arith.constant 0 : i32
    %c0_i32_0 = arith.constant 0 : i32
    %c0_i32_1 = arith.constant 0 : i32
    return %arg1, %c0_i32, %c0_i32_0 : i32, i32, i32
  }
  func.func @transform_10(%arg0: i32, %arg1: i32) -> (i32, i32, i32) {
    %c0_i32 = arith.constant 0 : i32
    %c0_i32_0 = arith.constant 0 : i32
    %c0_i32_1 = arith.constant 0 : i32
    return %arg1, %c0_i32, %c0_i32_0 : i32, i32, i32
  }
  func.func @transform_11(%arg0: i32, %arg1: i32) -> (i32, i32, i32) {
    %c0_i32 = arith.constant 0 : i32
    %c0_i32_0 = arith.constant 0 : i32
    %c0_i32_1 = arith.constant 0 : i32
    return %arg1, %c0_i32, %c0_i32_0 : i32, i32, i32
  }
  func.func @transform_12(%arg0: i32, %arg1: i32) -> (i32, i32, i32) {
    %c0_i32 = arith.constant 0 : i32
    %c0_i32_0 = arith.constant 0 : i32
    %c0_i32_1 = arith.constant 0 : i32
    return %arg1, %c0_i32, %c0_i32_0 : i32, i32, i32
  }
  func.func @transform_13(%arg0: i32, %arg1: i32) -> (i32, i32) {
    %c0_i32 = arith.constant 0 : i32
    %c0_i32_0 = arith.constant 0 : i32
    %c0_i32_1 = arith.constant 0 : i32
    return %c0_i32, %c0_i32_0 : i32, i32
  }
  func.func @transform_14(%arg0: i32, %arg1: i32) -> (i32, i32) {
    %c0_i32 = arith.constant 0 : i32
    %c0_i32_0 = arith.constant 0 : i32
    %c0_i32_1 = arith.constant 0 : i32
    return %c0_i32, %c0_i32_0 : i32, i32
  }
  func.func @transform_15(%arg0: i32, %arg1: i32) -> (i32, i32) {
    %c0_i32 = arith.constant 0 : i32
    %c0_i32_0 = arith.constant 0 : i32
    %c0_i32_1 = arith.constant 0 : i32
    return %c0_i32, %c0_i32_0 : i32, i32
  }
  func.func @transform_16(%arg0: i32, %arg1: i32) -> (i32, i32) {
    %c0_i32 = arith.constant 0 : i32
    %c0_i32_0 = arith.constant 0 : i32
    %c0_i32_1 = arith.constant 0 : i32
    return %c0_i32, %c0_i32_0 : i32, i32
  }
  func.func @transform_17(%arg0: i32, %arg1: i32) -> (i32, i32, i32) {
    %c0_i32 = arith.constant 0 : i32
    %c0_i32_0 = arith.constant 0 : i32
    %c0_i32_1 = arith.constant 0 : i32
    return %arg0, %c0_i32, %c0_i32_0 : i32, i32, i32
  }
}

</mosaic_0001>

<llo_original>
// kernel: bigram_forward.1
$region0: #{bigram_forward.1}
  #allocation0 [shape = 'u32[]', space=smem, size = 0x4, offset = 0x4, fixed_abs, tag = 'smem constant byte address 0x4 - core index']
  #allocation1 [shape = 'u32[144,128]{1,0:T(1,128)}', space=vmem, size = 0x12000, scoped, tag = 'internal scratch']
  #allocation2 [shape = 'f32[2,16,384]{2,1,0:T(8,128)}', space=vmem, size = 0xc000, scoped, tag = 'scratch operand']
  #allocation3 [shape = 'bf16[2,16,384]{2,1,0:T(8,128)(2,1)}', space=vmem, size = 0x6000, scoped, tag = 'scratch operand']
  %s0 = inlined_call_operand.vmem [shape: f32[16,16], index: 0, kind: input, shape index: {}]
  %s1 = inlined_call_operand.vmem [shape: f32[2,16,384], index: 1, kind: input, shape index: {}]
  %s2 = inlined_call_operand.hbm [shape: f32[6,1,384], index: 2, kind: input, shape index: {}]
  %s3 = inlined_call_operand.hbm [shape: f32[6,1,384], index: 3, kind: input, shape index: {}]
  %s4 = inlined_call_operand.hbm [shape: bf16[6,384,1152], index: 4, kind: input, shape index: {}]
  %s5 = inlined_call_operand.hbm [shape: bf16[6,384,384], index: 5, kind: input, shape index: {}]
  %s6 = inlined_call_operand.hbm [shape: f32[6,1,384], index: 6, kind: input, shape index: {}]
  %s7 = inlined_call_operand.hbm [shape: f32[6,1,384], index: 7, kind: input, shape index: {}]
  %s8 = inlined_call_operand.hbm [shape: f32[6,1,384], index: 8, kind: input, shape index: {}]
  %s9 = inlined_call_operand.hbm [shape: bf16[6,384,1536], index: 9, kind: input, shape index: {}]
  %s10 = inlined_call_operand.hbm [shape: f32[6,1,1536], index: 10, kind: input, shape index: {}]
  %s11 = inlined_call_operand.hbm [shape: bf16[6,1536,384], index: 11, kind: input, shape index: {}]
  %s12 = inlined_call_operand.hbm [shape: f32[6,1,384], index: 12, kind: input, shape index: {}]
  %s13 = inlined_call_operand.hbm [shape: f32[1,384], index: 13, kind: input, shape index: {}]
  %s14 = inlined_call_operand.hbm [shape: f32[1,384], index: 14, kind: input, shape index: {}]
  %s15 = inlined_call_operand.hbm [shape: bf16[384,128], index: 15, kind: input, shape index: {}]
  %s16 = inlined_call_operand.hbm [shape: f32[1,128], index: 16, kind: input, shape index: {}]
  %s17 = inlined_call_operand.hbm [shape: f32[2,16,128], index: 17, kind: output, shape index: {}]
  %s18 = sld [smem:[#allocation0]]
  $region169: #{bigram_forward.1} parent=0
    _
  %s20 = ssub.s32 1, %s18
  %s21 = scalar_select 0, %s20, %s18
  $region1: #{bigram_forward.1} parent=0
    #allocation4 [shape = 'u8[3072]{0}', space=vmem, size = 0xc00, scoped, tag = 'input window, operand 2']
    #allocation5 [shape = 's32[2]{0}', space=sflag, size = 0x8, scoped, tag = 'scoped memory for bigram_forward.1']
    #allocation6 [shape = 's32[2]{0}', space=sflag, size = 0x8, scoped, tag = 'scoped memory for bigram_forward.1']
    #allocation7 [shape = 'u8[3072]{0}', space=vmem, size = 0xc00, scoped, tag = 'input window, operand 3']
    #allocation8 [shape = 's32[2]{0}', space=sflag, size = 0x8, scoped, tag = 'scoped memory for bigram_forward.1']
    #allocation9 [shape = 'u8[1769472]{0}', space=vmem, size = 0x1b0000, scoped, tag = 'input window, operand 4']
    #allocation10 [shape = 'u8[589824]{0}', space=vmem, size = 0x90000, scoped, tag = 'input window, operand 5']
    #allocation11 [shape = 's32[2]{0}', space=sflag, size = 0x8, scoped, tag = 'scoped memory for bigram_forward.1']
    #allocation12 [shape = 'u8[3072]{0}', space=vmem, size = 0xc00, scoped, tag = 'input window, operand 6']
    #allocation13 [shape = 'u8[3072]{0}', space=vmem, size = 0xc00, scoped, tag = 'input window, operand 7']
    #allocation14 [shape = 's32[2]{0}', space=sflag, size = 0x8, scoped, tag = 'scoped memory for bigram_forward.1']
    #allocation15 [shape = 'u8[3072]{0}', space=vmem, size = 0xc00, scoped, tag = 'input window, operand 8']
    #allocation16 [shape = 'u8[2359296]{0}', space=vmem, size = 0x240000, scoped, tag = 'input window, operand 9']
    #allocation17 [shape = 's32[2]{0}', space=sflag, size = 0x8, scoped, tag = 'scoped memory for bigram_forward.1']
    #allocation18 [shape = 'u8[12288]{0}', space=vmem, size = 0x3000, scoped, tag = 'input window, operand 10']
    #allocation19 [shape = 'u8[2359296]{0}', space=vmem, size = 0x240000, scoped, tag = 'input window, operand 11']
    #allocation20 [shape = 's32[2]{0}', space=sflag, size = 0x8, scoped, tag = 'scoped memory for bigram_forward.1']
    #allocation21 [shape = 'u8[3072]{0}', space=vmem, size = 0xc00, scoped, tag = 'input window, operand 12']
    #allocation22 [shape = 'u8[1536]{0}', space=vmem, size = 0x800, scoped, tag = 'input window, operand 13, single buffered']
    #allocation23 [shape = 's32[1]{0}', space=sflag, size = 0x4, scoped, tag = 'scoped memory for bigram_forward.1']
    #allocation24 [shape = 'u8[1536]{0}', space=vmem, size = 0x800, scoped, tag = 'input window, operand 14, single buffered']
    #allocation25 [shape = 'u8[98304]{0}', space=vmem, size = 0x18000, scoped, tag = 'input window, operand 15, single buffered']
    #allocation26 [shape = 's32[1]{0}', space=sflag, size = 0x4, scoped, tag = 'scoped memory for bigram_forward.1']
    #allocation27 [shape = 'u8[512]{0}', space=vmem, size = 0x400, scoped, tag = 'input window, operand 16, single buffered']
    #allocation28 [shape = 'u8[16384]{0}', space=vmem, size = 0x4000, scoped, tag = 'output window, operand 0, single buffered']
    %22 = vsyncpa [#allocation5], 0
    %s23 = scalar_lea.sflag [#allocation5], 1
    %24 = vsyncpa %s23, 0
    %25 = vsyncpa [#allocation8], 0
    %s26 = scalar_lea.sflag [#allocation8], 1
    %27 = vsyncpa %s26, 0
    %28 = vsyncpa [#allocation11], 0
    %s29 = scalar_lea.sflag [#allocation11], 1
    %30 = vsyncpa %s29, 0
    %31 = vsyncpa [#allocation14], 0
    %s32 = scalar_lea.sflag [#allocation14], 1
    %33 = vsyncpa %s32, 0
    %34 = vsyncpa [#allocation17], 0
    %s35 = scalar_lea.sflag [#allocation17], 1
    %36 = vsyncpa %s35, 0
    %37 = vsyncpa [#allocation20], 0
    %s38 = scalar_lea.sflag [#allocation20], 1
    %39 = vsyncpa %s38, 0
    %40 = vsyncpa [#allocation23], 0
    %41 = vsyncpa [#allocation26], 0
    %42 = vsyncpa [#allocation6], 0
    loop: start=0, step=1, limit=8
    $region2: #{bigram_forward.1} parent=1 // loop_pre_header
      _
    $region3: #{bigram_forward.1} parent=1 // loop_header
      %s44 = sphi 0, %s48
      %p45 = scmp.ge.s32.totalorder %s44, 8
      %s51 = sphi 0, %s63
      %s52 = sphi 0, %s59
      %s53 = sphi 0, %s51
      %s54 = sphi 0, %s52
      %s55 = sphi 0, %s53
      %s56 = sphi 0, %s54
      %s64 = sphi 0, %s64
      %s66 = sphi 0, %s64
      %s67 = sphi 0, %s66
      %s81 = sphi 0, %s67
      %s87 = sphi 0, %s89
      %s90 = sphi 0, %s87
      %s91 = sphi 0, %s90
      %s107 = sphi 0, %s91
      %s113 = sphi 0, %s115
      %s116 = sphi 0, %s113
      %s117 = sphi 0, %s116
      %s133 = sphi 0, %s117
      %s139 = sphi 0, %s141
      %s142 = sphi 0, %s139
      %s143 = sphi 0, %s142
      %s159 = sphi 0, %s143
      %s165 = sphi 0, %s167
      %s168 = sphi 0, %s165
      %s169 = sphi 0, %s168
      %s185 = sphi 0, %s169
      %s191 = sphi 0, %s193
      %s194 = sphi 0, %s191
      %s195 = sphi 0, %s194
      %s211 = sphi 0, %s195
      %s217 = sphi 0, %s219
      %s220 = sphi 0, %s217
      %s221 = sphi 0, %s220
      %s237 = sphi 0, %s221
      %s243 = sphi 0, %s245
      %s246 = sphi 0, %s243
      %s247 = sphi 0, %s246
      %s263 = sphi 0, %s247
      %s269 = sphi 0, %s271
      %s272 = sphi 0, %s269
      %s273 = sphi 0, %s272
      %s289 = sphi 0, %s273
      %s295 = sphi 0, %s297
      %s298 = sphi 0, %s295
      %s299 = sphi 0, %s298
      %s315 = sphi 0, %s299
      %s321 = sphi 0, %s323
      %s324 = sphi 0, %s321
      %s325 = sphi 0, %s324
      %s341 = sphi 0, %s325
      %s347 = sphi 0, %s349
      %s350 = sphi 0, %s347
      %s351 = sphi 0, %s350
      %s367 = sphi 0, %s351
      %s373 = sphi 0, %s375
      %s376 = sphi 0, %s373
      %s377 = sphi 0, %s376
      %s393 = sphi 0, %s377
      %s397 = sphi 0, %s397
      %s399 = sphi 0, %s397
      %s400 = sphi 0, %s399
      %s414 = sphi 0, %s400
      %s418 = sphi 0, %s418
      %s420 = sphi 0, %s418
      %s421 = sphi 0, %s420
      %s435 = sphi 0, %s421
      %s439 = sphi 0, %s439
      %s441 = sphi 0, %s439
      %s442 = sphi 0, %s441
      %s456 = sphi 0, %s442
      %s460 = sphi 0, %s460
      %s462 = sphi 0, %s460
      %s463 = sphi 0, %s462
      %s477 = sphi 0, %s463
      %s483 = sphi 0, %s485
      %s486 = sphi 0, %s483
      %s487 = sphi 0, %s486
      %s503 = sphi 0, %s487
    $region4: #{bigram_forward.1} parent=1 // loop_header_branch
      %47 = sbr.rel (%p45) target = $region8
    $region5: #{bigram_forward.1} parent=1 // loop_body
      %s49 = ssub.s32 %s44, 1
      %s50 = ssub.s32 %s44, 2
      %s57 = sadd.s32 1, %s52
      %p58 = scmp.ge.s32.totalorder %s57, 6
      %s59 = scalar_select %p58, 0, %s57
      %s60 = sadd.s32 1, %s51
      %s61 = scalar_select %p58, %s60, %s51
      %p62 = scmp.ge.s32.totalorder %s61, 1
      %s63 = scalar_select %p62, 0, %s61
      %s65 = sadd.s32 %s64, 1
      %p68 = scmp.eq.s32.totalorder %s44, 5
      %p69 = scmp.ne.s32.totalorder %s64, %s66
      %p70 = scmp.eq.s32.totalorder %s44, 0
      %p71 = por %p69, %p70
      %p72 = scmp.ne.s32.totalorder %s64, %s66
      %p73 = scmp.eq.s32.totalorder %s49, 5
      %p74 = por %p72, %p73
      %p75 = scmp.ne.s32.totalorder %s66, %s67
      %p76 = scmp.eq.s32.totalorder %s49, 0
      %p77 = por %p75, %p76
      %p78 = scmp.ne.s32.totalorder %s66, %s67
      %p79 = scmp.eq.s32.totalorder %s50, 5
      %p80 = por %p78, %p79
      %p82 = scmp.ne.s32.totalorder %s67, %s81
      %p83 = scmp.eq.s32.totalorder %s50, 0
      %p84 = por %p82, %p83
      %s85 = ssub.s32 %s51, %s63
      %p86 = scmp.eq.s32.totalorder %s85, 0
      %s88 = sadd.s32 %s87, 1
      %s89 = scalar_select %p86, %s87, %s88
      %p92 = pneg %p86
      %p93 = scmp.eq.s32.totalorder %s44, 5
      %p94 = por %p92, %p93
      %p95 = scmp.ne.s32.totalorder %s87, %s90
      %p96 = scmp.eq.s32.totalorder %s44, 0
      %p97 = por %p95, %p96
      %p98 = scmp.ne.s32.totalorder %s87, %s90
      %p99 = scmp.eq.s32.totalorder %s49, 5
      %p100 = por %p98, %p99
      %p101 = scmp.ne.s32.totalorder %s90, %s91
      %p102 = scmp.eq.s32.totalorder %s49, 0
      %p103 = por %p101, %p102
      %p104 = scmp.ne.s32.totalorder %s90, %s91
      %p105 = scmp.eq.s32.totalorder %s50, 5
      %p106 = por %p104, %p105
      %p108 = scmp.ne.s32.totalorder %s91, %s107
      %p109 = scmp.eq.s32.totalorder %s50, 0
      %p110 = por %p108, %p109
      %s111 = ssub.s32 %s52, %s59
      %p112 = scmp.eq.s32.totalorder %s111, 0
      %s114 = sadd.s32 %s113, 1
      %s115 = scalar_select %p112, %s113, %s114
      %p118 = pneg %p112
      %p119 = scmp.eq.s32.totalorder %s44, 5
      %p120 = por %p118, %p119
      %p121 = scmp.ne.s32.totalorder %s113, %s116
      %p122 = scmp.eq.s32.totalorder %s44, 0
      %p123 = por %p121, %p122
      %p124 = scmp.ne.s32.totalorder %s113, %s116
      %p125 = scmp.eq.s32.totalorder %s49, 5
      %p126 = por %p124, %p125
      %p127 = scmp.ne.s32.totalorder %s116, %s117
      %p128 = scmp.eq.s32.totalorder %s49, 0
      %p129 = por %p127, %p128
      %p130 = scmp.ne.s32.totalorder %s116, %s117
      %p131 = scmp.eq.s32.totalorder %s50, 5
      %p132 = por %p130, %p131
      %p134 = scmp.ne.s32.totalorder %s117, %s133
      %p135 = scmp.eq.s32.totalorder %s50, 0
      %p136 = por %p134, %p135
      %s137 = ssub.s32 %s52, %s59
      %p138 = scmp.eq.s32.totalorder %s137, 0
      %s140 = sadd.s32 %s139, 1
      %s141 = scalar_select %p138, %s139, %s140
      %p144 = pneg %p138
      %p145 = scmp.eq.s32.totalorder %s44, 5
      %p146 = por %p144, %p145
      %p147 = scmp.ne.s32.totalorder %s139, %s142
      %p148 = scmp.eq.s32.totalorder %s44, 0
      %p149 = por %p147, %p148
      %p150 = scmp.ne.s32.totalorder %s139, %s142
      %p151 = scmp.eq.s32.totalorder %s49, 5
      %p152 = por %p150, %p151
      %p153 = scmp.ne.s32.totalorder %s142, %s143
      %p154 = scmp.eq.s32.totalorder %s49, 0
      %p155 = por %p153, %p154
      %p156 = scmp.ne.s32.totalorder %s142, %s143
      %p157 = scmp.eq.s32.totalorder %s50, 5
      %p158 = por %p156, %p157
      %p160 = scmp.ne.s32.totalorder %s143, %s159
      %p161 = scmp.eq.s32.totalorder %s50, 0
      %p162 = por %p160, %p161
      %s163 = ssub.s32 %s52, %s59
      %p164 = scmp.eq.s32.totalorder %s163, 0
      %s166 = sadd.s32 %s165, 1
      %s167 = scalar_select %p164, %s165, %s166
      %p170 = pneg %p164
      %p171 = scmp.eq.s32.totalorder %s44, 5
      %p172 = por %p170, %p171
      %p173 = scmp.ne.s32.totalorder %s165, %s168
      %p174 = scmp.eq.s32.totalorder %s44, 0
      %p175 = por %p173, %p174
      %p176 = scmp.ne.s32.totalorder %s165, %s168
      %p177 = scmp.eq.s32.totalorder %s49, 5
      %p178 = por %p176, %p177
      %p179 = scmp.ne.s32.totalorder %s168, %s169
      %p180 = scmp.eq.s32.totalorder %s49, 0
      %p181 = por %p179, %p180
      %p182 = scmp.ne.s32.totalorder %s168, %s169
      %p183 = scmp.eq.s32.totalorder %s50, 5
      %p184 = por %p182, %p183
      %p186 = scmp.ne.s32.totalorder %s169, %s185
      %p187 = scmp.eq.s32.totalorder %s50, 0
      %p188 = por %p186, %p187
      %s189 = ssub.s32 %s52, %s59
      %p190 = scmp.eq.s32.totalorder %s189, 0
      %s192 = sadd.s32 %s191, 1
      %s193 = scalar_select %p190, %s191, %s192
      %p196 = pneg %p190
      %p197 = scmp.eq.s32.totalorder %s44, 5
      %p198 = por %p196, %p197
      %p199 = scmp.ne.s32.totalorder %s191, %s194
      %p200 = scmp.eq.s32.totalorder %s44, 0
      %p201 = por %p199, %p200
      %p202 = scmp.ne.s32.totalorder %s191, %s194
      %p203 = scmp.eq.s32.totalorder %s49, 5
      %p204 = por %p202, %p203
      %p205 = scmp.ne.s32.totalorder %s194, %s195
      %p206 = scmp.eq.s32.totalorder %s49, 0
      %p207 = por %p205, %p206
      %p208 = scmp.ne.s32.totalorder %s194, %s195
      %p209 = scmp.eq.s32.totalorder %s50, 5
      %p210 = por %p208, %p209
      %p212 = scmp.ne.s32.totalorder %s195, %s211
      %p213 = scmp.eq.s32.totalorder %s50, 0
      %p214 = por %p212, %p213
      %s215 = ssub.s32 %s52, %s59
      %p216 = scmp.eq.s32.totalorder %s215, 0
      %s218 = sadd.s32 %s217, 1
      %s219 = scalar_select %p216, %s217, %s218
      %p222 = pneg %p216
      %p223 = scmp.eq.s32.totalorder %s44, 5
      %p224 = por %p222, %p223
      %p225 = scmp.ne.s32.totalorder %s217, %s220
      %p226 = scmp.eq.s32.totalorder %s44, 0
      %p227 = por %p225, %p226
      %p228 = scmp.ne.s32.totalorder %s217, %s220
      %p229 = scmp.eq.s32.totalorder %s49, 5
      %p230 = por %p228, %p229
      %p231 = scmp.ne.s32.totalorder %s220, %s221
      %p232 = scmp.eq.s32.totalorder %s49, 0
      %p233 = por %p231, %p232
      %p234 = scmp.ne.s32.totalorder %s220, %s221
      %p235 = scmp.eq.s32.totalorder %s50, 5
      %p236 = por %p234, %p235
      %p238 = scmp.ne.s32.totalorder %s221, %s237
      %p239 = scmp.eq.s32.totalorder %s50, 0
      %p240 = por %p238, %p239
      %s241 = ssub.s32 %s52, %s59
      %p242 = scmp.eq.s32.totalorder %s241, 0
      %s244 = sadd.s32 %s243, 1
      %s245 = scalar_select %p242, %s243, %s244
      %p248 = pneg %p242
      %p249 = scmp.eq.s32.totalorder %s44, 5
      %p250 = por %p248, %p249
      %p251 = scmp.ne.s32.totalorder %s243, %s246
      %p252 = scmp.eq.s32.totalorder %s44, 0
      %p253 = por %p251, %p252
      %p254 = scmp.ne.s32.totalorder %s243, %s246
      %p255 = scmp.eq.s32.totalorder %s49, 5
      %p256 = por %p254, %p255
      %p257 = scmp.ne.s32.totalorder %s246, %s247
      %p258 = scmp.eq.s32.totalorder %s49, 0
      %p259 = por %p257, %p258
      %p260 = scmp.ne.s32.totalorder %s246, %s247
      %p261 = scmp.eq.s32.totalorder %s50, 5
      %p262 = por %p260, %p261
      %p264 = scmp.ne.s32.totalorder %s247, %s263
      %p265 = scmp.eq.s32.totalorder %s50, 0
      %p266 = por %p264, %p265
      %s267 = ssub.s32 %s52, %s59
      %p268 = scmp.eq.s32.totalorder %s267, 0
      %s270 = sadd.s32 %s269, 1
      %s271 = scalar_select %p268, %s269, %s270
      %p274 = pneg %p268
      %p275 = scmp.eq.s32.totalorder %s44, 5
      %p276 = por %p274, %p275
      %p277 = scmp.ne.s32.totalorder %s269, %s272
      %p278 = scmp.eq.s32.totalorder %s44, 0
      %p279 = por %p277, %p278
      %p280 = scmp.ne.s32.totalorder %s269, %s272
      %p281 = scmp.eq.s32.totalorder %s49, 5
      %p282 = por %p280, %p281
      %p283 = scmp.ne.s32.totalorder %s272, %s273
      %p284 = scmp.eq.s32.totalorder %s49, 0
      %p285 = por %p283, %p284
      %p286 = scmp.ne.s32.totalorder %s272, %s273
      %p287 = scmp.eq.s32.totalorder %s50, 5
      %p288 = por %p286, %p287
      %p290 = scmp.ne.s32.totalorder %s273, %s289
      %p291 = scmp.eq.s32.totalorder %s50, 0
      %p292 = por %p290, %p291
      %s293 = ssub.s32 %s52, %s59
      %p294 = scmp.eq.s32.totalorder %s293, 0
      %s296 = sadd.s32 %s295, 1
      %s297 = scalar_select %p294, %s295, %s296
      %p300 = pneg %p294
      %p301 = scmp.eq.s32.totalorder %s44, 5
      %p302 = por %p300, %p301
      %p303 = scmp.ne.s32.totalorder %s295, %s298
      %p304 = scmp.eq.s32.totalorder %s44, 0
      %p305 = por %p303, %p304
      %p306 = scmp.ne.s32.totalorder %s295, %s298
      %p307 = scmp.eq.s32.totalorder %s49, 5
      %p308 = por %p306, %p307
      %p309 = scmp.ne.s32.totalorder %s298, %s299
      %p310 = scmp.eq.s32.totalorder %s49, 0
      %p311 = por %p309, %p310
      %p312 = scmp.ne.s32.totalorder %s298, %s299
      %p313 = scmp.eq.s32.totalorder %s50, 5
      %p314 = por %p312, %p313
      %p316 = scmp.ne.s32.totalorder %s299, %s315
      %p317 = scmp.eq.s32.totalorder %s50, 0
      %p318 = por %p316, %p317
      %s319 = ssub.s32 %s52, %s59
      %p320 = scmp.eq.s32.totalorder %s319, 0
      %s322 = sadd.s32 %s321, 1
      %s323 = scalar_select %p320, %s321, %s322
      %p326 = pneg %p320
      %p327 = scmp.eq.s32.totalorder %s44, 5
      %p328 = por %p326, %p327
      %p329 = scmp.ne.s32.totalorder %s321, %s324
      %p330 = scmp.eq.s32.totalorder %s44, 0
      %p331 = por %p329, %p330
      %p332 = scmp.ne.s32.totalorder %s321, %s324
      %p333 = scmp.eq.s32.totalorder %s49, 5
      %p334 = por %p332, %p333
      %p335 = scmp.ne.s32.totalorder %s324, %s325
      %p336 = scmp.eq.s32.totalorder %s49, 0
      %p337 = por %p335, %p336
      %p338 = scmp.ne.s32.totalorder %s324, %s325
      %p339 = scmp.eq.s32.totalorder %s50, 5
      %p340 = por %p338, %p339
      %p342 = scmp.ne.s32.totalorder %s325, %s341
      %p343 = scmp.eq.s32.totalorder %s50, 0
      %p344 = por %p342, %p343
      %s345 = ssub.s32 %s52, %s59
      %p346 = scmp.eq.s32.totalorder %s345, 0
      %s348 = sadd.s32 %s347, 1
      %s349 = scalar_select %p346, %s347, %s348
      %p352 = pneg %p346
      %p353 = scmp.eq.s32.totalorder %s44, 5
      %p354 = por %p352, %p353
      %p355 = scmp.ne.s32.totalorder %s347, %s350
      %p356 = scmp.eq.s32.totalorder %s44, 0
      %p357 = por %p355, %p356
      %p358 = scmp.ne.s32.totalorder %s347, %s350
      %p359 = scmp.eq.s32.totalorder %s49, 5
      %p360 = por %p358, %p359
      %p361 = scmp.ne.s32.totalorder %s350, %s351
      %p362 = scmp.eq.s32.totalorder %s49, 0
      %p363 = por %p361, %p362
      %p364 = scmp.ne.s32.totalorder %s350, %s351
      %p365 = scmp.eq.s32.totalorder %s50, 5
      %p366 = por %p364, %p365
      %p368 = scmp.ne.s32.totalorder %s351, %s367
      %p369 = scmp.eq.s32.totalorder %s50, 0
      %p370 = por %p368, %p369
      %s371 = ssub.s32 %s52, %s59
      %p372 = scmp.eq.s32.totalorder %s371, 0
      %s374 = sadd.s32 %s373, 1
      %s375 = scalar_select %p372, %s373, %s374
      %p378 = pneg %p372
      %p379 = scmp.eq.s32.totalorder %s44, 5
      %p380 = por %p378, %p379
      %p381 = scmp.ne.s32.totalorder %s373, %s376
      %p382 = scmp.eq.s32.totalorder %s44, 0
      %p383 = por %p381, %p382
      %p384 = scmp.ne.s32.totalorder %s373, %s376
      %p385 = scmp.eq.s32.totalorder %s49, 5
      %p386 = por %p384, %p385
      %p387 = scmp.ne.s32.totalorder %s376, %s377
      %p388 = scmp.eq.s32.totalorder %s49, 0
      %p389 = por %p387, %p388
      %p390 = scmp.ne.s32.totalorder %s376, %s377
      %p391 = scmp.eq.s32.totalorder %s50, 5
      %p392 = por %p390, %p391
      %p394 = scmp.ne.s32.totalorder %s377, %s393
      %p395 = scmp.eq.s32.totalorder %s50, 0
      %p396 = por %p394, %p395
      %s398 = sadd.s32 %s397, 1
      %p401 = scmp.eq.s32.totalorder %s44, 5
      %p402 = scmp.ne.s32.totalorder %s397, %s399
      %p403 = scmp.eq.s32.totalorder %s44, 0
      %p404 = por %p402, %p403
      %p405 = scmp.ne.s32.totalorder %s397, %s399
      %p406 = scmp.eq.s32.totalorder %s49, 5
      %p407 = por %p405, %p406
      %p408 = scmp.ne.s32.totalorder %s399, %s400
      %p409 = scmp.eq.s32.totalorder %s49, 0
      %p410 = por %p408, %p409
      %p411 = scmp.ne.s32.totalorder %s399, %s400
      %p412 = scmp.eq.s32.totalorder %s50, 5
      %p413 = por %p411, %p412
      %p415 = scmp.ne.s32.totalorder %s400, %s414
      %p416 = scmp.eq.s32.totalorder %s50, 0
      %p417 = por %p415, %p416
      %s419 = sadd.s32 %s418, 1
      %p422 = scmp.eq.s32.totalorder %s44, 5
      %p423 = scmp.ne.s32.totalorder %s418, %s420
      %p424 = scmp.eq.s32.totalorder %s44, 0
      %p425 = por %p423, %p424
      %p426 = scmp.ne.s32.totalorder %s418, %s420
      %p427 = scmp.eq.s32.totalorder %s49, 5
      %p428 = por %p426, %p427
      %p429 = scmp.ne.s32.totalorder %s420, %s421
      %p430 = scmp.eq.s32.totalorder %s49, 0
      %p431 = por %p429, %p430
      %p432 = scmp.ne.s32.totalorder %s420, %s421
      %p433 = scmp.eq.s32.totalorder %s50, 5
      %p434 = por %p432, %p433
      %p436 = scmp.ne.s32.totalorder %s421, %s435
      %p437 = scmp.eq.s32.totalorder %s50, 0
      %p438 = por %p436, %p437
      %s440 = sadd.s32 %s439, 1
      %p443 = scmp.eq.s32.totalorder %s44, 5
      %p444 = scmp.ne.s32.totalorder %s439, %s441
      %p445 = scmp.eq.s32.totalorder %s44, 0
      %p446 = por %p444, %p445
      %p447 = scmp.ne.s32.totalorder %s439, %s441
      %p448 = scmp.eq.s32.totalorder %s49, 5
      %p449 = por %p447, %p448
      %p450 = scmp.ne.s32.totalorder %s441, %s442
      %p451 = scmp.eq.s32.totalorder %s49, 0
      %p452 = por %p450, %p451
      %p453 = scmp.ne.s32.totalorder %s441, %s442
      %p454 = scmp.eq.s32.totalorder %s50, 5
      %p455 = por %p453, %p454
      %p457 = scmp.ne.s32.totalorder %s442, %s456
      %p458 = scmp.eq.s32.totalorder %s50, 0
      %p459 = por %p457, %p458
      %s461 = sadd.s32 %s460, 1
      %p464 = scmp.eq.s32.totalorder %s44, 5
      %p465 = scmp.ne.s32.totalorder %s460, %s462
      %p466 = scmp.eq.s32.totalorder %s44, 0
      %p467 = por %p465, %p466
      %p468 = scmp.ne.s32.totalorder %s460, %s462
      %p469 = scmp.eq.s32.totalorder %s49, 5
      %p470 = por %p468, %p469
      %p471 = scmp.ne.s32.totalorder %s462, %s463
      %p472 = scmp.eq.s32.totalorder %s49, 0
      %p473 = por %p471, %p472
      %p474 = scmp.ne.s32.totalorder %s462, %s463
      %p475 = scmp.eq.s32.totalorder %s50, 5
      %p476 = por %p474, %p475
      %p478 = scmp.ne.s32.totalorder %s463, %s477
      %p479 = scmp.eq.s32.totalorder %s50, 0
      %p480 = por %p478, %p479
      %s481 = ssub.s32 %s51, %s63
      %p482 = scmp.eq.s32.totalorder %s481, 0
      %s484 = sadd.s32 %s483, 1
      %s485 = scalar_select %p482, %s483, %s484
      %p488 = pneg %p482
      %p489 = scmp.eq.s32.totalorder %s44, 5
      %p490 = por %p488, %p489
      %p491 = scmp.ne.s32.totalorder %s483, %s486
      %p492 = scmp.eq.s32.totalorder %s44, 0
      %p493 = por %p491, %p492
      %p494 = scmp.ne.s32.totalorder %s483, %s486
      %p495 = scmp.eq.s32.totalorder %s49, 5
      %p496 = por %p494, %p495
      %p497 = scmp.ne.s32.totalorder %s486, %s487
      %p498 = scmp.eq.s32.totalorder %s49, 0
      %p499 = por %p497, %p498
      %p500 = scmp.ne.s32.totalorder %s486, %s487
      %p501 = scmp.eq.s32.totalorder %s50, 5
      %p502 = por %p500, %p501
      %p504 = scmp.ne.s32.totalorder %s487, %s503
      %p505 = scmp.eq.s32.totalorder %s50, 0
      %p506 = por %p504, %p505
      %p507 = scmp.le.s32.totalorder 1, %s44
      %p508 = scmp.lt.s32.totalorder %s44, 7
      %p509 = pnand %p507, %p508
      %p510 = pneg %p509
      // Predicated region
      $region9: #{bigram_forward.1} parent=5 // pred_check
        _
      $region10: #{bigram_forward.1} parent=5 // pred_check_branch
        %512 = sbr.rel (%p509) target = $region12
      $region11: #{bigram_forward.1} parent=5 // pred_region
        %s513 = ssub.s32 %s44, 1
        // Predicated region
        $region13: #{bigram_forward.1} parent=11 // pred_check
          %p514 = pneg %p77
        $region14: #{bigram_forward.1} parent=11 // pred_check_branch
          %516 = sbr.rel (%p514) target = $region16
        $region15: #{bigram_forward.1} parent=11 // pred_region
          _
        $region16: #{bigram_forward.1} parent=11 // pred_fallthru
          _
        // Predicated region
        $region17: #{bigram_forward.1} parent=11 // pred_check
          %p517 = pneg %p103
        $region18: #{bigram_forward.1} parent=11 // pred_check_branch
          %519 = sbr.rel (%p517) target = $region20
        $region19: #{bigram_forward.1} parent=11 // pred_region
          %s520 = smul.u32 2, %s53
          %p521 = scmp.lt.s32.totalorder %s520, 1
          %s522 = scalar_select %p521, %s520, 1
          %s523 = smul.addr %s522, 6
          %s524 = smul.addr %s523, 8
          %s525 = scalar_lea.vmem %s1, %s524
          %s526 = smul.u32 2, %s53
        $region20: #{bigram_forward.1} parent=11 // pred_fallthru
          _
        // Predicated region
        $region21: #{bigram_forward.1} parent=11 // pred_check
          %p527 = pneg %p410
        $region22: #{bigram_forward.1} parent=11 // pred_check_branch
          %529 = sbr.rel (%p527) target = $region24
        $region23: #{bigram_forward.1} parent=11 // pred_region
          %s531 = ssub.s32 48, 48
          %532 = vsyncadd [#allocation23], %s531
          %s534 = sshll.u32 [#allocation22], 4
          %s535 = int_to_ptr.vmem [resolvable:$true] %s534
          %537 = dma.hbm_to_vmem [thread:$0]  %s13, 48, %s535, [#allocation23]
        $region24: #{bigram_forward.1} parent=11 // pred_fallthru
          _
        // Predicated region
        $region25: #{bigram_forward.1} parent=11 // pred_check
          %p538 = pneg %p431
        $region26: #{bigram_forward.1} parent=11 // pred_check_branch
          %540 = sbr.rel (%p538) target = $region28
        $region27: #{bigram_forward.1} parent=11 // pred_region
          %s542 = ssub.s32 48, 48
          %543 = vsyncadd [#allocation23], %s542
          %s545 = sshll.u32 [#allocation24], 4
          %s546 = int_to_ptr.vmem [resolvable:$true] %s545
          %548 = dma.hbm_to_vmem [thread:$0]  %s14, 48, %s546, [#allocation23]
        $region28: #{bigram_forward.1} parent=11 // pred_fallthru
          _
        // Predicated region
        $region29: #{bigram_forward.1} parent=11 // pred_check
          %p549 = pneg %p452
        $region30: #{bigram_forward.1} parent=11 // pred_check_branch
          %551 = sbr.rel (%p549) target = $region32
        $region31: #{bigram_forward.1} parent=11 // pred_region
          %s553 = ssub.s32 3072, 3072
          %554 = vsyncadd [#allocation26], %s553
          %s555 = sshll.u32 [#allocation25], 4
          %s556 = int_to_ptr.vmem [resolvable:$true] %s555
          %561 = dma.hbm_to_vmem [thread:$0]  %s15, 3072, %s556, [#allocation26], 64, 64, 4
        $region32: #{bigram_forward.1} parent=11 // pred_fallthru
          _
        // Predicated region
        $region33: #{bigram_forward.1} parent=11 // pred_check
          %p562 = pneg %p473
        $region34: #{bigram_forward.1} parent=11 // pred_check_branch
          %564 = sbr.rel (%p562) target = $region36
        $region35: #{bigram_forward.1} parent=11 // pred_region
          %s566 = ssub.s32 16, 16
          %567 = vsyncadd [#allocation26], %s566
          %s569 = sshll.u32 [#allocation27], 4
          %s570 = int_to_ptr.vmem [resolvable:$true] %s569
          %572 = dma.hbm_to_vmem [thread:$0]  %s16, 16, %s570, [#allocation26]
        $region36: #{bigram_forward.1} parent=11 // pred_fallthru
          _
      $region12: #{bigram_forward.1} parent=5 // pred_fallthru
        _
      %p573 = scmp.lt.s32.totalorder %s44, 6
      // Predicated region
      $region37: #{bigram_forward.1} parent=5 // pred_check
        %p574 = pneg %p573
      $region38: #{bigram_forward.1} parent=5 // pred_check_branch
        %576 = sbr.rel (%p574) target = $region40
      $region39: #{bigram_forward.1} parent=5 // pred_region
        // Predicated region
        $region41: #{bigram_forward.1} parent=39 // pred_check
          %p577 = pneg %p123
        $region42: #{bigram_forward.1} parent=39 // pred_check_branch
          %579 = sbr.rel (%p577) target = $region44
        $region43: #{bigram_forward.1} parent=39 // pred_region
          %s580 = sand.u32 %s113, 1
          %s581 = scalar_lea.sflag [#allocation5], %s580
          %s582 = sand.u32 %s113, 1
          %s583 = smul.addr %s582, 3
          %s584 = scalar_lea.vmem [#allocation4], %s583
          %s586 = ssub.s32 48, 48
          %587 = vsyncadd %s581, %s586
          %s588 = smul.addr %s52, 3
          %s589 = smul.addr %s588, 16
          %s590 = scalar_lea.hbm %s2, %s589
          %s592 = sshll.u32 %s584, 4
          %s593 = int_to_ptr.vmem [resolvable:$true] %s592
          %595 = dma.hbm_to_vmem [thread:$0]  %s590, 48, %s593, %s581
        $region44: #{bigram_forward.1} parent=39 // pred_fallthru
          _
        // Predicated region
        $region45: #{bigram_forward.1} parent=39 // pred_check
          %p596 = pneg %p149
        $region46: #{bigram_forward.1} parent=39 // pred_check_branch
          %598 = sbr.rel (%p596) target = $region48
        $region47: #{bigram_forward.1} parent=39 // pred_region
          %s599 = sand.u32 %s44, 1
          %s600 = scalar_lea.sflag [#allocation8], %s599
          %s601 = sand.u32 %s139, 1
          %s602 = smul.addr %s601, 3
          %s603 = scalar_lea.vmem [#allocation7], %s602
          %s605 = ssub.s32 48, 48
          %606 = vsyncadd %s600, %s605
          %s607 = smul.addr %s52, 3
          %s608 = smul.addr %s607, 16
          %s609 = scalar_lea.hbm %s3, %s608
          %s611 = sshll.u32 %s603, 4
          %s612 = int_to_ptr.vmem [resolvable:$true] %s611
          %614 = dma.hbm_to_vmem [thread:$0]  %s609, 48, %s612, %s600
        $region48: #{bigram_forward.1} parent=39 // pred_fallthru
          _
        // Predicated region
        $region49: #{bigram_forward.1} parent=39 // pred_check
          %p615 = pneg %p175
        $region50: #{bigram_forward.1} parent=39 // pred_check_branch
          %617 = sbr.rel (%p615) target = $region52
        $region51: #{bigram_forward.1} parent=39 // pred_region
          %s618 = sand.u32 %s44, 1
          %s619 = scalar_lea.sflag [#allocation8], %s618
          %s620 = sand.u32 %s165, 1
          %s621 = smul.addr %s620, 1728
          %s622 = scalar_lea.vmem [#allocation9], %s621
          %s624 = ssub.s32 27648, 27648
          %625 = vsyncadd %s619, %s624
          %s626 = smul.addr %s52, 432
          %s627 = smul.addr %s626, 64
          %s628 = scalar_lea.hbm %s4, %s627
          %s629 = sshll.u32 %s622, 4
          %s630 = int_to_ptr.vmem [resolvable:$true] %s629
          %635 = dma.hbm_to_vmem [thread:$0]  %s628, 27648, %s630, %s619, 576, 576, 36
        $region52: #{bigram_forward.1} parent=39 // pred_fallthru
          _
        // Predicated region
        $region53: #{bigram_forward.1} parent=39 // pred_check
          %p636 = pneg %p201
        $region54: #{bigram_forward.1} parent=39 // pred_check_branch
          %638 = sbr.rel (%p636) target = $region56
        $region55: #{bigram_forward.1} parent=39 // pred_region
          %s639 = sand.u32 %s44, 1
          %s640 = scalar_lea.sflag [#allocation11], %s639
          %s641 = sand.u32 %s191, 1
          %s642 = smul.addr %s641, 576
          %s643 = scalar_lea.vmem [#allocation10], %s642
          %s645 = ssub.s32 9216, 9216
          %646 = vsyncadd %s640, %s645
          %s647 = smul.addr %s52, 144
          %s648 = smul.addr %s647, 64
          %s649 = scalar_lea.hbm %s5, %s648
          %s650 = sshll.u32 %s643, 4
          %s651 = int_to_ptr.vmem [resolvable:$true] %s650
          %656 = dma.hbm_to_vmem [thread:$0]  %s649, 9216, %s651, %s640, 192, 192, 12
        $region56: #{bigram_forward.1} parent=39 // pred_fallthru
          _
        // Predicated region
        $region57: #{bigram_forward.1} parent=39 // pred_check
          %p657 = pneg %p227
        $region58: #{bigram_forward.1} parent=39 // pred_check_branch
          %659 = sbr.rel (%p657) target = $region60
        $region59: #{bigram_forward.1} parent=39 // pred_region
          %s660 = sand.u32 %s44, 1
          %s661 = scalar_lea.sflag [#allocation11], %s660
          %s662 = sand.u32 %s217, 1
          %s663 = smul.addr %s662, 3
          %s664 = scalar_lea.vmem [#allocation12], %s663
          %s666 = ssub.s32 48, 48
          %667 = vsyncadd %s661, %s666
          %s668 = smul.addr %s52, 3
          %s669 = smul.addr %s668, 16
          %s670 = scalar_lea.hbm %s6, %s669
          %s672 = sshll.u32 %s664, 4
          %s673 = int_to_ptr.vmem [resolvable:$true] %s672
          %675 = dma.hbm_to_vmem [thread:$0]  %s670, 48, %s673, %s661
        $region60: #{bigram_forward.1} parent=39 // pred_fallthru
          _
        // Predicated region
        $region61: #{bigram_forward.1} parent=39 // pred_check
          %p676 = pneg %p253
        $region62: #{bigram_forward.1} parent=39 // pred_check_branch
          %678 = sbr.rel (%p676) target = $region64
        $region63: #{bigram_forward.1} parent=39 // pred_region
          %s679 = sand.u32 %s44, 1
          %s680 = scalar_lea.sflag [#allocation14], %s679
          %s681 = sand.u32 %s243, 1
          %s682 = smul.addr %s681, 3
          %s683 = scalar_lea.vmem [#allocation13], %s682
          %s685 = ssub.s32 48, 48
          %686 = vsyncadd %s680, %s685
          %s687 = smul.addr %s52, 3
          %s688 = smul.addr %s687, 16
          %s689 = scalar_lea.hbm %s7, %s688
          %s691 = sshll.u32 %s683, 4
          %s692 = int_to_ptr.vmem [resolvable:$true] %s691
          %694 = dma.hbm_to_vmem [thread:$0]  %s689, 48, %s692, %s680
        $region64: #{bigram_forward.1} parent=39 // pred_fallthru
          _
        // Predicated region
        $region65: #{bigram_forward.1} parent=39 // pred_check
          %p695 = pneg %p279
        $region66: #{bigram_forward.1} parent=39 // pred_check_branch
          %697 = sbr.rel (%p695) target = $region68
        $region67: #{bigram_forward.1} parent=39 // pred_region
          %s698 = sand.u32 %s44, 1
          %s699 = scalar_lea.sflag [#allocation14], %s698
          %s700 = sand.u32 %s269, 1
          %s701 = smul.addr %s700, 3
          %s702 = scalar_lea.vmem [#allocation15], %s701
          %s704 = ssub.s32 48, 48
          %705 = vsyncadd %s699, %s704
          %s706 = smul.addr %s52, 3
          %s707 = smul.addr %s706, 16
          %s708 = scalar_lea.hbm %s8, %s707
          %s710 = sshll.u32 %s702, 4
          %s711 = int_to_ptr.vmem [resolvable:$true] %s710
          %713 = dma.hbm_to_vmem [thread:$0]  %s708, 48, %s711, %s699
        $region68: #{bigram_forward.1} parent=39 // pred_fallthru
          _
        // Predicated region
        $region69: #{bigram_forward.1} parent=39 // pred_check
          %p714 = pneg %p305
        $region70: #{bigram_forward.1} parent=39 // pred_check_branch
          %716 = sbr.rel (%p714) target = $region72
        $region71: #{bigram_forward.1} parent=39 // pred_region
          %s717 = sand.u32 %s44, 1
          %s718 = scalar_lea.sflag [#allocation17], %s717
          %s719 = sand.u32 %s295, 1
          %s720 = smul.addr %s719, 2304
          %s721 = scalar_lea.vmem [#allocation16], %s720
          %s723 = ssub.s32 36864, 36864
          %724 = vsyncadd %s718, %s723
          %s725 = smul.addr %s52, 576
          %s726 = smul.addr %s725, 64
          %s727 = scalar_lea.hbm %s9, %s726
          %s728 = sshll.u32 %s721, 4
          %s729 = int_to_ptr.vmem [resolvable:$true] %s728
          %734 = dma.hbm_to_vmem [thread:$0]  %s727, 36864, %s729, %s718, 768, 768, 48
        $region72: #{bigram_forward.1} parent=39 // pred_fallthru
          _
        // Predicated region
        $region73: #{bigram_forward.1} parent=39 // pred_check
          %p735 = pneg %p331
        $region74: #{bigram_forward.1} parent=39 // pred_check_branch
          %737 = sbr.rel (%p735) target = $region76
        $region75: #{bigram_forward.1} parent=39 // pred_region
          %s738 = sand.u32 %s44, 1
          %s739 = scalar_lea.sflag [#allocation17], %s738
          %s740 = sand.u32 %s321, 1
          %s741 = smul.addr %s740, 12
          %s742 = scalar_lea.vmem [#allocation18], %s741
          %s744 = ssub.s32 192, 192
          %745 = vsyncadd %s739, %s744
          %s746 = smul.addr %s52, 12
          %s747 = smul.addr %s746, 16
          %s748 = scalar_lea.hbm %s10, %s747
          %s750 = sshll.u32 %s742, 4
          %s751 = int_to_ptr.vmem [resolvable:$true] %s750
          %753 = dma.hbm_to_vmem [thread:$0]  %s748, 192, %s751, %s739
        $region76: #{bigram_forward.1} parent=39 // pred_fallthru
          _
        // Predicated region
        $region77: #{bigram_forward.1} parent=39 // pred_check
          %p754 = pneg %p357
        $region78: #{bigram_forward.1} parent=39 // pred_check_branch
          %756 = sbr.rel (%p754) target = $region80
        $region79: #{bigram_forward.1} parent=39 // pred_region
          %s757 = sand.u32 %s44, 1
          %s758 = scalar_lea.sflag [#allocation20], %s757
          %s759 = sand.u32 %s347, 1
          %s760 = smul.addr %s759, 2304
          %s761 = scalar_lea.vmem [#allocation19], %s760
          %s763 = ssub.s32 36864, 36864
          %764 = vsyncadd %s758, %s763
          %s765 = smul.addr %s52, 576
          %s766 = smul.addr %s765, 64
          %s767 = scalar_lea.hbm %s11, %s766
          %s768 = sshll.u32 %s761, 4
          %s769 = int_to_ptr.vmem [resolvable:$true] %s768
          %774 = dma.hbm_to_vmem [thread:$0]  %s767, 36864, %s769, %s758, 192, 192, 12
        $region80: #{bigram_forward.1} parent=39 // pred_fallthru
          _
        // Predicated region
        $region81: #{bigram_forward.1} parent=39 // pred_check
          %p775 = pneg %p383
        $region82: #{bigram_forward.1} parent=39 // pred_check_branch
          %777 = sbr.rel (%p775) target = $region84
        $region83: #{bigram_forward.1} parent=39 // pred_region
          %s778 = sand.u32 %s44, 1
          %s779 = scalar_lea.sflag [#allocation20], %s778
          %s780 = sand.u32 %s373, 1
          %s781 = smul.addr %s780, 3
          %s782 = scalar_lea.vmem [#allocation21], %s781
          %s784 = ssub.s32 48, 48
          %785 = vsyncadd %s779, %s784
          %s786 = smul.addr %s52, 3
          %s787 = smul.addr %s786, 16
          %s788 = scalar_lea.hbm %s12, %s787
          %s790 = sshll.u32 %s782, 4
          %s791 = int_to_ptr.vmem [resolvable:$true] %s790
          %793 = dma.hbm_to_vmem [thread:$0]  %s788, 48, %s791, %s779
        $region84: #{bigram_forward.1} parent=39 // pred_fallthru
          _
      $region40: #{bigram_forward.1} parent=5 // pred_fallthru
        _
      %p794 = scmp.le.s32.totalorder 1, %s44
      %p795 = scmp.lt.s32.totalorder %s44, 7
      %p796 = pnand %p794, %p795
      %p797 = pneg %p796
      // Predicated region
      $region85: #{bigram_forward.1} parent=5 // pred_check
        _
      $region86: #{bigram_forward.1} parent=5 // pred_check_branch
        %799 = sbr.rel (%p796) target = $region88
      $region87: #{bigram_forward.1} parent=5 // pred_region
        %s800 = ssub.s32 %s44, 1
        %s801 = sand.u32 %s116, 1
        %s802 = scalar_lea.sflag [#allocation5], %s801
        %s803 = sand.u32 %s116, 1
        %s804 = smul.addr %s803, 3
        %s805 = scalar_lea.vmem [#allocation4], %s804
        // Predicated region
        $region89: #{bigram_forward.1} parent=87 // pred_check
          %p806 = pneg %p129
        $region90: #{bigram_forward.1} parent=87 // pred_check_branch
          %808 = sbr.rel (%p806) target = $region92
        $region91: #{bigram_forward.1} parent=87 // pred_region
          %809 = dma.done %s802, 48
        $region92: #{bigram_forward.1} parent=87 // pred_fallthru
          _
        %s810 = sand.u32 %s49, 1
        %s811 = scalar_lea.sflag [#allocation8], %s810
        %s812 = sand.u32 %s142, 1
        %s813 = smul.addr %s812, 3
        %s814 = scalar_lea.vmem [#allocation7], %s813
        // Predicated region
        $region93: #{bigram_forward.1} parent=87 // pred_check
          %p815 = pneg %p155
        $region94: #{bigram_forward.1} parent=87 // pred_check_branch
          %817 = sbr.rel (%p815) target = $region96
        $region95: #{bigram_forward.1} parent=87 // pred_region
          %818 = dma.done %s811, 48
        $region96: #{bigram_forward.1} parent=87 // pred_fallthru
          _
        %s819 = sand.u32 %s49, 1
        %s820 = scalar_lea.sflag [#allocation8], %s819
        %s821 = sand.u32 %s168, 1
        %s822 = smul.addr %s821, 1728
        %s823 = scalar_lea.vmem [#allocation9], %s822
        // Predicated region
        $region97: #{bigram_forward.1} parent=87 // pred_check
          %p824 = pneg %p181
        $region98: #{bigram_forward.1} parent=87 // pred_check_branch
          %826 = sbr.rel (%p824) target = $region100
        $region99: #{bigram_forward.1} parent=87 // pred_region
          %827 = dma.done %s820, 27648
        $region100: #{bigram_forward.1} parent=87 // pred_fallthru
          _
        %s828 = sand.u32 %s49, 1
        %s829 = scalar_lea.sflag [#allocation11], %s828
        %s830 = sand.u32 %s194, 1
        %s831 = smul.addr %s830, 576
        %s832 = scalar_lea.vmem [#allocation10], %s831
        // Predicated region
        $region101: #{bigram_forward.1} parent=87 // pred_check
          %p833 = pneg %p207
        $region102: #{bigram_forward.1} parent=87 // pred_check_branch
          %835 = sbr.rel (%p833) target = $region104
        $region103: #{bigram_forward.1} parent=87 // pred_region
          %836 = dma.done %s829, 9216
        $region104: #{bigram_forward.1} parent=87 // pred_fallthru
          _
        %s837 = sand.u32 %s49, 1
        %s838 = scalar_lea.sflag [#allocation11], %s837
        %s839 = sand.u32 %s220, 1
        %s840 = smul.addr %s839, 3
        %s841 = scalar_lea.vmem [#allocation12], %s840
        // Predicated region
        $region105: #{bigram_forward.1} parent=87 // pred_check
          %p842 = pneg %p233
        $region106: #{bigram_forward.1} parent=87 // pred_check_branch
          %844 = sbr.rel (%p842) target = $region108
        $region107: #{bigram_forward.1} parent=87 // pred_region
          %845 = dma.done %s838, 48
        $region108: #{bigram_forward.1} parent=87 // pred_fallthru
          _
        %s846 = sand.u32 %s49, 1
        %s847 = scalar_lea.sflag [#allocation14], %s846
        %s848 = sand.u32 %s246, 1
        %s849 = smul.addr %s848, 3
        %s850 = scalar_lea.vmem [#allocation13], %s849
        // Predicated region
        $region109: #{bigram_forward.1} parent=87 // pred_check
          %p851 = pneg %p259
        $region110: #{bigram_forward.1} parent=87 // pred_check_branch
          %853 = sbr.rel (%p851) target = $region112
        $region111: #{bigram_forward.1} parent=87 // pred_region
          %854 = dma.done %s847, 48
        $region112: #{bigram_forward.1} parent=87 // pred_fallthru
          _
        %s855 = sand.u32 %s49, 1
        %s856 = scalar_lea.sflag [#allocation14], %s855
        %s857 = sand.u32 %s272, 1
        %s858 = smul.addr %s857, 3
        %s859 = scalar_lea.vmem [#allocation15], %s858
        // Predicated region
        $region113: #{bigram_forward.1} parent=87 // pred_check
          %p860 = pneg %p285
        $region114: #{bigram_forward.1} parent=87 // pred_check_branch
          %862 = sbr.rel (%p860) target = $region116
        $region115: #{bigram_forward.1} parent=87 // pred_region
          %863 = dma.done %s856, 48
        $region116: #{bigram_forward.1} parent=87 // pred_fallthru
          _
        %s864 = sand.u32 %s49, 1
        %s865 = scalar_lea.sflag [#allocation17], %s864
        %s866 = sand.u32 %s298, 1
        %s867 = smul.addr %s866, 2304
        %s868 = scalar_lea.vmem [#allocation16], %s867
        // Predicated region
        $region117: #{bigram_forward.1} parent=87 // pred_check
          %p869 = pneg %p311
        $region118: #{bigram_forward.1} parent=87 // pred_check_branch
          %871 = sbr.rel (%p869) target = $region120
        $region119: #{bigram_forward.1} parent=87 // pred_region
          %872 = dma.done %s865, 36864
        $region120: #{bigram_forward.1} parent=87 // pred_fallthru
          _
        %s873 = sand.u32 %s49, 1
        %s874 = scalar_lea.sflag [#allocation17], %s873
        %s875 = sand.u32 %s324, 1
        %s876 = smul.addr %s875, 12
        %s877 = scalar_lea.vmem [#allocation18], %s876
        // Predicated region
        $region121: #{bigram_forward.1} parent=87 // pred_check
          %p878 = pneg %p337
        $region122: #{bigram_forward.1} parent=87 // pred_check_branch
          %880 = sbr.rel (%p878) target = $region124
        $region123: #{bigram_forward.1} parent=87 // pred_region
          %881 = dma.done %s874, 192
        $region124: #{bigram_forward.1} parent=87 // pred_fallthru
          _
        %s882 = sand.u32 %s49, 1
        %s883 = scalar_lea.sflag [#allocation20], %s882
        %s884 = sand.u32 %s350, 1
        %s885 = smul.addr %s884, 2304
        %s886 = scalar_lea.vmem [#allocation19], %s885
        // Predicated region
        $region125: #{bigram_forward.1} parent=87 // pred_check
          %p887 = pneg %p363
        $region126: #{bigram_forward.1} parent=87 // pred_check_branch
          %889 = sbr.rel (%p887) target = $region128
        $region127: #{bigram_forward.1} parent=87 // pred_region
          %890 = dma.done %s883, 36864
        $region128: #{bigram_forward.1} parent=87 // pred_fallthru
          _
        %s891 = sand.u32 %s49, 1
        %s892 = scalar_lea.sflag [#allocation20], %s891
        %s893 = sand.u32 %s376, 1
        %s894 = smul.addr %s893, 3
        %s895 = scalar_lea.vmem [#allocation21], %s894
        // Predicated region
        $region129: #{bigram_forward.1} parent=87 // pred_check
          %p896 = pneg %p389
        $region130: #{bigram_forward.1} parent=87 // pred_check_branch
          %898 = sbr.rel (%p896) target = $region132
        $region131: #{bigram_forward.1} parent=87 // pred_region
          %899 = dma.done %s892, 48
        $region132: #{bigram_forward.1} parent=87 // pred_fallthru
          _
        // Predicated region
        $region133: #{bigram_forward.1} parent=87 // pred_check
          %p900 = pneg %p410
        $region134: #{bigram_forward.1} parent=87 // pred_check_branch
          %902 = sbr.rel (%p900) target = $region136
        $region135: #{bigram_forward.1} parent=87 // pred_region
          %903 = dma.done [#allocation23], 48
        $region136: #{bigram_forward.1} parent=87 // pred_fallthru
          _
        // Predicated region
        $region137: #{bigram_forward.1} parent=87 // pred_check
          %p904 = pneg %p431
        $region138: #{bigram_forward.1} parent=87 // pred_check_branch
          %906 = sbr.rel (%p904) target = $region140
        $region139: #{bigram_forward.1} parent=87 // pred_region
          %907 = dma.done [#allocation23], 48
        $region140: #{bigram_forward.1} parent=87 // pred_fallthru
          _
        // Predicated region
        $region141: #{bigram_forward.1} parent=87 // pred_check
          %p908 = pneg %p452
        $region142: #{bigram_forward.1} parent=87 // pred_check_branch
          %910 = sbr.rel (%p908) target = $region144
        $region143: #{bigram_forward.1} parent=87 // pred_region
          %911 = dma.done [#allocation26], 3072
        $region144: #{bigram_forward.1} parent=87 // pred_fallthru
          _
        // Predicated region
        $region145: #{bigram_forward.1} parent=87 // pred_check
          %p912 = pneg %p473
        $region146: #{bigram_forward.1} parent=87 // pred_check_branch
          %914 = sbr.rel (%p912) target = $region148
        $region147: #{bigram_forward.1} parent=87 // pred_region
          %915 = dma.done [#allocation26], 16
        $region148: #{bigram_forward.1} parent=87 // pred_fallthru
          _
        %p916 = pneg %p77
        %p917 = pneg %p74
        %s918 = smul.u32 2, %s53
        %p919 = scmp.lt.s32.totalorder %s918, 1
        %s920 = scalar_select %p919, %s918, 1
        %s921 = smul.addr %s920, 6
        %s922 = smul.addr %s921, 8
        %s923 = scalar_lea.vmem %s1, %s922
        %p924 = pneg %p103
        %p925 = pneg %p100
        %s926 = sand.u32 %s116, 1
        %s927 = scalar_lea.sflag [#allocation5], %s926
        %s928 = sand.u32 %s116, 1
        %s929 = smul.addr %s928, 3
        %s930 = scalar_lea.vmem [#allocation4], %s929
        %p931 = pneg %p129
        %p932 = pneg %p126
        %s933 = sand.u32 %s49, 1
        %s934 = scalar_lea.sflag [#allocation8], %s933
        %s935 = sand.u32 %s142, 1
        %s936 = smul.addr %s935, 3
        %s937 = scalar_lea.vmem [#allocation7], %s936
        %p938 = pneg %p155
        %p939 = pneg %p152
        %s940 = sand.u32 %s49, 1
        %s941 = scalar_lea.sflag [#allocation8], %s940
        %s942 = sand.u32 %s168, 1
        %s943 = smul.addr %s942, 1728
        %s944 = scalar_lea.vmem [#allocation9], %s943
        %p945 = pneg %p181
        %p946 = pneg %p178
        %s947 = sand.u32 %s49, 1
        %s948 = scalar_lea.sflag [#allocation11], %s947
        %s949 = sand.u32 %s194, 1
        %s950 = smul.addr %s949, 576
        %s951 = scalar_lea.vmem [#allocation10], %s950
        %p952 = pneg %p207
        %p953 = pneg %p204
        %s954 = sand.u32 %s49, 1
        %s955 = scalar_lea.sflag [#allocation11], %s954
        %s956 = sand.u32 %s220, 1
        %s957 = smul.addr %s956, 3
        %s958 = scalar_lea.vmem [#allocation12], %s957
        %p959 = pneg %p233
        %p960 = pneg %p230
        %s961 = sand.u32 %s49, 1
        %s962 = scalar_lea.sflag [#allocation14], %s961
        %s963 = sand.u32 %s246, 1
        %s964 = smul.addr %s963, 3
        %s965 = scalar_lea.vmem [#allocation13], %s964
        %p966 = pneg %p259
        %p967 = pneg %p256
        %s968 = sand.u32 %s49, 1
        %s969 = scalar_lea.sflag [#allocation14], %s968
        %s970 = sand.u32 %s272, 1
        %s971 = smul.addr %s970, 3
        %s972 = scalar_lea.vmem [#allocation15], %s971
        %p973 = pneg %p285
        %p974 = pneg %p282
        %s975 = sand.u32 %s49, 1
        %s976 = scalar_lea.sflag [#allocation17], %s975
        %s977 = sand.u32 %s298, 1
        %s978 = smul.addr %s977, 2304
        %s979 = scalar_lea.vmem [#allocation16], %s978
        %p980 = pneg %p311
        %p981 = pneg %p308
        %s982 = sand.u32 %s49, 1
        %s983 = scalar_lea.sflag [#allocation17], %s982
        %s984 = sand.u32 %s324, 1
        %s985 = smul.addr %s984, 12
        %s986 = scalar_lea.vmem [#allocation18], %s985
        %p987 = pneg %p337
        %p988 = pneg %p334
        %s989 = sand.u32 %s49, 1
        %s990 = scalar_lea.sflag [#allocation20], %s989
        %s991 = sand.u32 %s350, 1
        %s992 = smul.addr %s991, 2304
        %s993 = scalar_lea.vmem [#allocation19], %s992
        %p994 = pneg %p363
        %p995 = pneg %p360
        %s996 = sand.u32 %s49, 1
        %s997 = scalar_lea.sflag [#allocation20], %s996
        %s998 = sand.u32 %s376, 1
        %s999 = smul.addr %s998, 3
        %s1000 = scalar_lea.vmem [#allocation21], %s999
        %p1001 = pneg %p389
        %p1002 = pneg %p386
        %p1003 = pneg %p410
        %p1004 = pneg %p407
        %p1005 = pneg %p431
        %p1006 = pneg %p428
        %p1007 = pneg %p452
        %p1008 = pneg %p449
        %p1009 = pneg %p473
        %p1010 = pneg %p470
        %p1011 = pneg %p499
        %p1012 = pneg %p496
        %s1013 = smul.u32 2, %s53
        %p1014 = scmp.lt.s32.totalorder %s1013, 1
        %s1015 = scalar_select %p1014, %s1013, 1
        %s1016 = smul.addr %s1015, 6
        %s1017 = smul.addr %s1016, 8
        %s1018 = scalar_lea.vmem %s1, %s1017
        %s1019 = smul.u32 2, %s53
        %s1020 = smul.u32 2, %s53
        %p1022 = scmp.eq.s32.totalorder %s54, 0
        // Predicated region
        $region149: #{bigram_forward.1} parent=87 // pred_check
          %p1023 = pneg %p1022
        $region150: #{bigram_forward.1} parent=87 // pred_check_branch
          %1025 = sbr.rel (%p1023) target = $region152
        $region151: #{bigram_forward.1} parent=87 // pred_region
          %v1026 = vld [vmem:[%s1018] sm:$0xff]
          %v1027 = vld [vmem:[%s1018 + $0x8] sm:$0xff]
          %v1028 = vld [vmem:[%s1018 + $0x10] sm:$0xff]
          %v1029 = vld [vmem:[%s1018 + $0x18] sm:$0xff]
          %v1030 = vld [vmem:[%s1018 + $0x20] sm:$0xff]
          %v1031 = vld [vmem:[%s1018 + $0x28] sm:$0xff]
          %v1032 = vld [vmem:[%s1018 + $0x30] sm:$0xff]
          %v1033 = vld [vmem:[%s1018 + $0x38] sm:$0xff]
          %v1034 = vld [vmem:[%s1018 + $0x40] sm:$0xff]
          %v1035 = vld [vmem:[%s1018 + $0x48] sm:$0xff]
          %v1036 = vld [vmem:[%s1018 + $0x50] sm:$0xff]
          %v1037 = vld [vmem:[%s1018 + $0x58] sm:$0xff]
          %1038 = vst [vmem:[#allocation2] sm:$0xff] %v1026
          %1039 = vst [vmem:[#allocation2 + $0x8] sm:$0xff] %v1027
          %1040 = vst [vmem:[#allocation2 + $0x10] sm:$0xff] %v1028
          %1041 = vst [vmem:[#allocation2 + $0x18] sm:$0xff] %v1029
          %1042 = vst [vmem:[#allocation2 + $0x20] sm:$0xff] %v1030
          %1043 = vst [vmem:[#allocation2 + $0x28] sm:$0xff] %v1031
          %1044 = vst [vmem:[#allocation2 + $0x30] sm:$0xff] %v1032
          %1045 = vst [vmem:[#allocation2 + $0x38] sm:$0xff] %v1033
          %1046 = vst [vmem:[#allocation2 + $0x40] sm:$0xff] %v1034
          %1047 = vst [vmem:[#allocation2 + $0x48] sm:$0xff] %v1035
          %1048 = vst [vmem:[#allocation2 + $0x50] sm:$0xff] %v1036
          %1049 = vst [vmem:[#allocation2 + $0x58] sm:$0xff] %v1037
        $region152: #{bigram_forward.1} parent=87 // pred_fallthru
          _
        %v1050 = vld [vmem:[#allocation2] sm:$0xff]
        %v1051 = vld [vmem:[#allocation2 + $0x8] sm:$0xff]
        %v1052 = vld [vmem:[#allocation2 + $0x10] sm:$0xff]
        %v1053 = vld [vmem:[#allocation2 + $0x18] sm:$0xff]
        %v1054 = vld [vmem:[#allocation2 + $0x20] sm:$0xff]
        %v1055 = vld [vmem:[#allocation2 + $0x28] sm:$0xff]
        %v1056 = vld [vmem:[#allocation2 + $0x30] sm:$0xff]
        %v1057 = vld [vmem:[#allocation2 + $0x38] sm:$0xff]
        %v1058 = vld [vmem:[#allocation2 + $0x40] sm:$0xff]
        %v1059 = vld [vmem:[#allocation2 + $0x48] sm:$0xff]
        %v1060 = vld [vmem:[#allocation2 + $0x50] sm:$0xff]
        %v1061 = vld [vmem:[#allocation2 + $0x58] sm:$0xff]
        %v1062 = vld [vmem:[%s0] sm:$0xff]
        %v1063 = vld [vmem:[%s0 + $0x8] sm:$0xff]
        %v1064 = vld [vmem:[%s805] sm:$0x7]
        %v1065 = vld [vmem:[%s814] sm:$0x7]
        %v1066 = vadd.f32 %v1050, %v1051
        %v1067 = vadd.f32 %v1066, %v1052
        %1068 = vadd.xlane.f32.xlu0 %v1067
        %v1069 = vpop.xlane.xlu0 %1068
        %v1070 = vadd.f32 %v1053, %v1054
        %v1071 = vadd.f32 %v1070, %v1055
        %1072 = vadd.xlane.f32.xlu0 %v1071
        %v1073 = vpop.xlane.xlu0 %1072
        %v1074 = vadd.f32 %v1056, %v1057
        %v1075 = vadd.f32 %v1074, %v1058
        %1076 = vadd.xlane.f32.xlu0 %v1075
        %v1077 = vpop.xlane.xlu0 %1076
        %v1078 = vadd.f32 %v1059, %v1060
        %v1079 = vadd.f32 %v1078, %v1061
        %1080 = vadd.xlane.f32.xlu0 %v1079
        %v1081 = vpop.xlane.xlu0 %1080
        %v1082 = vrcp.pop 384.0
        %v1083 = vmul.f32 %v1069, %v1082
        %v1084 = vmul.f32 %v1073, %v1082
        %v1085 = vmul.f32 %v1077, %v1082
        %v1086 = vmul.f32 %v1081, %v1082
        %v1087 = vsub.f32 %v1050, %v1083
        %v1088 = vsub.f32 %v1051, %v1083
        %v1089 = vsub.f32 %v1052, %v1083
        %v1090 = vsub.f32 %v1053, %v1084
        %v1091 = vsub.f32 %v1054, %v1084
        %v1092 = vsub.f32 %v1055, %v1084
        %v1093 = vsub.f32 %v1056, %v1085
        %v1094 = vsub.f32 %v1057, %v1085
        %v1095 = vsub.f32 %v1058, %v1085
        %v1096 = vsub.f32 %v1059, %v1086
        %v1097 = vsub.f32 %v1060, %v1086
        %v1098 = vsub.f32 %v1061, %v1086
        %v1099 = vmul.f32 %v1087, %v1087
        %v1100 = vmul.f32 %v1088, %v1088
        %v1101 = vmul.f32 %v1089, %v1089
        %v1102 = vmul.f32 %v1090, %v1090
        %v1103 = vmul.f32 %v1091, %v1091
        %v1104 = vmul.f32 %v1092, %v1092
        %v1105 = vmul.f32 %v1093, %v1093
        %v1106 = vmul.f32 %v1094, %v1094
        %v1107 = vmul.f32 %v1095, %v1095
        %v1108 = vmul.f32 %v1096, %v1096
        %v1109 = vmul.f32 %v1097, %v1097
        %v1110 = vmul.f32 %v1098, %v1098
        %v1111 = vadd.f32 %v1099, %v1100
        %v1112 = vadd.f32 %v1111, %v1101
        %1113 = vadd.xlane.f32.xlu0 %v1112
        %v1114 = vpop.xlane.xlu0 %1113
        %v1115 = vadd.f32 %v1102, %v1103
        %v1116 = vadd.f32 %v1115, %v1104
        %1117 = vadd.xlane.f32.xlu0 %v1116
        %v1118 = vpop.xlane.xlu0 %1117
        %v1119 = vadd.f32 %v1105, %v1106
        %v1120 = vadd.f32 %v1119, %v1107
        %1121 = vadd.xlane.f32.xlu0 %v1120
        %v1122 = vpop.xlane.xlu0 %1121
        %v1123 = vadd.f32 %v1108, %v1109
        %v1124 = vadd.f32 %v1123, %v1110
        %1125 = vadd.xlane.f32.xlu0 %v1124
        %v1126 = vpop.xlane.xlu0 %1125
        %v1127 = vmul.f32 %v1114, %v1082
        %v1128 = vmul.f32 %v1118, %v1082
        %v1129 = vmul.f32 %v1122, %v1082
        %v1130 = vmul.f32 %v1126, %v1082
        %v1131 = vadd.f32 %v1127, 1e-05
        %v1132 = vadd.f32 %v1128, 1e-05
        %v1133 = vadd.f32 %v1129, 1e-05
        %v1134 = vadd.f32 %v1130, 1e-05
        %v1135 = vrsqrt.pop %v1131
        %v1136 = vrsqrt.pop %v1132
        %v1137 = vrsqrt.pop %v1133
        %v1138 = vrsqrt.pop %v1134
        %v1139 = vmul.f32 %v1087, %v1135
        %v1140 = vmul.f32 %v1088, %v1135
        %v1141 = vmul.f32 %v1089, %v1135
        %v1142 = vmul.f32 %v1090, %v1136
        %v1143 = vmul.f32 %v1091, %v1136
        %v1144 = vmul.f32 %v1092, %v1136
        %v1145 = vmul.f32 %v1093, %v1137
        %v1146 = vmul.f32 %v1094, %v1137
        %v1147 = vmul.f32 %v1095, %v1137
        %v1148 = vmul.f32 %v1096, %v1138
        %v1149 = vmul.f32 %v1097, %v1138
        %v1150 = vmul.f32 %v1098, %v1138
        %v1152 = vlaneseq
        %v1153 = vshrl.u32 %v1152, 7
        %v1154 = vsub.s32 0, %v1153
        %v1155 = vrot.slane %v1064, %v1154
        %v1156 = vlaneseq
        %v1157 = vshrl.u32 %v1156, 7
        %v1158 = vsub.s32 1, %v1157
        %v1159 = vrot.slane %v1064, %v1158
        %v1160 = vlaneseq
        %v1161 = vshrl.u32 %v1160, 7
        %v1162 = vsub.s32 2, %v1161
        %v1163 = vrot.slane %v1064, %v1162
        %v1167 = vmul.f32 %v1139, %v1155
        %v1168 = vmul.f32 %v1140, %v1159
        %v1169 = vmul.f32 %v1141, %v1163
        %v1170 = vmul.f32 %v1142, %v1155
        %v1171 = vmul.f32 %v1143, %v1159
        %v1172 = vmul.f32 %v1144, %v1163
        %v1173 = vmul.f32 %v1145, %v1155
        %v1174 = vmul.f32 %v1146, %v1159
        %v1175 = vmul.f32 %v1147, %v1163
        %v1176 = vmul.f32 %v1148, %v1155
        %v1177 = vmul.f32 %v1149, %v1159
        %v1178 = vmul.f32 %v1150, %v1163
        %v1180 = vlaneseq
        %v1181 = vshrl.u32 %v1180, 7
        %v1182 = vsub.s32 0, %v1181
        %v1183 = vrot.slane %v1065, %v1182
        %v1184 = vlaneseq
        %v1185 = vshrl.u32 %v1184, 7
        %v1186 = vsub.s32 1, %v1185
        %v1187 = vrot.slane %v1065, %v1186
        %v1188 = vlaneseq
        %v1189 = vshrl.u32 %v1188, 7
        %v1190 = vsub.s32 2, %v1189
        %v1191 = vrot.slane %v1065, %v1190
        %v1195 = vadd.f32 %v1167, %v1183
        %v1196 = vadd.f32 %v1168, %v1187
        %v1197 = vadd.f32 %v1169, %v1191
        %v1198 = vadd.f32 %v1170, %v1183
        %v1199 = vadd.f32 %v1171, %v1187
        %v1200 = vadd.f32 %v1172, %v1191
        %v1201 = vadd.f32 %v1173, %v1183
        %v1202 = vadd.f32 %v1174, %v1187
        %v1203 = vadd.f32 %v1175, %v1191
        %v1204 = vadd.f32 %v1176, %v1183
        %v1205 = vadd.f32 %v1177, %v1187
        %v1206 = vadd.f32 %v1178, %v1191
        %v1207 = vpack.c.bf16 %v1198, %v1195
        %v1208 = vpack.c.bf16 %v1199, %v1196
        %v1209 = vpack.c.bf16 %v1200, %v1197
        %v1210 = vpack.c.bf16 %v1204, %v1201
        %v1211 = vpack.c.bf16 %v1205, %v1202
        %v1212 = vpack.c.bf16 %v1206, %v1203
        %v1213 = vld [vmem:[%s823] sm:$0xff]
        %v1214 = vld [vmem:[%s823 + $0x8] sm:$0xff]
        %v1215 = vld [vmem:[%s823 + $0x10] sm:$0xff]
        %v1216 = vld [vmem:[%s823 + $0x18] sm:$0xff]
        %v1217 = vld [vmem:[%s823 + $0x20] sm:$0xf]
        %v1218 = vld [vmem:[%s823 + $0x24] sm:$0xff]
        %v1219 = vld [vmem:[%s823 + $0x2c] sm:$0xff]
        %v1220 = vld [vmem:[%s823 + $0x34] sm:$0xff]
        %v1221 = vld [vmem:[%s823 + $0x3c] sm:$0xff]
        %v1222 = vld [vmem:[%s823 + $0x44] sm:$0xf]
        %v1223 = vld [vmem:[%s823 + $0x48] sm:$0xff]
        %v1224 = vld [vmem:[%s823 + $0x50] sm:$0xff]
        %v1225 = vld [vmem:[%s823 + $0x58] sm:$0xff]
        %v1226 = vld [vmem:[%s823 + $0x60] sm:$0xff]
        %v1227 = vld [vmem:[%s823 + $0x68] sm:$0xf]
        %v1228 = vld [vmem:[%s823 + $0x6c] sm:$0xff]
        %v1229 = vld [vmem:[%s823 + $0x74] sm:$0xff]
        %v1230 = vld [vmem:[%s823 + $0x7c] sm:$0xff]
        %v1231 = vld [vmem:[%s823 + $0x84] sm:$0xff]
        %v1232 = vld [vmem:[%s823 + $0x8c] sm:$0xf]
        %v1233 = vld [vmem:[%s823 + $0x90] sm:$0xff]
        %v1234 = vld [vmem:[%s823 + $0x98] sm:$0xff]
        %v1235 = vld [vmem:[%s823 + $0xa0] sm:$0xff]
        %v1236 = vld [vmem:[%s823 + $0xa8] sm:$0xff]
        %v1237 = vld [vmem:[%s823 + $0xb0] sm:$0xf]
        %v1238 = vld [vmem:[%s823 + $0xb4] sm:$0xff]
        %v1239 = vld [vmem:[%s823 + $0xbc] sm:$0xff]
        %v1240 = vld [vmem:[%s823 + $0xc4] sm:$0xff]
        %v1241 = vld [vmem:[%s823 + $0xcc] sm:$0xff]
        %v1242 = vld [vmem:[%s823 + $0xd4] sm:$0xf]
        %v1243 = vld [vmem:[%s823 + $0xd8] sm:$0xff]
        %v1244 = vld [vmem:[%s823 + $0xe0] sm:$0xff]
        %v1245 = vld [vmem:[%s823 + $0xe8] sm:$0xff]
        %v1246 = vld [vmem:[%s823 + $0xf0] sm:$0xff]
        %v1247 = vld [vmem:[%s823 + $0xf8] sm:$0xf]
        %v1248 = vld [vmem:[%s823 + $0xfc] sm:$0xff]
        %v1249 = vld [vmem:[%s823 + $0x104] sm:$0xff]
        %v1250 = vld [vmem:[%s823 + $0x10c] sm:$0xff]
        %v1251 = vld [vmem:[%s823 + $0x114] sm:$0xff]
        %v1252 = vld [vmem:[%s823 + $0x11c] sm:$0xf]
        %v1253 = vld [vmem:[%s823 + $0x120] sm:$0xff]
        %v1254 = vld [vmem:[%s823 + $0x128] sm:$0xff]
        %v1255 = vld [vmem:[%s823 + $0x130] sm:$0xff]
        %v1256 = vld [vmem:[%s823 + $0x138] sm:$0xff]
        %v1257 = vld [vmem:[%s823 + $0x140] sm:$0xf]
        %v1258 = vld [vmem:[%s823 + $0x144] sm:$0xff]
        %v1259 = vld [vmem:[%s823 + $0x14c] sm:$0xff]
        %v1260 = vld [vmem:[%s823 + $0x154] sm:$0xff]
        %v1261 = vld [vmem:[%s823 + $0x15c] sm:$0xff]
        %v1262 = vld [vmem:[%s823 + $0x164] sm:$0xf]
        %v1263 = vld [vmem:[%s823 + $0x168] sm:$0xff]
        %v1264 = vld [vmem:[%s823 + $0x170] sm:$0xff]
        %v1265 = vld [vmem:[%s823 + $0x178] sm:$0xff]
        %v1266 = vld [vmem:[%s823 + $0x180] sm:$0xff]
        %v1267 = vld [vmem:[%s823 + $0x188] sm:$0xf]
        %v1268 = vld [vmem:[%s823 + $0x18c] sm:$0xff]
        %v1269 = vld [vmem:[%s823 + $0x194] sm:$0xff]
        %v1270 = vld [vmem:[%s823 + $0x19c] sm:$0xff]
        %v1271 = vld [vmem:[%s823 + $0x1a4] sm:$0xff]
        %v1272 = vld [vmem:[%s823 + $0x1ac] sm:$0xf]
        %v1273 = vld [vmem:[%s823 + $0x1b0] sm:$0xff]
        %v1274 = vld [vmem:[%s823 + $0x1b8] sm:$0xff]
        %v1275 = vld [vmem:[%s823 + $0x1c0] sm:$0xff]
        %v1276 = vld [vmem:[%s823 + $0x1c8] sm:$0xff]
        %v1277 = vld [vmem:[%s823 + $0x1d0] sm:$0xf]
        %v1278 = vld [vmem:[%s823 + $0x1d4] sm:$0xff]
        %v1279 = vld [vmem:[%s823 + $0x1dc] sm:$0xff]
        %v1280 = vld [vmem:[%s823 + $0x1e4] sm:$0xff]
        %v1281 = vld [vmem:[%s823 + $0x1ec] sm:$0xff]
        %v1282 = vld [vmem:[%s823 + $0x1f4] sm:$0xf]
        %v1283 = vld [vmem:[%s823 + $0x1f8] sm:$0xff]
        %v1284 = vld [vmem:[%s823 + $0x200] sm:$0xff]
        %v1285 = vld [vmem:[%s823 + $0x208] sm:$0xff]
        %v1286 = vld [vmem:[%s823 + $0x210] sm:$0xff]
        %v1287 = vld [vmem:[%s823 + $0x218] sm:$0xf]
        %v1288 = vld [vmem:[%s823 + $0x21c] sm:$0xff]
        %v1289 = vld [vmem:[%s823 + $0x224] sm:$0xff]
        %v1290 = vld [vmem:[%s823 + $0x22c] sm:$0xff]
        %v1291 = vld [vmem:[%s823 + $0x234] sm:$0xff]
        %v1292 = vld [vmem:[%s823 + $0x23c] sm:$0xf]
        %v1293 = vld [vmem:[%s823 + $0x240] sm:$0xff]
        %v1294 = vld [vmem:[%s823 + $0x248] sm:$0xff]
        %v1295 = vld [vmem:[%s823 + $0x250] sm:$0xff]
        %v1296 = vld [vmem:[%s823 + $0x258] sm:$0xff]
        %v1297 = vld [vmem:[%s823 + $0x260] sm:$0xf]
        %v1298 = vld [vmem:[%s823 + $0x264] sm:$0xff]
        %v1299 = vld [vmem:[%s823 + $0x26c] sm:$0xff]
        %v1300 = vld [vmem:[%s823 + $0x274] sm:$0xff]
        %v1301 = vld [vmem:[%s823 + $0x27c] sm:$0xff]
        %v1302 = vld [vmem:[%s823 + $0x284] sm:$0xf]
        %v1303 = vld [vmem:[%s823 + $0x288] sm:$0xff]
        %v1304 = vld [vmem:[%s823 + $0x290] sm:$0xff]
        %v1305 = vld [vmem:[%s823 + $0x298] sm:$0xff]
        %v1306 = vld [vmem:[%s823 + $0x2a0] sm:$0xff]
        %v1307 = vld [vmem:[%s823 + $0x2a8] sm:$0xf]
        %v1308 = vld [vmem:[%s823 + $0x2ac] sm:$0xff]
        %v1309 = vld [vmem:[%s823 + $0x2b4] sm:$0xff]
        %v1310 = vld [vmem:[%s823 + $0x2bc] sm:$0xff]
        %v1311 = vld [vmem:[%s823 + $0x2c4] sm:$0xff]
        %v1312 = vld [vmem:[%s823 + $0x2cc] sm:$0xf]
        %v1313 = vld [vmem:[%s823 + $0x2d0] sm:$0xff]
        %v1314 = vld [vmem:[%s823 + $0x2d8] sm:$0xff]
        %v1315 = vld [vmem:[%s823 + $0x2e0] sm:$0xff]
        %v1316 = vld [vmem:[%s823 + $0x2e8] sm:$0xff]
        %v1317 = vld [vmem:[%s823 + $0x2f0] sm:$0xf]
        %v1318 = vld [vmem:[%s823 + $0x2f4] sm:$0xff]
        %v1319 = vld [vmem:[%s823 + $0x2fc] sm:$0xff]
        %v1320 = vld [vmem:[%s823 + $0x304] sm:$0xff]
        %v1321 = vld [vmem:[%s823 + $0x30c] sm:$0xff]
        %v1322 = vld [vmem:[%s823 + $0x314] sm:$0xf]
        %v1323 = vld [vmem:[%s823 + $0x318] sm:$0xff]
        %v1324 = vld [vmem:[%s823 + $0x320] sm:$0xff]
        %v1325 = vld [vmem:[%s823 + $0x328] sm:$0xff]
        %v1326 = vld [vmem:[%s823 + $0x330] sm:$0xff]
        %v1327 = vld [vmem:[%s823 + $0x338] sm:$0xf]
        %v1328 = vld [vmem:[%s823 + $0x33c] sm:$0xff]
        %v1329 = vld [vmem:[%s823 + $0x344] sm:$0xff]
        %v1330 = vld [vmem:[%s823 + $0x34c] sm:$0xff]
        %v1331 = vld [vmem:[%s823 + $0x354] sm:$0xff]
        %v1332 = vld [vmem:[%s823 + $0x35c] sm:$0xf]
        %v1333 = vld [vmem:[%s823 + $0x360] sm:$0xff]
        %v1334 = vld [vmem:[%s823 + $0x368] sm:$0xff]
        %v1335 = vld [vmem:[%s823 + $0x370] sm:$0xff]
        %v1336 = vld [vmem:[%s823 + $0x378] sm:$0xff]
        %v1337 = vld [vmem:[%s823 + $0x380] sm:$0xf]
        %v1338 = vld [vmem:[%s823 + $0x384] sm:$0xff]
        %v1339 = vld [vmem:[%s823 + $0x38c] sm:$0xff]
        %v1340 = vld [vmem:[%s823 + $0x394] sm:$0xff]
        %v1341 = vld [vmem:[%s823 + $0x39c] sm:$0xff]
        %v1342 = vld [vmem:[%s823 + $0x3a4] sm:$0xf]
        %v1343 = vld [vmem:[%s823 + $0x3a8] sm:$0xff]
        %v1344 = vld [vmem:[%s823 + $0x3b0] sm:$0xff]
        %v1345 = vld [vmem:[%s823 + $0x3b8] sm:$0xff]
        %v1346 = vld [vmem:[%s823 + $0x3c0] sm:$0xff]
        %v1347 = vld [vmem:[%s823 + $0x3c8] sm:$0xf]
        %v1348 = vld [vmem:[%s823 + $0x3cc] sm:$0xff]
        %v1349 = vld [vmem:[%s823 + $0x3d4] sm:$0xff]
        %v1350 = vld [vmem:[%s823 + $0x3dc] sm:$0xff]
        %v1351 = vld [vmem:[%s823 + $0x3e4] sm:$0xff]
        %v1352 = vld [vmem:[%s823 + $0x3ec] sm:$0xf]
        %v1353 = vld [vmem:[%s823 + $0x3f0] sm:$0xff]
        %v1354 = vld [vmem:[%s823 + $0x3f8] sm:$0xff]
        %v1355 = vld [vmem:[%s823 + $0x400] sm:$0xff]
        %v1356 = vld [vmem:[%s823 + $0x408] sm:$0xff]
        %v1357 = vld [vmem:[%s823 + $0x410] sm:$0xf]
        %v1358 = vld [vmem:[%s823 + $0x414] sm:$0xff]
        %v1359 = vld [vmem:[%s823 + $0x41c] sm:$0xff]
        %v1360 = vld [vmem:[%s823 + $0x424] sm:$0xff]
        %v1361 = vld [vmem:[%s823 + $0x42c] sm:$0xff]
        %v1362 = vld [vmem:[%s823 + $0x434] sm:$0xf]
        %v1363 = vld [vmem:[%s823 + $0x438] sm:$0xff]
        %v1364 = vld [vmem:[%s823 + $0x440] sm:$0xff]
        %v1365 = vld [vmem:[%s823 + $0x448] sm:$0xff]
        %v1366 = vld [vmem:[%s823 + $0x450] sm:$0xff]
        %v1367 = vld [vmem:[%s823 + $0x458] sm:$0xf]
        %v1368 = vld [vmem:[%s823 + $0x45c] sm:$0xff]
        %v1369 = vld [vmem:[%s823 + $0x464] sm:$0xff]
        %v1370 = vld [vmem:[%s823 + $0x46c] sm:$0xff]
        %v1371 = vld [vmem:[%s823 + $0x474] sm:$0xff]
        %v1372 = vld [vmem:[%s823 + $0x47c] sm:$0xf]
        %v1373 = vld [vmem:[%s823 + $0x480] sm:$0xff]
        %v1374 = vld [vmem:[%s823 + $0x488] sm:$0xff]
        %v1375 = vld [vmem:[%s823 + $0x490] sm:$0xff]
        %v1376 = vld [vmem:[%s823 + $0x498] sm:$0xff]
        %v1377 = vld [vmem:[%s823 + $0x4a0] sm:$0xf]
        %v1378 = vld [vmem:[%s823 + $0x4a4] sm:$0xff]
        %v1379 = vld [vmem:[%s823 + $0x4ac] sm:$0xff]
        %v1380 = vld [vmem:[%s823 + $0x4b4] sm:$0xff]
        %v1381 = vld [vmem:[%s823 + $0x4bc] sm:$0xff]
        %v1382 = vld [vmem:[%s823 + $0x4c4] sm:$0xf]
        %v1383 = vld [vmem:[%s823 + $0x4c8] sm:$0xff]
        %v1384 = vld [vmem:[%s823 + $0x4d0] sm:$0xff]
        %v1385 = vld [vmem:[%s823 + $0x4d8] sm:$0xff]
        %v1386 = vld [vmem:[%s823 + $0x4e0] sm:$0xff]
        %v1387 = vld [vmem:[%s823 + $0x4e8] sm:$0xf]
        %v1388 = vld [vmem:[%s823 + $0x4ec] sm:$0xff]
        %v1389 = vld [vmem:[%s823 + $0x4f4] sm:$0xff]
        %v1390 = vld [vmem:[%s823 + $0x4fc] sm:$0xff]
        %v1391 = vld [vmem:[%s823 + $0x504] sm:$0xff]
        %v1392 = vld [vmem:[%s823 + $0x50c] sm:$0xf]
        %v1393 = vld [vmem:[%s823 + $0x510] sm:$0xff]
        %v1394 = vld [vmem:[%s823 + $0x518] sm:$0xff]
        %v1395 = vld [vmem:[%s823 + $0x520] sm:$0xff]
        %v1396 = vld [vmem:[%s823 + $0x528] sm:$0xff]
        %v1397 = vld [vmem:[%s823 + $0x530] sm:$0xf]
        %v1398 = vld [vmem:[%s823 + $0x534] sm:$0xff]
        %v1399 = vld [vmem:[%s823 + $0x53c] sm:$0xff]
        %v1400 = vld [vmem:[%s823 + $0x544] sm:$0xff]
        %v1401 = vld [vmem:[%s823 + $0x54c] sm:$0xff]
        %v1402 = vld [vmem:[%s823 + $0x554] sm:$0xf]
        %v1403 = vld [vmem:[%s823 + $0x558] sm:$0xff]
        %v1404 = vld [vmem:[%s823 + $0x560] sm:$0xff]
        %v1405 = vld [vmem:[%s823 + $0x568] sm:$0xff]
        %v1406 = vld [vmem:[%s823 + $0x570] sm:$0xff]
        %v1407 = vld [vmem:[%s823 + $0x578] sm:$0xf]
        %v1408 = vld [vmem:[%s823 + $0x57c] sm:$0xff]
        %v1409 = vld [vmem:[%s823 + $0x584] sm:$0xff]
        %v1410 = vld [vmem:[%s823 + $0x58c] sm:$0xff]
        %v1411 = vld [vmem:[%s823 + $0x594] sm:$0xff]
        %v1412 = vld [vmem:[%s823 + $0x59c] sm:$0xf]
        %v1413 = vld [vmem:[%s823 + $0x5a0] sm:$0xff]
        %v1414 = vld [vmem:[%s823 + $0x5a8] sm:$0xff]
        %v1415 = vld [vmem:[%s823 + $0x5b0] sm:$0xff]
        %v1416 = vld [vmem:[%s823 + $0x5b8] sm:$0xff]
        %v1417 = vld [vmem:[%s823 + $0x5c0] sm:$0xf]
        %v1418 = vld [vmem:[%s823 + $0x5c4] sm:$0xff]
        %v1419 = vld [vmem:[%s823 + $0x5cc] sm:$0xff]
        %v1420 = vld [vmem:[%s823 + $0x5d4] sm:$0xff]
        %v1421 = vld [vmem:[%s823 + $0x5dc] sm:$0xff]
        %v1422 = vld [vmem:[%s823 + $0x5e4] sm:$0xf]
        %v1423 = vld [vmem:[%s823 + $0x5e8] sm:$0xff]
        %v1424 = vld [vmem:[%s823 + $0x5f0] sm:$0xff]
        %v1425 = vld [vmem:[%s823 + $0x5f8] sm:$0xff]
        %v1426 = vld [vmem:[%s823 + $0x600] sm:$0xff]
        %v1427 = vld [vmem:[%s823 + $0x608] sm:$0xf]
        %v1428 = vld [vmem:[%s823 + $0x60c] sm:$0xff]
        %v1429 = vld [vmem:[%s823 + $0x614] sm:$0xff]
        %v1430 = vld [vmem:[%s823 + $0x61c] sm:$0xff]
        %v1431 = vld [vmem:[%s823 + $0x624] sm:$0xff]
        %v1432 = vld [vmem:[%s823 + $0x62c] sm:$0xf]
        %v1433 = vld [vmem:[%s823 + $0x630] sm:$0xff]
        %v1434 = vld [vmem:[%s823 + $0x638] sm:$0xff]
        %v1435 = vld [vmem:[%s823 + $0x640] sm:$0xff]
        %v1436 = vld [vmem:[%s823 + $0x648] sm:$0xff]
        %v1437 = vld [vmem:[%s823 + $0x650] sm:$0xf]
        %v1438 = vld [vmem:[%s823 + $0x654] sm:$0xff]
        %v1439 = vld [vmem:[%s823 + $0x65c] sm:$0xff]
        %v1440 = vld [vmem:[%s823 + $0x664] sm:$0xff]
        %v1441 = vld [vmem:[%s823 + $0x66c] sm:$0xff]
        %v1442 = vld [vmem:[%s823 + $0x674] sm:$0xf]
        %v1443 = vld [vmem:[%s823 + $0x678] sm:$0xff]
        %v1444 = vld [vmem:[%s823 + $0x680] sm:$0xff]
        %v1445 = vld [vmem:[%s823 + $0x688] sm:$0xff]
        %v1446 = vld [vmem:[%s823 + $0x690] sm:$0xff]
        %v1447 = vld [vmem:[%s823 + $0x698] sm:$0xf]
        %v1448 = vld [vmem:[%s823 + $0x69c] sm:$0xff]
        %v1449 = vld [vmem:[%s823 + $0x6a4] sm:$0xff]
        %v1450 = vld [vmem:[%s823 + $0x6ac] sm:$0xff]
        %v1451 = vld [vmem:[%s823 + $0x6b4] sm:$0xff]
        %v1452 = vld [vmem:[%s823 + $0x6bc] sm:$0xf]
        %v1693 = vunpack.c.l.b16 %v1213
        %v1694 = vunpack.c.h.b16 %v1213
        %v1695 = vunpack.c.l.b16 %v1214
        %v1696 = vunpack.c.h.b16 %v1214
        %v1697 = vunpack.c.l.b16 %v1215
        %v1698 = vunpack.c.h.b16 %v1215
        %v1699 = vunpack.c.l.b16 %v1216
        %v1700 = vunpack.c.h.b16 %v1216
        %v1701 = vunpack.c.l.b16 %v1217
        %v1702 = vunpack.c.l.b16 %v1218
        %v1703 = vunpack.c.h.b16 %v1218
        %v1704 = vunpack.c.l.b16 %v1219
        %v1705 = vunpack.c.h.b16 %v1219
        %v1706 = vunpack.c.l.b16 %v1220
        %v1707 = vunpack.c.h.b16 %v1220
        %v1708 = vunpack.c.l.b16 %v1221
        %v1709 = vunpack.c.h.b16 %v1221
        %v1710 = vunpack.c.l.b16 %v1222
        %v1711 = vunpack.c.l.b16 %v1223
        %v1712 = vunpack.c.h.b16 %v1223
        %v1713 = vunpack.c.l.b16 %v1224
        %v1714 = vunpack.c.h.b16 %v1224
        %v1715 = vunpack.c.l.b16 %v1225
        %v1716 = vunpack.c.h.b16 %v1225
        %v1717 = vunpack.c.l.b16 %v1226
        %v1718 = vunpack.c.h.b16 %v1226
        %v1719 = vunpack.c.l.b16 %v1227
        %v1720 = vunpack.c.l.b16 %v1228
        %v1721 = vunpack.c.h.b16 %v1228
        %v1722 = vunpack.c.l.b16 %v1229
        %v1723 = vunpack.c.h.b16 %v1229
        %v1724 = vunpack.c.l.b16 %v1230
        %v1725 = vunpack.c.h.b16 %v1230
        %v1726 = vunpack.c.l.b16 %v1231
        %v1727 = vunpack.c.h.b16 %v1231
        %v1728 = vunpack.c.l.b16 %v1232
        %v1729 = vunpack.c.l.b16 %v1233
        %v1730 = vunpack.c.h.b16 %v1233
        %v1731 = vunpack.c.l.b16 %v1234
        %v1732 = vunpack.c.h.b16 %v1234
        %v1733 = vunpack.c.l.b16 %v1235
        %v1734 = vunpack.c.h.b16 %v1235
        %v1735 = vunpack.c.l.b16 %v1236
        %v1736 = vunpack.c.h.b16 %v1236
        %v1737 = vunpack.c.l.b16 %v1237
        %v1738 = vunpack.c.l.b16 %v1238
        %v1739 = vunpack.c.h.b16 %v1238
        %v1740 = vunpack.c.l.b16 %v1239
        %v1741 = vunpack.c.h.b16 %v1239
        %v1742 = vunpack.c.l.b16 %v1240
        %v1743 = vunpack.c.h.b16 %v1240
        %v1744 = vunpack.c.l.b16 %v1241
        %v1745 = vunpack.c.h.b16 %v1241
        %v1746 = vunpack.c.l.b16 %v1242
        %v1747 = vunpack.c.l.b16 %v1243
        %v1748 = vunpack.c.h.b16 %v1243
        %v1749 = vunpack.c.l.b16 %v1244
        %v1750 = vunpack.c.h.b16 %v1244
        %v1751 = vunpack.c.l.b16 %v1245
        %v1752 = vunpack.c.h.b16 %v1245
        %v1753 = vunpack.c.l.b16 %v1246
        %v1754 = vunpack.c.h.b16 %v1246
        %v1755 = vunpack.c.l.b16 %v1247
        %v1756 = vunpack.c.l.b16 %v1248
        %v1757 = vunpack.c.h.b16 %v1248
        %v1758 = vunpack.c.l.b16 %v1249
        %v1759 = vunpack.c.h.b16 %v1249
        %v1760 = vunpack.c.l.b16 %v1250
        %v1761 = vunpack.c.h.b16 %v1250
        %v1762 = vunpack.c.l.b16 %v1251
        %v1763 = vunpack.c.h.b16 %v1251
        %v1764 = vunpack.c.l.b16 %v1252
        %v1765 = vunpack.c.l.b16 %v1253
        %v1766 = vunpack.c.h.b16 %v1253
        %v1767 = vunpack.c.l.b16 %v1254
        %v1768 = vunpack.c.h.b16 %v1254
        %v1769 = vunpack.c.l.b16 %v1255
        %v1770 = vunpack.c.h.b16 %v1255
        %v1771 = vunpack.c.l.b16 %v1256
        %v1772 = vunpack.c.h.b16 %v1256
        %v1773 = vunpack.c.l.b16 %v1257
        %v1774 = vunpack.c.l.b16 %v1258
        %v1775 = vunpack.c.h.b16 %v1258
        %v1776 = vunpack.c.l.b16 %v1259
        %v1777 = vunpack.c.h.b16 %v1259
        %v1778 = vunpack.c.l.b16 %v1260
        %v1779 = vunpack.c.h.b16 %v1260
        %v1780 = vunpack.c.l.b16 %v1261
        %v1781 = vunpack.c.h.b16 %v1261
        %v1782 = vunpack.c.l.b16 %v1262
        %v1783 = vunpack.c.l.b16 %v1263
        %v1784 = vunpack.c.h.b16 %v1263
        %v1785 = vunpack.c.l.b16 %v1264
        %v1786 = vunpack.c.h.b16 %v1264
        %v1787 = vunpack.c.l.b16 %v1265
        %v1788 = vunpack.c.h.b16 %v1265
        %v1789 = vunpack.c.l.b16 %v1266
        %v1790 = vunpack.c.h.b16 %v1266
        %v1791 = vunpack.c.l.b16 %v1267
        %v1792 = vunpack.c.l.b16 %v1268
        %v1793 = vunpack.c.h.b16 %v1268
        %v1794 = vunpack.c.l.b16 %v1269
        %v1795 = vunpack.c.h.b16 %v1269
        %v1796 = vunpack.c.l.b16 %v1270
        %v1797 = vunpack.c.h.b16 %v1270
        %v1798 = vunpack.c.l.b16 %v1271
        %v1799 = vunpack.c.h.b16 %v1271
        %v1800 = vunpack.c.l.b16 %v1272
        %v1801 = vunpack.c.l.b16 %v1273
        %v1802 = vunpack.c.h.b16 %v1273
        %v1803 = vunpack.c.l.b16 %v1274
        %v1804 = vunpack.c.h.b16 %v1274
        %v1805 = vunpack.c.l.b16 %v1275
        %v1806 = vunpack.c.h.b16 %v1275
        %v1807 = vunpack.c.l.b16 %v1276
        %v1808 = vunpack.c.h.b16 %v1276
        %v1809 = vunpack.c.l.b16 %v1277
        %v1810 = vunpack.c.l.b16 %v1278
        %v1811 = vunpack.c.h.b16 %v1278
        %v1812 = vunpack.c.l.b16 %v1279
        %v1813 = vunpack.c.h.b16 %v1279
        %v1814 = vunpack.c.l.b16 %v1280
        %v1815 = vunpack.c.h.b16 %v1280
        %v1816 = vunpack.c.l.b16 %v1281
        %v1817 = vunpack.c.h.b16 %v1281
        %v1818 = vunpack.c.l.b16 %v1282
        %v1819 = vunpack.c.l.b16 %v1283
        %v1820 = vunpack.c.h.b16 %v1283
        %v1821 = vunpack.c.l.b16 %v1284
        %v1822 = vunpack.c.h.b16 %v1284
        %v1823 = vunpack.c.l.b16 %v1285
        %v1824 = vunpack.c.h.b16 %v1285
        %v1825 = vunpack.c.l.b16 %v1286
        %v1826 = vunpack.c.h.b16 %v1286
        %v1827 = vunpack.c.l.b16 %v1287
        %v1828 = vunpack.c.l.b16 %v1288
        %v1829 = vunpack.c.h.b16 %v1288
        %v1830 = vunpack.c.l.b16 %v1289
        %v1831 = vunpack.c.h.b16 %v1289
        %v1832 = vunpack.c.l.b16 %v1290
        %v1833 = vunpack.c.h.b16 %v1290
        %v1834 = vunpack.c.l.b16 %v1291
        %v1835 = vunpack.c.h.b16 %v1291
        %v1836 = vunpack.c.l.b16 %v1292
        %v1837 = vunpack.c.l.b16 %v1293
        %v1838 = vunpack.c.h.b16 %v1293
        %v1839 = vunpack.c.l.b16 %v1294
        %v1840 = vunpack.c.h.b16 %v1294
        %v1841 = vunpack.c.l.b16 %v1295
        %v1842 = vunpack.c.h.b16 %v1295
        %v1843 = vunpack.c.l.b16 %v1296
        %v1844 = vunpack.c.h.b16 %v1296
        %v1845 = vunpack.c.l.b16 %v1297
        %v1846 = vunpack.c.l.b16 %v1298
        %v1847 = vunpack.c.h.b16 %v1298
        %v1848 = vunpack.c.l.b16 %v1299
        %v1849 = vunpack.c.h.b16 %v1299
        %v1850 = vunpack.c.l.b16 %v1300
        %v1851 = vunpack.c.h.b16 %v1300
        %v1852 = vunpack.c.l.b16 %v1301
        %v1853 = vunpack.c.h.b16 %v1301
        %v1854 = vunpack.c.l.b16 %v1302
        %v1855 = vunpack.c.l.b16 %v1303
        %v1856 = vunpack.c.h.b16 %v1303
        %v1857 = vunpack.c.l.b16 %v1304
        %v1858 = vunpack.c.h.b16 %v1304
        %v1859 = vunpack.c.l.b16 %v1305
        %v1860 = vunpack.c.h.b16 %v1305
        %v1861 = vunpack.c.l.b16 %v1306
        %v1862 = vunpack.c.h.b16 %v1306
        %v1863 = vunpack.c.l.b16 %v1307
        %v1864 = vunpack.c.l.b16 %v1308
        %v1865 = vunpack.c.h.b16 %v1308
        %v1866 = vunpack.c.l.b16 %v1309
        %v1867 = vunpack.c.h.b16 %v1309
        %v1868 = vunpack.c.l.b16 %v1310
        %v1869 = vunpack.c.h.b16 %v1310
        %v1870 = vunpack.c.l.b16 %v1311
        %v1871 = vunpack.c.h.b16 %v1311
        %v1872 = vunpack.c.l.b16 %v1312
        %v1873 = vunpack.c.l.b16 %v1313
        %v1874 = vunpack.c.h.b16 %v1313
        %v1875 = vunpack.c.l.b16 %v1314
        %v1876 = vunpack.c.h.b16 %v1314
        %v1877 = vunpack.c.l.b16 %v1315
        %v1878 = vunpack.c.h.b16 %v1315
        %v1879 = vunpack.c.l.b16 %v1316
        %v1880 = vunpack.c.h.b16 %v1316
        %v1881 = vunpack.c.l.b16 %v1317
        %v1882 = vunpack.c.l.b16 %v1318
        %v1883 = vunpack.c.h.b16 %v1318
        %v1884 = vunpack.c.l.b16 %v1319
        %v1885 = vunpack.c.h.b16 %v1319
        %v1886 = vunpack.c.l.b16 %v1320
        %v1887 = vunpack.c.h.b16 %v1320
        %v1888 = vunpack.c.l.b16 %v1321
        %v1889 = vunpack.c.h.b16 %v1321
        %v1890 = vunpack.c.l.b16 %v1322
        %v1891 = vunpack.c.l.b16 %v1323
        %v1892 = vunpack.c.h.b16 %v1323
        %v1893 = vunpack.c.l.b16 %v1324
        %v1894 = vunpack.c.h.b16 %v1324
        %v1895 = vunpack.c.l.b16 %v1325
        %v1896 = vunpack.c.h.b16 %v1325
        %v1897 = vunpack.c.l.b16 %v1326
        %v1898 = vunpack.c.h.b16 %v1326
        %v1899 = vunpack.c.l.b16 %v1327
        %v1900 = vunpack.c.l.b16 %v1328
        %v1901 = vunpack.c.h.b16 %v1328
        %v1902 = vunpack.c.l.b16 %v1329
        %v1903 = vunpack.c.h.b16 %v1329
        %v1904 = vunpack.c.l.b16 %v1330
        %v1905 = vunpack.c.h.b16 %v1330
        %v1906 = vunpack.c.l.b16 %v1331
        %v1907 = vunpack.c.h.b16 %v1331
        %v1908 = vunpack.c.l.b16 %v1332
        %v1909 = vunpack.c.l.b16 %v1333
        %v1910 = vunpack.c.h.b16 %v1333
        %v1911 = vunpack.c.l.b16 %v1334
        %v1912 = vunpack.c.h.b16 %v1334
        %v1913 = vunpack.c.l.b16 %v1335
        %v1914 = vunpack.c.h.b16 %v1335
        %v1915 = vunpack.c.l.b16 %v1336
        %v1916 = vunpack.c.h.b16 %v1336
        %v1917 = vunpack.c.l.b16 %v1337
        %v1918 = vunpack.c.l.b16 %v1338
        %v1919 = vunpack.c.h.b16 %v1338
        %v1920 = vunpack.c.l.b16 %v1339
        %v1921 = vunpack.c.h.b16 %v1339
        %v1922 = vunpack.c.l.b16 %v1340
        %v1923 = vunpack.c.h.b16 %v1340
        %v1924 = vunpack.c.l.b16 %v1341
        %v1925 = vunpack.c.h.b16 %v1341
        %v1926 = vunpack.c.l.b16 %v1342
        %v1927 = vunpack.c.l.b16 %v1343
        %v1928 = vunpack.c.h.b16 %v1343
        %v1929 = vunpack.c.l.b16 %v1344
        %v1930 = vunpack.c.h.b16 %v1344
        %v1931 = vunpack.c.l.b16 %v1345
        %v1932 = vunpack.c.h.b16 %v1345
        %v1933 = vunpack.c.l.b16 %v1346
        %v1934 = vunpack.c.h.b16 %v1346
        %v1935 = vunpack.c.l.b16 %v1347
        %v1936 = vunpack.c.l.b16 %v1348
        %v1937 = vunpack.c.h.b16 %v1348
        %v1938 = vunpack.c.l.b16 %v1349
        %v1939 = vunpack.c.h.b16 %v1349
        %v1940 = vunpack.c.l.b16 %v1350
        %v1941 = vunpack.c.h.b16 %v1350
        %v1942 = vunpack.c.l.b16 %v1351
        %v1943 = vunpack.c.h.b16 %v1351
        %v1944 = vunpack.c.l.b16 %v1352
        %v1945 = vunpack.c.l.b16 %v1353
        %v1946 = vunpack.c.h.b16 %v1353
        %v1947 = vunpack.c.l.b16 %v1354
        %v1948 = vunpack.c.h.b16 %v1354
        %v1949 = vunpack.c.l.b16 %v1355
        %v1950 = vunpack.c.h.b16 %v1355
        %v1951 = vunpack.c.l.b16 %v1356
        %v1952 = vunpack.c.h.b16 %v1356
        %v1953 = vunpack.c.l.b16 %v1357
        %v1954 = vunpack.c.l.b16 %v1358
        %v1955 = vunpack.c.h.b16 %v1358
        %v1956 = vunpack.c.l.b16 %v1359
        %v1957 = vunpack.c.h.b16 %v1359
        %v1958 = vunpack.c.l.b16 %v1360
        %v1959 = vunpack.c.h.b16 %v1360
        %v1960 = vunpack.c.l.b16 %v1361
        %v1961 = vunpack.c.h.b16 %v1361
        %v1962 = vunpack.c.l.b16 %v1362
        %v1963 = vunpack.c.l.b16 %v1363
        %v1964 = vunpack.c.h.b16 %v1363
        %v1965 = vunpack.c.l.b16 %v1364
        %v1966 = vunpack.c.h.b16 %v1364
        %v1967 = vunpack.c.l.b16 %v1365
        %v1968 = vunpack.c.h.b16 %v1365
        %v1969 = vunpack.c.l.b16 %v1366
        %v1970 = vunpack.c.h.b16 %v1366
        %v1971 = vunpack.c.l.b16 %v1367
        %v1972 = vunpack.c.l.b16 %v1368
        %v1973 = vunpack.c.h.b16 %v1368
        %v1974 = vunpack.c.l.b16 %v1369
        %v1975 = vunpack.c.h.b16 %v1369
        %v1976 = vunpack.c.l.b16 %v1370
        %v1977 = vunpack.c.h.b16 %v1370
        %v1978 = vunpack.c.l.b16 %v1371
        %v1979 = vunpack.c.h.b16 %v1371
        %v1980 = vunpack.c.l.b16 %v1372
        %v1981 = vunpack.c.l.b16 %v1373
        %v1982 = vunpack.c.h.b16 %v1373
        %v1983 = vunpack.c.l.b16 %v1374
        %v1984 = vunpack.c.h.b16 %v1374
        %v1985 = vunpack.c.l.b16 %v1375
        %v1986 = vunpack.c.h.b16 %v1375
        %v1987 = vunpack.c.l.b16 %v1376
        %v1988 = vunpack.c.h.b16 %v1376
        %v1989 = vunpack.c.l.b16 %v1377
        %v1990 = vunpack.c.l.b16 %v1378
        %v1991 = vunpack.c.h.b16 %v1378
        %v1992 = vunpack.c.l.b16 %v1379
        %v1993 = vunpack.c.h.b16 %v1379
        %v1994 = vunpack.c.l.b16 %v1380
        %v1995 = vunpack.c.h.b16 %v1380
        %v1996 = vunpack.c.l.b16 %v1381
        %v1997 = vunpack.c.h.b16 %v1381
        %v1998 = vunpack.c.l.b16 %v1382
        %v1999 = vunpack.c.l.b16 %v1383
        %v2000 = vunpack.c.h.b16 %v1383
        %v2001 = vunpack.c.l.b16 %v1384
        %v2002 = vunpack.c.h.b16 %v1384
        %v2003 = vunpack.c.l.b16 %v1385
        %v2004 = vunpack.c.h.b16 %v1385
        %v2005 = vunpack.c.l.b16 %v1386
        %v2006 = vunpack.c.h.b16 %v1386
        %v2007 = vunpack.c.l.b16 %v1387
        %v2008 = vunpack.c.l.b16 %v1388
        %v2009 = vunpack.c.h.b16 %v1388
        %v2010 = vunpack.c.l.b16 %v1389
        %v2011 = vunpack.c.h.b16 %v1389
        %v2012 = vunpack.c.l.b16 %v1390
        %v2013 = vunpack.c.h.b16 %v1390
        %v2014 = vunpack.c.l.b16 %v1391
        %v2015 = vunpack.c.h.b16 %v1391
        %v2016 = vunpack.c.l.b16 %v1392
        %v2017 = vunpack.c.l.b16 %v1393
        %v2018 = vunpack.c.h.b16 %v1393
        %v2019 = vunpack.c.l.b16 %v1394
        %v2020 = vunpack.c.h.b16 %v1394
        %v2021 = vunpack.c.l.b16 %v1395
        %v2022 = vunpack.c.h.b16 %v1395
        %v2023 = vunpack.c.l.b16 %v1396
        %v2024 = vunpack.c.h.b16 %v1396
        %v2025 = vunpack.c.l.b16 %v1397
        %v2026 = vunpack.c.l.b16 %v1398
        %v2027 = vunpack.c.h.b16 %v1398
        %v2028 = vunpack.c.l.b16 %v1399
        %v2029 = vunpack.c.h.b16 %v1399
        %v2030 = vunpack.c.l.b16 %v1400
        %v2031 = vunpack.c.h.b16 %v1400
        %v2032 = vunpack.c.l.b16 %v1401
        %v2033 = vunpack.c.h.b16 %v1401
        %v2034 = vunpack.c.l.b16 %v1402
        %v2035 = vunpack.c.l.b16 %v1403
        %v2036 = vunpack.c.h.b16 %v1403
        %v2037 = vunpack.c.l.b16 %v1404
        %v2038 = vunpack.c.h.b16 %v1404
        %v2039 = vunpack.c.l.b16 %v1405
        %v2040 = vunpack.c.h.b16 %v1405
        %v2041 = vunpack.c.l.b16 %v1406
        %v2042 = vunpack.c.h.b16 %v1406
        %v2043 = vunpack.c.l.b16 %v1407
        %v2044 = vunpack.c.l.b16 %v1408
        %v2045 = vunpack.c.h.b16 %v1408
        %v2046 = vunpack.c.l.b16 %v1409
        %v2047 = vunpack.c.h.b16 %v1409
        %v2048 = vunpack.c.l.b16 %v1410
        %v2049 = vunpack.c.h.b16 %v1410
        %v2050 = vunpack.c.l.b16 %v1411
        %v2051 = vunpack.c.h.b16 %v1411
        %v2052 = vunpack.c.l.b16 %v1412
        %v2053 = vunpack.c.l.b16 %v1413
        %v2054 = vunpack.c.h.b16 %v1413
        %v2055 = vunpack.c.l.b16 %v1414
        %v2056 = vunpack.c.h.b16 %v1414
        %v2057 = vunpack.c.l.b16 %v1415
        %v2058 = vunpack.c.h.b16 %v1415
        %v2059 = vunpack.c.l.b16 %v1416
        %v2060 = vunpack.c.h.b16 %v1416
        %v2061 = vunpack.c.l.b16 %v1417
        %v2062 = vunpack.c.l.b16 %v1418
        %v2063 = vunpack.c.h.b16 %v1418
        %v2064 = vunpack.c.l.b16 %v1419
        %v2065 = vunpack.c.h.b16 %v1419
        %v2066 = vunpack.c.l.b16 %v1420
        %v2067 = vunpack.c.h.b16 %v1420
        %v2068 = vunpack.c.l.b16 %v1421
        %v2069 = vunpack.c.h.b16 %v1421
        %v2070 = vunpack.c.l.b16 %v1422
        %v2071 = vunpack.c.l.b16 %v1423
        %v2072 = vunpack.c.h.b16 %v1423
        %v2073 = vunpack.c.l.b16 %v1424
        %v2074 = vunpack.c.h.b16 %v1424
        %v2075 = vunpack.c.l.b16 %v1425
        %v2076 = vunpack.c.h.b16 %v1425
        %v2077 = vunpack.c.l.b16 %v1426
        %v2078 = vunpack.c.h.b16 %v1426
        %v2079 = vunpack.c.l.b16 %v1427
        %v2080 = vunpack.c.l.b16 %v1428
        %v2081 = vunpack.c.h.b16 %v1428
        %v2082 = vunpack.c.l.b16 %v1429
        %v2083 = vunpack.c.h.b16 %v1429
        %v2084 = vunpack.c.l.b16 %v1430
        %v2085 = vunpack.c.h.b16 %v1430
        %v2086 = vunpack.c.l.b16 %v1431
        %v2087 = vunpack.c.h.b16 %v1431
        %v2088 = vunpack.c.l.b16 %v1432
        %v2089 = vunpack.c.l.b16 %v1433
        %v2090 = vunpack.c.h.b16 %v1433
        %v2091 = vunpack.c.l.b16 %v1434
        %v2092 = vunpack.c.h.b16 %v1434
        %v2093 = vunpack.c.l.b16 %v1435
        %v2094 = vunpack.c.h.b16 %v1435
        %v2095 = vunpack.c.l.b16 %v1436
        %v2096 = vunpack.c.h.b16 %v1436
        %v2097 = vunpack.c.l.b16 %v1437
        %v2098 = vunpack.c.l.b16 %v1438
        %v2099 = vunpack.c.h.b16 %v1438
        %v2100 = vunpack.c.l.b16 %v1439
        %v2101 = vunpack.c.h.b16 %v1439
        %v2102 = vunpack.c.l.b16 %v1440
        %v2103 = vunpack.c.h.b16 %v1440
        %v2104 = vunpack.c.l.b16 %v1441
        %v2105 = vunpack.c.h.b16 %v1441
        %v2106 = vunpack.c.l.b16 %v1442
        %v2107 = vunpack.c.l.b16 %v1443
        %v2108 = vunpack.c.h.b16 %v1443
        %v2109 = vunpack.c.l.b16 %v1444
        %v2110 = vunpack.c.h.b16 %v1444
        %v2111 = vunpack.c.l.b16 %v1445
        %v2112 = vunpack.c.h.b16 %v1445
        %v2113 = vunpack.c.l.b16 %v1446
        %v2114 = vunpack.c.h.b16 %v1446
        %v2115 = vunpack.c.l.b16 %v1447
        %v2116 = vunpack.c.l.b16 %v1448
        %v2117 = vunpack.c.h.b16 %v1448
        %v2118 = vunpack.c.l.b16 %v1449
        %v2119 = vunpack.c.h.b16 %v1449
        %v2120 = vunpack.c.l.b16 %v1450
        %v2121 = vunpack.c.h.b16 %v1450
        %v2122 = vunpack.c.l.b16 %v1451
        %v2123 = vunpack.c.h.b16 %v1451
        %v2124 = vunpack.c.l.b16 %v1452
        %v2125 = vpack.c.b16 %v1702, %v1693
        %v2126 = vpack.c.b16 %v1703, %v1694
        %v2127 = vpack.c.b16 %v1704, %v1695
        %v2128 = vpack.c.b16 %v1705, %v1696
        %v2129 = vpack.c.b16 %v1706, %v1697
        %v2130 = vpack.c.b16 %v1707, %v1698
        %v2131 = vpack.c.b16 %v1708, %v1699
        %v2132 = vpack.c.b16 %v1709, %v1700
        %v2133 = vpack.c.b16 %v1710, %v1701
        %v2134 = vpack.c.b16 %v1720, %v1711
        %v2135 = vpack.c.b16 %v1721, %v1712
        %v2136 = vpack.c.b16 %v1722, %v1713
        %v2137 = vpack.c.b16 %v1723, %v1714
        %v2138 = vpack.c.b16 %v1724, %v1715
        %v2139 = vpack.c.b16 %v1725, %v1716
        %v2140 = vpack.c.b16 %v1726, %v1717
        %v2141 = vpack.c.b16 %v1727, %v1718
        %v2142 = vpack.c.b16 %v1728, %v1719
        %v2143 = vpack.c.b16 %v1738, %v1729
        %v2144 = vpack.c.b16 %v1739, %v1730
        %v2145 = vpack.c.b16 %v1740, %v1731
        %v2146 = vpack.c.b16 %v1741, %v1732
        %v2147 = vpack.c.b16 %v1742, %v1733
        %v2148 = vpack.c.b16 %v1743, %v1734
        %v2149 = vpack.c.b16 %v1744, %v1735
        %v2150 = vpack.c.b16 %v1745, %v1736
        %v2151 = vpack.c.b16 %v1746, %v1737
        %v2152 = vpack.c.b16 %v1756, %v1747
        %v2153 = vpack.c.b16 %v1757, %v1748
        %v2154 = vpack.c.b16 %v1758, %v1749
        %v2155 = vpack.c.b16 %v1759, %v1750
        %v2156 = vpack.c.b16 %v1760, %v1751
        %v2157 = vpack.c.b16 %v1761, %v1752
        %v2158 = vpack.c.b16 %v1762, %v1753
        %v2159 = vpack.c.b16 %v1763, %v1754
        %v2160 = vpack.c.b16 %v1764, %v1755
        %v2161 = vpack.c.b16 %v1774, %v1765
        %v2162 = vpack.c.b16 %v1775, %v1766
        %v2163 = vpack.c.b16 %v1776, %v1767
        %v2164 = vpack.c.b16 %v1777, %v1768
        %v2165 = vpack.c.b16 %v1778, %v1769
        %v2166 = vpack.c.b16 %v1779, %v1770
        %v2167 = vpack.c.b16 %v1780, %v1771
        %v2168 = vpack.c.b16 %v1781, %v1772
        %v2169 = vpack.c.b16 %v1782, %v1773
        %v2170 = vpack.c.b16 %v1792, %v1783
        %v2171 = vpack.c.b16 %v1793, %v1784
        %v2172 = vpack.c.b16 %v1794, %v1785
        %v2173 = vpack.c.b16 %v1795, %v1786
        %v2174 = vpack.c.b16 %v1796, %v1787
        %v2175 = vpack.c.b16 %v1797, %v1788
        %v2176 = vpack.c.b16 %v1798, %v1789
        %v2177 = vpack.c.b16 %v1799, %v1790
        %v2178 = vpack.c.b16 %v1800, %v1791
        %v2179 = vpack.c.b16 %v1810, %v1801
        %v2180 = vpack.c.b16 %v1811, %v1802
        %v2181 = vpack.c.b16 %v1812, %v1803
        %v2182 = vpack.c.b16 %v1813, %v1804
        %v2183 = vpack.c.b16 %v1814, %v1805
        %v2184 = vpack.c.b16 %v1815, %v1806
        %v2185 = vpack.c.b16 %v1816, %v1807
        %v2186 = vpack.c.b16 %v1817, %v1808
        %v2187 = vpack.c.b16 %v1818, %v1809
        %v2188 = vpack.c.b16 %v1828, %v1819
        %v2189 = vpack.c.b16 %v1829, %v1820
        %v2190 = vpack.c.b16 %v1830, %v1821
        %v2191 = vpack.c.b16 %v1831, %v1822
        %v2192 = vpack.c.b16 %v1832, %v1823
        %v2193 = vpack.c.b16 %v1833, %v1824
        %v2194 = vpack.c.b16 %v1834, %v1825
        %v2195 = vpack.c.b16 %v1835, %v1826
        %v2196 = vpack.c.b16 %v1836, %v1827
        %v2197 = vpack.c.b16 %v1846, %v1837
        %v2198 = vpack.c.b16 %v1847, %v1838
        %v2199 = vpack.c.b16 %v1848, %v1839
        %v2200 = vpack.c.b16 %v1849, %v1840
        %v2201 = vpack.c.b16 %v1850, %v1841
        %v2202 = vpack.c.b16 %v1851, %v1842
        %v2203 = vpack.c.b16 %v1852, %v1843
        %v2204 = vpack.c.b16 %v1853, %v1844
        %v2205 = vpack.c.b16 %v1854, %v1845
        %v2206 = vpack.c.b16 %v1864, %v1855
        %v2207 = vpack.c.b16 %v1865, %v1856
        %v2208 = vpack.c.b16 %v1866, %v1857
        %v2209 = vpack.c.b16 %v1867, %v1858
        %v2210 = vpack.c.b16 %v1868, %v1859
        %v2211 = vpack.c.b16 %v1869, %v1860
        %v2212 = vpack.c.b16 %v1870, %v1861
        %v2213 = vpack.c.b16 %v1871, %v1862
        %v2214 = vpack.c.b16 %v1872, %v1863
        %v2215 = vpack.c.b16 %v1882, %v1873
        %v2216 = vpack.c.b16 %v1883, %v1874
        %v2217 = vpack.c.b16 %v1884, %v1875
        %v2218 = vpack.c.b16 %v1885, %v1876
        %v2219 = vpack.c.b16 %v1886, %v1877
        %v2220 = vpack.c.b16 %v1887, %v1878
        %v2221 = vpack.c.b16 %v1888, %v1879
        %v2222 = vpack.c.b16 %v1889, %v1880
        %v2223 = vpack.c.b16 %v1890, %v1881
        %v2224 = vpack.c.b16 %v1900, %v1891
        %v2225 = vpack.c.b16 %v1901, %v1892
        %v2226 = vpack.c.b16 %v1902, %v1893
        %v2227 = vpack.c.b16 %v1903, %v1894
        %v2228 = vpack.c.b16 %v1904, %v1895
        %v2229 = vpack.c.b16 %v1905, %v1896
        %v2230 = vpack.c.b16 %v1906, %v1897
        %v2231 = vpack.c.b16 %v1907, %v1898
        %v2232 = vpack.c.b16 %v1908, %v1899
        %v2233 = vpack.c.b16 %v1918, %v1909
        %v2234 = vpack.c.b16 %v1919, %v1910
        %v2235 = vpack.c.b16 %v1920, %v1911
        %v2236 = vpack.c.b16 %v1921, %v1912
        %v2237 = vpack.c.b16 %v1922, %v1913
        %v2238 = vpack.c.b16 %v1923, %v1914
        %v2239 = vpack.c.b16 %v1924, %v1915
        %v2240 = vpack.c.b16 %v1925, %v1916
        %v2241 = vpack.c.b16 %v1926, %v1917
        %v2242 = vpack.c.b16 %v1936, %v1927
        %v2243 = vpack.c.b16 %v1937, %v1928
        %v2244 = vpack.c.b16 %v1938, %v1929
        %v2245 = vpack.c.b16 %v1939, %v1930
        %v2246 = vpack.c.b16 %v1940, %v1931
        %v2247 = vpack.c.b16 %v1941, %v1932
        %v2248 = vpack.c.b16 %v1942, %v1933
        %v2249 = vpack.c.b16 %v1943, %v1934
        %v2250 = vpack.c.b16 %v1944, %v1935
        %v2251 = vpack.c.b16 %v1954, %v1945
        %v2252 = vpack.c.b16 %v1955, %v1946
        %v2253 = vpack.c.b16 %v1956, %v1947
        %v2254 = vpack.c.b16 %v1957, %v1948
        %v2255 = vpack.c.b16 %v1958, %v1949
        %v2256 = vpack.c.b16 %v1959, %v1950
        %v2257 = vpack.c.b16 %v1960, %v1951
        %v2258 = vpack.c.b16 %v1961, %v1952
        %v2259 = vpack.c.b16 %v1962, %v1953
        %v2260 = vpack.c.b16 %v1972, %v1963
        %v2261 = vpack.c.b16 %v1973, %v1964
        %v2262 = vpack.c.b16 %v1974, %v1965
        %v2263 = vpack.c.b16 %v1975, %v1966
        %v2264 = vpack.c.b16 %v1976, %v1967
        %v2265 = vpack.c.b16 %v1977, %v1968
        %v2266 = vpack.c.b16 %v1978, %v1969
        %v2267 = vpack.c.b16 %v1979, %v1970
        %v2268 = vpack.c.b16 %v1980, %v1971
        %v2269 = vpack.c.b16 %v1990, %v1981
        %v2270 = vpack.c.b16 %v1991, %v1982
        %v2271 = vpack.c.b16 %v1992, %v1983
        %v2272 = vpack.c.b16 %v1993, %v1984
        %v2273 = vpack.c.b16 %v1994, %v1985
        %v2274 = vpack.c.b16 %v1995, %v1986
        %v2275 = vpack.c.b16 %v1996, %v1987
        %v2276 = vpack.c.b16 %v1997, %v1988
        %v2277 = vpack.c.b16 %v1998, %v1989
        %v2278 = vpack.c.b16 %v2008, %v1999
        %v2279 = vpack.c.b16 %v2009, %v2000
        %v2280 = vpack.c.b16 %v2010, %v2001
        %v2281 = vpack.c.b16 %v2011, %v2002
        %v2282 = vpack.c.b16 %v2012, %v2003
        %v2283 = vpack.c.b16 %v2013, %v2004
        %v2284 = vpack.c.b16 %v2014, %v2005
        %v2285 = vpack.c.b16 %v2015, %v2006
        %v2286 = vpack.c.b16 %v2016, %v2007
        %v2287 = vpack.c.b16 %v2026, %v2017
        %v2288 = vpack.c.b16 %v2027, %v2018
        %v2289 = vpack.c.b16 %v2028, %v2019
        %v2290 = vpack.c.b16 %v2029, %v2020
        %v2291 = vpack.c.b16 %v2030, %v2021
        %v2292 = vpack.c.b16 %v2031, %v2022
        %v2293 = vpack.c.b16 %v2032, %v2023
        %v2294 = vpack.c.b16 %v2033, %v2024
        %v2295 = vpack.c.b16 %v2034, %v2025
        %v2296 = vpack.c.b16 %v2044, %v2035
        %v2297 = vpack.c.b16 %v2045, %v2036
        %v2298 = vpack.c.b16 %v2046, %v2037
        %v2299 = vpack.c.b16 %v2047, %v2038
        %v2300 = vpack.c.b16 %v2048, %v2039
        %v2301 = vpack.c.b16 %v2049, %v2040
        %v2302 = vpack.c.b16 %v2050, %v2041
        %v2303 = vpack.c.b16 %v2051, %v2042
        %v2304 = vpack.c.b16 %v2052, %v2043
        %v2305 = vpack.c.b16 %v2062, %v2053
        %v2306 = vpack.c.b16 %v2063, %v2054
        %v2307 = vpack.c.b16 %v2064, %v2055
        %v2308 = vpack.c.b16 %v2065, %v2056
        %v2309 = vpack.c.b16 %v2066, %v2057
        %v2310 = vpack.c.b16 %v2067, %v2058
        %v2311 = vpack.c.b16 %v2068, %v2059
        %v2312 = vpack.c.b16 %v2069, %v2060
        %v2313 = vpack.c.b16 %v2070, %v2061
        %v2314 = vpack.c.b16 %v2080, %v2071
        %v2315 = vpack.c.b16 %v2081, %v2072
        %v2316 = vpack.c.b16 %v2082, %v2073
        %v2317 = vpack.c.b16 %v2083, %v2074
        %v2318 = vpack.c.b16 %v2084, %v2075
        %v2319 = vpack.c.b16 %v2085, %v2076
        %v2320 = vpack.c.b16 %v2086, %v2077
        %v2321 = vpack.c.b16 %v2087, %v2078
        %v2322 = vpack.c.b16 %v2088, %v2079
        %v2323 = vpack.c.b16 %v2098, %v2089
        %v2324 = vpack.c.b16 %v2099, %v2090
        %v2325 = vpack.c.b16 %v2100, %v2091
        %v2326 = vpack.c.b16 %v2101, %v2092
        %v2327 = vpack.c.b16 %v2102, %v2093
        %v2328 = vpack.c.b16 %v2103, %v2094
        %v2329 = vpack.c.b16 %v2104, %v2095
        %v2330 = vpack.c.b16 %v2105, %v2096
        %v2331 = vpack.c.b16 %v2106, %v2097
        %v2332 = vpack.c.b16 %v2116, %v2107
        %v2333 = vpack.c.b16 %v2117, %v2108
        %v2334 = vpack.c.b16 %v2118, %v2109
        %v2335 = vpack.c.b16 %v2119, %v2110
        %v2336 = vpack.c.b16 %v2120, %v2111
        %v2337 = vpack.c.b16 %v2121, %v2112
        %v2338 = vpack.c.b16 %v2122, %v2113
        %v2339 = vpack.c.b16 %v2123, %v2114
        %v2340 = vpack.c.b16 %v2124, %v2115
        %2557 = vmatprep.subr.bf16.mxu0 %v2189
        %2558 = vmatpush1.bf16.msra.mxu0 %v2188
        %2559 = vmatprep.subr.bf16.mxu0 %v2180
        %2560 = vmatpush1.bf16.msra.mxu0 %v2179
        %2561 = vmatprep.subr.bf16.mxu0 %v2171
        %2562 = vmatpush1.bf16.msra.mxu0 %v2170
        %2563 = vmatprep.subr.bf16.mxu0 %v2162
        %2564 = vmatpush1.bf16.msra.mxu0 %v2161
        %2565 = vmatprep.subr.bf16.mxu0 %v2153
        %2566 = vmatpush1.bf16.msra.mxu0 %v2152
        %2567 = vmatprep.subr.bf16.mxu0 %v2144
        %2568 = vmatpush1.bf16.msra.mxu0 %v2143
        %2569 = vmatprep.subr.bf16.mxu0 %v2135
        %2570 = vmatpush1.bf16.msra.mxu0 %v2134
        %2571 = vmatprep.subr.bf16.mxu0 %v2126
        %2572 = vmatpush1.bf16.msra.mxu0 %v2125
        %2573 = vmatprep.subr.bf16.mxu0 %v2261
        %2574 = vmatpush2.bf16.msra.mxu0 %v2260
        %2575 = vmatprep.subr.bf16.mxu0 %v2252
        %2576 = vmatpush2.bf16.msra.mxu0 %v2251
        %2577 = vmatprep.subr.bf16.mxu0 %v2243
        %2578 = vmatpush2.bf16.msra.mxu0 %v2242
        %2579 = vmatprep.subr.bf16.mxu0 %v2234
        %2580 = vmatpush2.bf16.msra.mxu0 %v2233
        %2581 = vmatprep.subr.bf16.mxu0 %v2225
        %2582 = vmatpush2.bf16.msra.mxu0 %v2224
        %2583 = vmatprep.subr.bf16.mxu0 %v2216
        %2584 = vmatpush2.bf16.msra.mxu0 %v2215
        %2585 = vmatprep.subr.bf16.mxu0 %v2207
        %2586 = vmatpush2.bf16.msra.mxu0 %v2206
        %2587 = vmatprep.subr.bf16.mxu0 %v2198
        %2588 = vmatpush2.bf16.msra.mxu0 %v2197
        %2589 = vmatprep.mubr.bf16.mxu0 %v1208
        %2590 = vmatmul.mubr.bf16.gmra.mxu0 %v1207
        %v2591 = vpop.f32.mrf.mxu0
        %v2592 = vadd.f32 0.0, %v2591
        %v2593 = vpop.f32.mrf.mxu0
        %v2594 = vadd.f32 0.0, %v2593
        %v2595 = vpop.f32.mrf.mxu0
        %v2596 = vadd.f32 0.0, %v2595
        %v2597 = vpop.f32.mrf.mxu0
        %v2598 = vadd.f32 0.0, %v2597
        %2599 = vmatprep.mubr.bf16.mxu0 %v1211
        %2600 = vmatmul.mubr.bf16.gmra.mxu0 %v1210
        %v2601 = vpop.f32.mrf.mxu0
        %v2602 = vadd.f32 0.0, %v2601
        %v2603 = vpop.f32.mrf.mxu0
        %v2604 = vadd.f32 0.0, %v2603
        %v2605 = vpop.f32.mrf.mxu0
        %v2606 = vadd.f32 0.0, %v2605
        %v2607 = vpop.f32.mrf.mxu0
        %v2608 = vadd.f32 0.0, %v2607
        %2609 = vdwg.mxu0
        %2610 = vmatprep.subr.bf16.mxu0 %v2333
        %2611 = vmatpush1.bf16.msra.mxu0 %v2332
        %2612 = vmatprep.subr.bf16.mxu0 %v2324
        %2613 = vmatpush1.bf16.msra.mxu0 %v2323
        %2614 = vmatprep.subr.bf16.mxu0 %v2315
        %2615 = vmatpush1.bf16.msra.mxu0 %v2314
        %2616 = vmatprep.subr.bf16.mxu0 %v2306
        %2617 = vmatpush1.bf16.msra.mxu0 %v2305
        %2618 = vmatprep.subr.bf16.mxu0 %v2297
        %2619 = vmatpush1.bf16.msra.mxu0 %v2296
        %2620 = vmatprep.subr.bf16.mxu0 %v2288
        %2621 = vmatpush1.bf16.msra.mxu0 %v2287
        %2622 = vmatprep.subr.bf16.mxu0 %v2279
        %2623 = vmatpush1.bf16.msra.mxu0 %v2278
        %2624 = vmatprep.subr.bf16.mxu0 %v2270
        %2625 = vmatpush1.bf16.msra.mxu0 %v2269
        %2626 = vmatprep.subr.bf16.mxu0 0
        %2627 = vmatpush2.bf16.msra.mxu0 0
        %2628 = vmatprep.subr.bf16.mxu0 0
        %2629 = vmatpush2.bf16.msra.mxu0 0
        %2630 = vmatprep.subr.bf16.mxu0 0
        %2631 = vmatpush2.bf16.msra.mxu0 0
        %2632 = vmatprep.subr.bf16.mxu0 0
        %2633 = vmatpush2.bf16.msra.mxu0 0
        %2634 = vmatprep.subr.bf16.mxu0 0
        %2635 = vmatpush2.bf16.msra.mxu0 0
        %2636 = vmatprep.subr.bf16.mxu0 0
        %2637 = vmatpush2.bf16.msra.mxu0 0
        %2638 = vmatprep.subr.bf16.mxu0 0
        %2639 = vmatpush2.bf16.msra.mxu0 0
        %2640 = vmatprep.subr.bf16.mxu0 0
        %2641 = vmatpush2.bf16.msra.mxu0 0
        %2642 = vmatprep.mubr.bf16.mxu0 0
        %2643 = vmatmul.mubr.bf16.gmra.mxu0 %v1209
        %v2644 = vpop.f32.mrf.mxu0
        %v2645 = vadd.f32 %v2592, %v2644
        %v2646 = vpop.f32.mrf.mxu0
        %v2647 = vadd.f32 %v2594, %v2646
        %v2648 = vpop.f32.mrf.mxu0
        %v2649 = vadd.f32 %v2596, %v2648
        %v2650 = vpop.f32.mrf.mxu0
        %v2651 = vadd.f32 %v2598, %v2650
        %2652 = vmatprep.mubr.bf16.mxu0 0
        %2653 = vmatmul.mubr.bf16.gmra.mxu0 %v1212
        %v2654 = vpop.f32.mrf.mxu0
        %v2655 = vadd.f32 %v2602, %v2654
        %v2656 = vpop.f32.mrf.mxu0
        %v2657 = vadd.f32 %v2604, %v2656
        %v2658 = vpop.f32.mrf.mxu0
        %v2659 = vadd.f32 %v2606, %v2658
        %v2660 = vpop.f32.mrf.mxu0
        %v2661 = vadd.f32 %v2608, %v2660
        %2662 = vdwg.mxu0
        %2663 = vmatprep.subr.bf16.mxu0 %v2191
        %2664 = vmatpush1.bf16.msra.mxu0 %v2190
        %2665 = vmatprep.subr.bf16.mxu0 %v2182
        %2666 = vmatpush1.bf16.msra.mxu0 %v2181
        %2667 = vmatprep.subr.bf16.mxu0 %v2173
        %2668 = vmatpush1.bf16.msra.mxu0 %v2172
        %2669 = vmatprep.subr.bf16.mxu0 %v2164
        %2670 = vmatpush1.bf16.msra.mxu0 %v2163
        %2671 = vmatprep.subr.bf16.mxu0 %v2155
        %2672 = vmatpush1.bf16.msra.mxu0 %v2154
        %2673 = vmatprep.subr.bf16.mxu0 %v2146
        %2674 = vmatpush1.bf16.msra.mxu0 %v2145
        %2675 = vmatprep.subr.bf16.mxu0 %v2137
        %2676 = vmatpush1.bf16.msra.mxu0 %v2136
        %2677 = vmatprep.subr.bf16.mxu0 %v2128
        %2678 = vmatpush1.bf16.msra.mxu0 %v2127
        %2679 = vmatprep.subr.bf16.mxu0 %v2263
        %2680 = vmatpush2.bf16.msra.mxu0 %v2262
        %2681 = vmatprep.subr.bf16.mxu0 %v2254
        %2682 = vmatpush2.bf16.msra.mxu0 %v2253
        %2683 = vmatprep.subr.bf16.mxu0 %v2245
        %2684 = vmatpush2.bf16.msra.mxu0 %v2244
        %2685 = vmatprep.subr.bf16.mxu0 %v2236
        %2686 = vmatpush2.bf16.msra.mxu0 %v2235
        %2687 = vmatprep.subr.bf16.mxu0 %v2227
        %2688 = vmatpush2.bf16.msra.mxu0 %v2226
        %2689 = vmatprep.subr.bf16.mxu0 %v2218
        %2690 = vmatpush2.bf16.msra.mxu0 %v2217
        %2691 = vmatprep.subr.bf16.mxu0 %v2209
        %2692 = vmatpush2.bf16.msra.mxu0 %v2208
        %2693 = vmatprep.subr.bf16.mxu0 %v2200
        %2694 = vmatpush2.bf16.msra.mxu0 %v2199
        %2695 = vmatprep.mubr.bf16.mxu0 %v1208
        %2696 = vmatmul.mubr.bf16.gmra.mxu0 %v1207
        %v2697 = vpop.f32.mrf.mxu0
        %v2698 = vadd.f32 0.0, %v2697
        %v2699 = vpop.f32.mrf.mxu0
        %v2700 = vadd.f32 0.0, %v2699
        %v2701 = vpop.f32.mrf.mxu0
        %v2702 = vadd.f32 0.0, %v2701
        %v2703 = vpop.f32.mrf.mxu0
        %v2704 = vadd.f32 0.0, %v2703
        %2705 = vmatprep.mubr.bf16.mxu0 %v1211
        %2706 = vmatmul.mubr.bf16.gmra.mxu0 %v1210
        %v2707 = vpop.f32.mrf.mxu0
        %v2708 = vadd.f32 0.0, %v2707
        %v2709 = vpop.f32.mrf.mxu0
        %v2710 = vadd.f32 0.0, %v2709
        %v2711 = vpop.f32.mrf.mxu0
        %v2712 = vadd.f32 0.0, %v2711
        %v2713 = vpop.f32.mrf.mxu0
        %v2714 = vadd.f32 0.0, %v2713
        %2715 = vdwg.mxu0
        %2716 = vmatprep.subr.bf16.mxu0 %v2335
        %2717 = vmatpush1.bf16.msra.mxu0 %v2334
        %2718 = vmatprep.subr.bf16.mxu0 %v2326
        %2719 = vmatpush1.bf16.msra.mxu0 %v2325
        %2720 = vmatprep.subr.bf16.mxu0 %v2317
        %2721 = vmatpush1.bf16.msra.mxu0 %v2316
        %2722 = vmatprep.subr.bf16.mxu0 %v2308
        %2723 = vmatpush1.bf16.msra.mxu0 %v2307
        %2724 = vmatprep.subr.bf16.mxu0 %v2299
        %2725 = vmatpush1.bf16.msra.mxu0 %v2298
        %2726 = vmatprep.subr.bf16.mxu0 %v2290
        %2727 = vmatpush1.bf16.msra.mxu0 %v2289
        %2728 = vmatprep.subr.bf16.mxu0 %v2281
        %2729 = vmatpush1.bf16.msra.mxu0 %v2280
        %2730 = vmatprep.subr.bf16.mxu0 %v2272
        %2731 = vmatpush1.bf16.msra.mxu0 %v2271
        %2732 = vmatprep.subr.bf16.mxu0 0
        %2733 = vmatpush2.bf16.msra.mxu0 0
        %2734 = vmatprep.subr.bf16.mxu0 0
        %2735 = vmatpush2.bf16.msra.mxu0 0
        %2736 = vmatprep.subr.bf16.mxu0 0
        %2737 = vmatpush2.bf16.msra.mxu0 0
        %2738 = vmatprep.subr.bf16.mxu0 0
        %2739 = vmatpush2.bf16.msra.mxu0 0
        %2740 = vmatprep.subr.bf16.mxu0 0
        %2741 = vmatpush2.bf16.msra.mxu0 0
        %2742 = vmatprep.subr.bf16.mxu0 0
        %2743 = vmatpush2.bf16.msra.mxu0 0
        %2744 = vmatprep.subr.bf16.mxu0 0
        %2745 = vmatpush2.bf16.msra.mxu0 0
        %2746 = vmatprep.subr.bf16.mxu0 0
        %2747 = vmatpush2.bf16.msra.mxu0 0
        %2748 = vmatprep.mubr.bf16.mxu0 0
        %2749 = vmatmul.mubr.bf16.gmra.mxu0 %v1209
        %v2750 = vpop.f32.mrf.mxu0
        %v2751 = vadd.f32 %v2698, %v2750
        %v2752 = vpop.f32.mrf.mxu0
        %v2753 = vadd.f32 %v2700, %v2752
        %v2754 = vpop.f32.mrf.mxu0
        %v2755 = vadd.f32 %v2702, %v2754
        %v2756 = vpop.f32.mrf.mxu0
        %v2757 = vadd.f32 %v2704, %v2756
        %2758 = vmatprep.mubr.bf16.mxu0 0
        %2759 = vmatmul.mubr.bf16.gmra.mxu0 %v1212
        %v2760 = vpop.f32.mrf.mxu0
        %v2761 = vadd.f32 %v2708, %v2760
        %v2762 = vpop.f32.mrf.mxu0
        %v2763 = vadd.f32 %v2710, %v2762
        %v2764 = vpop.f32.mrf.mxu0
        %v2765 = vadd.f32 %v2712, %v2764
        %v2766 = vpop.f32.mrf.mxu0
        %v2767 = vadd.f32 %v2714, %v2766
        %2768 = vdwg.mxu0
        %2769 = vmatprep.subr.bf16.mxu0 %v2193
        %2770 = vmatpush1.bf16.msra.mxu0 %v2192
        %2771 = vmatprep.subr.bf16.mxu0 %v2184
        %2772 = vmatpush1.bf16.msra.mxu0 %v2183
        %2773 = vmatprep.subr.bf16.mxu0 %v2175
        %2774 = vmatpush1.bf16.msra.mxu0 %v2174
        %2775 = vmatprep.subr.bf16.mxu0 %v2166
        %2776 = vmatpush1.bf16.msra.mxu0 %v2165
        %2777 = vmatprep.subr.bf16.mxu0 %v2157
        %2778 = vmatpush1.bf16.msra.mxu0 %v2156
        %2779 = vmatprep.subr.bf16.mxu0 %v2148
        %2780 = vmatpush1.bf16.msra.mxu0 %v2147
        %2781 = vmatprep.subr.bf16.mxu0 %v2139
        %2782 = vmatpush1.bf16.msra.mxu0 %v2138
        %2783 = vmatprep.subr.bf16.mxu0 %v2130
        %2784 = vmatpush1.bf16.msra.mxu0 %v2129
        %2785 = vmatprep.subr.bf16.mxu0 %v2265
        %2786 = vmatpush2.bf16.msra.mxu0 %v2264
        %2787 = vmatprep.subr.bf16.mxu0 %v2256
        %2788 = vmatpush2.bf16.msra.mxu0 %v2255
        %2789 = vmatprep.subr.bf16.mxu0 %v2247
        %2790 = vmatpush2.bf16.msra.mxu0 %v2246
        %2791 = vmatprep.subr.bf16.mxu0 %v2238
        %2792 = vmatpush2.bf16.msra.mxu0 %v2237
        %2793 = vmatprep.subr.bf16.mxu0 %v2229
        %2794 = vmatpush2.bf16.msra.mxu0 %v2228
        %2795 = vmatprep.subr.bf16.mxu0 %v2220
        %2796 = vmatpush2.bf16.msra.mxu0 %v2219
        %2797 = vmatprep.subr.bf16.mxu0 %v2211
        %2798 = vmatpush2.bf16.msra.mxu0 %v2210
        %2799 = vmatprep.subr.bf16.mxu0 %v2202
        %2800 = vmatpush2.bf16.msra.mxu0 %v2201
        %2801 = vmatprep.mubr.bf16.mxu0 %v1208
        %2802 = vmatmul.mubr.bf16.gmra.mxu0 %v1207
        %v2803 = vpop.f32.mrf.mxu0
        %v2804 = vadd.f32 0.0, %v2803
        %v2805 = vpop.f32.mrf.mxu0
        %v2806 = vadd.f32 0.0, %v2805
        %v2807 = vpop.f32.mrf.mxu0
        %v2808 = vadd.f32 0.0, %v2807
        %v2809 = vpop.f32.mrf.mxu0
        %v2810 = vadd.f32 0.0, %v2809
        %2811 = vmatprep.mubr.bf16.mxu0 %v1211
        %2812 = vmatmul.mubr.bf16.gmra.mxu0 %v1210
        %v2813 = vpop.f32.mrf.mxu0
        %v2814 = vadd.f32 0.0, %v2813
        %v2815 = vpop.f32.mrf.mxu0
        %v2816 = vadd.f32 0.0, %v2815
        %v2817 = vpop.f32.mrf.mxu0
        %v2818 = vadd.f32 0.0, %v2817
        %v2819 = vpop.f32.mrf.mxu0
        %v2820 = vadd.f32 0.0, %v2819
        %2821 = vdwg.mxu0
        %2822 = vmatprep.subr.bf16.mxu0 %v2337
        %2823 = vmatpush1.bf16.msra.mxu0 %v2336
        %2824 = vmatprep.subr.bf16.mxu0 %v2328
        %2825 = vmatpush1.bf16.msra.mxu0 %v2327
        %2826 = vmatprep.subr.bf16.mxu0 %v2319
        %2827 = vmatpush1.bf16.msra.mxu0 %v2318
        %2828 = vmatprep.subr.bf16.mxu0 %v2310
        %2829 = vmatpush1.bf16.msra.mxu0 %v2309
        %2830 = vmatprep.subr.bf16.mxu0 %v2301
        %2831 = vmatpush1.bf16.msra.mxu0 %v2300
        %2832 = vmatprep.subr.bf16.mxu0 %v2292
        %2833 = vmatpush1.bf16.msra.mxu0 %v2291
        %2834 = vmatprep.subr.bf16.mxu0 %v2283
        %2835 = vmatpush1.bf16.msra.mxu0 %v2282
        %2836 = vmatprep.subr.bf16.mxu0 %v2274
        %2837 = vmatpush1.bf16.msra.mxu0 %v2273
        %2838 = vmatprep.subr.bf16.mxu0 0
        %2839 = vmatpush2.bf16.msra.mxu0 0
        %2840 = vmatprep.subr.bf16.mxu0 0
        %2841 = vmatpush2.bf16.msra.mxu0 0
        %2842 = vmatprep.subr.bf16.mxu0 0
        %2843 = vmatpush2.bf16.msra.mxu0 0
        %2844 = vmatprep.subr.bf16.mxu0 0
        %2845 = vmatpush2.bf16.msra.mxu0 0
        %2846 = vmatprep.subr.bf16.mxu0 0
        %2847 = vmatpush2.bf16.msra.mxu0 0
        %2848 = vmatprep.subr.bf16.mxu0 0
        %2849 = vmatpush2.bf16.msra.mxu0 0
        %2850 = vmatprep.subr.bf16.mxu0 0
        %2851 = vmatpush2.bf16.msra.mxu0 0
        %2852 = vmatprep.subr.bf16.mxu0 0
        %2853 = vmatpush2.bf16.msra.mxu0 0
        %2854 = vmatprep.mubr.bf16.mxu0 0
        %2855 = vmatmul.mubr.bf16.gmra.mxu0 %v1209
        %v2856 = vpop.f32.mrf.mxu0
        %v2857 = vadd.f32 %v2804, %v2856
        %v2858 = vpop.f32.mrf.mxu0
        %v2859 = vadd.f32 %v2806, %v2858
        %v2860 = vpop.f32.mrf.mxu0
        %v2861 = vadd.f32 %v2808, %v2860
        %v2862 = vpop.f32.mrf.mxu0
        %v2863 = vadd.f32 %v2810, %v2862
        %2864 = vmatprep.mubr.bf16.mxu0 0
        %2865 = vmatmul.mubr.bf16.gmra.mxu0 %v1212
        %v2866 = vpop.f32.mrf.mxu0
        %v2867 = vadd.f32 %v2814, %v2866
        %v2868 = vpop.f32.mrf.mxu0
        %v2869 = vadd.f32 %v2816, %v2868
        %v2870 = vpop.f32.mrf.mxu0
        %v2871 = vadd.f32 %v2818, %v2870
        %v2872 = vpop.f32.mrf.mxu0
        %v2873 = vadd.f32 %v2820, %v2872
        %2874 = vdwg.mxu0
        %2875 = vmatprep.subr.bf16.mxu0 %v2195
        %2876 = vmatpush1.bf16.msra.mxu0 %v2194
        %2877 = vmatprep.subr.bf16.mxu0 %v2186
        %2878 = vmatpush1.bf16.msra.mxu0 %v2185
        %2879 = vmatprep.subr.bf16.mxu0 %v2177
        %2880 = vmatpush1.bf16.msra.mxu0 %v2176
        %2881 = vmatprep.subr.bf16.mxu0 %v2168
        %2882 = vmatpush1.bf16.msra.mxu0 %v2167
        %2883 = vmatprep.subr.bf16.mxu0 %v2159
        %2884 = vmatpush1.bf16.msra.mxu0 %v2158
        %2885 = vmatprep.subr.bf16.mxu0 %v2150
        %2886 = vmatpush1.bf16.msra.mxu0 %v2149
        %2887 = vmatprep.subr.bf16.mxu0 %v2141
        %2888 = vmatpush1.bf16.msra.mxu0 %v2140
        %2889 = vmatprep.subr.bf16.mxu0 %v2132
        %2890 = vmatpush1.bf16.msra.mxu0 %v2131
        %2891 = vmatprep.subr.bf16.mxu0 %v2267
        %2892 = vmatpush2.bf16.msra.mxu0 %v2266
        %2893 = vmatprep.subr.bf16.mxu0 %v2258
        %2894 = vmatpush2.bf16.msra.mxu0 %v2257
        %2895 = vmatprep.subr.bf16.mxu0 %v2249
        %2896 = vmatpush2.bf16.msra.mxu0 %v2248
        %2897 = vmatprep.subr.bf16.mxu0 %v2240
        %2898 = vmatpush2.bf16.msra.mxu0 %v2239
        %2899 = vmatprep.subr.bf16.mxu0 %v2231
        %2900 = vmatpush2.bf16.msra.mxu0 %v2230
        %2901 = vmatprep.subr.bf16.mxu0 %v2222
        %2902 = vmatpush2.bf16.msra.mxu0 %v2221
        %2903 = vmatprep.subr.bf16.mxu0 %v2213
        %2904 = vmatpush2.bf16.msra.mxu0 %v2212
        %2905 = vmatprep.subr.bf16.mxu0 %v2204
        %2906 = vmatpush2.bf16.msra.mxu0 %v2203
        %2907 = vmatprep.mubr.bf16.mxu0 %v1208
        %2908 = vmatmul.mubr.bf16.gmra.mxu0 %v1207
        %v2909 = vpop.f32.mrf.mxu0
        %v2910 = vadd.f32 0.0, %v2909
        %v2911 = vpop.f32.mrf.mxu0
        %v2912 = vadd.f32 0.0, %v2911
        %v2913 = vpop.f32.mrf.mxu0
        %v2914 = vadd.f32 0.0, %v2913
        %v2915 = vpop.f32.mrf.mxu0
        %v2916 = vadd.f32 0.0, %v2915
        %2917 = vmatprep.mubr.bf16.mxu0 %v1211
        %2918 = vmatmul.mubr.bf16.gmra.mxu0 %v1210
        %v2919 = vpop.f32.mrf.mxu0
        %v2920 = vadd.f32 0.0, %v2919
        %v2921 = vpop.f32.mrf.mxu0
        %v2922 = vadd.f32 0.0, %v2921
        %v2923 = vpop.f32.mrf.mxu0
        %v2924 = vadd.f32 0.0, %v2923
        %v2925 = vpop.f32.mrf.mxu0
        %v2926 = vadd.f32 0.0, %v2925
        %2927 = vdwg.mxu0
        %2928 = vmatprep.subr.bf16.mxu0 %v2339
        %2929 = vmatpush1.bf16.msra.mxu0 %v2338
        %2930 = vmatprep.subr.bf16.mxu0 %v2330
        %2931 = vmatpush1.bf16.msra.mxu0 %v2329
        %2932 = vmatprep.subr.bf16.mxu0 %v2321
        %2933 = vmatpush1.bf16.msra.mxu0 %v2320
        %2934 = vmatprep.subr.bf16.mxu0 %v2312
        %2935 = vmatpush1.bf16.msra.mxu0 %v2311
        %2936 = vmatprep.subr.bf16.mxu0 %v2303
        %2937 = vmatpush1.bf16.msra.mxu0 %v2302
        %2938 = vmatprep.subr.bf16.mxu0 %v2294
        %2939 = vmatpush1.bf16.msra.mxu0 %v2293
        %2940 = vmatprep.subr.bf16.mxu0 %v2285
        %2941 = vmatpush1.bf16.msra.mxu0 %v2284
        %2942 = vmatprep.subr.bf16.mxu0 %v2276
        %2943 = vmatpush1.bf16.msra.mxu0 %v2275
        %2944 = vmatprep.subr.bf16.mxu0 0
        %2945 = vmatpush2.bf16.msra.mxu0 0
        %2946 = vmatprep.subr.bf16.mxu0 0
        %2947 = vmatpush2.bf16.msra.mxu0 0
        %2948 = vmatprep.subr.bf16.mxu0 0
        %2949 = vmatpush2.bf16.msra.mxu0 0
        %2950 = vmatprep.subr.bf16.mxu0 0
        %2951 = vmatpush2.bf16.msra.mxu0 0
        %2952 = vmatprep.subr.bf16.mxu0 0
        %2953 = vmatpush2.bf16.msra.mxu0 0
        %2954 = vmatprep.subr.bf16.mxu0 0
        %2955 = vmatpush2.bf16.msra.mxu0 0
        %2956 = vmatprep.subr.bf16.mxu0 0
        %2957 = vmatpush2.bf16.msra.mxu0 0
        %2958 = vmatprep.subr.bf16.mxu0 0
        %2959 = vmatpush2.bf16.msra.mxu0 0
        %2960 = vmatprep.mubr.bf16.mxu0 0
        %2961 = vmatmul.mubr.bf16.gmra.mxu0 %v1209
        %v2962 = vpop.f32.mrf.mxu0
        %v2963 = vadd.f32 %v2910, %v2962
        %v2964 = vpop.f32.mrf.mxu0
        %v2965 = vadd.f32 %v2912, %v2964
        %v2966 = vpop.f32.mrf.mxu0
        %v2967 = vadd.f32 %v2914, %v2966
        %v2968 = vpop.f32.mrf.mxu0
        %v2969 = vadd.f32 %v2916, %v2968
        %2970 = vmatprep.mubr.bf16.mxu0 0
        %2971 = vmatmul.mubr.bf16.gmra.mxu0 %v1212
        %v2972 = vpop.f32.mrf.mxu0
        %v2973 = vadd.f32 %v2920, %v2972
        %v2974 = vpop.f32.mrf.mxu0
        %v2975 = vadd.f32 %v2922, %v2974
        %v2976 = vpop.f32.mrf.mxu0
        %v2977 = vadd.f32 %v2924, %v2976
        %v2978 = vpop.f32.mrf.mxu0
        %v2979 = vadd.f32 %v2926, %v2978
        %2980 = vdwg.mxu0
        %2981 = vmatprep.subr.bf16.mxu0 0
        %2982 = vmatpush1.bf16.msra.mxu0 %v2196
        %2983 = vmatprep.subr.bf16.mxu0 0
        %2984 = vmatpush1.bf16.msra.mxu0 %v2187
        %2985 = vmatprep.subr.bf16.mxu0 0
        %2986 = vmatpush1.bf16.msra.mxu0 %v2178
        %2987 = vmatprep.subr.bf16.mxu0 0
        %2988 = vmatpush1.bf16.msra.mxu0 %v2169
        %2989 = vmatprep.subr.bf16.mxu0 0
        %2990 = vmatpush1.bf16.msra.mxu0 %v2160
        %2991 = vmatprep.subr.bf16.mxu0 0
        %2992 = vmatpush1.bf16.msra.mxu0 %v2151
        %2993 = vmatprep.subr.bf16.mxu0 0
        %2994 = vmatpush1.bf16.msra.mxu0 %v2142
        %2995 = vmatprep.subr.bf16.mxu0 0
        %2996 = vmatpush1.bf16.msra.mxu0 %v2133
        %2997 = vmatprep.subr.bf16.mxu0 0
        %2998 = vmatpush2.bf16.msra.mxu0 %v2268
        %2999 = vmatprep.subr.bf16.mxu0 0
        %3000 = vmatpush2.bf16.msra.mxu0 %v2259
        %3001 = vmatprep.subr.bf16.mxu0 0
        %3002 = vmatpush2.bf16.msra.mxu0 %v2250
        %3003 = vmatprep.subr.bf16.mxu0 0
        %3004 = vmatpush2.bf16.msra.mxu0 %v2241
        %3005 = vmatprep.subr.bf16.mxu0 0
        %3006 = vmatpush2.bf16.msra.mxu0 %v2232
        %3007 = vmatprep.subr.bf16.mxu0 0
        %3008 = vmatpush2.bf16.msra.mxu0 %v2223
        %3009 = vmatprep.subr.bf16.mxu0 0
        %3010 = vmatpush2.bf16.msra.mxu0 %v2214
        %3011 = vmatprep.subr.bf16.mxu0 0
        %3012 = vmatpush2.bf16.msra.mxu0 %v2205
        %3013 = vmatprep.mubr.bf16.mxu0 %v1208
        %3014 = vmatmul.mubr.bf16.gmra.mxu0 %v1207
        %v3015 = vpop.f32.mrf.mxu0
        %v3016 = vadd.f32 0.0, %v3015
        %v3017 = vpop.f32.mrf.mxu0
        %v3018 = vpop.f32.mrf.mxu0
        %v3019 = vadd.f32 0.0, %v3018
        %v3020 = vpop.f32.mrf.mxu0
        %3021 = vmatprep.mubr.bf16.mxu0 %v1211
        %3022 = vmatmul.mubr.bf16.gmra.mxu0 %v1210
        %v3023 = vpop.f32.mrf.mxu0
        %v3024 = vadd.f32 0.0, %v3023
        %v3025 = vpop.f32.mrf.mxu0
        %v3026 = vpop.f32.mrf.mxu0
        %v3027 = vadd.f32 0.0, %v3026
        %v3028 = vpop.f32.mrf.mxu0
        %3029 = vdwg.mxu0
        %3030 = vmatprep.subr.bf16.mxu0 0
        %3031 = vmatpush1.bf16.msra.mxu0 %v2340
        %3032 = vmatprep.subr.bf16.mxu0 0
        %3033 = vmatpush1.bf16.msra.mxu0 %v2331
        %3034 = vmatprep.subr.bf16.mxu0 0
        %3035 = vmatpush1.bf16.msra.mxu0 %v2322
        %3036 = vmatprep.subr.bf16.mxu0 0
        %3037 = vmatpush1.bf16.msra.mxu0 %v2313
        %3038 = vmatprep.subr.bf16.mxu0 0
        %3039 = vmatpush1.bf16.msra.mxu0 %v2304
        %3040 = vmatprep.subr.bf16.mxu0 0
        %3041 = vmatpush1.bf16.msra.mxu0 %v2295
        %3042 = vmatprep.subr.bf16.mxu0 0
        %3043 = vmatpush1.bf16.msra.mxu0 %v2286
        %3044 = vmatprep.subr.bf16.mxu0 0
        %3045 = vmatpush1.bf16.msra.mxu0 %v2277
        %3046 = vmatprep.subr.bf16.mxu0 0
        %3047 = vmatpush2.bf16.msra.mxu0 0
        %3048 = vmatprep.subr.bf16.mxu0 0
        %3049 = vmatpush2.bf16.msra.mxu0 0
        %3050 = vmatprep.subr.bf16.mxu0 0
        %3051 = vmatpush2.bf16.msra.mxu0 0
        %3052 = vmatprep.subr.bf16.mxu0 0
        %3053 = vmatpush2.bf16.msra.mxu0 0
        %3054 = vmatprep.subr.bf16.mxu0 0
        %3055 = vmatpush2.bf16.msra.mxu0 0
        %3056 = vmatprep.subr.bf16.mxu0 0
        %3057 = vmatpush2.bf16.msra.mxu0 0
        %3058 = vmatprep.subr.bf16.mxu0 0
        %3059 = vmatpush2.bf16.msra.mxu0 0
        %3060 = vmatprep.subr.bf16.mxu0 0
        %3061 = vmatpush2.bf16.msra.mxu0 0
        %3062 = vmatprep.mubr.bf16.mxu0 0
        %3063 = vmatmul.mubr.bf16.gmra.mxu0 %v1209
        %v3064 = vpop.f32.mrf.mxu0
        %v3065 = vadd.f32 %v3016, %v3064
        %v3066 = vpop.f32.mrf.mxu0
        %v3067 = vpop.f32.mrf.mxu0
        %v3068 = vadd.f32 %v3019, %v3067
        %v3069 = vpop.f32.mrf.mxu0
        %3070 = vmatprep.mubr.bf16.mxu0 0
        %3071 = vmatmul.mubr.bf16.gmra.mxu0 %v1212
        %v3072 = vpop.f32.mrf.mxu0
        %v3073 = vadd.f32 %v3024, %v3072
        %v3074 = vpop.f32.mrf.mxu0
        %v3075 = vpop.f32.mrf.mxu0
        %v3076 = vadd.f32 %v3027, %v3075
        %v3077 = vpop.f32.mrf.mxu0
        %3078 = vdwg.mxu0
        %v3079 = vpack.c.bf16 %v2649, %v2645
        %v3080 = vpack.c.bf16 %v2659, %v2655
        %v3081 = vpack.c.bf16 %v2757, %v2753
        %v3082 = vpack.c.bf16 %v2767, %v2763
        %v3083 = vpack.c.bf16 %v2967, %v2963
        %v3084 = vpack.c.bf16 %v2977, %v2973
        %vm3085 = vcmask 523264
        %v3087 = vsel %vm3085, %v3079, 0
        %v3090 = vsel %vm3085, %v3081, 0
        %3092 = vmatprep.subr.bf16.mxu0 0
        %3093 = vmatpush1.bf16.xpose.msra.mxu0 0
        %3094 = vmatprep.subr.bf16.mxu0 0
        %3095 = vmatpush1.bf16.xpose.msra.mxu0 0
        %3096 = vmatprep.subr.bf16.mxu0 0
        %3097 = vmatpush1.bf16.xpose.msra.mxu0 0
        %3098 = vmatprep.subr.bf16.mxu0 0
        %3099 = vmatpush1.bf16.xpose.msra.mxu0 0
        %3100 = vmatprep.subr.bf16.mxu0 0
        %3101 = vmatpush1.bf16.xpose.msra.mxu0 0
        %3102 = vmatprep.subr.bf16.mxu0 0
        %3103 = vmatpush1.bf16.xpose.msra.mxu0 0
        %3104 = vmatprep.subr.bf16.mxu0 0
        %3105 = vmatpush1.bf16.xpose.msra.mxu0 0
        %3106 = vmatprep.subr.bf16.mxu0 0
        %3107 = vmatpush1.bf16.xpose.msra.mxu0 %v3090
        %3108 = vmatprep.subr.bf16.mxu0 0
        %3109 = vmatpush2.bf16.xpose.msra.mxu0 0
        %3110 = vmatprep.subr.bf16.mxu0 0
        %3111 = vmatpush2.bf16.xpose.msra.mxu0 0
        %3112 = vmatprep.subr.bf16.mxu0 0
        %3113 = vmatpush2.bf16.xpose.msra.mxu0 0
        %3114 = vmatprep.subr.bf16.mxu0 0
        %3115 = vmatpush2.bf16.xpose.msra.mxu0 0
        %3116 = vmatprep.subr.bf16.mxu0 0
        %3117 = vmatpush2.bf16.xpose.msra.mxu0 0
        %3118 = vmatprep.subr.bf16.mxu0 0
        %3119 = vmatpush2.bf16.xpose.msra.mxu0 0
        %3120 = vmatprep.subr.bf16.mxu0 0
        %3121 = vmatpush2.bf16.xpose.msra.mxu0 0
        %3122 = vmatprep.subr.bf16.mxu0 0
        %3123 = vmatpush2.bf16.xpose.msra.mxu0 0
        %3124 = vmatprep.mubr.bf16.mxu0 0
        %3125 = vmatmul.mubr.bf16.gmra.mxu0 %v3087
        %v3126 = vpop.f32.mrf.mxu0
        %v3127 = vadd.f32 %v1062, %v3126
        %v3128 = vpop.f32.mrf.mxu0
        %v3129 = vpop.f32.mrf.mxu0
        %v3130 = vadd.f32 %v1063, %v3129
        %v3131 = vpop.f32.mrf.mxu0
        %3132 = vdwg.mxu0
        %v3134 = vsel %vm3085, %v3080, 0
        %v3137 = vsel %vm3085, %v3082, 0
        %3139 = vmatprep.subr.bf16.mxu0 0
        %3140 = vmatpush1.bf16.xpose.msra.mxu0 0
        %3141 = vmatprep.subr.bf16.mxu0 0
        %3142 = vmatpush1.bf16.xpose.msra.mxu0 0
        %3143 = vmatprep.subr.bf16.mxu0 0
        %3144 = vmatpush1.bf16.xpose.msra.mxu0 0
        %3145 = vmatprep.subr.bf16.mxu0 0
        %3146 = vmatpush1.bf16.xpose.msra.mxu0 0
        %3147 = vmatprep.subr.bf16.mxu0 0
        %3148 = vmatpush1.bf16.xpose.msra.mxu0 0
        %3149 = vmatprep.subr.bf16.mxu0 0
        %3150 = vmatpush1.bf16.xpose.msra.mxu0 0
        %3151 = vmatprep.subr.bf16.mxu0 0
        %3152 = vmatpush1.bf16.xpose.msra.mxu0 0
        %3153 = vmatprep.subr.bf16.mxu0 0
        %3154 = vmatpush1.bf16.xpose.msra.mxu0 %v3137
        %3155 = vmatprep.subr.bf16.mxu0 0
        %3156 = vmatpush2.bf16.xpose.msra.mxu0 0
        %3157 = vmatprep.subr.bf16.mxu0 0
        %3158 = vmatpush2.bf16.xpose.msra.mxu0 0
        %3159 = vmatprep.subr.bf16.mxu0 0
        %3160 = vmatpush2.bf16.xpose.msra.mxu0 0
        %3161 = vmatprep.subr.bf16.mxu0 0
        %3162 = vmatpush2.bf16.xpose.msra.mxu0 0
        %3163 = vmatprep.subr.bf16.mxu0 0
        %3164 = vmatpush2.bf16.xpose.msra.mxu0 0
        %3165 = vmatprep.subr.bf16.mxu0 0
        %3166 = vmatpush2.bf16.xpose.msra.mxu0 0
        %3167 = vmatprep.subr.bf16.mxu0 0
        %3168 = vmatpush2.bf16.xpose.msra.mxu0 0
        %3169 = vmatprep.subr.bf16.mxu0 0
        %3170 = vmatpush2.bf16.xpose.msra.mxu0 0
        %3171 = vmatprep.mubr.bf16.mxu0 0
        %3172 = vmatmul.mubr.bf16.gmra.mxu0 %v3134
        %v3173 = vpop.f32.mrf.mxu0
        %v3174 = vadd.f32 %v1062, %v3173
        %v3175 = vpop.f32.mrf.mxu0
        %v3176 = vpop.f32.mrf.mxu0
        %v3177 = vadd.f32 %v1063, %v3176
        %v3178 = vpop.f32.mrf.mxu0
        %3179 = vdwg.mxu0
        %vm3180 = vcmask 130048
        %v3181 = vsel %vm3180, %v3127, -inf
        %3182 = vmax.xlane.f32.xlu0 %v3181
        %v3183 = vpop.xlane.xlu0 %3182
        %v3184 = vsel %vm3180, %v3130, -inf
        %3185 = vmax.xlane.f32.xlu0 %v3184
        %v3186 = vpop.xlane.xlu0 %3185
        %v3187 = vsel %vm3180, %v3174, -inf
        %3188 = vmax.xlane.f32.xlu0 %v3187
        %v3189 = vpop.xlane.xlu0 %3188
        %v3190 = vsel %vm3180, %v3177, -inf
        %3191 = vmax.xlane.f32.xlu0 %v3190
        %v3192 = vpop.xlane.xlu0 %3191
        %v3193 = vsub.f32 %v3127, %v3183
        %v3194 = vsub.f32 %v3130, %v3186
        %v3195 = vsub.f32 %v3174, %v3189
        %v3196 = vsub.f32 %v3177, %v3192
        %v3197 = vmul.f32 %v3193, 1.442695
        %v3198 = vpow.pop %v3197
        %v3199 = vmul.f32 %v3194, 1.442695
        %v3200 = vpow.pop %v3199
        %v3201 = vmul.f32 %v3195, 1.442695
        %v3202 = vpow.pop %v3201
        %v3203 = vmul.f32 %v3196, 1.442695
        %v3204 = vpow.pop %v3203
        %v3205 = vsel %vm3180, %v3198, 0.0
        %3206 = vadd.xlane.f32.xlu0 %v3205
        %v3207 = vpop.xlane.xlu0 %3206
        %v3208 = vsel %vm3180, %v3200, 0.0
        %3209 = vadd.xlane.f32.xlu0 %v3208
        %v3210 = vpop.xlane.xlu0 %3209
        %v3211 = vsel %vm3180, %v3202, 0.0
        %3212 = vadd.xlane.f32.xlu0 %v3211
        %v3213 = vpop.xlane.xlu0 %3212
        %v3214 = vsel %vm3180, %v3204, 0.0
        %3215 = vadd.xlane.f32.xlu0 %v3214
        %v3216 = vpop.xlane.xlu0 %3215
        %v3217 = vrcp.pop %v3207
        %v3218 = vrcp.pop %v3210
        %v3219 = vrcp.pop %v3213
        %v3220 = vrcp.pop %v3216
        %v3221 = vmul.f32 %v3198, %v3217
        %v3222 = vmul.f32 %v3200, %v3218
        %v3223 = vmul.f32 %v3202, %v3219
        %v3224 = vmul.f32 %v3204, %v3220
        %v3225 = vpack.c.bf16 %v3222, %v3221
        %v3226 = vpack.c.bf16 %v3224, %v3223
        %v3228 = vsel %vm3180, %v3225, 0
        %3230 = vmatprep.subr.bf16.mxu0 0
        %3231 = vmatpush1.bf16.msra.mxu0 0
        %3232 = vmatprep.subr.bf16.mxu0 0
        %3233 = vmatpush1.bf16.msra.mxu0 0
        %3234 = vmatprep.subr.bf16.mxu0 0
        %3235 = vmatpush1.bf16.msra.mxu0 0
        %3236 = vmatprep.subr.bf16.mxu0 0
        %3237 = vmatpush1.bf16.msra.mxu0 0
        %3238 = vmatprep.subr.bf16.mxu0 0
        %3239 = vmatpush1.bf16.msra.mxu0 0
        %3240 = vmatprep.subr.bf16.mxu0 0
        %3241 = vmatpush1.bf16.msra.mxu0 0
        %3242 = vmatprep.subr.bf16.mxu0 0
        %3243 = vmatpush1.bf16.msra.mxu0 0
        %3244 = vmatprep.subr.bf16.mxu0 0
        %3245 = vmatpush1.bf16.msra.mxu0 %v3083
        %3246 = vmatprep.subr.bf16.mxu0 0
        %3247 = vmatpush2.bf16.msra.mxu0 0
        %3248 = vmatprep.subr.bf16.mxu0 0
        %3249 = vmatpush2.bf16.msra.mxu0 0
        %3250 = vmatprep.subr.bf16.mxu0 0
        %3251 = vmatpush2.bf16.msra.mxu0 0
        %3252 = vmatprep.subr.bf16.mxu0 0
        %3253 = vmatpush2.bf16.msra.mxu0 0
        %3254 = vmatprep.subr.bf16.mxu0 0
        %3255 = vmatpush2.bf16.msra.mxu0 0
        %3256 = vmatprep.subr.bf16.mxu0 0
        %3257 = vmatpush2.bf16.msra.mxu0 0
        %3258 = vmatprep.subr.bf16.mxu0 0
        %3259 = vmatpush2.bf16.msra.mxu0 0
        %3260 = vmatprep.subr.bf16.mxu0 0
        %3261 = vmatpush2.bf16.msra.mxu0 0
        %3262 = vmatprep.mubr.bf16.mxu0 0
        %3263 = vmatmul.mubr.bf16.gmra.mxu0 %v3228
        %v3264 = vpop.f32.mrf.mxu0
        %v3265 = vadd.f32 0.0, %v3264
        %v3266 = vpop.f32.mrf.mxu0
        %v3267 = vpop.f32.mrf.mxu0
        %v3268 = vadd.f32 0.0, %v3267
        %v3269 = vpop.f32.mrf.mxu0
        %3270 = vdwg.mxu0
        %v3272 = vsel %vm3180, %v3226, 0
        %3274 = vmatprep.subr.bf16.mxu0 0
        %3275 = vmatpush1.bf16.msra.mxu0 0
        %3276 = vmatprep.subr.bf16.mxu0 0
        %3277 = vmatpush1.bf16.msra.mxu0 0
        %3278 = vmatprep.subr.bf16.mxu0 0
        %3279 = vmatpush1.bf16.msra.mxu0 0
        %3280 = vmatprep.subr.bf16.mxu0 0
        %3281 = vmatpush1.bf16.msra.mxu0 0
        %3282 = vmatprep.subr.bf16.mxu0 0
        %3283 = vmatpush1.bf16.msra.mxu0 0
        %3284 = vmatprep.subr.bf16.mxu0 0
        %3285 = vmatpush1.bf16.msra.mxu0 0
        %3286 = vmatprep.subr.bf16.mxu0 0
        %3287 = vmatpush1.bf16.msra.mxu0 0
        %3288 = vmatprep.subr.bf16.mxu0 0
        %3289 = vmatpush1.bf16.msra.mxu0 %v3084
        %3290 = vmatprep.subr.bf16.mxu0 0
        %3291 = vmatpush2.bf16.msra.mxu0 0
        %3292 = vmatprep.subr.bf16.mxu0 0
        %3293 = vmatpush2.bf16.msra.mxu0 0
        %3294 = vmatprep.subr.bf16.mxu0 0
        %3295 = vmatpush2.bf16.msra.mxu0 0
        %3296 = vmatprep.subr.bf16.mxu0 0
        %3297 = vmatpush2.bf16.msra.mxu0 0
        %3298 = vmatprep.subr.bf16.mxu0 0
        %3299 = vmatpush2.bf16.msra.mxu0 0
        %3300 = vmatprep.subr.bf16.mxu0 0
        %3301 = vmatpush2.bf16.msra.mxu0 0
        %3302 = vmatprep.subr.bf16.mxu0 0
        %3303 = vmatpush2.bf16.msra.mxu0 0
        %3304 = vmatprep.subr.bf16.mxu0 0
        %3305 = vmatpush2.bf16.msra.mxu0 0
        %3306 = vmatprep.mubr.bf16.mxu0 0
        %3307 = vmatmul.mubr.bf16.gmra.mxu0 %v3272
        %v3308 = vpop.f32.mrf.mxu0
        %v3309 = vadd.f32 0.0, %v3308
        %v3310 = vpop.f32.mrf.mxu0
        %v3311 = vpop.f32.mrf.mxu0
        %v3312 = vadd.f32 0.0, %v3311
        %v3313 = vpop.f32.mrf.mxu0
        %3314 = vdwg.mxu0
        %3316 = vrot.lane.b32.xlu0 %v3079, 64
        %v3317 = vpop.permute.xlu0 %3316
        %3319 = vrot.lane.b32.xlu0 %v3081, 64
        %v3320 = vpop.permute.xlu0 %3319
        %v3322 = vsel %vm3085, %v3317, 0
        %v3325 = vsel %vm3085, %v3320, 0
        %3327 = vmatprep.subr.bf16.mxu0 0
        %3328 = vmatpush1.bf16.xpose.msra.mxu0 0
        %3329 = vmatprep.subr.bf16.mxu0 0
        %3330 = vmatpush1.bf16.xpose.msra.mxu0 0
        %3331 = vmatprep.subr.bf16.mxu0 0
        %3332 = vmatpush1.bf16.xpose.msra.mxu0 0
        %3333 = vmatprep.subr.bf16.mxu0 0
        %3334 = vmatpush1.bf16.xpose.msra.mxu0 0
        %3335 = vmatprep.subr.bf16.mxu0 0
        %3336 = vmatpush1.bf16.xpose.msra.mxu0 0
        %3337 = vmatprep.subr.bf16.mxu0 0
        %3338 = vmatpush1.bf16.xpose.msra.mxu0 0
        %3339 = vmatprep.subr.bf16.mxu0 0
        %3340 = vmatpush1.bf16.xpose.msra.mxu0 0
        %3341 = vmatprep.subr.bf16.mxu0 0
        %3342 = vmatpush1.bf16.xpose.msra.mxu0 %v3325
        %3343 = vmatprep.subr.bf16.mxu0 0
        %3344 = vmatpush2.bf16.xpose.msra.mxu0 0
        %3345 = vmatprep.subr.bf16.mxu0 0
        %3346 = vmatpush2.bf16.xpose.msra.mxu0 0
        %3347 = vmatprep.subr.bf16.mxu0 0
        %3348 = vmatpush2.bf16.xpose.msra.mxu0 0
        %3349 = vmatprep.subr.bf16.mxu0 0
        %3350 = vmatpush2.bf16.xpose.msra.mxu0 0
        %3351 = vmatprep.subr.bf16.mxu0 0
        %3352 = vmatpush2.bf16.xpose.msra.mxu0 0
        %3353 = vmatprep.subr.bf16.mxu0 0
        %3354 = vmatpush2.bf16.xpose.msra.mxu0 0
        %3355 = vmatprep.subr.bf16.mxu0 0
        %3356 = vmatpush2.bf16.xpose.msra.mxu0 0
        %3357 = vmatprep.subr.bf16.mxu0 0
        %3358 = vmatpush2.bf16.xpose.msra.mxu0 0
        %3359 = vmatprep.mubr.bf16.mxu0 0
        %3360 = vmatmul.mubr.bf16.gmra.mxu0 %v3322
        %v3361 = vpop.f32.mrf.mxu0
        %v3362 = vadd.f32 %v1062, %v3361
        %v3363 = vpop.f32.mrf.mxu0
        %v3364 = vpop.f32.mrf.mxu0
        %v3365 = vadd.f32 %v1063, %v3364
        %v3366 = vpop.f32.mrf.mxu0
        %3367 = vdwg.mxu0
        %3369 = vrot.lane.b32.xlu0 %v3080, 64
        %v3370 = vpop.permute.xlu0 %3369
        %3372 = vrot.lane.b32.xlu0 %v3082, 64
        %v3373 = vpop.permute.xlu0 %3372
        %v3375 = vsel %vm3085, %v3370, 0
        %v3378 = vsel %vm3085, %v3373, 0
        %3380 = vmatprep.subr.bf16.mxu0 0
        %3381 = vmatpush1.bf16.xpose.msra.mxu0 0
        %3382 = vmatprep.subr.bf16.mxu0 0
        %3383 = vmatpush1.bf16.xpose.msra.mxu0 0
        %3384 = vmatprep.subr.bf16.mxu0 0
        %3385 = vmatpush1.bf16.xpose.msra.mxu0 0
        %3386 = vmatprep.subr.bf16.mxu0 0
        %3387 = vmatpush1.bf16.xpose.msra.mxu0 0
        %3388 = vmatprep.subr.bf16.mxu0 0
        %3389 = vmatpush1.bf16.xpose.msra.mxu0 0
        %3390 = vmatprep.subr.bf16.mxu0 0
        %3391 = vmatpush1.bf16.xpose.msra.mxu0 0
        %3392 = vmatprep.subr.bf16.mxu0 0
        %3393 = vmatpush1.bf16.xpose.msra.mxu0 0
        %3394 = vmatprep.subr.bf16.mxu0 0
        %3395 = vmatpush1.bf16.xpose.msra.mxu0 %v3378
        %3396 = vmatprep.subr.bf16.mxu0 0
        %3397 = vmatpush2.bf16.xpose.msra.mxu0 0
        %3398 = vmatprep.subr.bf16.mxu0 0
        %3399 = vmatpush2.bf16.xpose.msra.mxu0 0
        %3400 = vmatprep.subr.bf16.mxu0 0
        %3401 = vmatpush2.bf16.xpose.msra.mxu0 0
        %3402 = vmatprep.subr.bf16.mxu0 0
        %3403 = vmatpush2.bf16.xpose.msra.mxu0 0
        %3404 = vmatprep.subr.bf16.mxu0 0
        %3405 = vmatpush2.bf16.xpose.msra.mxu0 0
        %3406 = vmatprep.subr.bf16.mxu0 0
        %3407 = vmatpush2.bf16.xpose.msra.mxu0 0
        %3408 = vmatprep.subr.bf16.mxu0 0
        %3409 = vmatpush2.bf16.xpose.msra.mxu0 0
        %3410 = vmatprep.subr.bf16.mxu0 0
        %3411 = vmatpush2.bf16.xpose.msra.mxu0 0
        %3412 = vmatprep.mubr.bf16.mxu0 0
        %3413 = vmatmul.mubr.bf16.gmra.mxu0 %v3375
        %v3414 = vpop.f32.mrf.mxu0
        %v3415 = vadd.f32 %v1062, %v3414
        %v3416 = vpop.f32.mrf.mxu0
        %v3417 = vpop.f32.mrf.mxu0
        %v3418 = vadd.f32 %v1063, %v3417
        %v3419 = vpop.f32.mrf.mxu0
        %3420 = vdwg.mxu0
        %v3421 = vsel %vm3180, %v3362, -inf
        %3422 = vmax.xlane.f32.xlu0 %v3421
        %v3423 = vpop.xlane.xlu0 %3422
        %v3424 = vsel %vm3180, %v3365, -inf
        %3425 = vmax.xlane.f32.xlu0 %v3424
        %v3426 = vpop.xlane.xlu0 %3425
        %v3427 = vsel %vm3180, %v3415, -inf
        %3428 = vmax.xlane.f32.xlu0 %v3427
        %v3429 = vpop.xlane.xlu0 %3428
        %v3430 = vsel %vm3180, %v3418, -inf
        %3431 = vmax.xlane.f32.xlu0 %v3430
        %v3432 = vpop.xlane.xlu0 %3431
        %v3433 = vsub.f32 %v3362, %v3423
        %v3434 = vsub.f32 %v3365, %v3426
        %v3435 = vsub.f32 %v3415, %v3429
        %v3436 = vsub.f32 %v3418, %v3432
        %v3437 = vmul.f32 %v3433, 1.442695
        %v3438 = vpow.pop %v3437
        %v3439 = vmul.f32 %v3434, 1.442695
        %v3440 = vpow.pop %v3439
        %v3441 = vmul.f32 %v3435, 1.442695
        %v3442 = vpow.pop %v3441
        %v3443 = vmul.f32 %v3436, 1.442695
        %v3444 = vpow.pop %v3443
        %v3445 = vsel %vm3180, %v3438, 0.0
        %3446 = vadd.xlane.f32.xlu0 %v3445
        %v3447 = vpop.xlane.xlu0 %3446
        %v3448 = vsel %vm3180, %v3440, 0.0
        %3449 = vadd.xlane.f32.xlu0 %v3448
        %v3450 = vpop.xlane.xlu0 %3449
        %v3451 = vsel %vm3180, %v3442, 0.0
        %3452 = vadd.xlane.f32.xlu0 %v3451
        %v3453 = vpop.xlane.xlu0 %3452
        %v3454 = vsel %vm3180, %v3444, 0.0
        %3455 = vadd.xlane.f32.xlu0 %v3454
        %v3456 = vpop.xlane.xlu0 %3455
        %v3457 = vrcp.pop %v3447
        %v3458 = vrcp.pop %v3450
        %v3459 = vrcp.pop %v3453
        %v3460 = vrcp.pop %v3456
        %v3461 = vmul.f32 %v3438, %v3457
        %v3462 = vmul.f32 %v3440, %v3458
        %v3463 = vmul.f32 %v3442, %v3459
        %v3464 = vmul.f32 %v3444, %v3460
        %v3465 = vpack.c.bf16 %v3462, %v3461
        %v3466 = vpack.c.bf16 %v3464, %v3463
        %3468 = vrot.lane.b32.xlu0 %v3083, 64
        %v3469 = vpop.permute.xlu0 %3468
        %v3472 = vsel %vm3180, %v3465, 0
        %3474 = vmatprep.subr.bf16.mxu0 0
        %3475 = vmatpush1.bf16.msra.mxu0 0
        %3476 = vmatprep.subr.bf16.mxu0 0
        %3477 = vmatpush1.bf16.msra.mxu0 0
        %3478 = vmatprep.subr.bf16.mxu0 0
        %3479 = vmatpush1.bf16.msra.mxu0 0
        %3480 = vmatprep.subr.bf16.mxu0 0
        %3481 = vmatpush1.bf16.msra.mxu0 0
        %3482 = vmatprep.subr.bf16.mxu0 0
        %3483 = vmatpush1.bf16.msra.mxu0 0
        %3484 = vmatprep.subr.bf16.mxu0 0
        %3485 = vmatpush1.bf16.msra.mxu0 0
        %3486 = vmatprep.subr.bf16.mxu0 0
        %3487 = vmatpush1.bf16.msra.mxu0 0
        %3488 = vmatprep.subr.bf16.mxu0 0
        %3489 = vmatpush1.bf16.msra.mxu0 %v3469
        %3490 = vmatprep.subr.bf16.mxu0 0
        %3491 = vmatpush2.bf16.msra.mxu0 0
        %3492 = vmatprep.subr.bf16.mxu0 0
        %3493 = vmatpush2.bf16.msra.mxu0 0
        %3494 = vmatprep.subr.bf16.mxu0 0
        %3495 = vmatpush2.bf16.msra.mxu0 0
        %3496 = vmatprep.subr.bf16.mxu0 0
        %3497 = vmatpush2.bf16.msra.mxu0 0
        %3498 = vmatprep.subr.bf16.mxu0 0
        %3499 = vmatpush2.bf16.msra.mxu0 0
        %3500 = vmatprep.subr.bf16.mxu0 0
        %3501 = vmatpush2.bf16.msra.mxu0 0
        %3502 = vmatprep.subr.bf16.mxu0 0
        %3503 = vmatpush2.bf16.msra.mxu0 0
        %3504 = vmatprep.subr.bf16.mxu0 0
        %3505 = vmatpush2.bf16.msra.mxu0 0
        %3506 = vmatprep.mubr.bf16.mxu0 0
        %3507 = vmatmul.mubr.bf16.gmra.mxu0 %v3472
        %v3508 = vpop.f32.mrf.mxu0
        %v3509 = vadd.f32 0.0, %v3508
        %v3510 = vpop.f32.mrf.mxu0
        %v3511 = vpop.f32.mrf.mxu0
        %v3512 = vadd.f32 0.0, %v3511
        %v3513 = vpop.f32.mrf.mxu0
        %3514 = vdwg.mxu0
        %3516 = vrot.lane.b32.xlu0 %v3084, 64
        %v3517 = vpop.permute.xlu0 %3516
        %v3520 = vsel %vm3180, %v3466, 0
        %3522 = vmatprep.subr.bf16.mxu0 0
        %3523 = vmatpush1.bf16.msra.mxu0 0
        %3524 = vmatprep.subr.bf16.mxu0 0
        %3525 = vmatpush1.bf16.msra.mxu0 0
        %3526 = vmatprep.subr.bf16.mxu0 0
        %3527 = vmatpush1.bf16.msra.mxu0 0
        %3528 = vmatprep.subr.bf16.mxu0 0
        %3529 = vmatpush1.bf16.msra.mxu0 0
        %3530 = vmatprep.subr.bf16.mxu0 0
        %3531 = vmatpush1.bf16.msra.mxu0 0
        %3532 = vmatprep.subr.bf16.mxu0 0
        %3533 = vmatpush1.bf16.msra.mxu0 0
        %3534 = vmatprep.subr.bf16.mxu0 0
        %3535 = vmatpush1.bf16.msra.mxu0 0
        %3536 = vmatprep.subr.bf16.mxu0 0
        %3537 = vmatpush1.bf16.msra.mxu0 %v3517
        %3538 = vmatprep.subr.bf16.mxu0 0
        %3539 = vmatpush2.bf16.msra.mxu0 0
        %3540 = vmatprep.subr.bf16.mxu0 0
        %3541 = vmatpush2.bf16.msra.mxu0 0
        %3542 = vmatprep.subr.bf16.mxu0 0
        %3543 = vmatpush2.bf16.msra.mxu0 0
        %3544 = vmatprep.subr.bf16.mxu0 0
        %3545 = vmatpush2.bf16.msra.mxu0 0
        %3546 = vmatprep.subr.bf16.mxu0 0
        %3547 = vmatpush2.bf16.msra.mxu0 0
        %3548 = vmatprep.subr.bf16.mxu0 0
        %3549 = vmatpush2.bf16.msra.mxu0 0
        %3550 = vmatprep.subr.bf16.mxu0 0
        %3551 = vmatpush2.bf16.msra.mxu0 0
        %3552 = vmatprep.subr.bf16.mxu0 0
        %3553 = vmatpush2.bf16.msra.mxu0 0
        %3554 = vmatprep.mubr.bf16.mxu0 0
        %3555 = vmatmul.mubr.bf16.gmra.mxu0 %v3520
        %v3556 = vpop.f32.mrf.mxu0
        %v3557 = vadd.f32 0.0, %v3556
        %v3558 = vpop.f32.mrf.mxu0
        %v3559 = vpop.f32.mrf.mxu0
        %v3560 = vadd.f32 0.0, %v3559
        %v3561 = vpop.f32.mrf.mxu0
        %3562 = vdwg.mxu0
        %3567 = vrot.lane.b32.xlu0 %v3509, 64
        %v3568 = vpop.permute.xlu0 %3567
        %3569 = vrot.lane.b32.xlu0 %v3512, 64
        %v3570 = vpop.permute.xlu0 %3569
        %3571 = vrot.lane.b32.xlu0 %v3557, 64
        %v3572 = vpop.permute.xlu0 %3571
        %3573 = vrot.lane.b32.xlu0 %v3560, 64
        %v3574 = vpop.permute.xlu0 %3573
        %v3579 = vsel %vm3085, %v3265, %v3568
        %v3580 = vsel %vm3085, %v3268, %v3570
        %v3581 = vsel %vm3085, %v3309, %v3572
        %v3582 = vsel %vm3085, %v3312, %v3574
        %v3583 = vpack.c.bf16 %v3580, %v3579
        %v3584 = vpack.c.bf16 %v3582, %v3581
        %v3587 = vunpack.c.l.b16 %v3583
        %v3588 = vunpack.c.h.b16 %v3583
        %v3589 = vunpack.c.l.b16 %v3584
        %v3590 = vunpack.c.h.b16 %v3584
        %v3591 = vpack.c.b16 %v3587, %v3587
        %v3592 = vpack.c.b16 %v3588, %v3588
        %v3593 = vpack.c.b16 %v3589, %v3589
        %v3594 = vpack.c.b16 %v3590, %v3590
        %3599 = vst [vmem:[#allocation3] sm:$0xf] %v3591
        %3600 = vst [vmem:[#allocation3 + $0xc] sm:$0xf] %v3592
        %3601 = vst [vmem:[#allocation3 + $0x18] sm:$0xf] %v3593
        %3602 = vst [vmem:[#allocation3 + $0x24] sm:$0xf] %v3594
        %v3603 = vpack.c.bf16 %v2651, %v2647
        %v3604 = vpack.c.bf16 %v2661, %v2657
        %v3605 = vpack.c.bf16 %v2861, %v2857
        %v3606 = vpack.c.bf16 %v2871, %v2867
        %v3607 = vpack.c.bf16 %v2969, %v2965
        %v3608 = vpack.c.bf16 %v2979, %v2975
        %v3610 = vsel %vm3085, %v3603, 0
        %v3613 = vsel %vm3085, %v3605, 0
        %3615 = vmatprep.subr.bf16.mxu0 0
        %3616 = vmatpush1.bf16.xpose.msra.mxu0 0
        %3617 = vmatprep.subr.bf16.mxu0 0
        %3618 = vmatpush1.bf16.xpose.msra.mxu0 0
        %3619 = vmatprep.subr.bf16.mxu0 0
        %3620 = vmatpush1.bf16.xpose.msra.mxu0 0
        %3621 = vmatprep.subr.bf16.mxu0 0
        %3622 = vmatpush1.bf16.xpose.msra.mxu0 0
        %3623 = vmatprep.subr.bf16.mxu0 0
        %3624 = vmatpush1.bf16.xpose.msra.mxu0 0
        %3625 = vmatprep.subr.bf16.mxu0 0
        %3626 = vmatpush1.bf16.xpose.msra.mxu0 0
        %3627 = vmatprep.subr.bf16.mxu0 0
        %3628 = vmatpush1.bf16.xpose.msra.mxu0 0
        %3629 = vmatprep.subr.bf16.mxu0 0
        %3630 = vmatpush1.bf16.xpose.msra.mxu0 %v3613
        %3631 = vmatprep.subr.bf16.mxu0 0
        %3632 = vmatpush2.bf16.xpose.msra.mxu0 0
        %3633 = vmatprep.subr.bf16.mxu0 0
        %3634 = vmatpush2.bf16.xpose.msra.mxu0 0
        %3635 = vmatprep.subr.bf16.mxu0 0
        %3636 = vmatpush2.bf16.xpose.msra.mxu0 0
        %3637 = vmatprep.subr.bf16.mxu0 0
        %3638 = vmatpush2.bf16.xpose.msra.mxu0 0
        %3639 = vmatprep.subr.bf16.mxu0 0
        %3640 = vmatpush2.bf16.xpose.msra.mxu0 0
        %3641 = vmatprep.subr.bf16.mxu0 0
        %3642 = vmatpush2.bf16.xpose.msra.mxu0 0
        %3643 = vmatprep.subr.bf16.mxu0 0
        %3644 = vmatpush2.bf16.xpose.msra.mxu0 0
        %3645 = vmatprep.subr.bf16.mxu0 0
        %3646 = vmatpush2.bf16.xpose.msra.mxu0 0
        %3647 = vmatprep.mubr.bf16.mxu0 0
        %3648 = vmatmul.mubr.bf16.gmra.mxu0 %v3610
        %v3649 = vpop.f32.mrf.mxu0
        %v3650 = vadd.f32 %v1062, %v3649
        %v3651 = vpop.f32.mrf.mxu0
        %v3652 = vpop.f32.mrf.mxu0
        %v3653 = vadd.f32 %v1063, %v3652
        %v3654 = vpop.f32.mrf.mxu0
        %3655 = vdwg.mxu0
        %v3657 = vsel %vm3085, %v3604, 0
        %v3660 = vsel %vm3085, %v3606, 0
        %3662 = vmatprep.subr.bf16.mxu0 0
        %3663 = vmatpush1.bf16.xpose.msra.mxu0 0
        %3664 = vmatprep.subr.bf16.mxu0 0
        %3665 = vmatpush1.bf16.xpose.msra.mxu0 0
        %3666 = vmatprep.subr.bf16.mxu0 0
        %3667 = vmatpush1.bf16.xpose.msra.mxu0 0
        %3668 = vmatprep.subr.bf16.mxu0 0
        %3669 = vmatpush1.bf16.xpose.msra.mxu0 0
        %3670 = vmatprep.subr.bf16.mxu0 0
        %3671 = vmatpush1.bf16.xpose.msra.mxu0 0
        %3672 = vmatprep.subr.bf16.mxu0 0
        %3673 = vmatpush1.bf16.xpose.msra.mxu0 0
        %3674 = vmatprep.subr.bf16.mxu0 0
        %3675 = vmatpush1.bf16.xpose.msra.mxu0 0
        %3676 = vmatprep.subr.bf16.mxu0 0
        %3677 = vmatpush1.bf16.xpose.msra.mxu0 %v3660
        %3678 = vmatprep.subr.bf16.mxu0 0
        %3679 = vmatpush2.bf16.xpose.msra.mxu0 0
        %3680 = vmatprep.subr.bf16.mxu0 0
        %3681 = vmatpush2.bf16.xpose.msra.mxu0 0
        %3682 = vmatprep.subr.bf16.mxu0 0
        %3683 = vmatpush2.bf16.xpose.msra.mxu0 0
        %3684 = vmatprep.subr.bf16.mxu0 0
        %3685 = vmatpush2.bf16.xpose.msra.mxu0 0
        %3686 = vmatprep.subr.bf16.mxu0 0
        %3687 = vmatpush2.bf16.xpose.msra.mxu0 0
        %3688 = vmatprep.subr.bf16.mxu0 0
        %3689 = vmatpush2.bf16.xpose.msra.mxu0 0
        %3690 = vmatprep.subr.bf16.mxu0 0
        %3691 = vmatpush2.bf16.xpose.msra.mxu0 0
        %3692 = vmatprep.subr.bf16.mxu0 0
        %3693 = vmatpush2.bf16.xpose.msra.mxu0 0
        %3694 = vmatprep.mubr.bf16.mxu0 0
        %3695 = vmatmul.mubr.bf16.gmra.mxu0 %v3657
        %v3696 = vpop.f32.mrf.mxu0
        %v3697 = vadd.f32 %v1062, %v3696
        %v3698 = vpop.f32.mrf.mxu0
        %v3699 = vpop.f32.mrf.mxu0
        %v3700 = vadd.f32 %v1063, %v3699
        %v3701 = vpop.f32.mrf.mxu0
        %3702 = vdwg.mxu0
        %v3703 = vsel %vm3180, %v3650, -inf
        %3704 = vmax.xlane.f32.xlu0 %v3703
        %v3705 = vpop.xlane.xlu0 %3704
        %v3706 = vsel %vm3180, %v3653, -inf
        %3707 = vmax.xlane.f32.xlu0 %v3706
        %v3708 = vpop.xlane.xlu0 %3707
        %v3709 = vsel %vm3180, %v3697, -inf
        %3710 = vmax.xlane.f32.xlu0 %v3709
        %v3711 = vpop.xlane.xlu0 %3710
        %v3712 = vsel %vm3180, %v3700, -inf
        %3713 = vmax.xlane.f32.xlu0 %v3712
        %v3714 = vpop.xlane.xlu0 %3713
        %v3715 = vsub.f32 %v3650, %v3705
        %v3716 = vsub.f32 %v3653, %v3708
        %v3717 = vsub.f32 %v3697, %v3711
        %v3718 = vsub.f32 %v3700, %v3714
        %v3719 = vmul.f32 %v3715, 1.442695
        %v3720 = vpow.pop %v3719
        %v3721 = vmul.f32 %v3716, 1.442695
        %v3722 = vpow.pop %v3721
        %v3723 = vmul.f32 %v3717, 1.442695
        %v3724 = vpow.pop %v3723
        %v3725 = vmul.f32 %v3718, 1.442695
        %v3726 = vpow.pop %v3725
        %v3727 = vsel %vm3180, %v3720, 0.0
        %3728 = vadd.xlane.f32.xlu0 %v3727
        %v3729 = vpop.xlane.xlu0 %3728
        %v3730 = vsel %vm3180, %v3722, 0.0
        %3731 = vadd.xlane.f32.xlu0 %v3730
        %v3732 = vpop.xlane.xlu0 %3731
        %v3733 = vsel %vm3180, %v3724, 0.0
        %3734 = vadd.xlane.f32.xlu0 %v3733
        %v3735 = vpop.xlane.xlu0 %3734
        %v3736 = vsel %vm3180, %v3726, 0.0
        %3737 = vadd.xlane.f32.xlu0 %v3736
        %v3738 = vpop.xlane.xlu0 %3737
        %v3739 = vrcp.pop %v3729
        %v3740 = vrcp.pop %v3732
        %v3741 = vrcp.pop %v3735
        %v3742 = vrcp.pop %v3738
        %v3743 = vmul.f32 %v3720, %v3739
        %v3744 = vmul.f32 %v3722, %v3740
        %v3745 = vmul.f32 %v3724, %v3741
        %v3746 = vmul.f32 %v3726, %v3742
        %v3747 = vpack.c.bf16 %v3744, %v3743
        %v3748 = vpack.c.bf16 %v3746, %v3745
        %v3750 = vsel %vm3180, %v3747, 0
        %3752 = vmatprep.subr.bf16.mxu0 0
        %3753 = vmatpush1.bf16.msra.mxu0 0
        %3754 = vmatprep.subr.bf16.mxu0 0
        %3755 = vmatpush1.bf16.msra.mxu0 0
        %3756 = vmatprep.subr.bf16.mxu0 0
        %3757 = vmatpush1.bf16.msra.mxu0 0
        %3758 = vmatprep.subr.bf16.mxu0 0
        %3759 = vmatpush1.bf16.msra.mxu0 0
        %3760 = vmatprep.subr.bf16.mxu0 0
        %3761 = vmatpush1.bf16.msra.mxu0 0
        %3762 = vmatprep.subr.bf16.mxu0 0
        %3763 = vmatpush1.bf16.msra.mxu0 0
        %3764 = vmatprep.subr.bf16.mxu0 0
        %3765 = vmatpush1.bf16.msra.mxu0 0
        %3766 = vmatprep.subr.bf16.mxu0 0
        %3767 = vmatpush1.bf16.msra.mxu0 %v3607
        %3768 = vmatprep.subr.bf16.mxu0 0
        %3769 = vmatpush2.bf16.msra.mxu0 0
        %3770 = vmatprep.subr.bf16.mxu0 0
        %3771 = vmatpush2.bf16.msra.mxu0 0
        %3772 = vmatprep.subr.bf16.mxu0 0
        %3773 = vmatpush2.bf16.msra.mxu0 0
        %3774 = vmatprep.subr.bf16.mxu0 0
        %3775 = vmatpush2.bf16.msra.mxu0 0
        %3776 = vmatprep.subr.bf16.mxu0 0
        %3777 = vmatpush2.bf16.msra.mxu0 0
        %3778 = vmatprep.subr.bf16.mxu0 0
        %3779 = vmatpush2.bf16.msra.mxu0 0
        %3780 = vmatprep.subr.bf16.mxu0 0
        %3781 = vmatpush2.bf16.msra.mxu0 0
        %3782 = vmatprep.subr.bf16.mxu0 0
        %3783 = vmatpush2.bf16.msra.mxu0 0
        %3784 = vmatprep.mubr.bf16.mxu0 0
        %3785 = vmatmul.mubr.bf16.gmra.mxu0 %v3750
        %v3786 = vpop.f32.mrf.mxu0
        %v3787 = vadd.f32 0.0, %v3786
        %v3788 = vpop.f32.mrf.mxu0
        %v3789 = vpop.f32.mrf.mxu0
        %v3790 = vadd.f32 0.0, %v3789
        %v3791 = vpop.f32.mrf.mxu0
        %3792 = vdwg.mxu0
        %v3794 = vsel %vm3180, %v3748, 0
        %3796 = vmatprep.subr.bf16.mxu0 0
        %3797 = vmatpush1.bf16.msra.mxu0 0
        %3798 = vmatprep.subr.bf16.mxu0 0
        %3799 = vmatpush1.bf16.msra.mxu0 0
        %3800 = vmatprep.subr.bf16.mxu0 0
        %3801 = vmatpush1.bf16.msra.mxu0 0
        %3802 = vmatprep.subr.bf16.mxu0 0
        %3803 = vmatpush1.bf16.msra.mxu0 0
        %3804 = vmatprep.subr.bf16.mxu0 0
        %3805 = vmatpush1.bf16.msra.mxu0 0
        %3806 = vmatprep.subr.bf16.mxu0 0
        %3807 = vmatpush1.bf16.msra.mxu0 0
        %3808 = vmatprep.subr.bf16.mxu0 0
        %3809 = vmatpush1.bf16.msra.mxu0 0
        %3810 = vmatprep.subr.bf16.mxu0 0
        %3811 = vmatpush1.bf16.msra.mxu0 %v3608
        %3812 = vmatprep.subr.bf16.mxu0 0
        %3813 = vmatpush2.bf16.msra.mxu0 0
        %3814 = vmatprep.subr.bf16.mxu0 0
        %3815 = vmatpush2.bf16.msra.mxu0 0
        %3816 = vmatprep.subr.bf16.mxu0 0
        %3817 = vmatpush2.bf16.msra.mxu0 0
        %3818 = vmatprep.subr.bf16.mxu0 0
        %3819 = vmatpush2.bf16.msra.mxu0 0
        %3820 = vmatprep.subr.bf16.mxu0 0
        %3821 = vmatpush2.bf16.msra.mxu0 0
        %3822 = vmatprep.subr.bf16.mxu0 0
        %3823 = vmatpush2.bf16.msra.mxu0 0
        %3824 = vmatprep.subr.bf16.mxu0 0
        %3825 = vmatpush2.bf16.msra.mxu0 0
        %3826 = vmatprep.subr.bf16.mxu0 0
        %3827 = vmatpush2.bf16.msra.mxu0 0
        %3828 = vmatprep.mubr.bf16.mxu0 0
        %3829 = vmatmul.mubr.bf16.gmra.mxu0 %v3794
        %v3830 = vpop.f32.mrf.mxu0
        %v3831 = vadd.f32 0.0, %v3830
        %v3832 = vpop.f32.mrf.mxu0
        %v3833 = vpop.f32.mrf.mxu0
        %v3834 = vadd.f32 0.0, %v3833
        %v3835 = vpop.f32.mrf.mxu0
        %3836 = vdwg.mxu0
        %3838 = vrot.lane.b32.xlu0 %v3603, 64
        %v3839 = vpop.permute.xlu0 %3838
        %3841 = vrot.lane.b32.xlu0 %v3605, 64
        %v3842 = vpop.permute.xlu0 %3841
        %v3844 = vsel %vm3085, %v3839, 0
        %v3847 = vsel %vm3085, %v3842, 0
        %3849 = vmatprep.subr.bf16.mxu0 0
        %3850 = vmatpush1.bf16.xpose.msra.mxu0 0
        %3851 = vmatprep.subr.bf16.mxu0 0
        %3852 = vmatpush1.bf16.xpose.msra.mxu0 0
        %3853 = vmatprep.subr.bf16.mxu0 0
        %3854 = vmatpush1.bf16.xpose.msra.mxu0 0
        %3855 = vmatprep.subr.bf16.mxu0 0
        %3856 = vmatpush1.bf16.xpose.msra.mxu0 0
        %3857 = vmatprep.subr.bf16.mxu0 0
        %3858 = vmatpush1.bf16.xpose.msra.mxu0 0
        %3859 = vmatprep.subr.bf16.mxu0 0
        %3860 = vmatpush1.bf16.xpose.msra.mxu0 0
        %3861 = vmatprep.subr.bf16.mxu0 0
        %3862 = vmatpush1.bf16.xpose.msra.mxu0 0
        %3863 = vmatprep.subr.bf16.mxu0 0
        %3864 = vmatpush1.bf16.xpose.msra.mxu0 %v3847
        %3865 = vmatprep.subr.bf16.mxu0 0
        %3866 = vmatpush2.bf16.xpose.msra.mxu0 0
        %3867 = vmatprep.subr.bf16.mxu0 0
        %3868 = vmatpush2.bf16.xpose.msra.mxu0 0
        %3869 = vmatprep.subr.bf16.mxu0 0
        %3870 = vmatpush2.bf16.xpose.msra.mxu0 0
        %3871 = vmatprep.subr.bf16.mxu0 0
        %3872 = vmatpush2.bf16.xpose.msra.mxu0 0
        %3873 = vmatprep.subr.bf16.mxu0 0
        %3874 = vmatpush2.bf16.xpose.msra.mxu0 0
        %3875 = vmatprep.subr.bf16.mxu0 0
        %3876 = vmatpush2.bf16.xpose.msra.mxu0 0
        %3877 = vmatprep.subr.bf16.mxu0 0
        %3878 = vmatpush2.bf16.xpose.msra.mxu0 0
        %3879 = vmatprep.subr.bf16.mxu0 0
        %3880 = vmatpush2.bf16.xpose.msra.mxu0 0
        %3881 = vmatprep.mubr.bf16.mxu0 0
        %3882 = vmatmul.mubr.bf16.gmra.mxu0 %v3844
        %v3883 = vpop.f32.mrf.mxu0
        %v3884 = vadd.f32 %v1062, %v3883
        %v3885 = vpop.f32.mrf.mxu0
        %v3886 = vpop.f32.mrf.mxu0
        %v3887 = vadd.f32 %v1063, %v3886
        %v3888 = vpop.f32.mrf.mxu0
        %3889 = vdwg.mxu0
        %3891 = vrot.lane.b32.xlu0 %v3604, 64
        %v3892 = vpop.permute.xlu0 %3891
        %3894 = vrot.lane.b32.xlu0 %v3606, 64
        %v3895 = vpop.permute.xlu0 %3894
        %v3897 = vsel %vm3085, %v3892, 0
        %v3900 = vsel %vm3085, %v3895, 0
        %3902 = vmatprep.subr.bf16.mxu0 0
        %3903 = vmatpush1.bf16.xpose.msra.mxu0 0
        %3904 = vmatprep.subr.bf16.mxu0 0
        %3905 = vmatpush1.bf16.xpose.msra.mxu0 0
        %3906 = vmatprep.subr.bf16.mxu0 0
        %3907 = vmatpush1.bf16.xpose.msra.mxu0 0
        %3908 = vmatprep.subr.bf16.mxu0 0
        %3909 = vmatpush1.bf16.xpose.msra.mxu0 0
        %3910 = vmatprep.subr.bf16.mxu0 0
        %3911 = vmatpush1.bf16.xpose.msra.mxu0 0
        %3912 = vmatprep.subr.bf16.mxu0 0
        %3913 = vmatpush1.bf16.xpose.msra.mxu0 0
        %3914 = vmatprep.subr.bf16.mxu0 0
        %3915 = vmatpush1.bf16.xpose.msra.mxu0 0
        %3916 = vmatprep.subr.bf16.mxu0 0
        %3917 = vmatpush1.bf16.xpose.msra.mxu0 %v3900
        %3918 = vmatprep.subr.bf16.mxu0 0
        %3919 = vmatpush2.bf16.xpose.msra.mxu0 0
        %3920 = vmatprep.subr.bf16.mxu0 0
        %3921 = vmatpush2.bf16.xpose.msra.mxu0 0
        %3922 = vmatprep.subr.bf16.mxu0 0
        %3923 = vmatpush2.bf16.xpose.msra.mxu0 0
        %3924 = vmatprep.subr.bf16.mxu0 0
        %3925 = vmatpush2.bf16.xpose.msra.mxu0 0
        %3926 = vmatprep.subr.bf16.mxu0 0
        %3927 = vmatpush2.bf16.xpose.msra.mxu0 0
        %3928 = vmatprep.subr.bf16.mxu0 0
        %3929 = vmatpush2.bf16.xpose.msra.mxu0 0
        %3930 = vmatprep.subr.bf16.mxu0 0
        %3931 = vmatpush2.bf16.xpose.msra.mxu0 0
        %3932 = vmatprep.subr.bf16.mxu0 0
        %3933 = vmatpush2.bf16.xpose.msra.mxu0 0
        %3934 = vmatprep.mubr.bf16.mxu0 0
        %3935 = vmatmul.mubr.bf16.gmra.mxu0 %v3897
        %v3936 = vpop.f32.mrf.mxu0
        %v3937 = vadd.f32 %v1062, %v3936
        %v3938 = vpop.f32.mrf.mxu0
        %v3939 = vpop.f32.mrf.mxu0
        %v3940 = vadd.f32 %v1063, %v3939
        %v3941 = vpop.f32.mrf.mxu0
        %3942 = vdwg.mxu0
        %v3943 = vsel %vm3180, %v3884, -inf
        %3944 = vmax.xlane.f32.xlu0 %v3943
        %v3945 = vpop.xlane.xlu0 %3944
        %v3946 = vsel %vm3180, %v3887, -inf
        %3947 = vmax.xlane.f32.xlu0 %v3946
        %v3948 = vpop.xlane.xlu0 %3947
        %v3949 = vsel %vm3180, %v3937, -inf
        %3950 = vmax.xlane.f32.xlu0 %v3949
        %v3951 = vpop.xlane.xlu0 %3950
        %v3952 = vsel %vm3180, %v3940, -inf
        %3953 = vmax.xlane.f32.xlu0 %v3952
        %v3954 = vpop.xlane.xlu0 %3953
        %v3955 = vsub.f32 %v3884, %v3945
        %v3956 = vsub.f32 %v3887, %v3948
        %v3957 = vsub.f32 %v3937, %v3951
        %v3958 = vsub.f32 %v3940, %v3954
        %v3959 = vmul.f32 %v3955, 1.442695
        %v3960 = vpow.pop %v3959
        %v3961 = vmul.f32 %v3956, 1.442695
        %v3962 = vpow.pop %v3961
        %v3963 = vmul.f32 %v3957, 1.442695
        %v3964 = vpow.pop %v3963
        %v3965 = vmul.f32 %v3958, 1.442695
        %v3966 = vpow.pop %v3965
        %v3967 = vsel %vm3180, %v3960, 0.0
        %3968 = vadd.xlane.f32.xlu0 %v3967
        %v3969 = vpop.xlane.xlu0 %3968
        %v3970 = vsel %vm3180, %v3962, 0.0
        %3971 = vadd.xlane.f32.xlu0 %v3970
        %v3972 = vpop.xlane.xlu0 %3971
        %v3973 = vsel %vm3180, %v3964, 0.0
        %3974 = vadd.xlane.f32.xlu0 %v3973
        %v3975 = vpop.xlane.xlu0 %3974
        %v3976 = vsel %vm3180, %v3966, 0.0
        %3977 = vadd.xlane.f32.xlu0 %v3976
        %v3978 = vpop.xlane.xlu0 %3977
        %v3979 = vrcp.pop %v3969
        %v3980 = vrcp.pop %v3972
        %v3981 = vrcp.pop %v3975
        %v3982 = vrcp.pop %v3978
        %v3983 = vmul.f32 %v3960, %v3979
        %v3984 = vmul.f32 %v3962, %v3980
        %v3985 = vmul.f32 %v3964, %v3981
        %v3986 = vmul.f32 %v3966, %v3982
        %v3987 = vpack.c.bf16 %v3984, %v3983
        %v3988 = vpack.c.bf16 %v3986, %v3985
        %3990 = vrot.lane.b32.xlu0 %v3607, 64
        %v3991 = vpop.permute.xlu0 %3990
        %v3994 = vsel %vm3180, %v3987, 0
        %3996 = vmatprep.subr.bf16.mxu0 0
        %3997 = vmatpush1.bf16.msra.mxu0 0
        %3998 = vmatprep.subr.bf16.mxu0 0
        %3999 = vmatpush1.bf16.msra.mxu0 0
        %4000 = vmatprep.subr.bf16.mxu0 0
        %4001 = vmatpush1.bf16.msra.mxu0 0
        %4002 = vmatprep.subr.bf16.mxu0 0
        %4003 = vmatpush1.bf16.msra.mxu0 0
        %4004 = vmatprep.subr.bf16.mxu0 0
        %4005 = vmatpush1.bf16.msra.mxu0 0
        %4006 = vmatprep.subr.bf16.mxu0 0
        %4007 = vmatpush1.bf16.msra.mxu0 0
        %4008 = vmatprep.subr.bf16.mxu0 0
        %4009 = vmatpush1.bf16.msra.mxu0 0
        %4010 = vmatprep.subr.bf16.mxu0 0
        %4011 = vmatpush1.bf16.msra.mxu0 %v3991
        %4012 = vmatprep.subr.bf16.mxu0 0
        %4013 = vmatpush2.bf16.msra.mxu0 0
        %4014 = vmatprep.subr.bf16.mxu0 0
        %4015 = vmatpush2.bf16.msra.mxu0 0
        %4016 = vmatprep.subr.bf16.mxu0 0
        %4017 = vmatpush2.bf16.msra.mxu0 0
        %4018 = vmatprep.subr.bf16.mxu0 0
        %4019 = vmatpush2.bf16.msra.mxu0 0
        %4020 = vmatprep.subr.bf16.mxu0 0
        %4021 = vmatpush2.bf16.msra.mxu0 0
        %4022 = vmatprep.subr.bf16.mxu0 0
        %4023 = vmatpush2.bf16.msra.mxu0 0
        %4024 = vmatprep.subr.bf16.mxu0 0
        %4025 = vmatpush2.bf16.msra.mxu0 0
        %4026 = vmatprep.subr.bf16.mxu0 0
        %4027 = vmatpush2.bf16.msra.mxu0 0
        %4028 = vmatprep.mubr.bf16.mxu0 0
        %4029 = vmatmul.mubr.bf16.gmra.mxu0 %v3994
        %v4030 = vpop.f32.mrf.mxu0
        %v4031 = vadd.f32 0.0, %v4030
        %v4032 = vpop.f32.mrf.mxu0
        %v4033 = vpop.f32.mrf.mxu0
        %v4034 = vadd.f32 0.0, %v4033
        %v4035 = vpop.f32.mrf.mxu0
        %4036 = vdwg.mxu0
        %4038 = vrot.lane.b32.xlu0 %v3608, 64
        %v4039 = vpop.permute.xlu0 %4038
        %v4042 = vsel %vm3180, %v3988, 0
        %4044 = vmatprep.subr.bf16.mxu0 0
        %4045 = vmatpush1.bf16.msra.mxu0 0
        %4046 = vmatprep.subr.bf16.mxu0 0
        %4047 = vmatpush1.bf16.msra.mxu0 0
        %4048 = vmatprep.subr.bf16.mxu0 0
        %4049 = vmatpush1.bf16.msra.mxu0 0
        %4050 = vmatprep.subr.bf16.mxu0 0
        %4051 = vmatpush1.bf16.msra.mxu0 0
        %4052 = vmatprep.subr.bf16.mxu0 0
        %4053 = vmatpush1.bf16.msra.mxu0 0
        %4054 = vmatprep.subr.bf16.mxu0 0
        %4055 = vmatpush1.bf16.msra.mxu0 0
        %4056 = vmatprep.subr.bf16.mxu0 0
        %4057 = vmatpush1.bf16.msra.mxu0 0
        %4058 = vmatprep.subr.bf16.mxu0 0
        %4059 = vmatpush1.bf16.msra.mxu0 %v4039
        %4060 = vmatprep.subr.bf16.mxu0 0
        %4061 = vmatpush2.bf16.msra.mxu0 0
        %4062 = vmatprep.subr.bf16.mxu0 0
        %4063 = vmatpush2.bf16.msra.mxu0 0
        %4064 = vmatprep.subr.bf16.mxu0 0
        %4065 = vmatpush2.bf16.msra.mxu0 0
        %4066 = vmatprep.subr.bf16.mxu0 0
        %4067 = vmatpush2.bf16.msra.mxu0 0
        %4068 = vmatprep.subr.bf16.mxu0 0
        %4069 = vmatpush2.bf16.msra.mxu0 0
        %4070 = vmatprep.subr.bf16.mxu0 0
        %4071 = vmatpush2.bf16.msra.mxu0 0
        %4072 = vmatprep.subr.bf16.mxu0 0
        %4073 = vmatpush2.bf16.msra.mxu0 0
        %4074 = vmatprep.subr.bf16.mxu0 0
        %4075 = vmatpush2.bf16.msra.mxu0 0
        %4076 = vmatprep.mubr.bf16.mxu0 0
        %4077 = vmatmul.mubr.bf16.gmra.mxu0 %v4042
        %v4078 = vpop.f32.mrf.mxu0
        %v4079 = vadd.f32 0.0, %v4078
        %v4080 = vpop.f32.mrf.mxu0
        %v4081 = vpop.f32.mrf.mxu0
        %v4082 = vadd.f32 0.0, %v4081
        %v4083 = vpop.f32.mrf.mxu0
        %4084 = vdwg.mxu0
        %4089 = vrot.lane.b32.xlu0 %v4031, 64
        %v4090 = vpop.permute.xlu0 %4089
        %4091 = vrot.lane.b32.xlu0 %v4034, 64
        %v4092 = vpop.permute.xlu0 %4091
        %4093 = vrot.lane.b32.xlu0 %v4079, 64
        %v4094 = vpop.permute.xlu0 %4093
        %4095 = vrot.lane.b32.xlu0 %v4082, 64
        %v4096 = vpop.permute.xlu0 %4095
        %v4101 = vsel %vm3085, %v3787, %v4090
        %v4102 = vsel %vm3085, %v3790, %v4092
        %v4103 = vsel %vm3085, %v3831, %v4094
        %v4104 = vsel %vm3085, %v3834, %v4096
        %v4105 = vpack.c.bf16 %v4102, %v4101
        %v4106 = vpack.c.bf16 %v4104, %v4103
        %v4109 = vunpack.c.l.b16 %v4105
        %v4110 = vunpack.c.h.b16 %v4105
        %v4111 = vunpack.c.l.b16 %v4106
        %v4112 = vunpack.c.h.b16 %v4106
        %v4113 = vpack.c.b16 %v4109, %v4109
        %v4114 = vpack.c.b16 %v4110, %v4110
        %v4115 = vpack.c.b16 %v4111, %v4111
        %v4116 = vpack.c.b16 %v4112, %v4112
        %4121 = vst [vmem:[#allocation3 + $0x4] sm:$0xf] %v4113
        %4122 = vst [vmem:[#allocation3 + $0x10] sm:$0xf] %v4114
        %4123 = vst [vmem:[#allocation3 + $0x1c] sm:$0xf] %v4115
        %4124 = vst [vmem:[#allocation3 + $0x28] sm:$0xf] %v4116
        %v4125 = vpack.c.bf16 %v2755, %v2751
        %v4126 = vpack.c.bf16 %v2765, %v2761
        %v4127 = vpack.c.bf16 %v2863, %v2859
        %v4128 = vpack.c.bf16 %v2873, %v2869
        %v4129 = vpack.c.bf16 %v3068, %v3065
        %v4130 = vpack.c.bf16 %v3076, %v3073
        %v4132 = vsel %vm3085, %v4125, 0
        %v4135 = vsel %vm3085, %v4127, 0
        %4137 = vmatprep.subr.bf16.mxu0 0
        %4138 = vmatpush1.bf16.xpose.msra.mxu0 0
        %4139 = vmatprep.subr.bf16.mxu0 0
        %4140 = vmatpush1.bf16.xpose.msra.mxu0 0
        %4141 = vmatprep.subr.bf16.mxu0 0
        %4142 = vmatpush1.bf16.xpose.msra.mxu0 0
        %4143 = vmatprep.subr.bf16.mxu0 0
        %4144 = vmatpush1.bf16.xpose.msra.mxu0 0
        %4145 = vmatprep.subr.bf16.mxu0 0
        %4146 = vmatpush1.bf16.xpose.msra.mxu0 0
        %4147 = vmatprep.subr.bf16.mxu0 0
        %4148 = vmatpush1.bf16.xpose.msra.mxu0 0
        %4149 = vmatprep.subr.bf16.mxu0 0
        %4150 = vmatpush1.bf16.xpose.msra.mxu0 0
        %4151 = vmatprep.subr.bf16.mxu0 0
        %4152 = vmatpush1.bf16.xpose.msra.mxu0 %v4135
        %4153 = vmatprep.subr.bf16.mxu0 0
        %4154 = vmatpush2.bf16.xpose.msra.mxu0 0
        %4155 = vmatprep.subr.bf16.mxu0 0
        %4156 = vmatpush2.bf16.xpose.msra.mxu0 0
        %4157 = vmatprep.subr.bf16.mxu0 0
        %4158 = vmatpush2.bf16.xpose.msra.mxu0 0
        %4159 = vmatprep.subr.bf16.mxu0 0
        %4160 = vmatpush2.bf16.xpose.msra.mxu0 0
        %4161 = vmatprep.subr.bf16.mxu0 0
        %4162 = vmatpush2.bf16.xpose.msra.mxu0 0
        %4163 = vmatprep.subr.bf16.mxu0 0
        %4164 = vmatpush2.bf16.xpose.msra.mxu0 0
        %4165 = vmatprep.subr.bf16.mxu0 0
        %4166 = vmatpush2.bf16.xpose.msra.mxu0 0
        %4167 = vmatprep.subr.bf16.mxu0 0
        %4168 = vmatpush2.bf16.xpose.msra.mxu0 0
        %4169 = vmatprep.mubr.bf16.mxu0 0
        %4170 = vmatmul.mubr.bf16.gmra.mxu0 %v4132
        %v4171 = vpop.f32.mrf.mxu0
        %v4172 = vadd.f32 %v1062, %v4171
        %v4173 = vpop.f32.mrf.mxu0
        %v4174 = vpop.f32.mrf.mxu0
        %v4175 = vadd.f32 %v1063, %v4174
        %v4176 = vpop.f32.mrf.mxu0
        %4177 = vdwg.mxu0
        %v4179 = vsel %vm3085, %v4126, 0
        %v4182 = vsel %vm3085, %v4128, 0
        %4184 = vmatprep.subr.bf16.mxu0 0
        %4185 = vmatpush1.bf16.xpose.msra.mxu0 0
        %4186 = vmatprep.subr.bf16.mxu0 0
        %4187 = vmatpush1.bf16.xpose.msra.mxu0 0
        %4188 = vmatprep.subr.bf16.mxu0 0
        %4189 = vmatpush1.bf16.xpose.msra.mxu0 0
        %4190 = vmatprep.subr.bf16.mxu0 0
        %4191 = vmatpush1.bf16.xpose.msra.mxu0 0
        %4192 = vmatprep.subr.bf16.mxu0 0
        %4193 = vmatpush1.bf16.xpose.msra.mxu0 0
        %4194 = vmatprep.subr.bf16.mxu0 0
        %4195 = vmatpush1.bf16.xpose.msra.mxu0 0
        %4196 = vmatprep.subr.bf16.mxu0 0
        %4197 = vmatpush1.bf16.xpose.msra.mxu0 0
        %4198 = vmatprep.subr.bf16.mxu0 0
        %4199 = vmatpush1.bf16.xpose.msra.mxu0 %v4182
        %4200 = vmatprep.subr.bf16.mxu0 0
        %4201 = vmatpush2.bf16.xpose.msra.mxu0 0
        %4202 = vmatprep.subr.bf16.mxu0 0
        %4203 = vmatpush2.bf16.xpose.msra.mxu0 0
        %4204 = vmatprep.subr.bf16.mxu0 0
        %4205 = vmatpush2.bf16.xpose.msra.mxu0 0
        %4206 = vmatprep.subr.bf16.mxu0 0
        %4207 = vmatpush2.bf16.xpose.msra.mxu0 0
        %4208 = vmatprep.subr.bf16.mxu0 0
        %4209 = vmatpush2.bf16.xpose.msra.mxu0 0
        %4210 = vmatprep.subr.bf16.mxu0 0
        %4211 = vmatpush2.bf16.xpose.msra.mxu0 0
        %4212 = vmatprep.subr.bf16.mxu0 0
        %4213 = vmatpush2.bf16.xpose.msra.mxu0 0
        %4214 = vmatprep.subr.bf16.mxu0 0
        %4215 = vmatpush2.bf16.xpose.msra.mxu0 0
        %4216 = vmatprep.mubr.bf16.mxu0 0
        %4217 = vmatmul.mubr.bf16.gmra.mxu0 %v4179
        %v4218 = vpop.f32.mrf.mxu0
        %v4219 = vadd.f32 %v1062, %v4218
        %v4220 = vpop.f32.mrf.mxu0
        %v4221 = vpop.f32.mrf.mxu0
        %v4222 = vadd.f32 %v1063, %v4221
        %v4223 = vpop.f32.mrf.mxu0
        %4224 = vdwg.mxu0
        %v4225 = vsel %vm3180, %v4172, -inf
        %4226 = vmax.xlane.f32.xlu0 %v4225
        %v4227 = vpop.xlane.xlu0 %4226
        %v4228 = vsel %vm3180, %v4175, -inf
        %4229 = vmax.xlane.f32.xlu0 %v4228
        %v4230 = vpop.xlane.xlu0 %4229
        %v4231 = vsel %vm3180, %v4219, -inf
        %4232 = vmax.xlane.f32.xlu0 %v4231
        %v4233 = vpop.xlane.xlu0 %4232
        %v4234 = vsel %vm3180, %v4222, -inf
        %4235 = vmax.xlane.f32.xlu0 %v4234
        %v4236 = vpop.xlane.xlu0 %4235
        %v4237 = vsub.f32 %v4172, %v4227
        %v4238 = vsub.f32 %v4175, %v4230
        %v4239 = vsub.f32 %v4219, %v4233
        %v4240 = vsub.f32 %v4222, %v4236
        %v4241 = vmul.f32 %v4237, 1.442695
        %v4242 = vpow.pop %v4241
        %v4243 = vmul.f32 %v4238, 1.442695
        %v4244 = vpow.pop %v4243
        %v4245 = vmul.f32 %v4239, 1.442695
        %v4246 = vpow.pop %v4245
        %v4247 = vmul.f32 %v4240, 1.442695
        %v4248 = vpow.pop %v4247
        %v4249 = vsel %vm3180, %v4242, 0.0
        %4250 = vadd.xlane.f32.xlu0 %v4249
        %v4251 = vpop.xlane.xlu0 %4250
        %v4252 = vsel %vm3180, %v4244, 0.0
        %4253 = vadd.xlane.f32.xlu0 %v4252
        %v4254 = vpop.xlane.xlu0 %4253
        %v4255 = vsel %vm3180, %v4246, 0.0
        %4256 = vadd.xlane.f32.xlu0 %v4255
        %v4257 = vpop.xlane.xlu0 %4256
        %v4258 = vsel %vm3180, %v4248, 0.0
        %4259 = vadd.xlane.f32.xlu0 %v4258
        %v4260 = vpop.xlane.xlu0 %4259
        %v4261 = vrcp.pop %v4251
        %v4262 = vrcp.pop %v4254
        %v4263 = vrcp.pop %v4257
        %v4264 = vrcp.pop %v4260
        %v4265 = vmul.f32 %v4242, %v4261
        %v4266 = vmul.f32 %v4244, %v4262
        %v4267 = vmul.f32 %v4246, %v4263
        %v4268 = vmul.f32 %v4248, %v4264
        %v4269 = vpack.c.bf16 %v4266, %v4265
        %v4270 = vpack.c.bf16 %v4268, %v4267
        %v4272 = vsel %vm3180, %v4269, 0
        %4274 = vmatprep.subr.bf16.mxu0 0
        %4275 = vmatpush1.bf16.msra.mxu0 0
        %4276 = vmatprep.subr.bf16.mxu0 0
        %4277 = vmatpush1.bf16.msra.mxu0 0
        %4278 = vmatprep.subr.bf16.mxu0 0
        %4279 = vmatpush1.bf16.msra.mxu0 0
        %4280 = vmatprep.subr.bf16.mxu0 0
        %4281 = vmatpush1.bf16.msra.mxu0 0
        %4282 = vmatprep.subr.bf16.mxu0 0
        %4283 = vmatpush1.bf16.msra.mxu0 0
        %4284 = vmatprep.subr.bf16.mxu0 0
        %4285 = vmatpush1.bf16.msra.mxu0 0
        %4286 = vmatprep.subr.bf16.mxu0 0
        %4287 = vmatpush1.bf16.msra.mxu0 0
        %4288 = vmatprep.subr.bf16.mxu0 0
        %4289 = vmatpush1.bf16.msra.mxu0 %v4129
        %4290 = vmatprep.subr.bf16.mxu0 0
        %4291 = vmatpush2.bf16.msra.mxu0 0
        %4292 = vmatprep.subr.bf16.mxu0 0
        %4293 = vmatpush2.bf16.msra.mxu0 0
        %4294 = vmatprep.subr.bf16.mxu0 0
        %4295 = vmatpush2.bf16.msra.mxu0 0
        %4296 = vmatprep.subr.bf16.mxu0 0
        %4297 = vmatpush2.bf16.msra.mxu0 0
        %4298 = vmatprep.subr.bf16.mxu0 0
        %4299 = vmatpush2.bf16.msra.mxu0 0
        %4300 = vmatprep.subr.bf16.mxu0 0
        %4301 = vmatpush2.bf16.msra.mxu0 0
        %4302 = vmatprep.subr.bf16.mxu0 0
        %4303 = vmatpush2.bf16.msra.mxu0 0
        %4304 = vmatprep.subr.bf16.mxu0 0
        %4305 = vmatpush2.bf16.msra.mxu0 0
        %4306 = vmatprep.mubr.bf16.mxu0 0
        %4307 = vmatmul.mubr.bf16.gmra.mxu0 %v4272
        %v4308 = vpop.f32.mrf.mxu0
        %v4309 = vadd.f32 0.0, %v4308
        %v4310 = vpop.f32.mrf.mxu0
        %v4311 = vpop.f32.mrf.mxu0
        %v4312 = vadd.f32 0.0, %v4311
        %v4313 = vpop.f32.mrf.mxu0
        %4314 = vdwg.mxu0
        %v4316 = vsel %vm3180, %v4270, 0
        %4318 = vmatprep.subr.bf16.mxu0 0
        %4319 = vmatpush1.bf16.msra.mxu0 0
        %4320 = vmatprep.subr.bf16.mxu0 0
        %4321 = vmatpush1.bf16.msra.mxu0 0
        %4322 = vmatprep.subr.bf16.mxu0 0
        %4323 = vmatpush1.bf16.msra.mxu0 0
        %4324 = vmatprep.subr.bf16.mxu0 0
        %4325 = vmatpush1.bf16.msra.mxu0 0
        %4326 = vmatprep.subr.bf16.mxu0 0
        %4327 = vmatpush1.bf16.msra.mxu0 0
        %4328 = vmatprep.subr.bf16.mxu0 0
        %4329 = vmatpush1.bf16.msra.mxu0 0
        %4330 = vmatprep.subr.bf16.mxu0 0
        %4331 = vmatpush1.bf16.msra.mxu0 0
        %4332 = vmatprep.subr.bf16.mxu0 0
        %4333 = vmatpush1.bf16.msra.mxu0 %v4130
        %4334 = vmatprep.subr.bf16.mxu0 0
        %4335 = vmatpush2.bf16.msra.mxu0 0
        %4336 = vmatprep.subr.bf16.mxu0 0
        %4337 = vmatpush2.bf16.msra.mxu0 0
        %4338 = vmatprep.subr.bf16.mxu0 0
        %4339 = vmatpush2.bf16.msra.mxu0 0
        %4340 = vmatprep.subr.bf16.mxu0 0
        %4341 = vmatpush2.bf16.msra.mxu0 0
        %4342 = vmatprep.subr.bf16.mxu0 0
        %4343 = vmatpush2.bf16.msra.mxu0 0
        %4344 = vmatprep.subr.bf16.mxu0 0
        %4345 = vmatpush2.bf16.msra.mxu0 0
        %4346 = vmatprep.subr.bf16.mxu0 0
        %4347 = vmatpush2.bf16.msra.mxu0 0
        %4348 = vmatprep.subr.bf16.mxu0 0
        %4349 = vmatpush2.bf16.msra.mxu0 0
        %4350 = vmatprep.mubr.bf16.mxu0 0
        %4351 = vmatmul.mubr.bf16.gmra.mxu0 %v4316
        %v4352 = vpop.f32.mrf.mxu0
        %v4353 = vadd.f32 0.0, %v4352
        %v4354 = vpop.f32.mrf.mxu0
        %v4355 = vpop.f32.mrf.mxu0
        %v4356 = vadd.f32 0.0, %v4355
        %v4357 = vpop.f32.mrf.mxu0
        %4358 = vdwg.mxu0
        %4360 = vrot.lane.b32.xlu0 %v4125, 64
        %v4361 = vpop.permute.xlu0 %4360
        %4363 = vrot.lane.b32.xlu0 %v4127, 64
        %v4364 = vpop.permute.xlu0 %4363
        %v4366 = vsel %vm3085, %v4361, 0
        %v4369 = vsel %vm3085, %v4364, 0
        %4371 = vmatprep.subr.bf16.mxu0 0
        %4372 = vmatpush1.bf16.xpose.msra.mxu0 0
        %4373 = vmatprep.subr.bf16.mxu0 0
        %4374 = vmatpush1.bf16.xpose.msra.mxu0 0
        %4375 = vmatprep.subr.bf16.mxu0 0
        %4376 = vmatpush1.bf16.xpose.msra.mxu0 0
        %4377 = vmatprep.subr.bf16.mxu0 0
        %4378 = vmatpush1.bf16.xpose.msra.mxu0 0
        %4379 = vmatprep.subr.bf16.mxu0 0
        %4380 = vmatpush1.bf16.xpose.msra.mxu0 0
        %4381 = vmatprep.subr.bf16.mxu0 0
        %4382 = vmatpush1.bf16.xpose.msra.mxu0 0
        %4383 = vmatprep.subr.bf16.mxu0 0
        %4384 = vmatpush1.bf16.xpose.msra.mxu0 0
        %4385 = vmatprep.subr.bf16.mxu0 0
        %4386 = vmatpush1.bf16.xpose.msra.mxu0 %v4369
        %4387 = vmatprep.subr.bf16.mxu0 0
        %4388 = vmatpush2.bf16.xpose.msra.mxu0 0
        %4389 = vmatprep.subr.bf16.mxu0 0
        %4390 = vmatpush2.bf16.xpose.msra.mxu0 0
        %4391 = vmatprep.subr.bf16.mxu0 0
        %4392 = vmatpush2.bf16.xpose.msra.mxu0 0
        %4393 = vmatprep.subr.bf16.mxu0 0
        %4394 = vmatpush2.bf16.xpose.msra.mxu0 0
        %4395 = vmatprep.subr.bf16.mxu0 0
        %4396 = vmatpush2.bf16.xpose.msra.mxu0 0
        %4397 = vmatprep.subr.bf16.mxu0 0
        %4398 = vmatpush2.bf16.xpose.msra.mxu0 0
        %4399 = vmatprep.subr.bf16.mxu0 0
        %4400 = vmatpush2.bf16.xpose.msra.mxu0 0
        %4401 = vmatprep.subr.bf16.mxu0 0
        %4402 = vmatpush2.bf16.xpose.msra.mxu0 0
        %4403 = vmatprep.mubr.bf16.mxu0 0
        %4404 = vmatmul.mubr.bf16.gmra.mxu0 %v4366
        %v4405 = vpop.f32.mrf.mxu0
        %v4406 = vadd.f32 %v1062, %v4405
        %v4407 = vpop.f32.mrf.mxu0
        %v4408 = vpop.f32.mrf.mxu0
        %v4409 = vadd.f32 %v1063, %v4408
        %v4410 = vpop.f32.mrf.mxu0
        %4411 = vdwg.mxu0
        %4413 = vrot.lane.b32.xlu0 %v4126, 64
        %v4414 = vpop.permute.xlu0 %4413
        %4416 = vrot.lane.b32.xlu0 %v4128, 64
        %v4417 = vpop.permute.xlu0 %4416
        %v4419 = vsel %vm3085, %v4414, 0
        %v4422 = vsel %vm3085, %v4417, 0
        %4424 = vmatprep.subr.bf16.mxu0 0
        %4425 = vmatpush1.bf16.xpose.msra.mxu0 0
        %4426 = vmatprep.subr.bf16.mxu0 0
        %4427 = vmatpush1.bf16.xpose.msra.mxu0 0
        %4428 = vmatprep.subr.bf16.mxu0 0
        %4429 = vmatpush1.bf16.xpose.msra.mxu0 0
        %4430 = vmatprep.subr.bf16.mxu0 0
        %4431 = vmatpush1.bf16.xpose.msra.mxu0 0
        %4432 = vmatprep.subr.bf16.mxu0 0
        %4433 = vmatpush1.bf16.xpose.msra.mxu0 0
        %4434 = vmatprep.subr.bf16.mxu0 0
        %4435 = vmatpush1.bf16.xpose.msra.mxu0 0
        %4436 = vmatprep.subr.bf16.mxu0 0
        %4437 = vmatpush1.bf16.xpose.msra.mxu0 0
        %4438 = vmatprep.subr.bf16.mxu0 0
        %4439 = vmatpush1.bf16.xpose.msra.mxu0 %v4422
        %4440 = vmatprep.subr.bf16.mxu0 0
        %4441 = vmatpush2.bf16.xpose.msra.mxu0 0
        %4442 = vmatprep.subr.bf16.mxu0 0
        %4443 = vmatpush2.bf16.xpose.msra.mxu0 0
        %4444 = vmatprep.subr.bf16.mxu0 0
        %4445 = vmatpush2.bf16.xpose.msra.mxu0 0
        %4446 = vmatprep.subr.bf16.mxu0 0
        %4447 = vmatpush2.bf16.xpose.msra.mxu0 0
        %4448 = vmatprep.subr.bf16.mxu0 0
        %4449 = vmatpush2.bf16.xpose.msra.mxu0 0
        %4450 = vmatprep.subr.bf16.mxu0 0
        %4451 = vmatpush2.bf16.xpose.msra.mxu0 0
        %4452 = vmatprep.subr.bf16.mxu0 0
        %4453 = vmatpush2.bf16.xpose.msra.mxu0 0
        %4454 = vmatprep.subr.bf16.mxu0 0
        %4455 = vmatpush2.bf16.xpose.msra.mxu0 0
        %4456 = vmatprep.mubr.bf16.mxu0 0
        %4457 = vmatmul.mubr.bf16.gmra.mxu0 %v4419
        %v4458 = vpop.f32.mrf.mxu0
        %v4459 = vadd.f32 %v1062, %v4458
        %v4460 = vpop.f32.mrf.mxu0
        %v4461 = vpop.f32.mrf.mxu0
        %v4462 = vadd.f32 %v1063, %v4461
        %v4463 = vpop.f32.mrf.mxu0
        %4464 = vdwg.mxu0
        %v4465 = vsel %vm3180, %v4406, -inf
        %4466 = vmax.xlane.f32.xlu0 %v4465
        %v4467 = vpop.xlane.xlu0 %4466
        %v4468 = vsel %vm3180, %v4409, -inf
        %4469 = vmax.xlane.f32.xlu0 %v4468
        %v4470 = vpop.xlane.xlu0 %4469
        %v4471 = vsel %vm3180, %v4459, -inf
        %4472 = vmax.xlane.f32.xlu0 %v4471
        %v4473 = vpop.xlane.xlu0 %4472
        %v4474 = vsel %vm3180, %v4462, -inf
        %4475 = vmax.xlane.f32.xlu0 %v4474
        %v4476 = vpop.xlane.xlu0 %4475
        %v4477 = vsub.f32 %v4406, %v4467
        %v4478 = vsub.f32 %v4409, %v4470
        %v4479 = vsub.f32 %v4459, %v4473
        %v4480 = vsub.f32 %v4462, %v4476
        %v4481 = vmul.f32 %v4477, 1.442695
        %v4482 = vpow.pop %v4481
        %v4483 = vmul.f32 %v4478, 1.442695
        %v4484 = vpow.pop %v4483
        %v4485 = vmul.f32 %v4479, 1.442695
        %v4486 = vpow.pop %v4485
        %v4487 = vmul.f32 %v4480, 1.442695
        %v4488 = vpow.pop %v4487
        %v4489 = vsel %vm3180, %v4482, 0.0
        %4490 = vadd.xlane.f32.xlu0 %v4489
        %v4491 = vpop.xlane.xlu0 %4490
        %v4492 = vsel %vm3180, %v4484, 0.0
        %4493 = vadd.xlane.f32.xlu0 %v4492
        %v4494 = vpop.xlane.xlu0 %4493
        %v4495 = vsel %vm3180, %v4486, 0.0
        %4496 = vadd.xlane.f32.xlu0 %v4495
        %v4497 = vpop.xlane.xlu0 %4496
        %v4498 = vsel %vm3180, %v4488, 0.0
        %4499 = vadd.xlane.f32.xlu0 %v4498
        %v4500 = vpop.xlane.xlu0 %4499
        %v4501 = vrcp.pop %v4491
        %v4502 = vrcp.pop %v4494
        %v4503 = vrcp.pop %v4497
        %v4504 = vrcp.pop %v4500
        %v4505 = vmul.f32 %v4482, %v4501
        %v4506 = vmul.f32 %v4484, %v4502
        %v4507 = vmul.f32 %v4486, %v4503
        %v4508 = vmul.f32 %v4488, %v4504
        %v4509 = vpack.c.bf16 %v4506, %v4505
        %v4510 = vpack.c.bf16 %v4508, %v4507
        %4512 = vrot.lane.b32.xlu0 %v4129, 64
        %v4513 = vpop.permute.xlu0 %4512
        %v4516 = vsel %vm3180, %v4509, 0
        %4518 = vmatprep.subr.bf16.mxu0 0
        %4519 = vmatpush1.bf16.msra.mxu0 0
        %4520 = vmatprep.subr.bf16.mxu0 0
        %4521 = vmatpush1.bf16.msra.mxu0 0
        %4522 = vmatprep.subr.bf16.mxu0 0
        %4523 = vmatpush1.bf16.msra.mxu0 0
        %4524 = vmatprep.subr.bf16.mxu0 0
        %4525 = vmatpush1.bf16.msra.mxu0 0
        %4526 = vmatprep.subr.bf16.mxu0 0
        %4527 = vmatpush1.bf16.msra.mxu0 0
        %4528 = vmatprep.subr.bf16.mxu0 0
        %4529 = vmatpush1.bf16.msra.mxu0 0
        %4530 = vmatprep.subr.bf16.mxu0 0
        %4531 = vmatpush1.bf16.msra.mxu0 0
        %4532 = vmatprep.subr.bf16.mxu0 0
        %4533 = vmatpush1.bf16.msra.mxu0 %v4513
        %4534 = vmatprep.subr.bf16.mxu0 0
        %4535 = vmatpush2.bf16.msra.mxu0 0
        %4536 = vmatprep.subr.bf16.mxu0 0
        %4537 = vmatpush2.bf16.msra.mxu0 0
        %4538 = vmatprep.subr.bf16.mxu0 0
        %4539 = vmatpush2.bf16.msra.mxu0 0
        %4540 = vmatprep.subr.bf16.mxu0 0
        %4541 = vmatpush2.bf16.msra.mxu0 0
        %4542 = vmatprep.subr.bf16.mxu0 0
        %4543 = vmatpush2.bf16.msra.mxu0 0
        %4544 = vmatprep.subr.bf16.mxu0 0
        %4545 = vmatpush2.bf16.msra.mxu0 0
        %4546 = vmatprep.subr.bf16.mxu0 0
        %4547 = vmatpush2.bf16.msra.mxu0 0
        %4548 = vmatprep.subr.bf16.mxu0 0
        %4549 = vmatpush2.bf16.msra.mxu0 0
        %4550 = vmatprep.mubr.bf16.mxu0 0
        %4551 = vmatmul.mubr.bf16.gmra.mxu0 %v4516
        %v4552 = vpop.f32.mrf.mxu0
        %v4553 = vadd.f32 0.0, %v4552
        %v4554 = vpop.f32.mrf.mxu0
        %v4555 = vpop.f32.mrf.mxu0
        %v4556 = vadd.f32 0.0, %v4555
        %v4557 = vpop.f32.mrf.mxu0
        %4558 = vdwg.mxu0
        %4560 = vrot.lane.b32.xlu0 %v4130, 64
        %v4561 = vpop.permute.xlu0 %4560
        %v4564 = vsel %vm3180, %v4510, 0
        %4566 = vmatprep.subr.bf16.mxu0 0
        %4567 = vmatpush1.bf16.msra.mxu0 0
        %4568 = vmatprep.subr.bf16.mxu0 0
        %4569 = vmatpush1.bf16.msra.mxu0 0
        %4570 = vmatprep.subr.bf16.mxu0 0
        %4571 = vmatpush1.bf16.msra.mxu0 0
        %4572 = vmatprep.subr.bf16.mxu0 0
        %4573 = vmatpush1.bf16.msra.mxu0 0
        %4574 = vmatprep.subr.bf16.mxu0 0
        %4575 = vmatpush1.bf16.msra.mxu0 0
        %4576 = vmatprep.subr.bf16.mxu0 0
        %4577 = vmatpush1.bf16.msra.mxu0 0
        %4578 = vmatprep.subr.bf16.mxu0 0
        %4579 = vmatpush1.bf16.msra.mxu0 0
        %4580 = vmatprep.subr.bf16.mxu0 0
        %4581 = vmatpush1.bf16.msra.mxu0 %v4561
        %4582 = vmatprep.subr.bf16.mxu0 0
        %4583 = vmatpush2.bf16.msra.mxu0 0
        %4584 = vmatprep.subr.bf16.mxu0 0
        %4585 = vmatpush2.bf16.msra.mxu0 0
        %4586 = vmatprep.subr.bf16.mxu0 0
        %4587 = vmatpush2.bf16.msra.mxu0 0
        %4588 = vmatprep.subr.bf16.mxu0 0
        %4589 = vmatpush2.bf16.msra.mxu0 0
        %4590 = vmatprep.subr.bf16.mxu0 0
        %4591 = vmatpush2.bf16.msra.mxu0 0
        %4592 = vmatprep.subr.bf16.mxu0 0
        %4593 = vmatpush2.bf16.msra.mxu0 0
        %4594 = vmatprep.subr.bf16.mxu0 0
        %4595 = vmatpush2.bf16.msra.mxu0 0
        %4596 = vmatprep.subr.bf16.mxu0 0
        %4597 = vmatpush2.bf16.msra.mxu0 0
        %4598 = vmatprep.mubr.bf16.mxu0 0
        %4599 = vmatmul.mubr.bf16.gmra.mxu0 %v4564
        %v4600 = vpop.f32.mrf.mxu0
        %v4601 = vadd.f32 0.0, %v4600
        %v4602 = vpop.f32.mrf.mxu0
        %v4603 = vpop.f32.mrf.mxu0
        %v4604 = vadd.f32 0.0, %v4603
        %v4605 = vpop.f32.mrf.mxu0
        %4606 = vdwg.mxu0
        %4611 = vrot.lane.b32.xlu0 %v4553, 64
        %v4612 = vpop.permute.xlu0 %4611
        %4613 = vrot.lane.b32.xlu0 %v4556, 64
        %v4614 = vpop.permute.xlu0 %4613
        %4615 = vrot.lane.b32.xlu0 %v4601, 64
        %v4616 = vpop.permute.xlu0 %4615
        %4617 = vrot.lane.b32.xlu0 %v4604, 64
        %v4618 = vpop.permute.xlu0 %4617
        %v4623 = vsel %vm3085, %v4309, %v4612
        %v4624 = vsel %vm3085, %v4312, %v4614
        %v4625 = vsel %vm3085, %v4353, %v4616
        %v4626 = vsel %vm3085, %v4356, %v4618
        %v4627 = vpack.c.bf16 %v4624, %v4623
        %v4628 = vpack.c.bf16 %v4626, %v4625
        %v4631 = vunpack.c.l.b16 %v4627
        %v4632 = vunpack.c.h.b16 %v4627
        %v4633 = vunpack.c.l.b16 %v4628
        %v4634 = vunpack.c.h.b16 %v4628
        %v4635 = vpack.c.b16 %v4631, %v4631
        %v4636 = vpack.c.b16 %v4632, %v4632
        %v4637 = vpack.c.b16 %v4633, %v4633
        %v4638 = vpack.c.b16 %v4634, %v4634
        %4643 = vst [vmem:[#allocation3 + $0x8] sm:$0xf] %v4635
        %4644 = vst [vmem:[#allocation3 + $0x14] sm:$0xf] %v4636
        %4645 = vst [vmem:[#allocation3 + $0x20] sm:$0xf] %v4637
        %4646 = vst [vmem:[#allocation3 + $0x2c] sm:$0xf] %v4638
        %v4647 = vld [vmem:[#allocation3] sm:$0xff]
        %v4648 = vld [vmem:[#allocation3 + $0x8] sm:$0xf]
        %v4649 = vld [vmem:[#allocation3 + $0xc] sm:$0xff]
        %v4650 = vld [vmem:[#allocation3 + $0x14] sm:$0xf]
        %v4651 = vld [vmem:[#allocation3 + $0x18] sm:$0xff]
        %v4652 = vld [vmem:[#allocation3 + $0x20] sm:$0xf]
        %v4653 = vld [vmem:[#allocation3 + $0x24] sm:$0xff]
        %v4654 = vld [vmem:[#allocation3 + $0x2c] sm:$0xf]
        %v4655 = vld [vmem:[%s832] sm:$0xff]
        %v4656 = vld [vmem:[%s832 + $0x8] sm:$0xf]
        %v4657 = vld [vmem:[%s832 + $0xc] sm:$0xff]
        %v4658 = vld [vmem:[%s832 + $0x14] sm:$0xf]
        %v4659 = vld [vmem:[%s832 + $0x18] sm:$0xff]
        %v4660 = vld [vmem:[%s832 + $0x20] sm:$0xf]
        %v4661 = vld [vmem:[%s832 + $0x24] sm:$0xff]
        %v4662 = vld [vmem:[%s832 + $0x2c] sm:$0xf]
        %v4663 = vld [vmem:[%s832 + $0x30] sm:$0xff]
        %v4664 = vld [vmem:[%s832 + $0x38] sm:$0xf]
        %v4665 = vld [vmem:[%s832 + $0x3c] sm:$0xff]
        %v4666 = vld [vmem:[%s832 + $0x44] sm:$0xf]
        %v4667 = vld [vmem:[%s832 + $0x48] sm:$0xff]
        %v4668 = vld [vmem:[%s832 + $0x50] sm:$0xf]
        %v4669 = vld [vmem:[%s832 + $0x54] sm:$0xff]
        %v4670 = vld [vmem:[%s832 + $0x5c] sm:$0xf]
        %v4671 = vld [vmem:[%s832 + $0x60] sm:$0xff]
        %v4672 = vld [vmem:[%s832 + $0x68] sm:$0xf]
        %v4673 = vld [vmem:[%s832 + $0x6c] sm:$0xff]
        %v4674 = vld [vmem:[%s832 + $0x74] sm:$0xf]
        %v4675 = vld [vmem:[%s832 + $0x78] sm:$0xff]
        %v4676 = vld [vmem:[%s832 + $0x80] sm:$0xf]
        %v4677 = vld [vmem:[%s832 + $0x84] sm:$0xff]
        %v4678 = vld [vmem:[%s832 + $0x8c] sm:$0xf]
        %v4679 = vld [vmem:[%s832 + $0x90] sm:$0xff]
        %v4680 = vld [vmem:[%s832 + $0x98] sm:$0xf]
        %v4681 = vld [vmem:[%s832 + $0x9c] sm:$0xff]
        %v4682 = vld [vmem:[%s832 + $0xa4] sm:$0xf]
        %v4683 = vld [vmem:[%s832 + $0xa8] sm:$0xff]
        %v4684 = vld [vmem:[%s832 + $0xb0] sm:$0xf]
        %v4685 = vld [vmem:[%s832 + $0xb4] sm:$0xff]
        %v4686 = vld [vmem:[%s832 + $0xbc] sm:$0xf]
        %v4687 = vld [vmem:[%s832 + $0xc0] sm:$0xff]
        %v4688 = vld [vmem:[%s832 + $0xc8] sm:$0xf]
        %v4689 = vld [vmem:[%s832 + $0xcc] sm:$0xff]
        %v4690 = vld [vmem:[%s832 + $0xd4] sm:$0xf]
        %v4691 = vld [vmem:[%s832 + $0xd8] sm:$0xff]
        %v4692 = vld [vmem:[%s832 + $0xe0] sm:$0xf]
        %v4693 = vld [vmem:[%s832 + $0xe4] sm:$0xff]
        %v4694 = vld [vmem:[%s832 + $0xec] sm:$0xf]
        %v4695 = vld [vmem:[%s832 + $0xf0] sm:$0xff]
        %v4696 = vld [vmem:[%s832 + $0xf8] sm:$0xf]
        %v4697 = vld [vmem:[%s832 + $0xfc] sm:$0xff]
        %v4698 = vld [vmem:[%s832 + $0x104] sm:$0xf]
        %v4699 = vld [vmem:[%s832 + $0x108] sm:$0xff]
        %v4700 = vld [vmem:[%s832 + $0x110] sm:$0xf]
        %v4701 = vld [vmem:[%s832 + $0x114] sm:$0xff]
        %v4702 = vld [vmem:[%s832 + $0x11c] sm:$0xf]
        %v4703 = vld [vmem:[%s832 + $0x120] sm:$0xff]
        %v4704 = vld [vmem:[%s832 + $0x128] sm:$0xf]
        %v4705 = vld [vmem:[%s832 + $0x12c] sm:$0xff]
        %v4706 = vld [vmem:[%s832 + $0x134] sm:$0xf]
        %v4707 = vld [vmem:[%s832 + $0x138] sm:$0xff]
        %v4708 = vld [vmem:[%s832 + $0x140] sm:$0xf]
        %v4709 = vld [vmem:[%s832 + $0x144] sm:$0xff]
        %v4710 = vld [vmem:[%s832 + $0x14c] sm:$0xf]
        %v4711 = vld [vmem:[%s832 + $0x150] sm:$0xff]
        %v4712 = vld [vmem:[%s832 + $0x158] sm:$0xf]
        %v4713 = vld [vmem:[%s832 + $0x15c] sm:$0xff]
        %v4714 = vld [vmem:[%s832 + $0x164] sm:$0xf]
        %v4715 = vld [vmem:[%s832 + $0x168] sm:$0xff]
        %v4716 = vld [vmem:[%s832 + $0x170] sm:$0xf]
        %v4717 = vld [vmem:[%s832 + $0x174] sm:$0xff]
        %v4718 = vld [vmem:[%s832 + $0x17c] sm:$0xf]
        %v4719 = vld [vmem:[%s832 + $0x180] sm:$0xff]
        %v4720 = vld [vmem:[%s832 + $0x188] sm:$0xf]
        %v4721 = vld [vmem:[%s832 + $0x18c] sm:$0xff]
        %v4722 = vld [vmem:[%s832 + $0x194] sm:$0xf]
        %v4723 = vld [vmem:[%s832 + $0x198] sm:$0xff]
        %v4724 = vld [vmem:[%s832 + $0x1a0] sm:$0xf]
        %v4725 = vld [vmem:[%s832 + $0x1a4] sm:$0xff]
        %v4726 = vld [vmem:[%s832 + $0x1ac] sm:$0xf]
        %v4727 = vld [vmem:[%s832 + $0x1b0] sm:$0xff]
        %v4728 = vld [vmem:[%s832 + $0x1b8] sm:$0xf]
        %v4729 = vld [vmem:[%s832 + $0x1bc] sm:$0xff]
        %v4730 = vld [vmem:[%s832 + $0x1c4] sm:$0xf]
        %v4731 = vld [vmem:[%s832 + $0x1c8] sm:$0xff]
        %v4732 = vld [vmem:[%s832 + $0x1d0] sm:$0xf]
        %v4733 = vld [vmem:[%s832 + $0x1d4] sm:$0xff]
        %v4734 = vld [vmem:[%s832 + $0x1dc] sm:$0xf]
        %v4735 = vld [vmem:[%s832 + $0x1e0] sm:$0xff]
        %v4736 = vld [vmem:[%s832 + $0x1e8] sm:$0xf]
        %v4737 = vld [vmem:[%s832 + $0x1ec] sm:$0xff]
        %v4738 = vld [vmem:[%s832 + $0x1f4] sm:$0xf]
        %v4739 = vld [vmem:[%s832 + $0x1f8] sm:$0xff]
        %v4740 = vld [vmem:[%s832 + $0x200] sm:$0xf]
        %v4741 = vld [vmem:[%s832 + $0x204] sm:$0xff]
        %v4742 = vld [vmem:[%s832 + $0x20c] sm:$0xf]
        %v4743 = vld [vmem:[%s832 + $0x210] sm:$0xff]
        %v4744 = vld [vmem:[%s832 + $0x218] sm:$0xf]
        %v4745 = vld [vmem:[%s832 + $0x21c] sm:$0xff]
        %v4746 = vld [vmem:[%s832 + $0x224] sm:$0xf]
        %v4747 = vld [vmem:[%s832 + $0x228] sm:$0xff]
        %v4748 = vld [vmem:[%s832 + $0x230] sm:$0xf]
        %v4749 = vld [vmem:[%s832 + $0x234] sm:$0xff]
        %v4750 = vld [vmem:[%s832 + $0x23c] sm:$0xf]
        %v4751 = vld [vmem:[%s841] sm:$0x7]
        %v4753 = vlaneseq
        %v4754 = vshrl.u32 %v4753, 7
        %v4755 = vsub.s32 0, %v4754
        %v4756 = vrot.slane %v4751, %v4755
        %v4757 = vlaneseq
        %v4758 = vshrl.u32 %v4757, 7
        %v4759 = vsub.s32 1, %v4758
        %v4760 = vrot.slane %v4751, %v4759
        %v4761 = vlaneseq
        %v4762 = vshrl.u32 %v4761, 7
        %v4763 = vsub.s32 2, %v4762
        %v4764 = vrot.slane %v4751, %v4763
        %v4776 = vunpack.c.l.b16 %v4647
        %v4777 = vunpack.c.h.b16 %v4647
        %v4778 = vunpack.c.l.b16 %v4648
        %v4779 = vunpack.c.l.b16 %v4649
        %v4780 = vunpack.c.h.b16 %v4649
        %v4781 = vunpack.c.l.b16 %v4650
        %v4782 = vunpack.c.l.b16 %v4651
        %v4783 = vunpack.c.h.b16 %v4651
        %v4784 = vunpack.c.l.b16 %v4652
        %v4785 = vunpack.c.l.b16 %v4653
        %v4786 = vunpack.c.h.b16 %v4653
        %v4787 = vunpack.c.l.b16 %v4654
        %v4788 = vpack.c.b16 %v4779, %v4776
        %v4789 = vpack.c.b16 %v4780, %v4777
        %v4790 = vpack.c.b16 %v4781, %v4778
        %v4791 = vpack.c.b16 %v4785, %v4782
        %v4792 = vpack.c.b16 %v4786, %v4783
        %v4793 = vpack.c.b16 %v4787, %v4784
        %v4896 = vunpack.c.l.b16 %v4655
        %v4897 = vunpack.c.h.b16 %v4655
        %v4898 = vunpack.c.l.b16 %v4656
        %v4899 = vunpack.c.l.b16 %v4657
        %v4900 = vunpack.c.h.b16 %v4657
        %v4901 = vunpack.c.l.b16 %v4658
        %v4902 = vunpack.c.l.b16 %v4659
        %v4903 = vunpack.c.h.b16 %v4659
        %v4904 = vunpack.c.l.b16 %v4660
        %v4905 = vunpack.c.l.b16 %v4661
        %v4906 = vunpack.c.h.b16 %v4661
        %v4907 = vunpack.c.l.b16 %v4662
        %v4908 = vunpack.c.l.b16 %v4663
        %v4909 = vunpack.c.h.b16 %v4663
        %v4910 = vunpack.c.l.b16 %v4664
        %v4911 = vunpack.c.l.b16 %v4665
        %v4912 = vunpack.c.h.b16 %v4665
        %v4913 = vunpack.c.l.b16 %v4666
        %v4914 = vunpack.c.l.b16 %v4667
        %v4915 = vunpack.c.h.b16 %v4667
        %v4916 = vunpack.c.l.b16 %v4668
        %v4917 = vunpack.c.l.b16 %v4669
        %v4918 = vunpack.c.h.b16 %v4669
        %v4919 = vunpack.c.l.b16 %v4670
        %v4920 = vunpack.c.l.b16 %v4671
        %v4921 = vunpack.c.h.b16 %v4671
        %v4922 = vunpack.c.l.b16 %v4672
        %v4923 = vunpack.c.l.b16 %v4673
        %v4924 = vunpack.c.h.b16 %v4673
        %v4925 = vunpack.c.l.b16 %v4674
        %v4926 = vunpack.c.l.b16 %v4675
        %v4927 = vunpack.c.h.b16 %v4675
        %v4928 = vunpack.c.l.b16 %v4676
        %v4929 = vunpack.c.l.b16 %v4677
        %v4930 = vunpack.c.h.b16 %v4677
        %v4931 = vunpack.c.l.b16 %v4678
        %v4932 = vunpack.c.l.b16 %v4679
        %v4933 = vunpack.c.h.b16 %v4679
        %v4934 = vunpack.c.l.b16 %v4680
        %v4935 = vunpack.c.l.b16 %v4681
        %v4936 = vunpack.c.h.b16 %v4681
        %v4937 = vunpack.c.l.b16 %v4682
        %v4938 = vunpack.c.l.b16 %v4683
        %v4939 = vunpack.c.h.b16 %v4683
        %v4940 = vunpack.c.l.b16 %v4684
        %v4941 = vunpack.c.l.b16 %v4685
        %v4942 = vunpack.c.h.b16 %v4685
        %v4943 = vunpack.c.l.b16 %v4686
        %v4944 = vunpack.c.l.b16 %v4687
        %v4945 = vunpack.c.h.b16 %v4687
        %v4946 = vunpack.c.l.b16 %v4688
        %v4947 = vunpack.c.l.b16 %v4689
        %v4948 = vunpack.c.h.b16 %v4689
        %v4949 = vunpack.c.l.b16 %v4690
        %v4950 = vunpack.c.l.b16 %v4691
        %v4951 = vunpack.c.h.b16 %v4691
        %v4952 = vunpack.c.l.b16 %v4692
        %v4953 = vunpack.c.l.b16 %v4693
        %v4954 = vunpack.c.h.b16 %v4693
        %v4955 = vunpack.c.l.b16 %v4694
        %v4956 = vunpack.c.l.b16 %v4695
        %v4957 = vunpack.c.h.b16 %v4695
        %v4958 = vunpack.c.l.b16 %v4696
        %v4959 = vunpack.c.l.b16 %v4697
        %v4960 = vunpack.c.h.b16 %v4697
        %v4961 = vunpack.c.l.b16 %v4698
        %v4962 = vunpack.c.l.b16 %v4699
        %v4963 = vunpack.c.h.b16 %v4699
        %v4964 = vunpack.c.l.b16 %v4700
        %v4965 = vunpack.c.l.b16 %v4701
        %v4966 = vunpack.c.h.b16 %v4701
        %v4967 = vunpack.c.l.b16 %v4702
        %v4968 = vunpack.c.l.b16 %v4703
        %v4969 = vunpack.c.h.b16 %v4703
        %v4970 = vunpack.c.l.b16 %v4704
        %v4971 = vunpack.c.l.b16 %v4705
        %v4972 = vunpack.c.h.b16 %v4705
        %v4973 = vunpack.c.l.b16 %v4706
        %v4974 = vunpack.c.l.b16 %v4707
        %v4975 = vunpack.c.h.b16 %v4707
        %v4976 = vunpack.c.l.b16 %v4708
        %v4977 = vunpack.c.l.b16 %v4709
        %v4978 = vunpack.c.h.b16 %v4709
        %v4979 = vunpack.c.l.b16 %v4710
        %v4980 = vunpack.c.l.b16 %v4711
        %v4981 = vunpack.c.h.b16 %v4711
        %v4982 = vunpack.c.l.b16 %v4712
        %v4983 = vunpack.c.l.b16 %v4713
        %v4984 = vunpack.c.h.b16 %v4713
        %v4985 = vunpack.c.l.b16 %v4714
        %v4986 = vunpack.c.l.b16 %v4715
        %v4987 = vunpack.c.h.b16 %v4715
        %v4988 = vunpack.c.l.b16 %v4716
        %v4989 = vunpack.c.l.b16 %v4717
        %v4990 = vunpack.c.h.b16 %v4717
        %v4991 = vunpack.c.l.b16 %v4718
        %v4992 = vunpack.c.l.b16 %v4719
        %v4993 = vunpack.c.h.b16 %v4719
        %v4994 = vunpack.c.l.b16 %v4720
        %v4995 = vunpack.c.l.b16 %v4721
        %v4996 = vunpack.c.h.b16 %v4721
        %v4997 = vunpack.c.l.b16 %v4722
        %v4998 = vunpack.c.l.b16 %v4723
        %v4999 = vunpack.c.h.b16 %v4723
        %v5000 = vunpack.c.l.b16 %v4724
        %v5001 = vunpack.c.l.b16 %v4725
        %v5002 = vunpack.c.h.b16 %v4725
        %v5003 = vunpack.c.l.b16 %v4726
        %v5004 = vunpack.c.l.b16 %v4727
        %v5005 = vunpack.c.h.b16 %v4727
        %v5006 = vunpack.c.l.b16 %v4728
        %v5007 = vunpack.c.l.b16 %v4729
        %v5008 = vunpack.c.h.b16 %v4729
        %v5009 = vunpack.c.l.b16 %v4730
        %v5010 = vunpack.c.l.b16 %v4731
        %v5011 = vunpack.c.h.b16 %v4731
        %v5012 = vunpack.c.l.b16 %v4732
        %v5013 = vunpack.c.l.b16 %v4733
        %v5014 = vunpack.c.h.b16 %v4733
        %v5015 = vunpack.c.l.b16 %v4734
        %v5016 = vunpack.c.l.b16 %v4735
        %v5017 = vunpack.c.h.b16 %v4735
        %v5018 = vunpack.c.l.b16 %v4736
        %v5019 = vunpack.c.l.b16 %v4737
        %v5020 = vunpack.c.h.b16 %v4737
        %v5021 = vunpack.c.l.b16 %v4738
        %v5022 = vunpack.c.l.b16 %v4739
        %v5023 = vunpack.c.h.b16 %v4739
        %v5024 = vunpack.c.l.b16 %v4740
        %v5025 = vunpack.c.l.b16 %v4741
        %v5026 = vunpack.c.h.b16 %v4741
        %v5027 = vunpack.c.l.b16 %v4742
        %v5028 = vunpack.c.l.b16 %v4743
        %v5029 = vunpack.c.h.b16 %v4743
        %v5030 = vunpack.c.l.b16 %v4744
        %v5031 = vunpack.c.l.b16 %v4745
        %v5032 = vunpack.c.h.b16 %v4745
        %v5033 = vunpack.c.l.b16 %v4746
        %v5034 = vunpack.c.l.b16 %v4747
        %v5035 = vunpack.c.h.b16 %v4747
        %v5036 = vunpack.c.l.b16 %v4748
        %v5037 = vunpack.c.l.b16 %v4749
        %v5038 = vunpack.c.h.b16 %v4749
        %v5039 = vunpack.c.l.b16 %v4750
        %v5040 = vpack.c.b16 %v4899, %v4896
        %v5041 = vpack.c.b16 %v4900, %v4897
        %v5042 = vpack.c.b16 %v4901, %v4898
        %v5043 = vpack.c.b16 %v4905, %v4902
        %v5044 = vpack.c.b16 %v4906, %v4903
        %v5045 = vpack.c.b16 %v4907, %v4904
        %v5046 = vpack.c.b16 %v4911, %v4908
        %v5047 = vpack.c.b16 %v4912, %v4909
        %v5048 = vpack.c.b16 %v4913, %v4910
        %v5049 = vpack.c.b16 %v4917, %v4914
        %v5050 = vpack.c.b16 %v4918, %v4915
        %v5051 = vpack.c.b16 %v4919, %v4916
        %v5052 = vpack.c.b16 %v4923, %v4920
        %v5053 = vpack.c.b16 %v4924, %v4921
        %v5054 = vpack.c.b16 %v4925, %v4922
        %v5055 = vpack.c.b16 %v4929, %v4926
        %v5056 = vpack.c.b16 %v4930, %v4927
        %v5057 = vpack.c.b16 %v4931, %v4928
        %v5058 = vpack.c.b16 %v4935, %v4932
        %v5059 = vpack.c.b16 %v4936, %v4933
        %v5060 = vpack.c.b16 %v4937, %v4934
        %v5061 = vpack.c.b16 %v4941, %v4938
        %v5062 = vpack.c.b16 %v4942, %v4939
        %v5063 = vpack.c.b16 %v4943, %v4940
        %v5064 = vpack.c.b16 %v4947, %v4944
        %v5065 = vpack.c.b16 %v4948, %v4945
        %v5066 = vpack.c.b16 %v4949, %v4946
        %v5067 = vpack.c.b16 %v4953, %v4950
        %v5068 = vpack.c.b16 %v4954, %v4951
        %v5069 = vpack.c.b16 %v4955, %v4952
        %v5070 = vpack.c.b16 %v4959, %v4956
        %v5071 = vpack.c.b16 %v4960, %v4957
        %v5072 = vpack.c.b16 %v4961, %v4958
        %v5073 = vpack.c.b16 %v4965, %v4962
        %v5074 = vpack.c.b16 %v4966, %v4963
        %v5075 = vpack.c.b16 %v4967, %v4964
        %v5076 = vpack.c.b16 %v4971, %v4968
        %v5077 = vpack.c.b16 %v4972, %v4969
        %v5078 = vpack.c.b16 %v4973, %v4970
        %v5079 = vpack.c.b16 %v4977, %v4974
        %v5080 = vpack.c.b16 %v4978, %v4975
        %v5081 = vpack.c.b16 %v4979, %v4976
        %v5082 = vpack.c.b16 %v4983, %v4980
        %v5083 = vpack.c.b16 %v4984, %v4981
        %v5084 = vpack.c.b16 %v4985, %v4982
        %v5085 = vpack.c.b16 %v4989, %v4986
        %v5086 = vpack.c.b16 %v4990, %v4987
        %v5087 = vpack.c.b16 %v4991, %v4988
        %v5088 = vpack.c.b16 %v4995, %v4992
        %v5089 = vpack.c.b16 %v4996, %v4993
        %v5090 = vpack.c.b16 %v4997, %v4994
        %v5091 = vpack.c.b16 %v5001, %v4998
        %v5092 = vpack.c.b16 %v5002, %v4999
        %v5093 = vpack.c.b16 %v5003, %v5000
        %v5094 = vpack.c.b16 %v5007, %v5004
        %v5095 = vpack.c.b16 %v5008, %v5005
        %v5096 = vpack.c.b16 %v5009, %v5006
        %v5097 = vpack.c.b16 %v5013, %v5010
        %v5098 = vpack.c.b16 %v5014, %v5011
        %v5099 = vpack.c.b16 %v5015, %v5012
        %v5100 = vpack.c.b16 %v5019, %v5016
        %v5101 = vpack.c.b16 %v5020, %v5017
        %v5102 = vpack.c.b16 %v5021, %v5018
        %v5103 = vpack.c.b16 %v5025, %v5022
        %v5104 = vpack.c.b16 %v5026, %v5023
        %v5105 = vpack.c.b16 %v5027, %v5024
        %v5106 = vpack.c.b16 %v5031, %v5028
        %v5107 = vpack.c.b16 %v5032, %v5029
        %v5108 = vpack.c.b16 %v5033, %v5030
        %v5109 = vpack.c.b16 %v5037, %v5034
        %v5110 = vpack.c.b16 %v5038, %v5035
        %v5111 = vpack.c.b16 %v5039, %v5036
        %5184 = vmatprep.subr.bf16.mxu0 %v5062
        %5185 = vmatpush1.bf16.msra.mxu0 %v5061
        %5186 = vmatprep.subr.bf16.mxu0 %v5059
        %5187 = vmatpush1.bf16.msra.mxu0 %v5058
        %5188 = vmatprep.subr.bf16.mxu0 %v5056
        %5189 = vmatpush1.bf16.msra.mxu0 %v5055
        %5190 = vmatprep.subr.bf16.mxu0 %v5053
        %5191 = vmatpush1.bf16.msra.mxu0 %v5052
        %5192 = vmatprep.subr.bf16.mxu0 %v5050
        %5193 = vmatpush1.bf16.msra.mxu0 %v5049
        %5194 = vmatprep.subr.bf16.mxu0 %v5047
        %5195 = vmatpush1.bf16.msra.mxu0 %v5046
        %5196 = vmatprep.subr.bf16.mxu0 %v5044
        %5197 = vmatpush1.bf16.msra.mxu0 %v5043
        %5198 = vmatprep.subr.bf16.mxu0 %v5041
        %5199 = vmatpush1.bf16.msra.mxu0 %v5040
        %5200 = vmatprep.subr.bf16.mxu0 %v5086
        %5201 = vmatpush2.bf16.msra.mxu0 %v5085
        %5202 = vmatprep.subr.bf16.mxu0 %v5083
        %5203 = vmatpush2.bf16.msra.mxu0 %v5082
        %5204 = vmatprep.subr.bf16.mxu0 %v5080
        %5205 = vmatpush2.bf16.msra.mxu0 %v5079
        %5206 = vmatprep.subr.bf16.mxu0 %v5077
        %5207 = vmatpush2.bf16.msra.mxu0 %v5076
        %5208 = vmatprep.subr.bf16.mxu0 %v5074
        %5209 = vmatpush2.bf16.msra.mxu0 %v5073
        %5210 = vmatprep.subr.bf16.mxu0 %v5071
        %5211 = vmatpush2.bf16.msra.mxu0 %v5070
        %5212 = vmatprep.subr.bf16.mxu0 %v5068
        %5213 = vmatpush2.bf16.msra.mxu0 %v5067
        %5214 = vmatprep.subr.bf16.mxu0 %v5065
        %5215 = vmatpush2.bf16.msra.mxu0 %v5064
        %5216 = vmatprep.mubr.bf16.mxu0 %v4789
        %5217 = vmatmul.mubr.bf16.gmra.mxu0 %v4788
        %v5218 = vpop.f32.mrf.mxu0
        %v5219 = vadd.f32 %v4756, %v5218
        %v5220 = vpop.f32.mrf.mxu0
        %v5221 = vadd.f32 %v4760, %v5220
        %v5222 = vpop.f32.mrf.mxu0
        %v5223 = vadd.f32 %v4756, %v5222
        %v5224 = vpop.f32.mrf.mxu0
        %v5225 = vadd.f32 %v4760, %v5224
        %5226 = vmatprep.mubr.bf16.mxu0 %v4792
        %5227 = vmatmul.mubr.bf16.gmra.mxu0 %v4791
        %v5228 = vpop.f32.mrf.mxu0
        %v5229 = vadd.f32 %v4756, %v5228
        %v5230 = vpop.f32.mrf.mxu0
        %v5231 = vadd.f32 %v4760, %v5230
        %v5232 = vpop.f32.mrf.mxu0
        %v5233 = vadd.f32 %v4756, %v5232
        %v5234 = vpop.f32.mrf.mxu0
        %v5235 = vadd.f32 %v4760, %v5234
        %5236 = vdwg.mxu0
        %5237 = vmatprep.subr.bf16.mxu0 %v5110
        %5238 = vmatpush1.bf16.msra.mxu0 %v5109
        %5239 = vmatprep.subr.bf16.mxu0 %v5107
        %5240 = vmatpush1.bf16.msra.mxu0 %v5106
        %5241 = vmatprep.subr.bf16.mxu0 %v5104
        %5242 = vmatpush1.bf16.msra.mxu0 %v5103
        %5243 = vmatprep.subr.bf16.mxu0 %v5101
        %5244 = vmatpush1.bf16.msra.mxu0 %v5100
        %5245 = vmatprep.subr.bf16.mxu0 %v5098
        %5246 = vmatpush1.bf16.msra.mxu0 %v5097
        %5247 = vmatprep.subr.bf16.mxu0 %v5095
        %5248 = vmatpush1.bf16.msra.mxu0 %v5094
        %5249 = vmatprep.subr.bf16.mxu0 %v5092
        %5250 = vmatpush1.bf16.msra.mxu0 %v5091
        %5251 = vmatprep.subr.bf16.mxu0 %v5089
        %5252 = vmatpush1.bf16.msra.mxu0 %v5088
        %5253 = vmatprep.subr.bf16.mxu0 0
        %5254 = vmatpush2.bf16.msra.mxu0 0
        %5255 = vmatprep.subr.bf16.mxu0 0
        %5256 = vmatpush2.bf16.msra.mxu0 0
        %5257 = vmatprep.subr.bf16.mxu0 0
        %5258 = vmatpush2.bf16.msra.mxu0 0
        %5259 = vmatprep.subr.bf16.mxu0 0
        %5260 = vmatpush2.bf16.msra.mxu0 0
        %5261 = vmatprep.subr.bf16.mxu0 0
        %5262 = vmatpush2.bf16.msra.mxu0 0
        %5263 = vmatprep.subr.bf16.mxu0 0
        %5264 = vmatpush2.bf16.msra.mxu0 0
        %5265 = vmatprep.subr.bf16.mxu0 0
        %5266 = vmatpush2.bf16.msra.mxu0 0
        %5267 = vmatprep.subr.bf16.mxu0 0
        %5268 = vmatpush2.bf16.msra.mxu0 0
        %5269 = vmatprep.mubr.bf16.mxu0 0
        %5270 = vmatmul.mubr.bf16.gmra.mxu0 %v4790
        %v5271 = vpop.f32.mrf.mxu0
        %v5272 = vadd.f32 %v5219, %v5271
        %v5273 = vpop.f32.mrf.mxu0
        %v5274 = vadd.f32 %v5221, %v5273
        %v5275 = vpop.f32.mrf.mxu0
        %v5276 = vadd.f32 %v5223, %v5275
        %v5277 = vpop.f32.mrf.mxu0
        %v5278 = vadd.f32 %v5225, %v5277
        %5279 = vmatprep.mubr.bf16.mxu0 0
        %5280 = vmatmul.mubr.bf16.gmra.mxu0 %v4793
        %v5281 = vpop.f32.mrf.mxu0
        %v5282 = vadd.f32 %v5229, %v5281
        %v5283 = vpop.f32.mrf.mxu0
        %v5284 = vadd.f32 %v5231, %v5283
        %v5285 = vpop.f32.mrf.mxu0
        %v5286 = vadd.f32 %v5233, %v5285
        %v5287 = vpop.f32.mrf.mxu0
        %v5288 = vadd.f32 %v5235, %v5287
        %5289 = vdwg.mxu0
        %5290 = vmatprep.subr.bf16.mxu0 0
        %5291 = vmatpush1.bf16.msra.mxu0 %v5063
        %5292 = vmatprep.subr.bf16.mxu0 0
        %5293 = vmatpush1.bf16.msra.mxu0 %v5060
        %5294 = vmatprep.subr.bf16.mxu0 0
        %5295 = vmatpush1.bf16.msra.mxu0 %v5057
        %5296 = vmatprep.subr.bf16.mxu0 0
        %5297 = vmatpush1.bf16.msra.mxu0 %v5054
        %5298 = vmatprep.subr.bf16.mxu0 0
        %5299 = vmatpush1.bf16.msra.mxu0 %v5051
        %5300 = vmatprep.subr.bf16.mxu0 0
        %5301 = vmatpush1.bf16.msra.mxu0 %v5048
        %5302 = vmatprep.subr.bf16.mxu0 0
        %5303 = vmatpush1.bf16.msra.mxu0 %v5045
        %5304 = vmatprep.subr.bf16.mxu0 0
        %5305 = vmatpush1.bf16.msra.mxu0 %v5042
        %5306 = vmatprep.subr.bf16.mxu0 0
        %5307 = vmatpush2.bf16.msra.mxu0 %v5087
        %5308 = vmatprep.subr.bf16.mxu0 0
        %5309 = vmatpush2.bf16.msra.mxu0 %v5084
        %5310 = vmatprep.subr.bf16.mxu0 0
        %5311 = vmatpush2.bf16.msra.mxu0 %v5081
        %5312 = vmatprep.subr.bf16.mxu0 0
        %5313 = vmatpush2.bf16.msra.mxu0 %v5078
        %5314 = vmatprep.subr.bf16.mxu0 0
        %5315 = vmatpush2.bf16.msra.mxu0 %v5075
        %5316 = vmatprep.subr.bf16.mxu0 0
        %5317 = vmatpush2.bf16.msra.mxu0 %v5072
        %5318 = vmatprep.subr.bf16.mxu0 0
        %5319 = vmatpush2.bf16.msra.mxu0 %v5069
        %5320 = vmatprep.subr.bf16.mxu0 0
        %5321 = vmatpush2.bf16.msra.mxu0 %v5066
        %5322 = vmatprep.mubr.bf16.mxu0 %v4789
        %5323 = vmatmul.mubr.bf16.gmra.mxu0 %v4788
        %v5324 = vpop.f32.mrf.mxu0
        %v5325 = vadd.f32 %v4764, %v5324
        %v5326 = vpop.f32.mrf.mxu0
        %v5327 = vpop.f32.mrf.mxu0
        %v5328 = vadd.f32 %v4764, %v5327
        %v5329 = vpop.f32.mrf.mxu0
        %5330 = vmatprep.mubr.bf16.mxu0 %v4792
        %5331 = vmatmul.mubr.bf16.gmra.mxu0 %v4791
        %v5332 = vpop.f32.mrf.mxu0
        %v5333 = vadd.f32 %v4764, %v5332
        %v5334 = vpop.f32.mrf.mxu0
        %v5335 = vpop.f32.mrf.mxu0
        %v5336 = vadd.f32 %v4764, %v5335
        %v5337 = vpop.f32.mrf.mxu0
        %5338 = vdwg.mxu0
        %5339 = vmatprep.subr.bf16.mxu0 0
        %5340 = vmatpush1.bf16.msra.mxu0 %v5111
        %5341 = vmatprep.subr.bf16.mxu0 0
        %5342 = vmatpush1.bf16.msra.mxu0 %v5108
        %5343 = vmatprep.subr.bf16.mxu0 0
        %5344 = vmatpush1.bf16.msra.mxu0 %v5105
        %5345 = vmatprep.subr.bf16.mxu0 0
        %5346 = vmatpush1.bf16.msra.mxu0 %v5102
        %5347 = vmatprep.subr.bf16.mxu0 0
        %5348 = vmatpush1.bf16.msra.mxu0 %v5099
        %5349 = vmatprep.subr.bf16.mxu0 0
        %5350 = vmatpush1.bf16.msra.mxu0 %v5096
        %5351 = vmatprep.subr.bf16.mxu0 0
        %5352 = vmatpush1.bf16.msra.mxu0 %v5093
        %5353 = vmatprep.subr.bf16.mxu0 0
        %5354 = vmatpush1.bf16.msra.mxu0 %v5090
        %5355 = vmatprep.subr.bf16.mxu0 0
        %5356 = vmatpush2.bf16.msra.mxu0 0
        %5357 = vmatprep.subr.bf16.mxu0 0
        %5358 = vmatpush2.bf16.msra.mxu0 0
        %5359 = vmatprep.subr.bf16.mxu0 0
        %5360 = vmatpush2.bf16.msra.mxu0 0
        %5361 = vmatprep.subr.bf16.mxu0 0
        %5362 = vmatpush2.bf16.msra.mxu0 0
        %5363 = vmatprep.subr.bf16.mxu0 0
        %5364 = vmatpush2.bf16.msra.mxu0 0
        %5365 = vmatprep.subr.bf16.mxu0 0
        %5366 = vmatpush2.bf16.msra.mxu0 0
        %5367 = vmatprep.subr.bf16.mxu0 0
        %5368 = vmatpush2.bf16.msra.mxu0 0
        %5369 = vmatprep.subr.bf16.mxu0 0
        %5370 = vmatpush2.bf16.msra.mxu0 0
        %5371 = vmatprep.mubr.bf16.mxu0 0
        %5372 = vmatmul.mubr.bf16.gmra.mxu0 %v4790
        %v5373 = vpop.f32.mrf.mxu0
        %v5374 = vadd.f32 %v5325, %v5373
        %v5375 = vpop.f32.mrf.mxu0
        %v5376 = vpop.f32.mrf.mxu0
        %v5377 = vadd.f32 %v5328, %v5376
        %v5378 = vpop.f32.mrf.mxu0
        %5379 = vmatprep.mubr.bf16.mxu0 0
        %5380 = vmatmul.mubr.bf16.gmra.mxu0 %v4793
        %v5381 = vpop.f32.mrf.mxu0
        %v5382 = vadd.f32 %v5333, %v5381
        %v5383 = vpop.f32.mrf.mxu0
        %v5384 = vpop.f32.mrf.mxu0
        %v5385 = vadd.f32 %v5336, %v5384
        %v5386 = vpop.f32.mrf.mxu0
        %5387 = vdwg.mxu0
        %v5388 = vadd.f32 %v1050, %v5272
        %v5389 = vadd.f32 %v1051, %v5274
        %v5390 = vadd.f32 %v1052, %v5374
        %v5391 = vadd.f32 %v1053, %v5276
        %v5392 = vadd.f32 %v1054, %v5278
        %v5393 = vadd.f32 %v1055, %v5377
        %v5394 = vadd.f32 %v1056, %v5282
        %v5395 = vadd.f32 %v1057, %v5284
        %v5396 = vadd.f32 %v1058, %v5382
        %v5397 = vadd.f32 %v1059, %v5286
        %v5398 = vadd.f32 %v1060, %v5288
        %v5399 = vadd.f32 %v1061, %v5385
        %v5400 = vld [vmem:[%s850] sm:$0x7]
        %v5401 = vld [vmem:[%s859] sm:$0x7]
        %v5402 = vadd.f32 %v5388, %v5389
        %v5403 = vadd.f32 %v5402, %v5390
        %5404 = vadd.xlane.f32.xlu0 %v5403
        %v5405 = vpop.xlane.xlu0 %5404
        %v5406 = vadd.f32 %v5391, %v5392
        %v5407 = vadd.f32 %v5406, %v5393
        %5408 = vadd.xlane.f32.xlu0 %v5407
        %v5409 = vpop.xlane.xlu0 %5408
        %v5410 = vadd.f32 %v5394, %v5395
        %v5411 = vadd.f32 %v5410, %v5396
        %5412 = vadd.xlane.f32.xlu0 %v5411
        %v5413 = vpop.xlane.xlu0 %5412
        %v5414 = vadd.f32 %v5397, %v5398
        %v5415 = vadd.f32 %v5414, %v5399
        %5416 = vadd.xlane.f32.xlu0 %v5415
        %v5417 = vpop.xlane.xlu0 %5416
        %v5418 = vmul.f32 %v5405, %v1082
        %v5419 = vmul.f32 %v5409, %v1082
        %v5420 = vmul.f32 %v5413, %v1082
        %v5421 = vmul.f32 %v5417, %v1082
        %v5422 = vsub.f32 %v5388, %v5418
        %v5423 = vsub.f32 %v5389, %v5418
        %v5424 = vsub.f32 %v5390, %v5418
        %v5425 = vsub.f32 %v5391, %v5419
        %v5426 = vsub.f32 %v5392, %v5419
        %v5427 = vsub.f32 %v5393, %v5419
        %v5428 = vsub.f32 %v5394, %v5420
        %v5429 = vsub.f32 %v5395, %v5420
        %v5430 = vsub.f32 %v5396, %v5420
        %v5431 = vsub.f32 %v5397, %v5421
        %v5432 = vsub.f32 %v5398, %v5421
        %v5433 = vsub.f32 %v5399, %v5421
        %v5434 = vmul.f32 %v5422, %v5422
        %v5435 = vmul.f32 %v5423, %v5423
        %v5436 = vmul.f32 %v5424, %v5424
        %v5437 = vmul.f32 %v5425, %v5425
        %v5438 = vmul.f32 %v5426, %v5426
        %v5439 = vmul.f32 %v5427, %v5427
        %v5440 = vmul.f32 %v5428, %v5428
        %v5441 = vmul.f32 %v5429, %v5429
        %v5442 = vmul.f32 %v5430, %v5430
        %v5443 = vmul.f32 %v5431, %v5431
        %v5444 = vmul.f32 %v5432, %v5432
        %v5445 = vmul.f32 %v5433, %v5433
        %v5446 = vadd.f32 %v5434, %v5435
        %v5447 = vadd.f32 %v5446, %v5436
        %5448 = vadd.xlane.f32.xlu0 %v5447
        %v5449 = vpop.xlane.xlu0 %5448
        %v5450 = vadd.f32 %v5437, %v5438
        %v5451 = vadd.f32 %v5450, %v5439
        %5452 = vadd.xlane.f32.xlu0 %v5451
        %v5453 = vpop.xlane.xlu0 %5452
        %v5454 = vadd.f32 %v5440, %v5441
        %v5455 = vadd.f32 %v5454, %v5442
        %5456 = vadd.xlane.f32.xlu0 %v5455
        %v5457 = vpop.xlane.xlu0 %5456
        %v5458 = vadd.f32 %v5443, %v5444
        %v5459 = vadd.f32 %v5458, %v5445
        %5460 = vadd.xlane.f32.xlu0 %v5459
        %v5461 = vpop.xlane.xlu0 %5460
        %v5462 = vmul.f32 %v5449, %v1082
        %v5463 = vmul.f32 %v5453, %v1082
        %v5464 = vmul.f32 %v5457, %v1082
        %v5465 = vmul.f32 %v5461, %v1082
        %v5466 = vadd.f32 %v5462, 1e-05
        %v5467 = vadd.f32 %v5463, 1e-05
        %v5468 = vadd.f32 %v5464, 1e-05
        %v5469 = vadd.f32 %v5465, 1e-05
        %v5470 = vrsqrt.pop %v5466
        %v5471 = vrsqrt.pop %v5467
        %v5472 = vrsqrt.pop %v5468
        %v5473 = vrsqrt.pop %v5469
        %v5474 = vmul.f32 %v5422, %v5470
        %v5475 = vmul.f32 %v5423, %v5470
        %v5476 = vmul.f32 %v5424, %v5470
        %v5477 = vmul.f32 %v5425, %v5471
        %v5478 = vmul.f32 %v5426, %v5471
        %v5479 = vmul.f32 %v5427, %v5471
        %v5480 = vmul.f32 %v5428, %v5472
        %v5481 = vmul.f32 %v5429, %v5472
        %v5482 = vmul.f32 %v5430, %v5472
        %v5483 = vmul.f32 %v5431, %v5473
        %v5484 = vmul.f32 %v5432, %v5473
        %v5485 = vmul.f32 %v5433, %v5473
        %v5487 = vlaneseq
        %v5488 = vshrl.u32 %v5487, 7
        %v5489 = vsub.s32 0, %v5488
        %v5490 = vrot.slane %v5400, %v5489
        %v5491 = vlaneseq
        %v5492 = vshrl.u32 %v5491, 7
        %v5493 = vsub.s32 1, %v5492
        %v5494 = vrot.slane %v5400, %v5493
        %v5495 = vlaneseq
        %v5496 = vshrl.u32 %v5495, 7
        %v5497 = vsub.s32 2, %v5496
        %v5498 = vrot.slane %v5400, %v5497
        %v5502 = vmul.f32 %v5474, %v5490
        %v5503 = vmul.f32 %v5475, %v5494
        %v5504 = vmul.f32 %v5476, %v5498
        %v5505 = vmul.f32 %v5477, %v5490
        %v5506 = vmul.f32 %v5478, %v5494
        %v5507 = vmul.f32 %v5479, %v5498
        %v5508 = vmul.f32 %v5480, %v5490
        %v5509 = vmul.f32 %v5481, %v5494
        %v5510 = vmul.f32 %v5482, %v5498
        %v5511 = vmul.f32 %v5483, %v5490
        %v5512 = vmul.f32 %v5484, %v5494
        %v5513 = vmul.f32 %v5485, %v5498
        %v5515 = vlaneseq
        %v5516 = vshrl.u32 %v5515, 7
        %v5517 = vsub.s32 0, %v5516
        %v5518 = vrot.slane %v5401, %v5517
        %v5519 = vlaneseq
        %v5520 = vshrl.u32 %v5519, 7
        %v5521 = vsub.s32 1, %v5520
        %v5522 = vrot.slane %v5401, %v5521
        %v5523 = vlaneseq
        %v5524 = vshrl.u32 %v5523, 7
        %v5525 = vsub.s32 2, %v5524
        %v5526 = vrot.slane %v5401, %v5525
        %v5530 = vadd.f32 %v5502, %v5518
        %v5531 = vadd.f32 %v5503, %v5522
        %v5532 = vadd.f32 %v5504, %v5526
        %v5533 = vadd.f32 %v5505, %v5518
        %v5534 = vadd.f32 %v5506, %v5522
        %v5535 = vadd.f32 %v5507, %v5526
        %v5536 = vadd.f32 %v5508, %v5518
        %v5537 = vadd.f32 %v5509, %v5522
        %v5538 = vadd.f32 %v5510, %v5526
        %v5539 = vadd.f32 %v5511, %v5518
        %v5540 = vadd.f32 %v5512, %v5522
        %v5541 = vadd.f32 %v5513, %v5526
        %v5542 = vpack.c.bf16 %v5533, %v5530
        %v5543 = vpack.c.bf16 %v5534, %v5531
        %v5544 = vpack.c.bf16 %v5535, %v5532
        %v5545 = vpack.c.bf16 %v5539, %v5536
        %v5546 = vpack.c.bf16 %v5540, %v5537
        %v5547 = vpack.c.bf16 %v5541, %v5538
        %v5548 = vld [vmem:[%s868] sm:$0xff]
        %v5549 = vld [vmem:[%s868 + $0x8] sm:$0xff]
        %v5550 = vld [vmem:[%s868 + $0x10] sm:$0xff]
        %v5551 = vld [vmem:[%s868 + $0x18] sm:$0xff]
        %v5552 = vld [vmem:[%s868 + $0x20] sm:$0xff]
        %v5553 = vld [vmem:[%s868 + $0x28] sm:$0xff]
        %v5554 = vld [vmem:[%s868 + $0x30] sm:$0xff]
        %v5555 = vld [vmem:[%s868 + $0x38] sm:$0xff]
        %v5556 = vld [vmem:[%s868 + $0x40] sm:$0xff]
        %v5557 = vld [vmem:[%s868 + $0x48] sm:$0xff]
        %v5558 = vld [vmem:[%s868 + $0x50] sm:$0xff]
        %v5559 = vld [vmem:[%s868 + $0x58] sm:$0xff]
        %v5560 = vld [vmem:[%s868 + $0x60] sm:$0xff]
        %v5561 = vld [vmem:[%s868 + $0x68] sm:$0xff]
        %v5562 = vld [vmem:[%s868 + $0x70] sm:$0xff]
        %v5563 = vld [vmem:[%s868 + $0x78] sm:$0xff]
        %v5564 = vld [vmem:[%s868 + $0x80] sm:$0xff]
        %v5565 = vld [vmem:[%s868 + $0x88] sm:$0xff]
        %v5566 = vld [vmem:[%s868 + $0x90] sm:$0xff]
        %v5567 = vld [vmem:[%s868 + $0x98] sm:$0xff]
        %v5568 = vld [vmem:[%s868 + $0xa0] sm:$0xff]
        %v5569 = vld [vmem:[%s868 + $0xa8] sm:$0xff]
        %v5570 = vld [vmem:[%s868 + $0xb0] sm:$0xff]
        %v5571 = vld [vmem:[%s868 + $0xb8] sm:$0xff]
        %v5572 = vld [vmem:[%s868 + $0xc0] sm:$0xff]
        %v5573 = vld [vmem:[%s868 + $0xc8] sm:$0xff]
        %v5574 = vld [vmem:[%s868 + $0xd0] sm:$0xff]
        %v5575 = vld [vmem:[%s868 + $0xd8] sm:$0xff]
        %v5576 = vld [vmem:[%s868 + $0xe0] sm:$0xff]
        %v5577 = vld [vmem:[%s868 + $0xe8] sm:$0xff]
        %v5578 = vld [vmem:[%s868 + $0xf0] sm:$0xff]
        %v5579 = vld [vmem:[%s868 + $0xf8] sm:$0xff]
        %v5580 = vld [vmem:[%s868 + $0x100] sm:$0xff]
        %v5581 = vld [vmem:[%s868 + $0x108] sm:$0xff]
        %v5582 = vld [vmem:[%s868 + $0x110] sm:$0xff]
        %v5583 = vld [vmem:[%s868 + $0x118] sm:$0xff]
        %v5584 = vld [vmem:[%s868 + $0x120] sm:$0xff]
        %v5585 = vld [vmem:[%s868 + $0x128] sm:$0xff]
        %v5586 = vld [vmem:[%s868 + $0x130] sm:$0xff]
        %v5587 = vld [vmem:[%s868 + $0x138] sm:$0xff]
        %v5588 = vld [vmem:[%s868 + $0x140] sm:$0xff]
        %v5589 = vld [vmem:[%s868 + $0x148] sm:$0xff]
        %v5590 = vld [vmem:[%s868 + $0x150] sm:$0xff]
        %v5591 = vld [vmem:[%s868 + $0x158] sm:$0xff]
        %v5592 = vld [vmem:[%s868 + $0x160] sm:$0xff]
        %v5593 = vld [vmem:[%s868 + $0x168] sm:$0xff]
        %v5594 = vld [vmem:[%s868 + $0x170] sm:$0xff]
        %v5595 = vld [vmem:[%s868 + $0x178] sm:$0xff]
        %v5596 = vld [vmem:[%s868 + $0x180] sm:$0xff]
        %v5597 = vld [vmem:[%s868 + $0x188] sm:$0xff]
        %v5598 = vld [vmem:[%s868 + $0x190] sm:$0xff]
        %v5599 = vld [vmem:[%s868 + $0x198] sm:$0xff]
        %v5600 = vld [vmem:[%s868 + $0x1a0] sm:$0xff]
        %v5601 = vld [vmem:[%s868 + $0x1a8] sm:$0xff]
        %v5602 = vld [vmem:[%s868 + $0x1b0] sm:$0xff]
        %v5603 = vld [vmem:[%s868 + $0x1b8] sm:$0xff]
        %v5604 = vld [vmem:[%s868 + $0x1c0] sm:$0xff]
        %v5605 = vld [vmem:[%s868 + $0x1c8] sm:$0xff]
        %v5606 = vld [vmem:[%s868 + $0x1d0] sm:$0xff]
        %v5607 = vld [vmem:[%s868 + $0x1d8] sm:$0xff]
        %v5608 = vld [vmem:[%s868 + $0x1e0] sm:$0xff]
        %v5609 = vld [vmem:[%s868 + $0x1e8] sm:$0xff]
        %v5610 = vld [vmem:[%s868 + $0x1f0] sm:$0xff]
        %v5611 = vld [vmem:[%s868 + $0x1f8] sm:$0xff]
        %v5612 = vld [vmem:[%s868 + $0x200] sm:$0xff]
        %v5613 = vld [vmem:[%s868 + $0x208] sm:$0xff]
        %v5614 = vld [vmem:[%s868 + $0x210] sm:$0xff]
        %v5615 = vld [vmem:[%s868 + $0x218] sm:$0xff]
        %v5616 = vld [vmem:[%s868 + $0x220] sm:$0xff]
        %v5617 = vld [vmem:[%s868 + $0x228] sm:$0xff]
        %v5618 = vld [vmem:[%s868 + $0x230] sm:$0xff]
        %v5619 = vld [vmem:[%s868 + $0x238] sm:$0xff]
        %v5620 = vld [vmem:[%s868 + $0x240] sm:$0xff]
        %v5621 = vld [vmem:[%s868 + $0x248] sm:$0xff]
        %v5622 = vld [vmem:[%s868 + $0x250] sm:$0xff]
        %v5623 = vld [vmem:[%s868 + $0x258] sm:$0xff]
        %v5624 = vld [vmem:[%s868 + $0x260] sm:$0xff]
        %v5625 = vld [vmem:[%s868 + $0x268] sm:$0xff]
        %v5626 = vld [vmem:[%s868 + $0x270] sm:$0xff]
        %v5627 = vld [vmem:[%s868 + $0x278] sm:$0xff]
        %v5628 = vld [vmem:[%s868 + $0x280] sm:$0xff]
        %v5629 = vld [vmem:[%s868 + $0x288] sm:$0xff]
        %v5630 = vld [vmem:[%s868 + $0x290] sm:$0xff]
        %v5631 = vld [vmem:[%s868 + $0x298] sm:$0xff]
        %v5632 = vld [vmem:[%s868 + $0x2a0] sm:$0xff]
        %v5633 = vld [vmem:[%s868 + $0x2a8] sm:$0xff]
        %v5634 = vld [vmem:[%s868 + $0x2b0] sm:$0xff]
        %v5635 = vld [vmem:[%s868 + $0x2b8] sm:$0xff]
        %v5636 = vld [vmem:[%s868 + $0x2c0] sm:$0xff]
        %v5637 = vld [vmem:[%s868 + $0x2c8] sm:$0xff]
        %v5638 = vld [vmem:[%s868 + $0x2d0] sm:$0xff]
        %v5639 = vld [vmem:[%s868 + $0x2d8] sm:$0xff]
        %v5640 = vld [vmem:[%s868 + $0x2e0] sm:$0xff]
        %v5641 = vld [vmem:[%s868 + $0x2e8] sm:$0xff]
        %v5642 = vld [vmem:[%s868 + $0x2f0] sm:$0xff]
        %v5643 = vld [vmem:[%s868 + $0x2f8] sm:$0xff]
        %v5644 = vld [vmem:[%s868 + $0x300] sm:$0xff]
        %v5645 = vld [vmem:[%s868 + $0x308] sm:$0xff]
        %v5646 = vld [vmem:[%s868 + $0x310] sm:$0xff]
        %v5647 = vld [vmem:[%s868 + $0x318] sm:$0xff]
        %v5648 = vld [vmem:[%s868 + $0x320] sm:$0xff]
        %v5649 = vld [vmem:[%s868 + $0x328] sm:$0xff]
        %v5650 = vld [vmem:[%s868 + $0x330] sm:$0xff]
        %v5651 = vld [vmem:[%s868 + $0x338] sm:$0xff]
        %v5652 = vld [vmem:[%s868 + $0x340] sm:$0xff]
        %v5653 = vld [vmem:[%s868 + $0x348] sm:$0xff]
        %v5654 = vld [vmem:[%s868 + $0x350] sm:$0xff]
        %v5655 = vld [vmem:[%s868 + $0x358] sm:$0xff]
        %v5656 = vld [vmem:[%s868 + $0x360] sm:$0xff]
        %v5657 = vld [vmem:[%s868 + $0x368] sm:$0xff]
        %v5658 = vld [vmem:[%s868 + $0x370] sm:$0xff]
        %v5659 = vld [vmem:[%s868 + $0x378] sm:$0xff]
        %v5660 = vld [vmem:[%s868 + $0x380] sm:$0xff]
        %v5661 = vld [vmem:[%s868 + $0x388] sm:$0xff]
        %v5662 = vld [vmem:[%s868 + $0x390] sm:$0xff]
        %v5663 = vld [vmem:[%s868 + $0x398] sm:$0xff]
        %v5664 = vld [vmem:[%s868 + $0x3a0] sm:$0xff]
        %v5665 = vld [vmem:[%s868 + $0x3a8] sm:$0xff]
        %v5666 = vld [vmem:[%s868 + $0x3b0] sm:$0xff]
        %v5667 = vld [vmem:[%s868 + $0x3b8] sm:$0xff]
        %v5668 = vld [vmem:[%s868 + $0x3c0] sm:$0xff]
        %v5669 = vld [vmem:[%s868 + $0x3c8] sm:$0xff]
        %v5670 = vld [vmem:[%s868 + $0x3d0] sm:$0xff]
        %v5671 = vld [vmem:[%s868 + $0x3d8] sm:$0xff]
        %v5672 = vld [vmem:[%s868 + $0x3e0] sm:$0xff]
        %v5673 = vld [vmem:[%s868 + $0x3e8] sm:$0xff]
        %v5674 = vld [vmem:[%s868 + $0x3f0] sm:$0xff]
        %v5675 = vld [vmem:[%s868 + $0x3f8] sm:$0xff]
        %v5676 = vld [vmem:[%s868 + $0x400] sm:$0xff]
        %v5677 = vld [vmem:[%s868 + $0x408] sm:$0xff]
        %v5678 = vld [vmem:[%s868 + $0x410] sm:$0xff]
        %v5679 = vld [vmem:[%s868 + $0x418] sm:$0xff]
        %v5680 = vld [vmem:[%s868 + $0x420] sm:$0xff]
        %v5681 = vld [vmem:[%s868 + $0x428] sm:$0xff]
        %v5682 = vld [vmem:[%s868 + $0x430] sm:$0xff]
        %v5683 = vld [vmem:[%s868 + $0x438] sm:$0xff]
        %v5684 = vld [vmem:[%s868 + $0x440] sm:$0xff]
        %v5685 = vld [vmem:[%s868 + $0x448] sm:$0xff]
        %v5686 = vld [vmem:[%s868 + $0x450] sm:$0xff]
        %v5687 = vld [vmem:[%s868 + $0x458] sm:$0xff]
        %v5688 = vld [vmem:[%s868 + $0x460] sm:$0xff]
        %v5689 = vld [vmem:[%s868 + $0x468] sm:$0xff]
        %v5690 = vld [vmem:[%s868 + $0x470] sm:$0xff]
        %v5691 = vld [vmem:[%s868 + $0x478] sm:$0xff]
        %v5692 = vld [vmem:[%s868 + $0x480] sm:$0xff]
        %v5693 = vld [vmem:[%s868 + $0x488] sm:$0xff]
        %v5694 = vld [vmem:[%s868 + $0x490] sm:$0xff]
        %v5695 = vld [vmem:[%s868 + $0x498] sm:$0xff]
        %v5696 = vld [vmem:[%s868 + $0x4a0] sm:$0xff]
        %v5697 = vld [vmem:[%s868 + $0x4a8] sm:$0xff]
        %v5698 = vld [vmem:[%s868 + $0x4b0] sm:$0xff]
        %v5699 = vld [vmem:[%s868 + $0x4b8] sm:$0xff]
        %v5700 = vld [vmem:[%s868 + $0x4c0] sm:$0xff]
        %v5701 = vld [vmem:[%s868 + $0x4c8] sm:$0xff]
        %v5702 = vld [vmem:[%s868 + $0x4d0] sm:$0xff]
        %v5703 = vld [vmem:[%s868 + $0x4d8] sm:$0xff]
        %v5704 = vld [vmem:[%s868 + $0x4e0] sm:$0xff]
        %v5705 = vld [vmem:[%s868 + $0x4e8] sm:$0xff]
        %v5706 = vld [vmem:[%s868 + $0x4f0] sm:$0xff]
        %v5707 = vld [vmem:[%s868 + $0x4f8] sm:$0xff]
        %v5708 = vld [vmem:[%s868 + $0x500] sm:$0xff]
        %v5709 = vld [vmem:[%s868 + $0x508] sm:$0xff]
        %v5710 = vld [vmem:[%s868 + $0x510] sm:$0xff]
        %v5711 = vld [vmem:[%s868 + $0x518] sm:$0xff]
        %v5712 = vld [vmem:[%s868 + $0x520] sm:$0xff]
        %v5713 = vld [vmem:[%s868 + $0x528] sm:$0xff]
        %v5714 = vld [vmem:[%s868 + $0x530] sm:$0xff]
        %v5715 = vld [vmem:[%s868 + $0x538] sm:$0xff]
        %v5716 = vld [vmem:[%s868 + $0x540] sm:$0xff]
        %v5717 = vld [vmem:[%s868 + $0x548] sm:$0xff]
        %v5718 = vld [vmem:[%s868 + $0x550] sm:$0xff]
        %v5719 = vld [vmem:[%s868 + $0x558] sm:$0xff]
        %v5720 = vld [vmem:[%s868 + $0x560] sm:$0xff]
        %v5721 = vld [vmem:[%s868 + $0x568] sm:$0xff]
        %v5722 = vld [vmem:[%s868 + $0x570] sm:$0xff]
        %v5723 = vld [vmem:[%s868 + $0x578] sm:$0xff]
        %v5724 = vld [vmem:[%s868 + $0x580] sm:$0xff]
        %v5725 = vld [vmem:[%s868 + $0x588] sm:$0xff]
        %v5726 = vld [vmem:[%s868 + $0x590] sm:$0xff]
        %v5727 = vld [vmem:[%s868 + $0x598] sm:$0xff]
        %v5728 = vld [vmem:[%s868 + $0x5a0] sm:$0xff]
        %v5729 = vld [vmem:[%s868 + $0x5a8] sm:$0xff]
        %v5730 = vld [vmem:[%s868 + $0x5b0] sm:$0xff]
        %v5731 = vld [vmem:[%s868 + $0x5b8] sm:$0xff]
        %v5732 = vld [vmem:[%s868 + $0x5c0] sm:$0xff]
        %v5733 = vld [vmem:[%s868 + $0x5c8] sm:$0xff]
        %v5734 = vld [vmem:[%s868 + $0x5d0] sm:$0xff]
        %v5735 = vld [vmem:[%s868 + $0x5d8] sm:$0xff]
        %v5736 = vld [vmem:[%s868 + $0x5e0] sm:$0xff]
        %v5737 = vld [vmem:[%s868 + $0x5e8] sm:$0xff]
        %v5738 = vld [vmem:[%s868 + $0x5f0] sm:$0xff]
        %v5739 = vld [vmem:[%s868 + $0x5f8] sm:$0xff]
        %v5740 = vld [vmem:[%s868 + $0x600] sm:$0xff]
        %v5741 = vld [vmem:[%s868 + $0x608] sm:$0xff]
        %v5742 = vld [vmem:[%s868 + $0x610] sm:$0xff]
        %v5743 = vld [vmem:[%s868 + $0x618] sm:$0xff]
        %v5744 = vld [vmem:[%s868 + $0x620] sm:$0xff]
        %v5745 = vld [vmem:[%s868 + $0x628] sm:$0xff]
        %v5746 = vld [vmem:[%s868 + $0x630] sm:$0xff]
        %v5747 = vld [vmem:[%s868 + $0x638] sm:$0xff]
        %v5748 = vld [vmem:[%s868 + $0x640] sm:$0xff]
        %v5749 = vld [vmem:[%s868 + $0x648] sm:$0xff]
        %v5750 = vld [vmem:[%s868 + $0x650] sm:$0xff]
        %v5751 = vld [vmem:[%s868 + $0x658] sm:$0xff]
        %v5752 = vld [vmem:[%s868 + $0x660] sm:$0xff]
        %v5753 = vld [vmem:[%s868 + $0x668] sm:$0xff]
        %v5754 = vld [vmem:[%s868 + $0x670] sm:$0xff]
        %v5755 = vld [vmem:[%s868 + $0x678] sm:$0xff]
        %v5756 = vld [vmem:[%s868 + $0x680] sm:$0xff]
        %v5757 = vld [vmem:[%s868 + $0x688] sm:$0xff]
        %v5758 = vld [vmem:[%s868 + $0x690] sm:$0xff]
        %v5759 = vld [vmem:[%s868 + $0x698] sm:$0xff]
        %v5760 = vld [vmem:[%s868 + $0x6a0] sm:$0xff]
        %v5761 = vld [vmem:[%s868 + $0x6a8] sm:$0xff]
        %v5762 = vld [vmem:[%s868 + $0x6b0] sm:$0xff]
        %v5763 = vld [vmem:[%s868 + $0x6b8] sm:$0xff]
        %v5764 = vld [vmem:[%s868 + $0x6c0] sm:$0xff]
        %v5765 = vld [vmem:[%s868 + $0x6c8] sm:$0xff]
        %v5766 = vld [vmem:[%s868 + $0x6d0] sm:$0xff]
        %v5767 = vld [vmem:[%s868 + $0x6d8] sm:$0xff]
        %v5768 = vld [vmem:[%s868 + $0x6e0] sm:$0xff]
        %v5769 = vld [vmem:[%s868 + $0x6e8] sm:$0xff]
        %v5770 = vld [vmem:[%s868 + $0x6f0] sm:$0xff]
        %v5771 = vld [vmem:[%s868 + $0x6f8] sm:$0xff]
        %v5772 = vld [vmem:[%s868 + $0x700] sm:$0xff]
        %v5773 = vld [vmem:[%s868 + $0x708] sm:$0xff]
        %v5774 = vld [vmem:[%s868 + $0x710] sm:$0xff]
        %v5775 = vld [vmem:[%s868 + $0x718] sm:$0xff]
        %v5776 = vld [vmem:[%s868 + $0x720] sm:$0xff]
        %v5777 = vld [vmem:[%s868 + $0x728] sm:$0xff]
        %v5778 = vld [vmem:[%s868 + $0x730] sm:$0xff]
        %v5779 = vld [vmem:[%s868 + $0x738] sm:$0xff]
        %v5780 = vld [vmem:[%s868 + $0x740] sm:$0xff]
        %v5781 = vld [vmem:[%s868 + $0x748] sm:$0xff]
        %v5782 = vld [vmem:[%s868 + $0x750] sm:$0xff]
        %v5783 = vld [vmem:[%s868 + $0x758] sm:$0xff]
        %v5784 = vld [vmem:[%s868 + $0x760] sm:$0xff]
        %v5785 = vld [vmem:[%s868 + $0x768] sm:$0xff]
        %v5786 = vld [vmem:[%s868 + $0x770] sm:$0xff]
        %v5787 = vld [vmem:[%s868 + $0x778] sm:$0xff]
        %v5788 = vld [vmem:[%s868 + $0x780] sm:$0xff]
        %v5789 = vld [vmem:[%s868 + $0x788] sm:$0xff]
        %v5790 = vld [vmem:[%s868 + $0x790] sm:$0xff]
        %v5791 = vld [vmem:[%s868 + $0x798] sm:$0xff]
        %v5792 = vld [vmem:[%s868 + $0x7a0] sm:$0xff]
        %v5793 = vld [vmem:[%s868 + $0x7a8] sm:$0xff]
        %v5794 = vld [vmem:[%s868 + $0x7b0] sm:$0xff]
        %v5795 = vld [vmem:[%s868 + $0x7b8] sm:$0xff]
        %v5796 = vld [vmem:[%s868 + $0x7c0] sm:$0xff]
        %v5797 = vld [vmem:[%s868 + $0x7c8] sm:$0xff]
        %v5798 = vld [vmem:[%s868 + $0x7d0] sm:$0xff]
        %v5799 = vld [vmem:[%s868 + $0x7d8] sm:$0xff]
        %v5800 = vld [vmem:[%s868 + $0x7e0] sm:$0xff]
        %v5801 = vld [vmem:[%s868 + $0x7e8] sm:$0xff]
        %v5802 = vld [vmem:[%s868 + $0x7f0] sm:$0xff]
        %v5803 = vld [vmem:[%s868 + $0x7f8] sm:$0xff]
        %v5804 = vld [vmem:[%s868 + $0x800] sm:$0xff]
        %v5805 = vld [vmem:[%s868 + $0x808] sm:$0xff]
        %v5806 = vld [vmem:[%s868 + $0x810] sm:$0xff]
        %v5807 = vld [vmem:[%s868 + $0x818] sm:$0xff]
        %v5808 = vld [vmem:[%s868 + $0x820] sm:$0xff]
        %v5809 = vld [vmem:[%s868 + $0x828] sm:$0xff]
        %v5810 = vld [vmem:[%s868 + $0x830] sm:$0xff]
        %v5811 = vld [vmem:[%s868 + $0x838] sm:$0xff]
        %v5812 = vld [vmem:[%s868 + $0x840] sm:$0xff]
        %v5813 = vld [vmem:[%s868 + $0x848] sm:$0xff]
        %v5814 = vld [vmem:[%s868 + $0x850] sm:$0xff]
        %v5815 = vld [vmem:[%s868 + $0x858] sm:$0xff]
        %v5816 = vld [vmem:[%s868 + $0x860] sm:$0xff]
        %v5817 = vld [vmem:[%s868 + $0x868] sm:$0xff]
        %v5818 = vld [vmem:[%s868 + $0x870] sm:$0xff]
        %v5819 = vld [vmem:[%s868 + $0x878] sm:$0xff]
        %v5820 = vld [vmem:[%s868 + $0x880] sm:$0xff]
        %v5821 = vld [vmem:[%s868 + $0x888] sm:$0xff]
        %v5822 = vld [vmem:[%s868 + $0x890] sm:$0xff]
        %v5823 = vld [vmem:[%s868 + $0x898] sm:$0xff]
        %v5824 = vld [vmem:[%s868 + $0x8a0] sm:$0xff]
        %v5825 = vld [vmem:[%s868 + $0x8a8] sm:$0xff]
        %v5826 = vld [vmem:[%s868 + $0x8b0] sm:$0xff]
        %v5827 = vld [vmem:[%s868 + $0x8b8] sm:$0xff]
        %v5828 = vld [vmem:[%s868 + $0x8c0] sm:$0xff]
        %v5829 = vld [vmem:[%s868 + $0x8c8] sm:$0xff]
        %v5830 = vld [vmem:[%s868 + $0x8d0] sm:$0xff]
        %v5831 = vld [vmem:[%s868 + $0x8d8] sm:$0xff]
        %v5832 = vld [vmem:[%s868 + $0x8e0] sm:$0xff]
        %v5833 = vld [vmem:[%s868 + $0x8e8] sm:$0xff]
        %v5834 = vld [vmem:[%s868 + $0x8f0] sm:$0xff]
        %v5835 = vld [vmem:[%s868 + $0x8f8] sm:$0xff]
        %v5836 = vld [vmem:[%s877] sm:$0xff]
        %v5837 = vld [vmem:[%s877 + $0x8] sm:$0xf]
        %v5840 = vlaneseq
        %v5841 = vshrl.u32 %v5840, 7
        %v5842 = vsub.s32 0, %v5841
        %v5843 = vrot.slane %v5836, %v5842
        %v5844 = vlaneseq
        %v5845 = vshrl.u32 %v5844, 7
        %v5846 = vsub.s32 1, %v5845
        %v5847 = vrot.slane %v5836, %v5846
        %v5848 = vlaneseq
        %v5849 = vshrl.u32 %v5848, 7
        %v5850 = vsub.s32 2, %v5849
        %v5851 = vrot.slane %v5836, %v5850
        %v5852 = vlaneseq
        %v5853 = vshrl.u32 %v5852, 7
        %v5854 = vsub.s32 3, %v5853
        %v5855 = vrot.slane %v5836, %v5854
        %v5856 = vlaneseq
        %v5857 = vshrl.u32 %v5856, 7
        %v5858 = vsub.s32 4, %v5857
        %v5859 = vrot.slane %v5836, %v5858
        %v5860 = vlaneseq
        %v5861 = vshrl.u32 %v5860, 7
        %v5862 = vsub.s32 5, %v5861
        %v5863 = vrot.slane %v5836, %v5862
        %v5864 = vlaneseq
        %v5865 = vshrl.u32 %v5864, 7
        %v5866 = vsub.s32 6, %v5865
        %v5867 = vrot.slane %v5836, %v5866
        %v5868 = vlaneseq
        %v5869 = vshrl.u32 %v5868, 7
        %v5870 = vsub.s32 7, %v5869
        %v5871 = vrot.slane %v5836, %v5870
        %v5872 = vlaneseq
        %v5873 = vshrl.u32 %v5872, 7
        %v5874 = vsub.s32 0, %v5873
        %v5875 = vrot.slane %v5837, %v5874
        %v5876 = vlaneseq
        %v5877 = vshrl.u32 %v5876, 7
        %v5878 = vsub.s32 1, %v5877
        %v5879 = vrot.slane %v5837, %v5878
        %v5880 = vlaneseq
        %v5881 = vshrl.u32 %v5880, 7
        %v5882 = vsub.s32 2, %v5881
        %v5883 = vrot.slane %v5837, %v5882
        %v5884 = vlaneseq
        %v5885 = vshrl.u32 %v5884, 7
        %v5886 = vsub.s32 3, %v5885
        %v5887 = vrot.slane %v5837, %v5886
        %v6188 = vunpack.c.l.b16 %v5548
        %v6189 = vunpack.c.h.b16 %v5548
        %v6190 = vunpack.c.l.b16 %v5549
        %v6191 = vunpack.c.h.b16 %v5549
        %v6192 = vunpack.c.l.b16 %v5550
        %v6193 = vunpack.c.h.b16 %v5550
        %v6194 = vunpack.c.l.b16 %v5551
        %v6195 = vunpack.c.h.b16 %v5551
        %v6196 = vunpack.c.l.b16 %v5552
        %v6197 = vunpack.c.h.b16 %v5552
        %v6198 = vunpack.c.l.b16 %v5553
        %v6199 = vunpack.c.h.b16 %v5553
        %v6200 = vunpack.c.l.b16 %v5554
        %v6201 = vunpack.c.h.b16 %v5554
        %v6202 = vunpack.c.l.b16 %v5555
        %v6203 = vunpack.c.h.b16 %v5555
        %v6204 = vunpack.c.l.b16 %v5556
        %v6205 = vunpack.c.h.b16 %v5556
        %v6206 = vunpack.c.l.b16 %v5557
        %v6207 = vunpack.c.h.b16 %v5557
        %v6208 = vunpack.c.l.b16 %v5558
        %v6209 = vunpack.c.h.b16 %v5558
        %v6210 = vunpack.c.l.b16 %v5559
        %v6211 = vunpack.c.h.b16 %v5559
        %v6212 = vunpack.c.l.b16 %v5560
        %v6213 = vunpack.c.h.b16 %v5560
        %v6214 = vunpack.c.l.b16 %v5561
        %v6215 = vunpack.c.h.b16 %v5561
        %v6216 = vunpack.c.l.b16 %v5562
        %v6217 = vunpack.c.h.b16 %v5562
        %v6218 = vunpack.c.l.b16 %v5563
        %v6219 = vunpack.c.h.b16 %v5563
        %v6220 = vunpack.c.l.b16 %v5564
        %v6221 = vunpack.c.h.b16 %v5564
        %v6222 = vunpack.c.l.b16 %v5565
        %v6223 = vunpack.c.h.b16 %v5565
        %v6224 = vunpack.c.l.b16 %v5566
        %v6225 = vunpack.c.h.b16 %v5566
        %v6226 = vunpack.c.l.b16 %v5567
        %v6227 = vunpack.c.h.b16 %v5567
        %v6228 = vunpack.c.l.b16 %v5568
        %v6229 = vunpack.c.h.b16 %v5568
        %v6230 = vunpack.c.l.b16 %v5569
        %v6231 = vunpack.c.h.b16 %v5569
        %v6232 = vunpack.c.l.b16 %v5570
        %v6233 = vunpack.c.h.b16 %v5570
        %v6234 = vunpack.c.l.b16 %v5571
        %v6235 = vunpack.c.h.b16 %v5571
        %v6236 = vunpack.c.l.b16 %v5572
        %v6237 = vunpack.c.h.b16 %v5572
        %v6238 = vunpack.c.l.b16 %v5573
        %v6239 = vunpack.c.h.b16 %v5573
        %v6240 = vunpack.c.l.b16 %v5574
        %v6241 = vunpack.c.h.b16 %v5574
        %v6242 = vunpack.c.l.b16 %v5575
        %v6243 = vunpack.c.h.b16 %v5575
        %v6244 = vunpack.c.l.b16 %v5576
        %v6245 = vunpack.c.h.b16 %v5576
        %v6246 = vunpack.c.l.b16 %v5577
        %v6247 = vunpack.c.h.b16 %v5577
        %v6248 = vunpack.c.l.b16 %v5578
        %v6249 = vunpack.c.h.b16 %v5578
        %v6250 = vunpack.c.l.b16 %v5579
        %v6251 = vunpack.c.h.b16 %v5579
        %v6252 = vunpack.c.l.b16 %v5580
        %v6253 = vunpack.c.h.b16 %v5580
        %v6254 = vunpack.c.l.b16 %v5581
        %v6255 = vunpack.c.h.b16 %v5581
        %v6256 = vunpack.c.l.b16 %v5582
        %v6257 = vunpack.c.h.b16 %v5582
        %v6258 = vunpack.c.l.b16 %v5583
        %v6259 = vunpack.c.h.b16 %v5583
        %v6260 = vunpack.c.l.b16 %v5584
        %v6261 = vunpack.c.h.b16 %v5584
        %v6262 = vunpack.c.l.b16 %v5585
        %v6263 = vunpack.c.h.b16 %v5585
        %v6264 = vunpack.c.l.b16 %v5586
        %v6265 = vunpack.c.h.b16 %v5586
        %v6266 = vunpack.c.l.b16 %v5587
        %v6267 = vunpack.c.h.b16 %v5587
        %v6268 = vunpack.c.l.b16 %v5588
        %v6269 = vunpack.c.h.b16 %v5588
        %v6270 = vunpack.c.l.b16 %v5589
        %v6271 = vunpack.c.h.b16 %v5589
        %v6272 = vunpack.c.l.b16 %v5590
        %v6273 = vunpack.c.h.b16 %v5590
        %v6274 = vunpack.c.l.b16 %v5591
        %v6275 = vunpack.c.h.b16 %v5591
        %v6276 = vunpack.c.l.b16 %v5592
        %v6277 = vunpack.c.h.b16 %v5592
        %v6278 = vunpack.c.l.b16 %v5593
        %v6279 = vunpack.c.h.b16 %v5593
        %v6280 = vunpack.c.l.b16 %v5594
        %v6281 = vunpack.c.h.b16 %v5594
        %v6282 = vunpack.c.l.b16 %v5595
        %v6283 = vunpack.c.h.b16 %v5595
        %v6284 = vunpack.c.l.b16 %v5596
        %v6285 = vunpack.c.h.b16 %v5596
        %v6286 = vunpack.c.l.b16 %v5597
        %v6287 = vunpack.c.h.b16 %v5597
        %v6288 = vunpack.c.l.b16 %v5598
        %v6289 = vunpack.c.h.b16 %v5598
        %v6290 = vunpack.c.l.b16 %v5599
        %v6291 = vunpack.c.h.b16 %v5599
        %v6292 = vunpack.c.l.b16 %v5600
        %v6293 = vunpack.c.h.b16 %v5600
        %v6294 = vunpack.c.l.b16 %v5601
        %v6295 = vunpack.c.h.b16 %v5601
        %v6296 = vunpack.c.l.b16 %v5602
        %v6297 = vunpack.c.h.b16 %v5602
        %v6298 = vunpack.c.l.b16 %v5603
        %v6299 = vunpack.c.h.b16 %v5603
        %v6300 = vunpack.c.l.b16 %v5604
        %v6301 = vunpack.c.h.b16 %v5604
        %v6302 = vunpack.c.l.b16 %v5605
        %v6303 = vunpack.c.h.b16 %v5605
        %v6304 = vunpack.c.l.b16 %v5606
        %v6305 = vunpack.c.h.b16 %v5606
        %v6306 = vunpack.c.l.b16 %v5607
        %v6307 = vunpack.c.h.b16 %v5607
        %v6308 = vunpack.c.l.b16 %v5608
        %v6309 = vunpack.c.h.b16 %v5608
        %v6310 = vunpack.c.l.b16 %v5609
        %v6311 = vunpack.c.h.b16 %v5609
        %v6312 = vunpack.c.l.b16 %v5610
        %v6313 = vunpack.c.h.b16 %v5610
        %v6314 = vunpack.c.l.b16 %v5611
        %v6315 = vunpack.c.h.b16 %v5611
        %v6316 = vunpack.c.l.b16 %v5612
        %v6317 = vunpack.c.h.b16 %v5612
        %v6318 = vunpack.c.l.b16 %v5613
        %v6319 = vunpack.c.h.b16 %v5613
        %v6320 = vunpack.c.l.b16 %v5614
        %v6321 = vunpack.c.h.b16 %v5614
        %v6322 = vunpack.c.l.b16 %v5615
        %v6323 = vunpack.c.h.b16 %v5615
        %v6324 = vunpack.c.l.b16 %v5616
        %v6325 = vunpack.c.h.b16 %v5616
        %v6326 = vunpack.c.l.b16 %v5617
        %v6327 = vunpack.c.h.b16 %v5617
        %v6328 = vunpack.c.l.b16 %v5618
        %v6329 = vunpack.c.h.b16 %v5618
        %v6330 = vunpack.c.l.b16 %v5619
        %v6331 = vunpack.c.h.b16 %v5619
        %v6332 = vunpack.c.l.b16 %v5620
        %v6333 = vunpack.c.h.b16 %v5620
        %v6334 = vunpack.c.l.b16 %v5621
        %v6335 = vunpack.c.h.b16 %v5621
        %v6336 = vunpack.c.l.b16 %v5622
        %v6337 = vunpack.c.h.b16 %v5622
        %v6338 = vunpack.c.l.b16 %v5623
        %v6339 = vunpack.c.h.b16 %v5623
        %v6340 = vunpack.c.l.b16 %v5624
        %v6341 = vunpack.c.h.b16 %v5624
        %v6342 = vunpack.c.l.b16 %v5625
        %v6343 = vunpack.c.h.b16 %v5625
        %v6344 = vunpack.c.l.b16 %v5626
        %v6345 = vunpack.c.h.b16 %v5626
        %v6346 = vunpack.c.l.b16 %v5627
        %v6347 = vunpack.c.h.b16 %v5627
        %v6348 = vunpack.c.l.b16 %v5628
        %v6349 = vunpack.c.h.b16 %v5628
        %v6350 = vunpack.c.l.b16 %v5629
        %v6351 = vunpack.c.h.b16 %v5629
        %v6352 = vunpack.c.l.b16 %v5630
        %v6353 = vunpack.c.h.b16 %v5630
        %v6354 = vunpack.c.l.b16 %v5631
        %v6355 = vunpack.c.h.b16 %v5631
        %v6356 = vunpack.c.l.b16 %v5632
        %v6357 = vunpack.c.h.b16 %v5632
        %v6358 = vunpack.c.l.b16 %v5633
        %v6359 = vunpack.c.h.b16 %v5633
        %v6360 = vunpack.c.l.b16 %v5634
        %v6361 = vunpack.c.h.b16 %v5634
        %v6362 = vunpack.c.l.b16 %v5635
        %v6363 = vunpack.c.h.b16 %v5635
        %v6364 = vunpack.c.l.b16 %v5636
        %v6365 = vunpack.c.h.b16 %v5636
        %v6366 = vunpack.c.l.b16 %v5637
        %v6367 = vunpack.c.h.b16 %v5637
        %v6368 = vunpack.c.l.b16 %v5638
        %v6369 = vunpack.c.h.b16 %v5638
        %v6370 = vunpack.c.l.b16 %v5639
        %v6371 = vunpack.c.h.b16 %v5639
        %v6372 = vunpack.c.l.b16 %v5640
        %v6373 = vunpack.c.h.b16 %v5640
        %v6374 = vunpack.c.l.b16 %v5641
        %v6375 = vunpack.c.h.b16 %v5641
        %v6376 = vunpack.c.l.b16 %v5642
        %v6377 = vunpack.c.h.b16 %v5642
        %v6378 = vunpack.c.l.b16 %v5643
        %v6379 = vunpack.c.h.b16 %v5643
        %v6380 = vunpack.c.l.b16 %v5644
        %v6381 = vunpack.c.h.b16 %v5644
        %v6382 = vunpack.c.l.b16 %v5645
        %v6383 = vunpack.c.h.b16 %v5645
        %v6384 = vunpack.c.l.b16 %v5646
        %v6385 = vunpack.c.h.b16 %v5646
        %v6386 = vunpack.c.l.b16 %v5647
        %v6387 = vunpack.c.h.b16 %v5647
        %v6388 = vunpack.c.l.b16 %v5648
        %v6389 = vunpack.c.h.b16 %v5648
        %v6390 = vunpack.c.l.b16 %v5649
        %v6391 = vunpack.c.h.b16 %v5649
        %v6392 = vunpack.c.l.b16 %v5650
        %v6393 = vunpack.c.h.b16 %v5650
        %v6394 = vunpack.c.l.b16 %v5651
        %v6395 = vunpack.c.h.b16 %v5651
        %v6396 = vunpack.c.l.b16 %v5652
        %v6397 = vunpack.c.h.b16 %v5652
        %v6398 = vunpack.c.l.b16 %v5653
        %v6399 = vunpack.c.h.b16 %v5653
        %v6400 = vunpack.c.l.b16 %v5654
        %v6401 = vunpack.c.h.b16 %v5654
        %v6402 = vunpack.c.l.b16 %v5655
        %v6403 = vunpack.c.h.b16 %v5655
        %v6404 = vunpack.c.l.b16 %v5656
        %v6405 = vunpack.c.h.b16 %v5656
        %v6406 = vunpack.c.l.b16 %v5657
        %v6407 = vunpack.c.h.b16 %v5657
        %v6408 = vunpack.c.l.b16 %v5658
        %v6409 = vunpack.c.h.b16 %v5658
        %v6410 = vunpack.c.l.b16 %v5659
        %v6411 = vunpack.c.h.b16 %v5659
        %v6412 = vunpack.c.l.b16 %v5660
        %v6413 = vunpack.c.h.b16 %v5660
        %v6414 = vunpack.c.l.b16 %v5661
        %v6415 = vunpack.c.h.b16 %v5661
        %v6416 = vunpack.c.l.b16 %v5662
        %v6417 = vunpack.c.h.b16 %v5662
        %v6418 = vunpack.c.l.b16 %v5663
        %v6419 = vunpack.c.h.b16 %v5663
        %v6420 = vunpack.c.l.b16 %v5664
        %v6421 = vunpack.c.h.b16 %v5664
        %v6422 = vunpack.c.l.b16 %v5665
        %v6423 = vunpack.c.h.b16 %v5665
        %v6424 = vunpack.c.l.b16 %v5666
        %v6425 = vunpack.c.h.b16 %v5666
        %v6426 = vunpack.c.l.b16 %v5667
        %v6427 = vunpack.c.h.b16 %v5667
        %v6428 = vunpack.c.l.b16 %v5668
        %v6429 = vunpack.c.h.b16 %v5668
        %v6430 = vunpack.c.l.b16 %v5669
        %v6431 = vunpack.c.h.b16 %v5669
        %v6432 = vunpack.c.l.b16 %v5670
        %v6433 = vunpack.c.h.b16 %v5670
        %v6434 = vunpack.c.l.b16 %v5671
        %v6435 = vunpack.c.h.b16 %v5671
        %v6436 = vunpack.c.l.b16 %v5672
        %v6437 = vunpack.c.h.b16 %v5672
        %v6438 = vunpack.c.l.b16 %v5673
        %v6439 = vunpack.c.h.b16 %v5673
        %v6440 = vunpack.c.l.b16 %v5674
        %v6441 = vunpack.c.h.b16 %v5674
        %v6442 = vunpack.c.l.b16 %v5675
        %v6443 = vunpack.c.h.b16 %v5675
        %v6444 = vunpack.c.l.b16 %v5676
        %v6445 = vunpack.c.h.b16 %v5676
        %v6446 = vunpack.c.l.b16 %v5677
        %v6447 = vunpack.c.h.b16 %v5677
        %v6448 = vunpack.c.l.b16 %v5678
        %v6449 = vunpack.c.h.b16 %v5678
        %v6450 = vunpack.c.l.b16 %v5679
        %v6451 = vunpack.c.h.b16 %v5679
        %v6452 = vunpack.c.l.b16 %v5680
        %v6453 = vunpack.c.h.b16 %v5680
        %v6454 = vunpack.c.l.b16 %v5681
        %v6455 = vunpack.c.h.b16 %v5681
        %v6456 = vunpack.c.l.b16 %v5682
        %v6457 = vunpack.c.h.b16 %v5682
        %v6458 = vunpack.c.l.b16 %v5683
        %v6459 = vunpack.c.h.b16 %v5683
        %v6460 = vunpack.c.l.b16 %v5684
        %v6461 = vunpack.c.h.b16 %v5684
        %v6462 = vunpack.c.l.b16 %v5685
        %v6463 = vunpack.c.h.b16 %v5685
        %v6464 = vunpack.c.l.b16 %v5686
        %v6465 = vunpack.c.h.b16 %v5686
        %v6466 = vunpack.c.l.b16 %v5687
        %v6467 = vunpack.c.h.b16 %v5687
        %v6468 = vunpack.c.l.b16 %v5688
        %v6469 = vunpack.c.h.b16 %v5688
        %v6470 = vunpack.c.l.b16 %v5689
        %v6471 = vunpack.c.h.b16 %v5689
        %v6472 = vunpack.c.l.b16 %v5690
        %v6473 = vunpack.c.h.b16 %v5690
        %v6474 = vunpack.c.l.b16 %v5691
        %v6475 = vunpack.c.h.b16 %v5691
        %v6476 = vunpack.c.l.b16 %v5692
        %v6477 = vunpack.c.h.b16 %v5692
        %v6478 = vunpack.c.l.b16 %v5693
        %v6479 = vunpack.c.h.b16 %v5693
        %v6480 = vunpack.c.l.b16 %v5694
        %v6481 = vunpack.c.h.b16 %v5694
        %v6482 = vunpack.c.l.b16 %v5695
        %v6483 = vunpack.c.h.b16 %v5695
        %v6484 = vunpack.c.l.b16 %v5696
        %v6485 = vunpack.c.h.b16 %v5696
        %v6486 = vunpack.c.l.b16 %v5697
        %v6487 = vunpack.c.h.b16 %v5697
        %v6488 = vunpack.c.l.b16 %v5698
        %v6489 = vunpack.c.h.b16 %v5698
        %v6490 = vunpack.c.l.b16 %v5699
        %v6491 = vunpack.c.h.b16 %v5699
        %v6492 = vunpack.c.l.b16 %v5700
        %v6493 = vunpack.c.h.b16 %v5700
        %v6494 = vunpack.c.l.b16 %v5701
        %v6495 = vunpack.c.h.b16 %v5701
        %v6496 = vunpack.c.l.b16 %v5702
        %v6497 = vunpack.c.h.b16 %v5702
        %v6498 = vunpack.c.l.b16 %v5703
        %v6499 = vunpack.c.h.b16 %v5703
        %v6500 = vunpack.c.l.b16 %v5704
        %v6501 = vunpack.c.h.b16 %v5704
        %v6502 = vunpack.c.l.b16 %v5705
        %v6503 = vunpack.c.h.b16 %v5705
        %v6504 = vunpack.c.l.b16 %v5706
        %v6505 = vunpack.c.h.b16 %v5706
        %v6506 = vunpack.c.l.b16 %v5707
        %v6507 = vunpack.c.h.b16 %v5707
        %v6508 = vunpack.c.l.b16 %v5708
        %v6509 = vunpack.c.h.b16 %v5708
        %v6510 = vunpack.c.l.b16 %v5709
        %v6511 = vunpack.c.h.b16 %v5709
        %v6512 = vunpack.c.l.b16 %v5710
        %v6513 = vunpack.c.h.b16 %v5710
        %v6514 = vunpack.c.l.b16 %v5711
        %v6515 = vunpack.c.h.b16 %v5711
        %v6516 = vunpack.c.l.b16 %v5712
        %v6517 = vunpack.c.h.b16 %v5712
        %v6518 = vunpack.c.l.b16 %v5713
        %v6519 = vunpack.c.h.b16 %v5713
        %v6520 = vunpack.c.l.b16 %v5714
        %v6521 = vunpack.c.h.b16 %v5714
        %v6522 = vunpack.c.l.b16 %v5715
        %v6523 = vunpack.c.h.b16 %v5715
        %v6524 = vunpack.c.l.b16 %v5716
        %v6525 = vunpack.c.h.b16 %v5716
        %v6526 = vunpack.c.l.b16 %v5717
        %v6527 = vunpack.c.h.b16 %v5717
        %v6528 = vunpack.c.l.b16 %v5718
        %v6529 = vunpack.c.h.b16 %v5718
        %v6530 = vunpack.c.l.b16 %v5719
        %v6531 = vunpack.c.h.b16 %v5719
        %v6532 = vunpack.c.l.b16 %v5720
        %v6533 = vunpack.c.h.b16 %v5720
        %v6534 = vunpack.c.l.b16 %v5721
        %v6535 = vunpack.c.h.b16 %v5721
        %v6536 = vunpack.c.l.b16 %v5722
        %v6537 = vunpack.c.h.b16 %v5722
        %v6538 = vunpack.c.l.b16 %v5723
        %v6539 = vunpack.c.h.b16 %v5723
        %v6540 = vunpack.c.l.b16 %v5724
        %v6541 = vunpack.c.h.b16 %v5724
        %v6542 = vunpack.c.l.b16 %v5725
        %v6543 = vunpack.c.h.b16 %v5725
        %v6544 = vunpack.c.l.b16 %v5726
        %v6545 = vunpack.c.h.b16 %v5726
        %v6546 = vunpack.c.l.b16 %v5727
        %v6547 = vunpack.c.h.b16 %v5727
        %v6548 = vunpack.c.l.b16 %v5728
        %v6549 = vunpack.c.h.b16 %v5728
        %v6550 = vunpack.c.l.b16 %v5729
        %v6551 = vunpack.c.h.b16 %v5729
        %v6552 = vunpack.c.l.b16 %v5730
        %v6553 = vunpack.c.h.b16 %v5730
        %v6554 = vunpack.c.l.b16 %v5731
        %v6555 = vunpack.c.h.b16 %v5731
        %v6556 = vunpack.c.l.b16 %v5732
        %v6557 = vunpack.c.h.b16 %v5732
        %v6558 = vunpack.c.l.b16 %v5733
        %v6559 = vunpack.c.h.b16 %v5733
        %v6560 = vunpack.c.l.b16 %v5734
        %v6561 = vunpack.c.h.b16 %v5734
        %v6562 = vunpack.c.l.b16 %v5735
        %v6563 = vunpack.c.h.b16 %v5735
        %v6564 = vunpack.c.l.b16 %v5736
        %v6565 = vunpack.c.h.b16 %v5736
        %v6566 = vunpack.c.l.b16 %v5737
        %v6567 = vunpack.c.h.b16 %v5737
        %v6568 = vunpack.c.l.b16 %v5738
        %v6569 = vunpack.c.h.b16 %v5738
        %v6570 = vunpack.c.l.b16 %v5739
        %v6571 = vunpack.c.h.b16 %v5739
        %v6572 = vunpack.c.l.b16 %v5740
        %v6573 = vunpack.c.h.b16 %v5740
        %v6574 = vunpack.c.l.b16 %v5741
        %v6575 = vunpack.c.h.b16 %v5741
        %v6576 = vunpack.c.l.b16 %v5742
        %v6577 = vunpack.c.h.b16 %v5742
        %v6578 = vunpack.c.l.b16 %v5743
        %v6579 = vunpack.c.h.b16 %v5743
        %v6580 = vunpack.c.l.b16 %v5744
        %v6581 = vunpack.c.h.b16 %v5744
        %v6582 = vunpack.c.l.b16 %v5745
        %v6583 = vunpack.c.h.b16 %v5745
        %v6584 = vunpack.c.l.b16 %v5746
        %v6585 = vunpack.c.h.b16 %v5746
        %v6586 = vunpack.c.l.b16 %v5747
        %v6587 = vunpack.c.h.b16 %v5747
        %v6588 = vunpack.c.l.b16 %v5748
        %v6589 = vunpack.c.h.b16 %v5748
        %v6590 = vunpack.c.l.b16 %v5749
        %v6591 = vunpack.c.h.b16 %v5749
        %v6592 = vunpack.c.l.b16 %v5750
        %v6593 = vunpack.c.h.b16 %v5750
        %v6594 = vunpack.c.l.b16 %v5751
        %v6595 = vunpack.c.h.b16 %v5751
        %v6596 = vunpack.c.l.b16 %v5752
        %v6597 = vunpack.c.h.b16 %v5752
        %v6598 = vunpack.c.l.b16 %v5753
        %v6599 = vunpack.c.h.b16 %v5753
        %v6600 = vunpack.c.l.b16 %v5754
        %v6601 = vunpack.c.h.b16 %v5754
        %v6602 = vunpack.c.l.b16 %v5755
        %v6603 = vunpack.c.h.b16 %v5755
        %v6604 = vunpack.c.l.b16 %v5756
        %v6605 = vunpack.c.h.b16 %v5756
        %v6606 = vunpack.c.l.b16 %v5757
        %v6607 = vunpack.c.h.b16 %v5757
        %v6608 = vunpack.c.l.b16 %v5758
        %v6609 = vunpack.c.h.b16 %v5758
        %v6610 = vunpack.c.l.b16 %v5759
        %v6611 = vunpack.c.h.b16 %v5759
        %v6612 = vunpack.c.l.b16 %v5760
        %v6613 = vunpack.c.h.b16 %v5760
        %v6614 = vunpack.c.l.b16 %v5761
        %v6615 = vunpack.c.h.b16 %v5761
        %v6616 = vunpack.c.l.b16 %v5762
        %v6617 = vunpack.c.h.b16 %v5762
        %v6618 = vunpack.c.l.b16 %v5763
        %v6619 = vunpack.c.h.b16 %v5763
        %v6620 = vunpack.c.l.b16 %v5764
        %v6621 = vunpack.c.h.b16 %v5764
        %v6622 = vunpack.c.l.b16 %v5765
        %v6623 = vunpack.c.h.b16 %v5765
        %v6624 = vunpack.c.l.b16 %v5766
        %v6625 = vunpack.c.h.b16 %v5766
        %v6626 = vunpack.c.l.b16 %v5767
        %v6627 = vunpack.c.h.b16 %v5767
        %v6628 = vunpack.c.l.b16 %v5768
        %v6629 = vunpack.c.h.b16 %v5768
        %v6630 = vunpack.c.l.b16 %v5769
        %v6631 = vunpack.c.h.b16 %v5769
        %v6632 = vunpack.c.l.b16 %v5770
        %v6633 = vunpack.c.h.b16 %v5770
        %v6634 = vunpack.c.l.b16 %v5771
        %v6635 = vunpack.c.h.b16 %v5771
        %v6636 = vunpack.c.l.b16 %v5772
        %v6637 = vunpack.c.h.b16 %v5772
        %v6638 = vunpack.c.l.b16 %v5773
        %v6639 = vunpack.c.h.b16 %v5773
        %v6640 = vunpack.c.l.b16 %v5774
        %v6641 = vunpack.c.h.b16 %v5774
        %v6642 = vunpack.c.l.b16 %v5775
        %v6643 = vunpack.c.h.b16 %v5775
        %v6644 = vunpack.c.l.b16 %v5776
        %v6645 = vunpack.c.h.b16 %v5776
        %v6646 = vunpack.c.l.b16 %v5777
        %v6647 = vunpack.c.h.b16 %v5777
        %v6648 = vunpack.c.l.b16 %v5778
        %v6649 = vunpack.c.h.b16 %v5778
        %v6650 = vunpack.c.l.b16 %v5779
        %v6651 = vunpack.c.h.b16 %v5779
        %v6652 = vunpack.c.l.b16 %v5780
        %v6653 = vunpack.c.h.b16 %v5780
        %v6654 = vunpack.c.l.b16 %v5781
        %v6655 = vunpack.c.h.b16 %v5781
        %v6656 = vunpack.c.l.b16 %v5782
        %v6657 = vunpack.c.h.b16 %v5782
        %v6658 = vunpack.c.l.b16 %v5783
        %v6659 = vunpack.c.h.b16 %v5783
        %v6660 = vunpack.c.l.b16 %v5784
        %v6661 = vunpack.c.h.b16 %v5784
        %v6662 = vunpack.c.l.b16 %v5785
        %v6663 = vunpack.c.h.b16 %v5785
        %v6664 = vunpack.c.l.b16 %v5786
        %v6665 = vunpack.c.h.b16 %v5786
        %v6666 = vunpack.c.l.b16 %v5787
        %v6667 = vunpack.c.h.b16 %v5787
        %v6668 = vunpack.c.l.b16 %v5788
        %v6669 = vunpack.c.h.b16 %v5788
        %v6670 = vunpack.c.l.b16 %v5789
        %v6671 = vunpack.c.h.b16 %v5789
        %v6672 = vunpack.c.l.b16 %v5790
        %v6673 = vunpack.c.h.b16 %v5790
        %v6674 = vunpack.c.l.b16 %v5791
        %v6675 = vunpack.c.h.b16 %v5791
        %v6676 = vunpack.c.l.b16 %v5792
        %v6677 = vunpack.c.h.b16 %v5792
        %v6678 = vunpack.c.l.b16 %v5793
        %v6679 = vunpack.c.h.b16 %v5793
        %v6680 = vunpack.c.l.b16 %v5794
        %v6681 = vunpack.c.h.b16 %v5794
        %v6682 = vunpack.c.l.b16 %v5795
        %v6683 = vunpack.c.h.b16 %v5795
        %v6684 = vunpack.c.l.b16 %v5796
        %v6685 = vunpack.c.h.b16 %v5796
        %v6686 = vunpack.c.l.b16 %v5797
        %v6687 = vunpack.c.h.b16 %v5797
        %v6688 = vunpack.c.l.b16 %v5798
        %v6689 = vunpack.c.h.b16 %v5798
        %v6690 = vunpack.c.l.b16 %v5799
        %v6691 = vunpack.c.h.b16 %v5799
        %v6692 = vunpack.c.l.b16 %v5800
        %v6693 = vunpack.c.h.b16 %v5800
        %v6694 = vunpack.c.l.b16 %v5801
        %v6695 = vunpack.c.h.b16 %v5801
        %v6696 = vunpack.c.l.b16 %v5802
        %v6697 = vunpack.c.h.b16 %v5802
        %v6698 = vunpack.c.l.b16 %v5803
        %v6699 = vunpack.c.h.b16 %v5803
        %v6700 = vunpack.c.l.b16 %v5804
        %v6701 = vunpack.c.h.b16 %v5804
        %v6702 = vunpack.c.l.b16 %v5805
        %v6703 = vunpack.c.h.b16 %v5805
        %v6704 = vunpack.c.l.b16 %v5806
        %v6705 = vunpack.c.h.b16 %v5806
        %v6706 = vunpack.c.l.b16 %v5807
        %v6707 = vunpack.c.h.b16 %v5807
        %v6708 = vunpack.c.l.b16 %v5808
        %v6709 = vunpack.c.h.b16 %v5808
        %v6710 = vunpack.c.l.b16 %v5809
        %v6711 = vunpack.c.h.b16 %v5809
        %v6712 = vunpack.c.l.b16 %v5810
        %v6713 = vunpack.c.h.b16 %v5810
        %v6714 = vunpack.c.l.b16 %v5811
        %v6715 = vunpack.c.h.b16 %v5811
        %v6716 = vunpack.c.l.b16 %v5812
        %v6717 = vunpack.c.h.b16 %v5812
        %v6718 = vunpack.c.l.b16 %v5813
        %v6719 = vunpack.c.h.b16 %v5813
        %v6720 = vunpack.c.l.b16 %v5814
        %v6721 = vunpack.c.h.b16 %v5814
        %v6722 = vunpack.c.l.b16 %v5815
        %v6723 = vunpack.c.h.b16 %v5815
        %v6724 = vunpack.c.l.b16 %v5816
        %v6725 = vunpack.c.h.b16 %v5816
        %v6726 = vunpack.c.l.b16 %v5817
        %v6727 = vunpack.c.h.b16 %v5817
        %v6728 = vunpack.c.l.b16 %v5818
        %v6729 = vunpack.c.h.b16 %v5818
        %v6730 = vunpack.c.l.b16 %v5819
        %v6731 = vunpack.c.h.b16 %v5819
        %v6732 = vunpack.c.l.b16 %v5820
        %v6733 = vunpack.c.h.b16 %v5820
        %v6734 = vunpack.c.l.b16 %v5821
        %v6735 = vunpack.c.h.b16 %v5821
        %v6736 = vunpack.c.l.b16 %v5822
        %v6737 = vunpack.c.h.b16 %v5822
        %v6738 = vunpack.c.l.b16 %v5823
        %v6739 = vunpack.c.h.b16 %v5823
        %v6740 = vunpack.c.l.b16 %v5824
        %v6741 = vunpack.c.h.b16 %v5824
        %v6742 = vunpack.c.l.b16 %v5825
        %v6743 = vunpack.c.h.b16 %v5825
        %v6744 = vunpack.c.l.b16 %v5826
        %v6745 = vunpack.c.h.b16 %v5826
        %v6746 = vunpack.c.l.b16 %v5827
        %v6747 = vunpack.c.h.b16 %v5827
        %v6748 = vunpack.c.l.b16 %v5828
        %v6749 = vunpack.c.h.b16 %v5828
        %v6750 = vunpack.c.l.b16 %v5829
        %v6751 = vunpack.c.h.b16 %v5829
        %v6752 = vunpack.c.l.b16 %v5830
        %v6753 = vunpack.c.h.b16 %v5830
        %v6754 = vunpack.c.l.b16 %v5831
        %v6755 = vunpack.c.h.b16 %v5831
        %v6756 = vunpack.c.l.b16 %v5832
        %v6757 = vunpack.c.h.b16 %v5832
        %v6758 = vunpack.c.l.b16 %v5833
        %v6759 = vunpack.c.h.b16 %v5833
        %v6760 = vunpack.c.l.b16 %v5834
        %v6761 = vunpack.c.h.b16 %v5834
        %v6762 = vunpack.c.l.b16 %v5835
        %v6763 = vunpack.c.h.b16 %v5835
        %v6764 = vpack.c.b16 %v6200, %v6188
        %v6765 = vpack.c.b16 %v6201, %v6189
        %v6766 = vpack.c.b16 %v6202, %v6190
        %v6767 = vpack.c.b16 %v6203, %v6191
        %v6768 = vpack.c.b16 %v6204, %v6192
        %v6769 = vpack.c.b16 %v6205, %v6193
        %v6770 = vpack.c.b16 %v6206, %v6194
        %v6771 = vpack.c.b16 %v6207, %v6195
        %v6772 = vpack.c.b16 %v6208, %v6196
        %v6773 = vpack.c.b16 %v6209, %v6197
        %v6774 = vpack.c.b16 %v6210, %v6198
        %v6775 = vpack.c.b16 %v6211, %v6199
        %v6776 = vpack.c.b16 %v6224, %v6212
        %v6777 = vpack.c.b16 %v6225, %v6213
        %v6778 = vpack.c.b16 %v6226, %v6214
        %v6779 = vpack.c.b16 %v6227, %v6215
        %v6780 = vpack.c.b16 %v6228, %v6216
        %v6781 = vpack.c.b16 %v6229, %v6217
        %v6782 = vpack.c.b16 %v6230, %v6218
        %v6783 = vpack.c.b16 %v6231, %v6219
        %v6784 = vpack.c.b16 %v6232, %v6220
        %v6785 = vpack.c.b16 %v6233, %v6221
        %v6786 = vpack.c.b16 %v6234, %v6222
        %v6787 = vpack.c.b16 %v6235, %v6223
        %v6788 = vpack.c.b16 %v6248, %v6236
        %v6789 = vpack.c.b16 %v6249, %v6237
        %v6790 = vpack.c.b16 %v6250, %v6238
        %v6791 = vpack.c.b16 %v6251, %v6239
        %v6792 = vpack.c.b16 %v6252, %v6240
        %v6793 = vpack.c.b16 %v6253, %v6241
        %v6794 = vpack.c.b16 %v6254, %v6242
        %v6795 = vpack.c.b16 %v6255, %v6243
        %v6796 = vpack.c.b16 %v6256, %v6244
        %v6797 = vpack.c.b16 %v6257, %v6245
        %v6798 = vpack.c.b16 %v6258, %v6246
        %v6799 = vpack.c.b16 %v6259, %v6247
        %v6800 = vpack.c.b16 %v6272, %v6260
        %v6801 = vpack.c.b16 %v6273, %v6261
        %v6802 = vpack.c.b16 %v6274, %v6262
        %v6803 = vpack.c.b16 %v6275, %v6263
        %v6804 = vpack.c.b16 %v6276, %v6264
        %v6805 = vpack.c.b16 %v6277, %v6265
        %v6806 = vpack.c.b16 %v6278, %v6266
        %v6807 = vpack.c.b16 %v6279, %v6267
        %v6808 = vpack.c.b16 %v6280, %v6268
        %v6809 = vpack.c.b16 %v6281, %v6269
        %v6810 = vpack.c.b16 %v6282, %v6270
        %v6811 = vpack.c.b16 %v6283, %v6271
        %v6812 = vpack.c.b16 %v6296, %v6284
        %v6813 = vpack.c.b16 %v6297, %v6285
        %v6814 = vpack.c.b16 %v6298, %v6286
        %v6815 = vpack.c.b16 %v6299, %v6287
        %v6816 = vpack.c.b16 %v6300, %v6288
        %v6817 = vpack.c.b16 %v6301, %v6289
        %v6818 = vpack.c.b16 %v6302, %v6290
        %v6819 = vpack.c.b16 %v6303, %v6291
        %v6820 = vpack.c.b16 %v6304, %v6292
        %v6821 = vpack.c.b16 %v6305, %v6293
        %v6822 = vpack.c.b16 %v6306, %v6294
        %v6823 = vpack.c.b16 %v6307, %v6295
        %v6824 = vpack.c.b16 %v6320, %v6308
        %v6825 = vpack.c.b16 %v6321, %v6309
        %v6826 = vpack.c.b16 %v6322, %v6310
        %v6827 = vpack.c.b16 %v6323, %v6311
        %v6828 = vpack.c.b16 %v6324, %v6312
        %v6829 = vpack.c.b16 %v6325, %v6313
        %v6830 = vpack.c.b16 %v6326, %v6314
        %v6831 = vpack.c.b16 %v6327, %v6315
        %v6832 = vpack.c.b16 %v6328, %v6316
        %v6833 = vpack.c.b16 %v6329, %v6317
        %v6834 = vpack.c.b16 %v6330, %v6318
        %v6835 = vpack.c.b16 %v6331, %v6319
        %v6836 = vpack.c.b16 %v6344, %v6332
        %v6837 = vpack.c.b16 %v6345, %v6333
        %v6838 = vpack.c.b16 %v6346, %v6334
        %v6839 = vpack.c.b16 %v6347, %v6335
        %v6840 = vpack.c.b16 %v6348, %v6336
        %v6841 = vpack.c.b16 %v6349, %v6337
        %v6842 = vpack.c.b16 %v6350, %v6338
        %v6843 = vpack.c.b16 %v6351, %v6339
        %v6844 = vpack.c.b16 %v6352, %v6340
        %v6845 = vpack.c.b16 %v6353, %v6341
        %v6846 = vpack.c.b16 %v6354, %v6342
        %v6847 = vpack.c.b16 %v6355, %v6343
        %v6848 = vpack.c.b16 %v6368, %v6356
        %v6849 = vpack.c.b16 %v6369, %v6357
        %v6850 = vpack.c.b16 %v6370, %v6358
        %v6851 = vpack.c.b16 %v6371, %v6359
        %v6852 = vpack.c.b16 %v6372, %v6360
        %v6853 = vpack.c.b16 %v6373, %v6361
        %v6854 = vpack.c.b16 %v6374, %v6362
        %v6855 = vpack.c.b16 %v6375, %v6363
        %v6856 = vpack.c.b16 %v6376, %v6364
        %v6857 = vpack.c.b16 %v6377, %v6365
        %v6858 = vpack.c.b16 %v6378, %v6366
        %v6859 = vpack.c.b16 %v6379, %v6367
        %v6860 = vpack.c.b16 %v6392, %v6380
        %v6861 = vpack.c.b16 %v6393, %v6381
        %v6862 = vpack.c.b16 %v6394, %v6382
        %v6863 = vpack.c.b16 %v6395, %v6383
        %v6864 = vpack.c.b16 %v6396, %v6384
        %v6865 = vpack.c.b16 %v6397, %v6385
        %v6866 = vpack.c.b16 %v6398, %v6386
        %v6867 = vpack.c.b16 %v6399, %v6387
        %v6868 = vpack.c.b16 %v6400, %v6388
        %v6869 = vpack.c.b16 %v6401, %v6389
        %v6870 = vpack.c.b16 %v6402, %v6390
        %v6871 = vpack.c.b16 %v6403, %v6391
        %v6872 = vpack.c.b16 %v6416, %v6404
        %v6873 = vpack.c.b16 %v6417, %v6405
        %v6874 = vpack.c.b16 %v6418, %v6406
        %v6875 = vpack.c.b16 %v6419, %v6407
        %v6876 = vpack.c.b16 %v6420, %v6408
        %v6877 = vpack.c.b16 %v6421, %v6409
        %v6878 = vpack.c.b16 %v6422, %v6410
        %v6879 = vpack.c.b16 %v6423, %v6411
        %v6880 = vpack.c.b16 %v6424, %v6412
        %v6881 = vpack.c.b16 %v6425, %v6413
        %v6882 = vpack.c.b16 %v6426, %v6414
        %v6883 = vpack.c.b16 %v6427, %v6415
        %v6884 = vpack.c.b16 %v6440, %v6428
        %v6885 = vpack.c.b16 %v6441, %v6429
        %v6886 = vpack.c.b16 %v6442, %v6430
        %v6887 = vpack.c.b16 %v6443, %v6431
        %v6888 = vpack.c.b16 %v6444, %v6432
        %v6889 = vpack.c.b16 %v6445, %v6433
        %v6890 = vpack.c.b16 %v6446, %v6434
        %v6891 = vpack.c.b16 %v6447, %v6435
        %v6892 = vpack.c.b16 %v6448, %v6436
        %v6893 = vpack.c.b16 %v6449, %v6437
        %v6894 = vpack.c.b16 %v6450, %v6438
        %v6895 = vpack.c.b16 %v6451, %v6439
        %v6896 = vpack.c.b16 %v6464, %v6452
        %v6897 = vpack.c.b16 %v6465, %v6453
        %v6898 = vpack.c.b16 %v6466, %v6454
        %v6899 = vpack.c.b16 %v6467, %v6455
        %v6900 = vpack.c.b16 %v6468, %v6456
        %v6901 = vpack.c.b16 %v6469, %v6457
        %v6902 = vpack.c.b16 %v6470, %v6458
        %v6903 = vpack.c.b16 %v6471, %v6459
        %v6904 = vpack.c.b16 %v6472, %v6460
        %v6905 = vpack.c.b16 %v6473, %v6461
        %v6906 = vpack.c.b16 %v6474, %v6462
        %v6907 = vpack.c.b16 %v6475, %v6463
        %v6908 = vpack.c.b16 %v6488, %v6476
        %v6909 = vpack.c.b16 %v6489, %v6477
        %v6910 = vpack.c.b16 %v6490, %v6478
        %v6911 = vpack.c.b16 %v6491, %v6479
        %v6912 = vpack.c.b16 %v6492, %v6480
        %v6913 = vpack.c.b16 %v6493, %v6481
        %v6914 = vpack.c.b16 %v6494, %v6482
        %v6915 = vpack.c.b16 %v6495, %v6483
        %v6916 = vpack.c.b16 %v6496, %v6484
        %v6917 = vpack.c.b16 %v6497, %v6485
        %v6918 = vpack.c.b16 %v6498, %v6486
        %v6919 = vpack.c.b16 %v6499, %v6487
        %v6920 = vpack.c.b16 %v6512, %v6500
        %v6921 = vpack.c.b16 %v6513, %v6501
        %v6922 = vpack.c.b16 %v6514, %v6502
        %v6923 = vpack.c.b16 %v6515, %v6503
        %v6924 = vpack.c.b16 %v6516, %v6504
        %v6925 = vpack.c.b16 %v6517, %v6505
        %v6926 = vpack.c.b16 %v6518, %v6506
        %v6927 = vpack.c.b16 %v6519, %v6507
        %v6928 = vpack.c.b16 %v6520, %v6508
        %v6929 = vpack.c.b16 %v6521, %v6509
        %v6930 = vpack.c.b16 %v6522, %v6510
        %v6931 = vpack.c.b16 %v6523, %v6511
        %v6932 = vpack.c.b16 %v6536, %v6524
        %v6933 = vpack.c.b16 %v6537, %v6525
        %v6934 = vpack.c.b16 %v6538, %v6526
        %v6935 = vpack.c.b16 %v6539, %v6527
        %v6936 = vpack.c.b16 %v6540, %v6528
        %v6937 = vpack.c.b16 %v6541, %v6529
        %v6938 = vpack.c.b16 %v6542, %v6530
        %v6939 = vpack.c.b16 %v6543, %v6531
        %v6940 = vpack.c.b16 %v6544, %v6532
        %v6941 = vpack.c.b16 %v6545, %v6533
        %v6942 = vpack.c.b16 %v6546, %v6534
        %v6943 = vpack.c.b16 %v6547, %v6535
        %v6944 = vpack.c.b16 %v6560, %v6548
        %v6945 = vpack.c.b16 %v6561, %v6549
        %v6946 = vpack.c.b16 %v6562, %v6550
        %v6947 = vpack.c.b16 %v6563, %v6551
        %v6948 = vpack.c.b16 %v6564, %v6552
        %v6949 = vpack.c.b16 %v6565, %v6553
        %v6950 = vpack.c.b16 %v6566, %v6554
        %v6951 = vpack.c.b16 %v6567, %v6555
        %v6952 = vpack.c.b16 %v6568, %v6556
        %v6953 = vpack.c.b16 %v6569, %v6557
        %v6954 = vpack.c.b16 %v6570, %v6558
        %v6955 = vpack.c.b16 %v6571, %v6559
        %v6956 = vpack.c.b16 %v6584, %v6572
        %v6957 = vpack.c.b16 %v6585, %v6573
        %v6958 = vpack.c.b16 %v6586, %v6574
        %v6959 = vpack.c.b16 %v6587, %v6575
        %v6960 = vpack.c.b16 %v6588, %v6576
        %v6961 = vpack.c.b16 %v6589, %v6577
        %v6962 = vpack.c.b16 %v6590, %v6578
        %v6963 = vpack.c.b16 %v6591, %v6579
        %v6964 = vpack.c.b16 %v6592, %v6580
        %v6965 = vpack.c.b16 %v6593, %v6581
        %v6966 = vpack.c.b16 %v6594, %v6582
        %v6967 = vpack.c.b16 %v6595, %v6583
        %v6968 = vpack.c.b16 %v6608, %v6596
        %v6969 = vpack.c.b16 %v6609, %v6597
        %v6970 = vpack.c.b16 %v6610, %v6598
        %v6971 = vpack.c.b16 %v6611, %v6599
        %v6972 = vpack.c.b16 %v6612, %v6600
        %v6973 = vpack.c.b16 %v6613, %v6601
        %v6974 = vpack.c.b16 %v6614, %v6602
        %v6975 = vpack.c.b16 %v6615, %v6603
        %v6976 = vpack.c.b16 %v6616, %v6604
        %v6977 = vpack.c.b16 %v6617, %v6605
        %v6978 = vpack.c.b16 %v6618, %v6606
        %v6979 = vpack.c.b16 %v6619, %v6607
        %v6980 = vpack.c.b16 %v6632, %v6620
        %v6981 = vpack.c.b16 %v6633, %v6621
        %v6982 = vpack.c.b16 %v6634, %v6622
        %v6983 = vpack.c.b16 %v6635, %v6623
        %v6984 = vpack.c.b16 %v6636, %v6624
        %v6985 = vpack.c.b16 %v6637, %v6625
        %v6986 = vpack.c.b16 %v6638, %v6626
        %v6987 = vpack.c.b16 %v6639, %v6627
        %v6988 = vpack.c.b16 %v6640, %v6628
        %v6989 = vpack.c.b16 %v6641, %v6629
        %v6990 = vpack.c.b16 %v6642, %v6630
        %v6991 = vpack.c.b16 %v6643, %v6631
        %v6992 = vpack.c.b16 %v6656, %v6644
        %v6993 = vpack.c.b16 %v6657, %v6645
        %v6994 = vpack.c.b16 %v6658, %v6646
        %v6995 = vpack.c.b16 %v6659, %v6647
        %v6996 = vpack.c.b16 %v6660, %v6648
        %v6997 = vpack.c.b16 %v6661, %v6649
        %v6998 = vpack.c.b16 %v6662, %v6650
        %v6999 = vpack.c.b16 %v6663, %v6651
        %v7000 = vpack.c.b16 %v6664, %v6652
        %v7001 = vpack.c.b16 %v6665, %v6653
        %v7002 = vpack.c.b16 %v6666, %v6654
        %v7003 = vpack.c.b16 %v6667, %v6655
        %v7004 = vpack.c.b16 %v6680, %v6668
        %v7005 = vpack.c.b16 %v6681, %v6669
        %v7006 = vpack.c.b16 %v6682, %v6670
        %v7007 = vpack.c.b16 %v6683, %v6671
        %v7008 = vpack.c.b16 %v6684, %v6672
        %v7009 = vpack.c.b16 %v6685, %v6673
        %v7010 = vpack.c.b16 %v6686, %v6674
        %v7011 = vpack.c.b16 %v6687, %v6675
        %v7012 = vpack.c.b16 %v6688, %v6676
        %v7013 = vpack.c.b16 %v6689, %v6677
        %v7014 = vpack.c.b16 %v6690, %v6678
        %v7015 = vpack.c.b16 %v6691, %v6679
        %v7016 = vpack.c.b16 %v6704, %v6692
        %v7017 = vpack.c.b16 %v6705, %v6693
        %v7018 = vpack.c.b16 %v6706, %v6694
        %v7019 = vpack.c.b16 %v6707, %v6695
        %v7020 = vpack.c.b16 %v6708, %v6696
        %v7021 = vpack.c.b16 %v6709, %v6697
        %v7022 = vpack.c.b16 %v6710, %v6698
        %v7023 = vpack.c.b16 %v6711, %v6699
        %v7024 = vpack.c.b16 %v6712, %v6700
        %v7025 = vpack.c.b16 %v6713, %v6701
        %v7026 = vpack.c.b16 %v6714, %v6702
        %v7027 = vpack.c.b16 %v6715, %v6703
        %v7028 = vpack.c.b16 %v6728, %v6716
        %v7029 = vpack.c.b16 %v6729, %v6717
        %v7030 = vpack.c.b16 %v6730, %v6718
        %v7031 = vpack.c.b16 %v6731, %v6719
        %v7032 = vpack.c.b16 %v6732, %v6720
        %v7033 = vpack.c.b16 %v6733, %v6721
        %v7034 = vpack.c.b16 %v6734, %v6722
        %v7035 = vpack.c.b16 %v6735, %v6723
        %v7036 = vpack.c.b16 %v6736, %v6724
        %v7037 = vpack.c.b16 %v6737, %v6725
        %v7038 = vpack.c.b16 %v6738, %v6726
        %v7039 = vpack.c.b16 %v6739, %v6727
        %v7040 = vpack.c.b16 %v6752, %v6740
        %v7041 = vpack.c.b16 %v6753, %v6741
        %v7042 = vpack.c.b16 %v6754, %v6742
        %v7043 = vpack.c.b16 %v6755, %v6743
        %v7044 = vpack.c.b16 %v6756, %v6744
        %v7045 = vpack.c.b16 %v6757, %v6745
        %v7046 = vpack.c.b16 %v6758, %v6746
        %v7047 = vpack.c.b16 %v6759, %v6747
        %v7048 = vpack.c.b16 %v6760, %v6748
        %v7049 = vpack.c.b16 %v6761, %v6749
        %v7050 = vpack.c.b16 %v6762, %v6750
        %v7051 = vpack.c.b16 %v6763, %v6751
        %7340 = vmatprep.subr.bf16.mxu0 %v6849
        %7341 = vmatpush1.bf16.msra.mxu0 %v6848
        %7342 = vmatprep.subr.bf16.mxu0 %v6837
        %7343 = vmatpush1.bf16.msra.mxu0 %v6836
        %7344 = vmatprep.subr.bf16.mxu0 %v6825
        %7345 = vmatpush1.bf16.msra.mxu0 %v6824
        %7346 = vmatprep.subr.bf16.mxu0 %v6813
        %7347 = vmatpush1.bf16.msra.mxu0 %v6812
        %7348 = vmatprep.subr.bf16.mxu0 %v6801
        %7349 = vmatpush1.bf16.msra.mxu0 %v6800
        %7350 = vmatprep.subr.bf16.mxu0 %v6789
        %7351 = vmatpush1.bf16.msra.mxu0 %v6788
        %7352 = vmatprep.subr.bf16.mxu0 %v6777
        %7353 = vmatpush1.bf16.msra.mxu0 %v6776
        %7354 = vmatprep.subr.bf16.mxu0 %v6765
        %7355 = vmatpush1.bf16.msra.mxu0 %v6764
        %7356 = vmatprep.subr.bf16.mxu0 %v6945
        %7357 = vmatpush2.bf16.msra.mxu0 %v6944
        %7358 = vmatprep.subr.bf16.mxu0 %v6933
        %7359 = vmatpush2.bf16.msra.mxu0 %v6932
        %7360 = vmatprep.subr.bf16.mxu0 %v6921
        %7361 = vmatpush2.bf16.msra.mxu0 %v6920
        %7362 = vmatprep.subr.bf16.mxu0 %v6909
        %7363 = vmatpush2.bf16.msra.mxu0 %v6908
        %7364 = vmatprep.subr.bf16.mxu0 %v6897
        %7365 = vmatpush2.bf16.msra.mxu0 %v6896
        %7366 = vmatprep.subr.bf16.mxu0 %v6885
        %7367 = vmatpush2.bf16.msra.mxu0 %v6884
        %7368 = vmatprep.subr.bf16.mxu0 %v6873
        %7369 = vmatpush2.bf16.msra.mxu0 %v6872
        %7370 = vmatprep.subr.bf16.mxu0 %v6861
        %7371 = vmatpush2.bf16.msra.mxu0 %v6860
        %7372 = vmatprep.mubr.bf16.mxu0 %v5543
        %7373 = vmatmul.mubr.bf16.gmra.mxu0 %v5542
        %v7374 = vpop.f32.mrf.mxu0
        %v7375 = vadd.f32 %v5843, %v7374
        %v7376 = vpop.f32.mrf.mxu0
        %v7377 = vadd.f32 %v5847, %v7376
        %v7378 = vpop.f32.mrf.mxu0
        %v7379 = vadd.f32 %v5843, %v7378
        %v7380 = vpop.f32.mrf.mxu0
        %v7381 = vadd.f32 %v5847, %v7380
        %7382 = vmatprep.mubr.bf16.mxu0 %v5546
        %7383 = vmatmul.mubr.bf16.gmra.mxu0 %v5545
        %v7384 = vpop.f32.mrf.mxu0
        %v7385 = vadd.f32 %v5843, %v7384
        %v7386 = vpop.f32.mrf.mxu0
        %v7387 = vadd.f32 %v5847, %v7386
        %v7388 = vpop.f32.mrf.mxu0
        %v7389 = vadd.f32 %v5843, %v7388
        %v7390 = vpop.f32.mrf.mxu0
        %v7391 = vadd.f32 %v5847, %v7390
        %7392 = vdwg.mxu0
        %7393 = vmatprep.subr.bf16.mxu0 %v7041
        %7394 = vmatpush1.bf16.msra.mxu0 %v7040
        %7395 = vmatprep.subr.bf16.mxu0 %v7029
        %7396 = vmatpush1.bf16.msra.mxu0 %v7028
        %7397 = vmatprep.subr.bf16.mxu0 %v7017
        %7398 = vmatpush1.bf16.msra.mxu0 %v7016
        %7399 = vmatprep.subr.bf16.mxu0 %v7005
        %7400 = vmatpush1.bf16.msra.mxu0 %v7004
        %7401 = vmatprep.subr.bf16.mxu0 %v6993
        %7402 = vmatpush1.bf16.msra.mxu0 %v6992
        %7403 = vmatprep.subr.bf16.mxu0 %v6981
        %7404 = vmatpush1.bf16.msra.mxu0 %v6980
        %7405 = vmatprep.subr.bf16.mxu0 %v6969
        %7406 = vmatpush1.bf16.msra.mxu0 %v6968
        %7407 = vmatprep.subr.bf16.mxu0 %v6957
        %7408 = vmatpush1.bf16.msra.mxu0 %v6956
        %7409 = vmatprep.subr.bf16.mxu0 0
        %7410 = vmatpush2.bf16.msra.mxu0 0
        %7411 = vmatprep.subr.bf16.mxu0 0
        %7412 = vmatpush2.bf16.msra.mxu0 0
        %7413 = vmatprep.subr.bf16.mxu0 0
        %7414 = vmatpush2.bf16.msra.mxu0 0
        %7415 = vmatprep.subr.bf16.mxu0 0
        %7416 = vmatpush2.bf16.msra.mxu0 0
        %7417 = vmatprep.subr.bf16.mxu0 0
        %7418 = vmatpush2.bf16.msra.mxu0 0
        %7419 = vmatprep.subr.bf16.mxu0 0
        %7420 = vmatpush2.bf16.msra.mxu0 0
        %7421 = vmatprep.subr.bf16.mxu0 0
        %7422 = vmatpush2.bf16.msra.mxu0 0
        %7423 = vmatprep.subr.bf16.mxu0 0
        %7424 = vmatpush2.bf16.msra.mxu0 0
        %7425 = vmatprep.mubr.bf16.mxu0 0
        %7426 = vmatmul.mubr.bf16.gmra.mxu0 %v5544
        %v7427 = vpop.f32.mrf.mxu0
        %v7428 = vadd.f32 %v7375, %v7427
        %v7429 = vpop.f32.mrf.mxu0
        %v7430 = vadd.f32 %v7377, %v7429
        %v7431 = vpop.f32.mrf.mxu0
        %v7432 = vadd.f32 %v7379, %v7431
        %v7433 = vpop.f32.mrf.mxu0
        %v7434 = vadd.f32 %v7381, %v7433
        %7435 = vmatprep.mubr.bf16.mxu0 0
        %7436 = vmatmul.mubr.bf16.gmra.mxu0 %v5547
        %v7437 = vpop.f32.mrf.mxu0
        %v7438 = vadd.f32 %v7385, %v7437
        %v7439 = vpop.f32.mrf.mxu0
        %v7440 = vadd.f32 %v7387, %v7439
        %v7441 = vpop.f32.mrf.mxu0
        %v7442 = vadd.f32 %v7389, %v7441
        %v7443 = vpop.f32.mrf.mxu0
        %v7444 = vadd.f32 %v7391, %v7443
        %7445 = vdwg.mxu0
        %7446 = vmatprep.subr.bf16.mxu0 %v6851
        %7447 = vmatpush1.bf16.msra.mxu0 %v6850
        %7448 = vmatprep.subr.bf16.mxu0 %v6839
        %7449 = vmatpush1.bf16.msra.mxu0 %v6838
        %7450 = vmatprep.subr.bf16.mxu0 %v6827
        %7451 = vmatpush1.bf16.msra.mxu0 %v6826
        %7452 = vmatprep.subr.bf16.mxu0 %v6815
        %7453 = vmatpush1.bf16.msra.mxu0 %v6814
        %7454 = vmatprep.subr.bf16.mxu0 %v6803
        %7455 = vmatpush1.bf16.msra.mxu0 %v6802
        %7456 = vmatprep.subr.bf16.mxu0 %v6791
        %7457 = vmatpush1.bf16.msra.mxu0 %v6790
        %7458 = vmatprep.subr.bf16.mxu0 %v6779
        %7459 = vmatpush1.bf16.msra.mxu0 %v6778
        %7460 = vmatprep.subr.bf16.mxu0 %v6767
        %7461 = vmatpush1.bf16.msra.mxu0 %v6766
        %7462 = vmatprep.subr.bf16.mxu0 %v6947
        %7463 = vmatpush2.bf16.msra.mxu0 %v6946
        %7464 = vmatprep.subr.bf16.mxu0 %v6935
        %7465 = vmatpush2.bf16.msra.mxu0 %v6934
        %7466 = vmatprep.subr.bf16.mxu0 %v6923
        %7467 = vmatpush2.bf16.msra.mxu0 %v6922
        %7468 = vmatprep.subr.bf16.mxu0 %v6911
        %7469 = vmatpush2.bf16.msra.mxu0 %v6910
        %7470 = vmatprep.subr.bf16.mxu0 %v6899
        %7471 = vmatpush2.bf16.msra.mxu0 %v6898
        %7472 = vmatprep.subr.bf16.mxu0 %v6887
        %7473 = vmatpush2.bf16.msra.mxu0 %v6886
        %7474 = vmatprep.subr.bf16.mxu0 %v6875
        %7475 = vmatpush2.bf16.msra.mxu0 %v6874
        %7476 = vmatprep.subr.bf16.mxu0 %v6863
        %7477 = vmatpush2.bf16.msra.mxu0 %v6862
        %7478 = vmatprep.mubr.bf16.mxu0 %v5543
        %7479 = vmatmul.mubr.bf16.gmra.mxu0 %v5542
        %v7480 = vpop.f32.mrf.mxu0
        %v7481 = vadd.f32 %v5851, %v7480
        %v7482 = vpop.f32.mrf.mxu0
        %v7483 = vadd.f32 %v5855, %v7482
        %v7484 = vpop.f32.mrf.mxu0
        %v7485 = vadd.f32 %v5851, %v7484
        %v7486 = vpop.f32.mrf.mxu0
        %v7487 = vadd.f32 %v5855, %v7486
        %7488 = vmatprep.mubr.bf16.mxu0 %v5546
        %7489 = vmatmul.mubr.bf16.gmra.mxu0 %v5545
        %v7490 = vpop.f32.mrf.mxu0
        %v7491 = vadd.f32 %v5851, %v7490
        %v7492 = vpop.f32.mrf.mxu0
        %v7493 = vadd.f32 %v5855, %v7492
        %v7494 = vpop.f32.mrf.mxu0
        %v7495 = vadd.f32 %v5851, %v7494
        %v7496 = vpop.f32.mrf.mxu0
        %v7497 = vadd.f32 %v5855, %v7496
        %7498 = vdwg.mxu0
        %7499 = vmatprep.subr.bf16.mxu0 %v7043
        %7500 = vmatpush1.bf16.msra.mxu0 %v7042
        %7501 = vmatprep.subr.bf16.mxu0 %v7031
        %7502 = vmatpush1.bf16.msra.mxu0 %v7030
        %7503 = vmatprep.subr.bf16.mxu0 %v7019
        %7504 = vmatpush1.bf16.msra.mxu0 %v7018
        %7505 = vmatprep.subr.bf16.mxu0 %v7007
        %7506 = vmatpush1.bf16.msra.mxu0 %v7006
        %7507 = vmatprep.subr.bf16.mxu0 %v6995
        %7508 = vmatpush1.bf16.msra.mxu0 %v6994
        %7509 = vmatprep.subr.bf16.mxu0 %v6983
        %7510 = vmatpush1.bf16.msra.mxu0 %v6982
        %7511 = vmatprep.subr.bf16.mxu0 %v6971
        %7512 = vmatpush1.bf16.msra.mxu0 %v6970
        %7513 = vmatprep.subr.bf16.mxu0 %v6959
        %7514 = vmatpush1.bf16.msra.mxu0 %v6958
        %7515 = vmatprep.subr.bf16.mxu0 0
        %7516 = vmatpush2.bf16.msra.mxu0 0
        %7517 = vmatprep.subr.bf16.mxu0 0
        %7518 = vmatpush2.bf16.msra.mxu0 0
        %7519 = vmatprep.subr.bf16.mxu0 0
        %7520 = vmatpush2.bf16.msra.mxu0 0
        %7521 = vmatprep.subr.bf16.mxu0 0
        %7522 = vmatpush2.bf16.msra.mxu0 0
        %7523 = vmatprep.subr.bf16.mxu0 0
        %7524 = vmatpush2.bf16.msra.mxu0 0
        %7525 = vmatprep.subr.bf16.mxu0 0
        %7526 = vmatpush2.bf16.msra.mxu0 0
        %7527 = vmatprep.subr.bf16.mxu0 0
        %7528 = vmatpush2.bf16.msra.mxu0 0
        %7529 = vmatprep.subr.bf16.mxu0 0
        %7530 = vmatpush2.bf16.msra.mxu0 0
        %7531 = vmatprep.mubr.bf16.mxu0 0
        %7532 = vmatmul.mubr.bf16.gmra.mxu0 %v5544
        %v7533 = vpop.f32.mrf.mxu0
        %v7534 = vadd.f32 %v7481, %v7533
        %v7535 = vpop.f32.mrf.mxu0
        %v7536 = vadd.f32 %v7483, %v7535
        %v7537 = vpop.f32.mrf.mxu0
        %v7538 = vadd.f32 %v7485, %v7537
        %v7539 = vpop.f32.mrf.mxu0
        %v7540 = vadd.f32 %v7487, %v7539
        %7541 = vmatprep.mubr.bf16.mxu0 0
        %7542 = vmatmul.mubr.bf16.gmra.mxu0 %v5547
        %v7543 = vpop.f32.mrf.mxu0
        %v7544 = vadd.f32 %v7491, %v7543
        %v7545 = vpop.f32.mrf.mxu0
        %v7546 = vadd.f32 %v7493, %v7545
        %v7547 = vpop.f32.mrf.mxu0
        %v7548 = vadd.f32 %v7495, %v7547
        %v7549 = vpop.f32.mrf.mxu0
        %v7550 = vadd.f32 %v7497, %v7549
        %7551 = vdwg.mxu0
        %7552 = vmatprep.subr.bf16.mxu0 %v6853
        %7553 = vmatpush1.bf16.msra.mxu0 %v6852
        %7554 = vmatprep.subr.bf16.mxu0 %v6841
        %7555 = vmatpush1.bf16.msra.mxu0 %v6840
        %7556 = vmatprep.subr.bf16.mxu0 %v6829
        %7557 = vmatpush1.bf16.msra.mxu0 %v6828
        %7558 = vmatprep.subr.bf16.mxu0 %v6817
        %7559 = vmatpush1.bf16.msra.mxu0 %v6816
        %7560 = vmatprep.subr.bf16.mxu0 %v6805
        %7561 = vmatpush1.bf16.msra.mxu0 %v6804
        %7562 = vmatprep.subr.bf16.mxu0 %v6793
        %7563 = vmatpush1.bf16.msra.mxu0 %v6792
        %7564 = vmatprep.subr.bf16.mxu0 %v6781
        %7565 = vmatpush1.bf16.msra.mxu0 %v6780
        %7566 = vmatprep.subr.bf16.mxu0 %v6769
        %7567 = vmatpush1.bf16.msra.mxu0 %v6768
        %7568 = vmatprep.subr.bf16.mxu0 %v6949
        %7569 = vmatpush2.bf16.msra.mxu0 %v6948
        %7570 = vmatprep.subr.bf16.mxu0 %v6937
        %7571 = vmatpush2.bf16.msra.mxu0 %v6936
        %7572 = vmatprep.subr.bf16.mxu0 %v6925
        %7573 = vmatpush2.bf16.msra.mxu0 %v6924
        %7574 = vmatprep.subr.bf16.mxu0 %v6913
        %7575 = vmatpush2.bf16.msra.mxu0 %v6912
        %7576 = vmatprep.subr.bf16.mxu0 %v6901
        %7577 = vmatpush2.bf16.msra.mxu0 %v6900
        %7578 = vmatprep.subr.bf16.mxu0 %v6889
        %7579 = vmatpush2.bf16.msra.mxu0 %v6888
        %7580 = vmatprep.subr.bf16.mxu0 %v6877
        %7581 = vmatpush2.bf16.msra.mxu0 %v6876
        %7582 = vmatprep.subr.bf16.mxu0 %v6865
        %7583 = vmatpush2.bf16.msra.mxu0 %v6864
        %7584 = vmatprep.mubr.bf16.mxu0 %v5543
        %7585 = vmatmul.mubr.bf16.gmra.mxu0 %v5542
        %v7586 = vpop.f32.mrf.mxu0
        %v7587 = vadd.f32 %v5859, %v7586
        %v7588 = vpop.f32.mrf.mxu0
        %v7589 = vadd.f32 %v5863, %v7588
        %v7590 = vpop.f32.mrf.mxu0
        %v7591 = vadd.f32 %v5859, %v7590
        %v7592 = vpop.f32.mrf.mxu0
        %v7593 = vadd.f32 %v5863, %v7592
        %7594 = vmatprep.mubr.bf16.mxu0 %v5546
        %7595 = vmatmul.mubr.bf16.gmra.mxu0 %v5545
        %v7596 = vpop.f32.mrf.mxu0
        %v7597 = vadd.f32 %v5859, %v7596
        %v7598 = vpop.f32.mrf.mxu0
        %v7599 = vadd.f32 %v5863, %v7598
        %v7600 = vpop.f32.mrf.mxu0
        %v7601 = vadd.f32 %v5859, %v7600
        %v7602 = vpop.f32.mrf.mxu0
        %v7603 = vadd.f32 %v5863, %v7602
        %7604 = vdwg.mxu0
        %7605 = vmatprep.subr.bf16.mxu0 %v7045
        %7606 = vmatpush1.bf16.msra.mxu0 %v7044
        %7607 = vmatprep.subr.bf16.mxu0 %v7033
        %7608 = vmatpush1.bf16.msra.mxu0 %v7032
        %7609 = vmatprep.subr.bf16.mxu0 %v7021
        %7610 = vmatpush1.bf16.msra.mxu0 %v7020
        %7611 = vmatprep.subr.bf16.mxu0 %v7009
        %7612 = vmatpush1.bf16.msra.mxu0 %v7008
        %7613 = vmatprep.subr.bf16.mxu0 %v6997
        %7614 = vmatpush1.bf16.msra.mxu0 %v6996
        %7615 = vmatprep.subr.bf16.mxu0 %v6985
        %7616 = vmatpush1.bf16.msra.mxu0 %v6984
        %7617 = vmatprep.subr.bf16.mxu0 %v6973
        %7618 = vmatpush1.bf16.msra.mxu0 %v6972
        %7619 = vmatprep.subr.bf16.mxu0 %v6961
        %7620 = vmatpush1.bf16.msra.mxu0 %v6960
        %7621 = vmatprep.subr.bf16.mxu0 0
        %7622 = vmatpush2.bf16.msra.mxu0 0
        %7623 = vmatprep.subr.bf16.mxu0 0
        %7624 = vmatpush2.bf16.msra.mxu0 0
        %7625 = vmatprep.subr.bf16.mxu0 0
        %7626 = vmatpush2.bf16.msra.mxu0 0
        %7627 = vmatprep.subr.bf16.mxu0 0
        %7628 = vmatpush2.bf16.msra.mxu0 0
        %7629 = vmatprep.subr.bf16.mxu0 0
        %7630 = vmatpush2.bf16.msra.mxu0 0
        %7631 = vmatprep.subr.bf16.mxu0 0
        %7632 = vmatpush2.bf16.msra.mxu0 0
        %7633 = vmatprep.subr.bf16.mxu0 0
        %7634 = vmatpush2.bf16.msra.mxu0 0
        %7635 = vmatprep.subr.bf16.mxu0 0
        %7636 = vmatpush2.bf16.msra.mxu0 0
        %7637 = vmatprep.mubr.bf16.mxu0 0
        %7638 = vmatmul.mubr.bf16.gmra.mxu0 %v5544
        %v7639 = vpop.f32.mrf.mxu0
        %v7640 = vadd.f32 %v7587, %v7639
        %v7641 = vpop.f32.mrf.mxu0
        %v7642 = vadd.f32 %v7589, %v7641
        %v7643 = vpop.f32.mrf.mxu0
        %v7644 = vadd.f32 %v7591, %v7643
        %v7645 = vpop.f32.mrf.mxu0
        %v7646 = vadd.f32 %v7593, %v7645
        %7647 = vmatprep.mubr.bf16.mxu0 0
        %7648 = vmatmul.mubr.bf16.gmra.mxu0 %v5547
        %v7649 = vpop.f32.mrf.mxu0
        %v7650 = vadd.f32 %v7597, %v7649
        %v7651 = vpop.f32.mrf.mxu0
        %v7652 = vadd.f32 %v7599, %v7651
        %v7653 = vpop.f32.mrf.mxu0
        %v7654 = vadd.f32 %v7601, %v7653
        %v7655 = vpop.f32.mrf.mxu0
        %v7656 = vadd.f32 %v7603, %v7655
        %7657 = vdwg.mxu0
        %7658 = vmatprep.subr.bf16.mxu0 %v6855
        %7659 = vmatpush1.bf16.msra.mxu0 %v6854
        %7660 = vmatprep.subr.bf16.mxu0 %v6843
        %7661 = vmatpush1.bf16.msra.mxu0 %v6842
        %7662 = vmatprep.subr.bf16.mxu0 %v6831
        %7663 = vmatpush1.bf16.msra.mxu0 %v6830
        %7664 = vmatprep.subr.bf16.mxu0 %v6819
        %7665 = vmatpush1.bf16.msra.mxu0 %v6818
        %7666 = vmatprep.subr.bf16.mxu0 %v6807
        %7667 = vmatpush1.bf16.msra.mxu0 %v6806
        %7668 = vmatprep.subr.bf16.mxu0 %v6795
        %7669 = vmatpush1.bf16.msra.mxu0 %v6794
        %7670 = vmatprep.subr.bf16.mxu0 %v6783
        %7671 = vmatpush1.bf16.msra.mxu0 %v6782
        %7672 = vmatprep.subr.bf16.mxu0 %v6771
        %7673 = vmatpush1.bf16.msra.mxu0 %v6770
        %7674 = vmatprep.subr.bf16.mxu0 %v6951
        %7675 = vmatpush2.bf16.msra.mxu0 %v6950
        %7676 = vmatprep.subr.bf16.mxu0 %v6939
        %7677 = vmatpush2.bf16.msra.mxu0 %v6938
        %7678 = vmatprep.subr.bf16.mxu0 %v6927
        %7679 = vmatpush2.bf16.msra.mxu0 %v6926
        %7680 = vmatprep.subr.bf16.mxu0 %v6915
        %7681 = vmatpush2.bf16.msra.mxu0 %v6914
        %7682 = vmatprep.subr.bf16.mxu0 %v6903
        %7683 = vmatpush2.bf16.msra.mxu0 %v6902
        %7684 = vmatprep.subr.bf16.mxu0 %v6891
        %7685 = vmatpush2.bf16.msra.mxu0 %v6890
        %7686 = vmatprep.subr.bf16.mxu0 %v6879
        %7687 = vmatpush2.bf16.msra.mxu0 %v6878
        %7688 = vmatprep.subr.bf16.mxu0 %v6867
        %7689 = vmatpush2.bf16.msra.mxu0 %v6866
        %7690 = vmatprep.mubr.bf16.mxu0 %v5543
        %7691 = vmatmul.mubr.bf16.gmra.mxu0 %v5542
        %v7692 = vpop.f32.mrf.mxu0
        %v7693 = vadd.f32 %v5867, %v7692
        %v7694 = vpop.f32.mrf.mxu0
        %v7695 = vadd.f32 %v5871, %v7694
        %v7696 = vpop.f32.mrf.mxu0
        %v7697 = vadd.f32 %v5867, %v7696
        %v7698 = vpop.f32.mrf.mxu0
        %v7699 = vadd.f32 %v5871, %v7698
        %7700 = vmatprep.mubr.bf16.mxu0 %v5546
        %7701 = vmatmul.mubr.bf16.gmra.mxu0 %v5545
        %v7702 = vpop.f32.mrf.mxu0
        %v7703 = vadd.f32 %v5867, %v7702
        %v7704 = vpop.f32.mrf.mxu0
        %v7705 = vadd.f32 %v5871, %v7704
        %v7706 = vpop.f32.mrf.mxu0
        %v7707 = vadd.f32 %v5867, %v7706
        %v7708 = vpop.f32.mrf.mxu0
        %v7709 = vadd.f32 %v5871, %v7708
        %7710 = vdwg.mxu0
        %7711 = vmatprep.subr.bf16.mxu0 %v7047
        %7712 = vmatpush1.bf16.msra.mxu0 %v7046
        %7713 = vmatprep.subr.bf16.mxu0 %v7035
        %7714 = vmatpush1.bf16.msra.mxu0 %v7034
        %7715 = vmatprep.subr.bf16.mxu0 %v7023
        %7716 = vmatpush1.bf16.msra.mxu0 %v7022
        %7717 = vmatprep.subr.bf16.mxu0 %v7011
        %7718 = vmatpush1.bf16.msra.mxu0 %v7010
        %7719 = vmatprep.subr.bf16.mxu0 %v6999
        %7720 = vmatpush1.bf16.msra.mxu0 %v6998
        %7721 = vmatprep.subr.bf16.mxu0 %v6987
        %7722 = vmatpush1.bf16.msra.mxu0 %v6986
        %7723 = vmatprep.subr.bf16.mxu0 %v6975
        %7724 = vmatpush1.bf16.msra.mxu0 %v6974
        %7725 = vmatprep.subr.bf16.mxu0 %v6963
        %7726 = vmatpush1.bf16.msra.mxu0 %v6962
        %7727 = vmatprep.subr.bf16.mxu0 0
        %7728 = vmatpush2.bf16.msra.mxu0 0
        %7729 = vmatprep.subr.bf16.mxu0 0
        %7730 = vmatpush2.bf16.msra.mxu0 0
        %7731 = vmatprep.subr.bf16.mxu0 0
        %7732 = vmatpush2.bf16.msra.mxu0 0
        %7733 = vmatprep.subr.bf16.mxu0 0
        %7734 = vmatpush2.bf16.msra.mxu0 0
        %7735 = vmatprep.subr.bf16.mxu0 0
        %7736 = vmatpush2.bf16.msra.mxu0 0
        %7737 = vmatprep.subr.bf16.mxu0 0
        %7738 = vmatpush2.bf16.msra.mxu0 0
        %7739 = vmatprep.subr.bf16.mxu0 0
        %7740 = vmatpush2.bf16.msra.mxu0 0
        %7741 = vmatprep.subr.bf16.mxu0 0
        %7742 = vmatpush2.bf16.msra.mxu0 0
        %7743 = vmatprep.mubr.bf16.mxu0 0
        %7744 = vmatmul.mubr.bf16.gmra.mxu0 %v5544
        %v7745 = vpop.f32.mrf.mxu0
        %v7746 = vadd.f32 %v7693, %v7745
        %v7747 = vpop.f32.mrf.mxu0
        %v7748 = vadd.f32 %v7695, %v7747
        %v7749 = vpop.f32.mrf.mxu0
        %v7750 = vadd.f32 %v7697, %v7749
        %v7751 = vpop.f32.mrf.mxu0
        %v7752 = vadd.f32 %v7699, %v7751
        %7753 = vmatprep.mubr.bf16.mxu0 0
        %7754 = vmatmul.mubr.bf16.gmra.mxu0 %v5547
        %v7755 = vpop.f32.mrf.mxu0
        %v7756 = vadd.f32 %v7703, %v7755
        %v7757 = vpop.f32.mrf.mxu0
        %v7758 = vadd.f32 %v7705, %v7757
        %v7759 = vpop.f32.mrf.mxu0
        %v7760 = vadd.f32 %v7707, %v7759
        %v7761 = vpop.f32.mrf.mxu0
        %v7762 = vadd.f32 %v7709, %v7761
        %7763 = vdwg.mxu0
        %7764 = vmatprep.subr.bf16.mxu0 %v6857
        %7765 = vmatpush1.bf16.msra.mxu0 %v6856
        %7766 = vmatprep.subr.bf16.mxu0 %v6845
        %7767 = vmatpush1.bf16.msra.mxu0 %v6844
        %7768 = vmatprep.subr.bf16.mxu0 %v6833
        %7769 = vmatpush1.bf16.msra.mxu0 %v6832
        %7770 = vmatprep.subr.bf16.mxu0 %v6821
        %7771 = vmatpush1.bf16.msra.mxu0 %v6820
        %7772 = vmatprep.subr.bf16.mxu0 %v6809
        %7773 = vmatpush1.bf16.msra.mxu0 %v6808
        %7774 = vmatprep.subr.bf16.mxu0 %v6797
        %7775 = vmatpush1.bf16.msra.mxu0 %v6796
        %7776 = vmatprep.subr.bf16.mxu0 %v6785
        %7777 = vmatpush1.bf16.msra.mxu0 %v6784
        %7778 = vmatprep.subr.bf16.mxu0 %v6773
        %7779 = vmatpush1.bf16.msra.mxu0 %v6772
        %7780 = vmatprep.subr.bf16.mxu0 %v6953
        %7781 = vmatpush2.bf16.msra.mxu0 %v6952
        %7782 = vmatprep.subr.bf16.mxu0 %v6941
        %7783 = vmatpush2.bf16.msra.mxu0 %v6940
        %7784 = vmatprep.subr.bf16.mxu0 %v6929
        %7785 = vmatpush2.bf16.msra.mxu0 %v6928
        %7786 = vmatprep.subr.bf16.mxu0 %v6917
        %7787 = vmatpush2.bf16.msra.mxu0 %v6916
        %7788 = vmatprep.subr.bf16.mxu0 %v6905
        %7789 = vmatpush2.bf16.msra.mxu0 %v6904
        %7790 = vmatprep.subr.bf16.mxu0 %v6893
        %7791 = vmatpush2.bf16.msra.mxu0 %v6892
        %7792 = vmatprep.subr.bf16.mxu0 %v6881
        %7793 = vmatpush2.bf16.msra.mxu0 %v6880
        %7794 = vmatprep.subr.bf16.mxu0 %v6869
        %7795 = vmatpush2.bf16.msra.mxu0 %v6868
        %7796 = vmatprep.mubr.bf16.mxu0 %v5543
        %7797 = vmatmul.mubr.bf16.gmra.mxu0 %v5542
        %v7798 = vpop.f32.mrf.mxu0
        %v7799 = vadd.f32 %v5875, %v7798
        %v7800 = vpop.f32.mrf.mxu0
        %v7801 = vadd.f32 %v5879, %v7800
        %v7802 = vpop.f32.mrf.mxu0
        %v7803 = vadd.f32 %v5875, %v7802
        %v7804 = vpop.f32.mrf.mxu0
        %v7805 = vadd.f32 %v5879, %v7804
        %7806 = vmatprep.mubr.bf16.mxu0 %v5546
        %7807 = vmatmul.mubr.bf16.gmra.mxu0 %v5545
        %v7808 = vpop.f32.mrf.mxu0
        %v7809 = vadd.f32 %v5875, %v7808
        %v7810 = vpop.f32.mrf.mxu0
        %v7811 = vadd.f32 %v5879, %v7810
        %v7812 = vpop.f32.mrf.mxu0
        %v7813 = vadd.f32 %v5875, %v7812
        %v7814 = vpop.f32.mrf.mxu0
        %v7815 = vadd.f32 %v5879, %v7814
        %7816 = vdwg.mxu0
        %7817 = vmatprep.subr.bf16.mxu0 %v7049
        %7818 = vmatpush1.bf16.msra.mxu0 %v7048
        %7819 = vmatprep.subr.bf16.mxu0 %v7037
        %7820 = vmatpush1.bf16.msra.mxu0 %v7036
        %7821 = vmatprep.subr.bf16.mxu0 %v7025
        %7822 = vmatpush1.bf16.msra.mxu0 %v7024
        %7823 = vmatprep.subr.bf16.mxu0 %v7013
        %7824 = vmatpush1.bf16.msra.mxu0 %v7012
        %7825 = vmatprep.subr.bf16.mxu0 %v7001
        %7826 = vmatpush1.bf16.msra.mxu0 %v7000
        %7827 = vmatprep.subr.bf16.mxu0 %v6989
        %7828 = vmatpush1.bf16.msra.mxu0 %v6988
        %7829 = vmatprep.subr.bf16.mxu0 %v6977
        %7830 = vmatpush1.bf16.msra.mxu0 %v6976
        %7831 = vmatprep.subr.bf16.mxu0 %v6965
        %7832 = vmatpush1.bf16.msra.mxu0 %v6964
        %7833 = vmatprep.subr.bf16.mxu0 0
        %7834 = vmatpush2.bf16.msra.mxu0 0
        %7835 = vmatprep.subr.bf16.mxu0 0
        %7836 = vmatpush2.bf16.msra.mxu0 0
        %7837 = vmatprep.subr.bf16.mxu0 0
        %7838 = vmatpush2.bf16.msra.mxu0 0
        %7839 = vmatprep.subr.bf16.mxu0 0
        %7840 = vmatpush2.bf16.msra.mxu0 0
        %7841 = vmatprep.subr.bf16.mxu0 0
        %7842 = vmatpush2.bf16.msra.mxu0 0
        %7843 = vmatprep.subr.bf16.mxu0 0
        %7844 = vmatpush2.bf16.msra.mxu0 0
        %7845 = vmatprep.subr.bf16.mxu0 0
        %7846 = vmatpush2.bf16.msra.mxu0 0
        %7847 = vmatprep.subr.bf16.mxu0 0
        %7848 = vmatpush2.bf16.msra.mxu0 0
        %7849 = vmatprep.mubr.bf16.mxu0 0
        %7850 = vmatmul.mubr.bf16.gmra.mxu0 %v5544
        %v7851 = vpop.f32.mrf.mxu0
        %v7852 = vadd.f32 %v7799, %v7851
        %v7853 = vpop.f32.mrf.mxu0
        %v7854 = vadd.f32 %v7801, %v7853
        %v7855 = vpop.f32.mrf.mxu0
        %v7856 = vadd.f32 %v7803, %v7855
        %v7857 = vpop.f32.mrf.mxu0
        %v7858 = vadd.f32 %v7805, %v7857
        %7859 = vmatprep.mubr.bf16.mxu0 0
        %7860 = vmatmul.mubr.bf16.gmra.mxu0 %v5547
        %v7861 = vpop.f32.mrf.mxu0
        %v7862 = vadd.f32 %v7809, %v7861
        %v7863 = vpop.f32.mrf.mxu0
        %v7864 = vadd.f32 %v7811, %v7863
        %v7865 = vpop.f32.mrf.mxu0
        %v7866 = vadd.f32 %v7813, %v7865
        %v7867 = vpop.f32.mrf.mxu0
        %v7868 = vadd.f32 %v7815, %v7867
        %7869 = vdwg.mxu0
        %7870 = vmatprep.subr.bf16.mxu0 %v6859
        %7871 = vmatpush1.bf16.msra.mxu0 %v6858
        %7872 = vmatprep.subr.bf16.mxu0 %v6847
        %7873 = vmatpush1.bf16.msra.mxu0 %v6846
        %7874 = vmatprep.subr.bf16.mxu0 %v6835
        %7875 = vmatpush1.bf16.msra.mxu0 %v6834
        %7876 = vmatprep.subr.bf16.mxu0 %v6823
        %7877 = vmatpush1.bf16.msra.mxu0 %v6822
        %7878 = vmatprep.subr.bf16.mxu0 %v6811
        %7879 = vmatpush1.bf16.msra.mxu0 %v6810
        %7880 = vmatprep.subr.bf16.mxu0 %v6799
        %7881 = vmatpush1.bf16.msra.mxu0 %v6798
        %7882 = vmatprep.subr.bf16.mxu0 %v6787
        %7883 = vmatpush1.bf16.msra.mxu0 %v6786
        %7884 = vmatprep.subr.bf16.mxu0 %v6775
        %7885 = vmatpush1.bf16.msra.mxu0 %v6774
        %7886 = vmatprep.subr.bf16.mxu0 %v6955
        %7887 = vmatpush2.bf16.msra.mxu0 %v6954
        %7888 = vmatprep.subr.bf16.mxu0 %v6943
        %7889 = vmatpush2.bf16.msra.mxu0 %v6942
        %7890 = vmatprep.subr.bf16.mxu0 %v6931
        %7891 = vmatpush2.bf16.msra.mxu0 %v6930
        %7892 = vmatprep.subr.bf16.mxu0 %v6919
        %7893 = vmatpush2.bf16.msra.mxu0 %v6918
        %7894 = vmatprep.subr.bf16.mxu0 %v6907
        %7895 = vmatpush2.bf16.msra.mxu0 %v6906
        %7896 = vmatprep.subr.bf16.mxu0 %v6895
        %7897 = vmatpush2.bf16.msra.mxu0 %v6894
        %7898 = vmatprep.subr.bf16.mxu0 %v6883
        %7899 = vmatpush2.bf16.msra.mxu0 %v6882
        %7900 = vmatprep.subr.bf16.mxu0 %v6871
        %7901 = vmatpush2.bf16.msra.mxu0 %v6870
        %7902 = vmatprep.mubr.bf16.mxu0 %v5543
        %7903 = vmatmul.mubr.bf16.gmra.mxu0 %v5542
        %v7904 = vpop.f32.mrf.mxu0
        %v7905 = vadd.f32 %v5883, %v7904
        %v7906 = vpop.f32.mrf.mxu0
        %v7907 = vadd.f32 %v5887, %v7906
        %v7908 = vpop.f32.mrf.mxu0
        %v7909 = vadd.f32 %v5883, %v7908
        %v7910 = vpop.f32.mrf.mxu0
        %v7911 = vadd.f32 %v5887, %v7910
        %7912 = vmatprep.mubr.bf16.mxu0 %v5546
        %7913 = vmatmul.mubr.bf16.gmra.mxu0 %v5545
        %v7914 = vpop.f32.mrf.mxu0
        %v7915 = vadd.f32 %v5883, %v7914
        %v7916 = vpop.f32.mrf.mxu0
        %v7917 = vadd.f32 %v5887, %v7916
        %v7918 = vpop.f32.mrf.mxu0
        %v7919 = vadd.f32 %v5883, %v7918
        %v7920 = vpop.f32.mrf.mxu0
        %v7921 = vadd.f32 %v5887, %v7920
        %7922 = vdwg.mxu0
        %7923 = vmatprep.subr.bf16.mxu0 %v7051
        %7924 = vmatpush1.bf16.msra.mxu0 %v7050
        %7925 = vmatprep.subr.bf16.mxu0 %v7039
        %7926 = vmatpush1.bf16.msra.mxu0 %v7038
        %7927 = vmatprep.subr.bf16.mxu0 %v7027
        %7928 = vmatpush1.bf16.msra.mxu0 %v7026
        %7929 = vmatprep.subr.bf16.mxu0 %v7015
        %7930 = vmatpush1.bf16.msra.mxu0 %v7014
        %7931 = vmatprep.subr.bf16.mxu0 %v7003
        %7932 = vmatpush1.bf16.msra.mxu0 %v7002
        %7933 = vmatprep.subr.bf16.mxu0 %v6991
        %7934 = vmatpush1.bf16.msra.mxu0 %v6990
        %7935 = vmatprep.subr.bf16.mxu0 %v6979
        %7936 = vmatpush1.bf16.msra.mxu0 %v6978
        %7937 = vmatprep.subr.bf16.mxu0 %v6967
        %7938 = vmatpush1.bf16.msra.mxu0 %v6966
        %7939 = vmatprep.subr.bf16.mxu0 0
        %7940 = vmatpush2.bf16.msra.mxu0 0
        %7941 = vmatprep.subr.bf16.mxu0 0
        %7942 = vmatpush2.bf16.msra.mxu0 0
        %7943 = vmatprep.subr.bf16.mxu0 0
        %7944 = vmatpush2.bf16.msra.mxu0 0
        %7945 = vmatprep.subr.bf16.mxu0 0
        %7946 = vmatpush2.bf16.msra.mxu0 0
        %7947 = vmatprep.subr.bf16.mxu0 0
        %7948 = vmatpush2.bf16.msra.mxu0 0
        %7949 = vmatprep.subr.bf16.mxu0 0
        %7950 = vmatpush2.bf16.msra.mxu0 0
        %7951 = vmatprep.subr.bf16.mxu0 0
        %7952 = vmatpush2.bf16.msra.mxu0 0
        %7953 = vmatprep.subr.bf16.mxu0 0
        %7954 = vmatpush2.bf16.msra.mxu0 0
        %7955 = vmatprep.mubr.bf16.mxu0 0
        %7956 = vmatmul.mubr.bf16.gmra.mxu0 %v5544
        %v7957 = vpop.f32.mrf.mxu0
        %v7958 = vadd.f32 %v7905, %v7957
        %v7959 = vpop.f32.mrf.mxu0
        %v7960 = vadd.f32 %v7907, %v7959
        %v7961 = vpop.f32.mrf.mxu0
        %v7962 = vadd.f32 %v7909, %v7961
        %v7963 = vpop.f32.mrf.mxu0
        %v7964 = vadd.f32 %v7911, %v7963
        %7965 = vmatprep.mubr.bf16.mxu0 0
        %7966 = vmatmul.mubr.bf16.gmra.mxu0 %v5547
        %v7967 = vpop.f32.mrf.mxu0
        %v7968 = vadd.f32 %v7915, %v7967
        %v7969 = vpop.f32.mrf.mxu0
        %v7970 = vadd.f32 %v7917, %v7969
        %v7971 = vpop.f32.mrf.mxu0
        %v7972 = vadd.f32 %v7919, %v7971
        %v7973 = vpop.f32.mrf.mxu0
        %v7974 = vadd.f32 %v7921, %v7973
        %7975 = vdwg.mxu0
        %v7976 = vmax.f32 %v7428, 0.0
        %v7977 = vmax.f32 %v7430, 0.0
        %v7978 = vmax.f32 %v7534, 0.0
        %v7979 = vmax.f32 %v7536, 0.0
        %v7980 = vmax.f32 %v7640, 0.0
        %v7981 = vmax.f32 %v7642, 0.0
        %v7982 = vmax.f32 %v7746, 0.0
        %v7983 = vmax.f32 %v7748, 0.0
        %v7984 = vmax.f32 %v7852, 0.0
        %v7985 = vmax.f32 %v7854, 0.0
        %v7986 = vmax.f32 %v7958, 0.0
        %v7987 = vmax.f32 %v7960, 0.0
        %v7988 = vmax.f32 %v7432, 0.0
        %v7989 = vmax.f32 %v7434, 0.0
        %v7990 = vmax.f32 %v7538, 0.0
        %v7991 = vmax.f32 %v7540, 0.0
        %v7992 = vmax.f32 %v7644, 0.0
        %v7993 = vmax.f32 %v7646, 0.0
        %v7994 = vmax.f32 %v7750, 0.0
        %v7995 = vmax.f32 %v7752, 0.0
        %v7996 = vmax.f32 %v7856, 0.0
        %v7997 = vmax.f32 %v7858, 0.0
        %v7998 = vmax.f32 %v7962, 0.0
        %v7999 = vmax.f32 %v7964, 0.0
        %v8000 = vmax.f32 %v7438, 0.0
        %v8001 = vmax.f32 %v7440, 0.0
        %v8002 = vmax.f32 %v7544, 0.0
        %v8003 = vmax.f32 %v7546, 0.0
        %v8004 = vmax.f32 %v7650, 0.0
        %v8005 = vmax.f32 %v7652, 0.0
        %v8006 = vmax.f32 %v7756, 0.0
        %v8007 = vmax.f32 %v7758, 0.0
        %v8008 = vmax.f32 %v7862, 0.0
        %v8009 = vmax.f32 %v7864, 0.0
        %v8010 = vmax.f32 %v7968, 0.0
        %v8011 = vmax.f32 %v7970, 0.0
        %v8012 = vmax.f32 %v7442, 0.0
        %v8013 = vmax.f32 %v7444, 0.0
        %v8014 = vmax.f32 %v7548, 0.0
        %v8015 = vmax.f32 %v7550, 0.0
        %v8016 = vmax.f32 %v7654, 0.0
        %v8017 = vmax.f32 %v7656, 0.0
        %v8018 = vmax.f32 %v7760, 0.0
        %v8019 = vmax.f32 %v7762, 0.0
        %v8020 = vmax.f32 %v7866, 0.0
        %v8021 = vmax.f32 %v7868, 0.0
        %v8022 = vmax.f32 %v7972, 0.0
        %v8023 = vmax.f32 %v7974, 0.0
        %v8024 = vpack.c.bf16 %v7988, %v7976
        %v8025 = vpack.c.bf16 %v7989, %v7977
        %v8026 = vpack.c.bf16 %v7990, %v7978
        %v8027 = vpack.c.bf16 %v7991, %v7979
        %v8028 = vpack.c.bf16 %v7992, %v7980
        %v8029 = vpack.c.bf16 %v7993, %v7981
        %v8030 = vpack.c.bf16 %v7994, %v7982
        %v8031 = vpack.c.bf16 %v7995, %v7983
        %v8032 = vpack.c.bf16 %v7996, %v7984
        %v8033 = vpack.c.bf16 %v7997, %v7985
        %v8034 = vpack.c.bf16 %v7998, %v7986
        %v8035 = vpack.c.bf16 %v7999, %v7987
        %v8036 = vpack.c.bf16 %v8012, %v8000
        %v8037 = vpack.c.bf16 %v8013, %v8001
        %v8038 = vpack.c.bf16 %v8014, %v8002
        %v8039 = vpack.c.bf16 %v8015, %v8003
        %v8040 = vpack.c.bf16 %v8016, %v8004
        %v8041 = vpack.c.bf16 %v8017, %v8005
        %v8042 = vpack.c.bf16 %v8018, %v8006
        %v8043 = vpack.c.bf16 %v8019, %v8007
        %v8044 = vpack.c.bf16 %v8020, %v8008
        %v8045 = vpack.c.bf16 %v8021, %v8009
        %v8046 = vpack.c.bf16 %v8022, %v8010
        %v8047 = vpack.c.bf16 %v8023, %v8011
        %v8048 = vld [vmem:[%s886] sm:$0xff]
        %v8049 = vld [vmem:[%s886 + $0x8] sm:$0xf]
        %v8050 = vld [vmem:[%s886 + $0xc] sm:$0xff]
        %v8051 = vld [vmem:[%s886 + $0x14] sm:$0xf]
        %v8052 = vld [vmem:[%s886 + $0x18] sm:$0xff]
        %v8053 = vld [vmem:[%s886 + $0x20] sm:$0xf]
        %v8054 = vld [vmem:[%s886 + $0x24] sm:$0xff]
        %v8055 = vld [vmem:[%s886 + $0x2c] sm:$0xf]
        %v8056 = vld [vmem:[%s886 + $0x30] sm:$0xff]
        %v8057 = vld [vmem:[%s886 + $0x38] sm:$0xf]
        %v8058 = vld [vmem:[%s886 + $0x3c] sm:$0xff]
        %v8059 = vld [vmem:[%s886 + $0x44] sm:$0xf]
        %v8060 = vld [vmem:[%s886 + $0x48] sm:$0xff]
        %v8061 = vld [vmem:[%s886 + $0x50] sm:$0xf]
        %v8062 = vld [vmem:[%s886 + $0x54] sm:$0xff]
        %v8063 = vld [vmem:[%s886 + $0x5c] sm:$0xf]
        %v8064 = vld [vmem:[%s886 + $0x60] sm:$0xff]
        %v8065 = vld [vmem:[%s886 + $0x68] sm:$0xf]
        %v8066 = vld [vmem:[%s886 + $0x6c] sm:$0xff]
        %v8067 = vld [vmem:[%s886 + $0x74] sm:$0xf]
        %v8068 = vld [vmem:[%s886 + $0x78] sm:$0xff]
        %v8069 = vld [vmem:[%s886 + $0x80] sm:$0xf]
        %v8070 = vld [vmem:[%s886 + $0x84] sm:$0xff]
        %v8071 = vld [vmem:[%s886 + $0x8c] sm:$0xf]
        %v8072 = vld [vmem:[%s886 + $0x90] sm:$0xff]
        %v8073 = vld [vmem:[%s886 + $0x98] sm:$0xf]
        %v8074 = vld [vmem:[%s886 + $0x9c] sm:$0xff]
        %v8075 = vld [vmem:[%s886 + $0xa4] sm:$0xf]
        %v8076 = vld [vmem:[%s886 + $0xa8] sm:$0xff]
        %v8077 = vld [vmem:[%s886 + $0xb0] sm:$0xf]
        %v8078 = vld [vmem:[%s886 + $0xb4] sm:$0xff]
        %v8079 = vld [vmem:[%s886 + $0xbc] sm:$0xf]
        %v8080 = vld [vmem:[%s886 + $0xc0] sm:$0xff]
        %v8081 = vld [vmem:[%s886 + $0xc8] sm:$0xf]
        %v8082 = vld [vmem:[%s886 + $0xcc] sm:$0xff]
        %v8083 = vld [vmem:[%s886 + $0xd4] sm:$0xf]
        %v8084 = vld [vmem:[%s886 + $0xd8] sm:$0xff]
        %v8085 = vld [vmem:[%s886 + $0xe0] sm:$0xf]
        %v8086 = vld [vmem:[%s886 + $0xe4] sm:$0xff]
        %v8087 = vld [vmem:[%s886 + $0xec] sm:$0xf]
        %v8088 = vld [vmem:[%s886 + $0xf0] sm:$0xff]
        %v8089 = vld [vmem:[%s886 + $0xf8] sm:$0xf]
        %v8090 = vld [vmem:[%s886 + $0xfc] sm:$0xff]
        %v8091 = vld [vmem:[%s886 + $0x104] sm:$0xf]
        %v8092 = vld [vmem:[%s886 + $0x108] sm:$0xff]
        %v8093 = vld [vmem:[%s886 + $0x110] sm:$0xf]
        %v8094 = vld [vmem:[%s886 + $0x114] sm:$0xff]
        %v8095 = vld [vmem:[%s886 + $0x11c] sm:$0xf]
        %v8096 = vld [vmem:[%s886 + $0x120] sm:$0xff]
        %v8097 = vld [vmem:[%s886 + $0x128] sm:$0xf]
        %v8098 = vld [vmem:[%s886 + $0x12c] sm:$0xff]
        %v8099 = vld [vmem:[%s886 + $0x134] sm:$0xf]
        %v8100 = vld [vmem:[%s886 + $0x138] sm:$0xff]
        %v8101 = vld [vmem:[%s886 + $0x140] sm:$0xf]
        %v8102 = vld [vmem:[%s886 + $0x144] sm:$0xff]
        %v8103 = vld [vmem:[%s886 + $0x14c] sm:$0xf]
        %v8104 = vld [vmem:[%s886 + $0x150] sm:$0xff]
        %v8105 = vld [vmem:[%s886 + $0x158] sm:$0xf]
        %v8106 = vld [vmem:[%s886 + $0x15c] sm:$0xff]
        %v8107 = vld [vmem:[%s886 + $0x164] sm:$0xf]
        %v8108 = vld [vmem:[%s886 + $0x168] sm:$0xff]
        %v8109 = vld [vmem:[%s886 + $0x170] sm:$0xf]
        %v8110 = vld [vmem:[%s886 + $0x174] sm:$0xff]
        %v8111 = vld [vmem:[%s886 + $0x17c] sm:$0xf]
        %v8112 = vld [vmem:[%s886 + $0x180] sm:$0xff]
        %v8113 = vld [vmem:[%s886 + $0x188] sm:$0xf]
        %v8114 = vld [vmem:[%s886 + $0x18c] sm:$0xff]
        %v8115 = vld [vmem:[%s886 + $0x194] sm:$0xf]
        %v8116 = vld [vmem:[%s886 + $0x198] sm:$0xff]
        %v8117 = vld [vmem:[%s886 + $0x1a0] sm:$0xf]
        %v8118 = vld [vmem:[%s886 + $0x1a4] sm:$0xff]
        %v8119 = vld [vmem:[%s886 + $0x1ac] sm:$0xf]
        %v8120 = vld [vmem:[%s886 + $0x1b0] sm:$0xff]
        %v8121 = vld [vmem:[%s886 + $0x1b8] sm:$0xf]
        %v8122 = vld [vmem:[%s886 + $0x1bc] sm:$0xff]
        %v8123 = vld [vmem:[%s886 + $0x1c4] sm:$0xf]
        %v8124 = vld [vmem:[%s886 + $0x1c8] sm:$0xff]
        %v8125 = vld [vmem:[%s886 + $0x1d0] sm:$0xf]
        %v8126 = vld [vmem:[%s886 + $0x1d4] sm:$0xff]
        %v8127 = vld [vmem:[%s886 + $0x1dc] sm:$0xf]
        %v8128 = vld [vmem:[%s886 + $0x1e0] sm:$0xff]
        %v8129 = vld [vmem:[%s886 + $0x1e8] sm:$0xf]
        %v8130 = vld [vmem:[%s886 + $0x1ec] sm:$0xff]
        %v8131 = vld [vmem:[%s886 + $0x1f4] sm:$0xf]
        %v8132 = vld [vmem:[%s886 + $0x1f8] sm:$0xff]
        %v8133 = vld [vmem:[%s886 + $0x200] sm:$0xf]
        %v8134 = vld [vmem:[%s886 + $0x204] sm:$0xff]
        %v8135 = vld [vmem:[%s886 + $0x20c] sm:$0xf]
        %v8136 = vld [vmem:[%s886 + $0x210] sm:$0xff]
        %v8137 = vld [vmem:[%s886 + $0x218] sm:$0xf]
        %v8138 = vld [vmem:[%s886 + $0x21c] sm:$0xff]
        %v8139 = vld [vmem:[%s886 + $0x224] sm:$0xf]
        %v8140 = vld [vmem:[%s886 + $0x228] sm:$0xff]
        %v8141 = vld [vmem:[%s886 + $0x230] sm:$0xf]
        %v8142 = vld [vmem:[%s886 + $0x234] sm:$0xff]
        %v8143 = vld [vmem:[%s886 + $0x23c] sm:$0xf]
        %v8144 = vld [vmem:[%s886 + $0x240] sm:$0xff]
        %v8145 = vld [vmem:[%s886 + $0x248] sm:$0xf]
        %v8146 = vld [vmem:[%s886 + $0x24c] sm:$0xff]
        %v8147 = vld [vmem:[%s886 + $0x254] sm:$0xf]
        %v8148 = vld [vmem:[%s886 + $0x258] sm:$0xff]
        %v8149 = vld [vmem:[%s886 + $0x260] sm:$0xf]
        %v8150 = vld [vmem:[%s886 + $0x264] sm:$0xff]
        %v8151 = vld [vmem:[%s886 + $0x26c] sm:$0xf]
        %v8152 = vld [vmem:[%s886 + $0x270] sm:$0xff]
        %v8153 = vld [vmem:[%s886 + $0x278] sm:$0xf]
        %v8154 = vld [vmem:[%s886 + $0x27c] sm:$0xff]
        %v8155 = vld [vmem:[%s886 + $0x284] sm:$0xf]
        %v8156 = vld [vmem:[%s886 + $0x288] sm:$0xff]
        %v8157 = vld [vmem:[%s886 + $0x290] sm:$0xf]
        %v8158 = vld [vmem:[%s886 + $0x294] sm:$0xff]
        %v8159 = vld [vmem:[%s886 + $0x29c] sm:$0xf]
        %v8160 = vld [vmem:[%s886 + $0x2a0] sm:$0xff]
        %v8161 = vld [vmem:[%s886 + $0x2a8] sm:$0xf]
        %v8162 = vld [vmem:[%s886 + $0x2ac] sm:$0xff]
        %v8163 = vld [vmem:[%s886 + $0x2b4] sm:$0xf]
        %v8164 = vld [vmem:[%s886 + $0x2b8] sm:$0xff]
        %v8165 = vld [vmem:[%s886 + $0x2c0] sm:$0xf]
        %v8166 = vld [vmem:[%s886 + $0x2c4] sm:$0xff]
        %v8167 = vld [vmem:[%s886 + $0x2cc] sm:$0xf]
        %v8168 = vld [vmem:[%s886 + $0x2d0] sm:$0xff]
        %v8169 = vld [vmem:[%s886 + $0x2d8] sm:$0xf]
        %v8170 = vld [vmem:[%s886 + $0x2dc] sm:$0xff]
        %v8171 = vld [vmem:[%s886 + $0x2e4] sm:$0xf]
        %v8172 = vld [vmem:[%s886 + $0x2e8] sm:$0xff]
        %v8173 = vld [vmem:[%s886 + $0x2f0] sm:$0xf]
        %v8174 = vld [vmem:[%s886 + $0x2f4] sm:$0xff]
        %v8175 = vld [vmem:[%s886 + $0x2fc] sm:$0xf]
        %v8176 = vld [vmem:[%s886 + $0x300] sm:$0xff]
        %v8177 = vld [vmem:[%s886 + $0x308] sm:$0xf]
        %v8178 = vld [vmem:[%s886 + $0x30c] sm:$0xff]
        %v8179 = vld [vmem:[%s886 + $0x314] sm:$0xf]
        %v8180 = vld [vmem:[%s886 + $0x318] sm:$0xff]
        %v8181 = vld [vmem:[%s886 + $0x320] sm:$0xf]
        %v8182 = vld [vmem:[%s886 + $0x324] sm:$0xff]
        %v8183 = vld [vmem:[%s886 + $0x32c] sm:$0xf]
        %v8184 = vld [vmem:[%s886 + $0x330] sm:$0xff]
        %v8185 = vld [vmem:[%s886 + $0x338] sm:$0xf]
        %v8186 = vld [vmem:[%s886 + $0x33c] sm:$0xff]
        %v8187 = vld [vmem:[%s886 + $0x344] sm:$0xf]
        %v8188 = vld [vmem:[%s886 + $0x348] sm:$0xff]
        %v8189 = vld [vmem:[%s886 + $0x350] sm:$0xf]
        %v8190 = vld [vmem:[%s886 + $0x354] sm:$0xff]
        %v8191 = vld [vmem:[%s886 + $0x35c] sm:$0xf]
        %v8192 = vld [vmem:[%s886 + $0x360] sm:$0xff]
        %v8193 = vld [vmem:[%s886 + $0x368] sm:$0xf]
        %v8194 = vld [vmem:[%s886 + $0x36c] sm:$0xff]
        %v8195 = vld [vmem:[%s886 + $0x374] sm:$0xf]
        %v8196 = vld [vmem:[%s886 + $0x378] sm:$0xff]
        %v8197 = vld [vmem:[%s886 + $0x380] sm:$0xf]
        %v8198 = vld [vmem:[%s886 + $0x384] sm:$0xff]
        %v8199 = vld [vmem:[%s886 + $0x38c] sm:$0xf]
        %v8200 = vld [vmem:[%s886 + $0x390] sm:$0xff]
        %v8201 = vld [vmem:[%s886 + $0x398] sm:$0xf]
        %v8202 = vld [vmem:[%s886 + $0x39c] sm:$0xff]
        %v8203 = vld [vmem:[%s886 + $0x3a4] sm:$0xf]
        %v8204 = vld [vmem:[%s886 + $0x3a8] sm:$0xff]
        %v8205 = vld [vmem:[%s886 + $0x3b0] sm:$0xf]
        %v8206 = vld [vmem:[%s886 + $0x3b4] sm:$0xff]
        %v8207 = vld [vmem:[%s886 + $0x3bc] sm:$0xf]
        %v8208 = vld [vmem:[%s886 + $0x3c0] sm:$0xff]
        %v8209 = vld [vmem:[%s886 + $0x3c8] sm:$0xf]
        %v8210 = vld [vmem:[%s886 + $0x3cc] sm:$0xff]
        %v8211 = vld [vmem:[%s886 + $0x3d4] sm:$0xf]
        %v8212 = vld [vmem:[%s886 + $0x3d8] sm:$0xff]
        %v8213 = vld [vmem:[%s886 + $0x3e0] sm:$0xf]
        %v8214 = vld [vmem:[%s886 + $0x3e4] sm:$0xff]
        %v8215 = vld [vmem:[%s886 + $0x3ec] sm:$0xf]
        %v8216 = vld [vmem:[%s886 + $0x3f0] sm:$0xff]
        %v8217 = vld [vmem:[%s886 + $0x3f8] sm:$0xf]
        %v8218 = vld [vmem:[%s886 + $0x3fc] sm:$0xff]
        %v8219 = vld [vmem:[%s886 + $0x404] sm:$0xf]
        %v8220 = vld [vmem:[%s886 + $0x408] sm:$0xff]
        %v8221 = vld [vmem:[%s886 + $0x410] sm:$0xf]
        %v8222 = vld [vmem:[%s886 + $0x414] sm:$0xff]
        %v8223 = vld [vmem:[%s886 + $0x41c] sm:$0xf]
        %v8224 = vld [vmem:[%s886 + $0x420] sm:$0xff]
        %v8225 = vld [vmem:[%s886 + $0x428] sm:$0xf]
        %v8226 = vld [vmem:[%s886 + $0x42c] sm:$0xff]
        %v8227 = vld [vmem:[%s886 + $0x434] sm:$0xf]
        %v8228 = vld [vmem:[%s886 + $0x438] sm:$0xff]
        %v8229 = vld [vmem:[%s886 + $0x440] sm:$0xf]
        %v8230 = vld [vmem:[%s886 + $0x444] sm:$0xff]
        %v8231 = vld [vmem:[%s886 + $0x44c] sm:$0xf]
        %v8232 = vld [vmem:[%s886 + $0x450] sm:$0xff]
        %v8233 = vld [vmem:[%s886 + $0x458] sm:$0xf]
        %v8234 = vld [vmem:[%s886 + $0x45c] sm:$0xff]
        %v8235 = vld [vmem:[%s886 + $0x464] sm:$0xf]
        %v8236 = vld [vmem:[%s886 + $0x468] sm:$0xff]
        %v8237 = vld [vmem:[%s886 + $0x470] sm:$0xf]
        %v8238 = vld [vmem:[%s886 + $0x474] sm:$0xff]
        %v8239 = vld [vmem:[%s886 + $0x47c] sm:$0xf]
        %v8240 = vld [vmem:[%s886 + $0x480] sm:$0xff]
        %v8241 = vld [vmem:[%s886 + $0x488] sm:$0xf]
        %v8242 = vld [vmem:[%s886 + $0x48c] sm:$0xff]
        %v8243 = vld [vmem:[%s886 + $0x494] sm:$0xf]
        %v8244 = vld [vmem:[%s886 + $0x498] sm:$0xff]
        %v8245 = vld [vmem:[%s886 + $0x4a0] sm:$0xf]
        %v8246 = vld [vmem:[%s886 + $0x4a4] sm:$0xff]
        %v8247 = vld [vmem:[%s886 + $0x4ac] sm:$0xf]
        %v8248 = vld [vmem:[%s886 + $0x4b0] sm:$0xff]
        %v8249 = vld [vmem:[%s886 + $0x4b8] sm:$0xf]
        %v8250 = vld [vmem:[%s886 + $0x4bc] sm:$0xff]
        %v8251 = vld [vmem:[%s886 + $0x4c4] sm:$0xf]
        %v8252 = vld [vmem:[%s886 + $0x4c8] sm:$0xff]
        %v8253 = vld [vmem:[%s886 + $0x4d0] sm:$0xf]
        %v8254 = vld [vmem:[%s886 + $0x4d4] sm:$0xff]
        %v8255 = vld [vmem:[%s886 + $0x4dc] sm:$0xf]
        %v8256 = vld [vmem:[%s886 + $0x4e0] sm:$0xff]
        %v8257 = vld [vmem:[%s886 + $0x4e8] sm:$0xf]
        %v8258 = vld [vmem:[%s886 + $0x4ec] sm:$0xff]
        %v8259 = vld [vmem:[%s886 + $0x4f4] sm:$0xf]
        %v8260 = vld [vmem:[%s886 + $0x4f8] sm:$0xff]
        %v8261 = vld [vmem:[%s886 + $0x500] sm:$0xf]
        %v8262 = vld [vmem:[%s886 + $0x504] sm:$0xff]
        %v8263 = vld [vmem:[%s886 + $0x50c] sm:$0xf]
        %v8264 = vld [vmem:[%s886 + $0x510] sm:$0xff]
        %v8265 = vld [vmem:[%s886 + $0x518] sm:$0xf]
        %v8266 = vld [vmem:[%s886 + $0x51c] sm:$0xff]
        %v8267 = vld [vmem:[%s886 + $0x524] sm:$0xf]
        %v8268 = vld [vmem:[%s886 + $0x528] sm:$0xff]
        %v8269 = vld [vmem:[%s886 + $0x530] sm:$0xf]
        %v8270 = vld [vmem:[%s886 + $0x534] sm:$0xff]
        %v8271 = vld [vmem:[%s886 + $0x53c] sm:$0xf]
        %v8272 = vld [vmem:[%s886 + $0x540] sm:$0xff]
        %v8273 = vld [vmem:[%s886 + $0x548] sm:$0xf]
        %v8274 = vld [vmem:[%s886 + $0x54c] sm:$0xff]
        %v8275 = vld [vmem:[%s886 + $0x554] sm:$0xf]
        %v8276 = vld [vmem:[%s886 + $0x558] sm:$0xff]
        %v8277 = vld [vmem:[%s886 + $0x560] sm:$0xf]
        %v8278 = vld [vmem:[%s886 + $0x564] sm:$0xff]
        %v8279 = vld [vmem:[%s886 + $0x56c] sm:$0xf]
        %v8280 = vld [vmem:[%s886 + $0x570] sm:$0xff]
        %v8281 = vld [vmem:[%s886 + $0x578] sm:$0xf]
        %v8282 = vld [vmem:[%s886 + $0x57c] sm:$0xff]
        %v8283 = vld [vmem:[%s886 + $0x584] sm:$0xf]
        %v8284 = vld [vmem:[%s886 + $0x588] sm:$0xff]
        %v8285 = vld [vmem:[%s886 + $0x590] sm:$0xf]
        %v8286 = vld [vmem:[%s886 + $0x594] sm:$0xff]
        %v8287 = vld [vmem:[%s886 + $0x59c] sm:$0xf]
        %v8288 = vld [vmem:[%s886 + $0x5a0] sm:$0xff]
        %v8289 = vld [vmem:[%s886 + $0x5a8] sm:$0xf]
        %v8290 = vld [vmem:[%s886 + $0x5ac] sm:$0xff]
        %v8291 = vld [vmem:[%s886 + $0x5b4] sm:$0xf]
        %v8292 = vld [vmem:[%s886 + $0x5b8] sm:$0xff]
        %v8293 = vld [vmem:[%s886 + $0x5c0] sm:$0xf]
        %v8294 = vld [vmem:[%s886 + $0x5c4] sm:$0xff]
        %v8295 = vld [vmem:[%s886 + $0x5cc] sm:$0xf]
        %v8296 = vld [vmem:[%s886 + $0x5d0] sm:$0xff]
        %v8297 = vld [vmem:[%s886 + $0x5d8] sm:$0xf]
        %v8298 = vld [vmem:[%s886 + $0x5dc] sm:$0xff]
        %v8299 = vld [vmem:[%s886 + $0x5e4] sm:$0xf]
        %v8300 = vld [vmem:[%s886 + $0x5e8] sm:$0xff]
        %v8301 = vld [vmem:[%s886 + $0x5f0] sm:$0xf]
        %v8302 = vld [vmem:[%s886 + $0x5f4] sm:$0xff]
        %v8303 = vld [vmem:[%s886 + $0x5fc] sm:$0xf]
        %v8304 = vld [vmem:[%s886 + $0x600] sm:$0xff]
        %v8305 = vld [vmem:[%s886 + $0x608] sm:$0xf]
        %v8306 = vld [vmem:[%s886 + $0x60c] sm:$0xff]
        %v8307 = vld [vmem:[%s886 + $0x614] sm:$0xf]
        %v8308 = vld [vmem:[%s886 + $0x618] sm:$0xff]
        %v8309 = vld [vmem:[%s886 + $0x620] sm:$0xf]
        %v8310 = vld [vmem:[%s886 + $0x624] sm:$0xff]
        %v8311 = vld [vmem:[%s886 + $0x62c] sm:$0xf]
        %v8312 = vld [vmem:[%s886 + $0x630] sm:$0xff]
        %v8313 = vld [vmem:[%s886 + $0x638] sm:$0xf]
        %v8314 = vld [vmem:[%s886 + $0x63c] sm:$0xff]
        %v8315 = vld [vmem:[%s886 + $0x644] sm:$0xf]
        %v8316 = vld [vmem:[%s886 + $0x648] sm:$0xff]
        %v8317 = vld [vmem:[%s886 + $0x650] sm:$0xf]
        %v8318 = vld [vmem:[%s886 + $0x654] sm:$0xff]
        %v8319 = vld [vmem:[%s886 + $0x65c] sm:$0xf]
        %v8320 = vld [vmem:[%s886 + $0x660] sm:$0xff]
        %v8321 = vld [vmem:[%s886 + $0x668] sm:$0xf]
        %v8322 = vld [vmem:[%s886 + $0x66c] sm:$0xff]
        %v8323 = vld [vmem:[%s886 + $0x674] sm:$0xf]
        %v8324 = vld [vmem:[%s886 + $0x678] sm:$0xff]
        %v8325 = vld [vmem:[%s886 + $0x680] sm:$0xf]
        %v8326 = vld [vmem:[%s886 + $0x684] sm:$0xff]
        %v8327 = vld [vmem:[%s886 + $0x68c] sm:$0xf]
        %v8328 = vld [vmem:[%s886 + $0x690] sm:$0xff]
        %v8329 = vld [vmem:[%s886 + $0x698] sm:$0xf]
        %v8330 = vld [vmem:[%s886 + $0x69c] sm:$0xff]
        %v8331 = vld [vmem:[%s886 + $0x6a4] sm:$0xf]
        %v8332 = vld [vmem:[%s886 + $0x6a8] sm:$0xff]
        %v8333 = vld [vmem:[%s886 + $0x6b0] sm:$0xf]
        %v8334 = vld [vmem:[%s886 + $0x6b4] sm:$0xff]
        %v8335 = vld [vmem:[%s886 + $0x6bc] sm:$0xf]
        %v8336 = vld [vmem:[%s886 + $0x6c0] sm:$0xff]
        %v8337 = vld [vmem:[%s886 + $0x6c8] sm:$0xf]
        %v8338 = vld [vmem:[%s886 + $0x6cc] sm:$0xff]
        %v8339 = vld [vmem:[%s886 + $0x6d4] sm:$0xf]
        %v8340 = vld [vmem:[%s886 + $0x6d8] sm:$0xff]
        %v8341 = vld [vmem:[%s886 + $0x6e0] sm:$0xf]
        %v8342 = vld [vmem:[%s886 + $0x6e4] sm:$0xff]
        %v8343 = vld [vmem:[%s886 + $0x6ec] sm:$0xf]
        %v8344 = vld [vmem:[%s886 + $0x6f0] sm:$0xff]
        %v8345 = vld [vmem:[%s886 + $0x6f8] sm:$0xf]
        %v8346 = vld [vmem:[%s886 + $0x6fc] sm:$0xff]
        %v8347 = vld [vmem:[%s886 + $0x704] sm:$0xf]
        %v8348 = vld [vmem:[%s886 + $0x708] sm:$0xff]
        %v8349 = vld [vmem:[%s886 + $0x710] sm:$0xf]
        %v8350 = vld [vmem:[%s886 + $0x714] sm:$0xff]
        %v8351 = vld [vmem:[%s886 + $0x71c] sm:$0xf]
        %v8352 = vld [vmem:[%s886 + $0x720] sm:$0xff]
        %v8353 = vld [vmem:[%s886 + $0x728] sm:$0xf]
        %v8354 = vld [vmem:[%s886 + $0x72c] sm:$0xff]
        %v8355 = vld [vmem:[%s886 + $0x734] sm:$0xf]
        %v8356 = vld [vmem:[%s886 + $0x738] sm:$0xff]
        %v8357 = vld [vmem:[%s886 + $0x740] sm:$0xf]
        %v8358 = vld [vmem:[%s886 + $0x744] sm:$0xff]
        %v8359 = vld [vmem:[%s886 + $0x74c] sm:$0xf]
        %v8360 = vld [vmem:[%s886 + $0x750] sm:$0xff]
        %v8361 = vld [vmem:[%s886 + $0x758] sm:$0xf]
        %v8362 = vld [vmem:[%s886 + $0x75c] sm:$0xff]
        %v8363 = vld [vmem:[%s886 + $0x764] sm:$0xf]
        %v8364 = vld [vmem:[%s886 + $0x768] sm:$0xff]
        %v8365 = vld [vmem:[%s886 + $0x770] sm:$0xf]
        %v8366 = vld [vmem:[%s886 + $0x774] sm:$0xff]
        %v8367 = vld [vmem:[%s886 + $0x77c] sm:$0xf]
        %v8368 = vld [vmem:[%s886 + $0x780] sm:$0xff]
        %v8369 = vld [vmem:[%s886 + $0x788] sm:$0xf]
        %v8370 = vld [vmem:[%s886 + $0x78c] sm:$0xff]
        %v8371 = vld [vmem:[%s886 + $0x794] sm:$0xf]
        %v8372 = vld [vmem:[%s886 + $0x798] sm:$0xff]
        %v8373 = vld [vmem:[%s886 + $0x7a0] sm:$0xf]
        %v8374 = vld [vmem:[%s886 + $0x7a4] sm:$0xff]
        %v8375 = vld [vmem:[%s886 + $0x7ac] sm:$0xf]
        %v8376 = vld [vmem:[%s886 + $0x7b0] sm:$0xff]
        %v8377 = vld [vmem:[%s886 + $0x7b8] sm:$0xf]
        %v8378 = vld [vmem:[%s886 + $0x7bc] sm:$0xff]
        %v8379 = vld [vmem:[%s886 + $0x7c4] sm:$0xf]
        %v8380 = vld [vmem:[%s886 + $0x7c8] sm:$0xff]
        %v8381 = vld [vmem:[%s886 + $0x7d0] sm:$0xf]
        %v8382 = vld [vmem:[%s886 + $0x7d4] sm:$0xff]
        %v8383 = vld [vmem:[%s886 + $0x7dc] sm:$0xf]
        %v8384 = vld [vmem:[%s886 + $0x7e0] sm:$0xff]
        %v8385 = vld [vmem:[%s886 + $0x7e8] sm:$0xf]
        %v8386 = vld [vmem:[%s886 + $0x7ec] sm:$0xff]
        %v8387 = vld [vmem:[%s886 + $0x7f4] sm:$0xf]
        %v8388 = vld [vmem:[%s886 + $0x7f8] sm:$0xff]
        %v8389 = vld [vmem:[%s886 + $0x800] sm:$0xf]
        %v8390 = vld [vmem:[%s886 + $0x804] sm:$0xff]
        %v8391 = vld [vmem:[%s886 + $0x80c] sm:$0xf]
        %v8392 = vld [vmem:[%s886 + $0x810] sm:$0xff]
        %v8393 = vld [vmem:[%s886 + $0x818] sm:$0xf]
        %v8394 = vld [vmem:[%s886 + $0x81c] sm:$0xff]
        %v8395 = vld [vmem:[%s886 + $0x824] sm:$0xf]
        %v8396 = vld [vmem:[%s886 + $0x828] sm:$0xff]
        %v8397 = vld [vmem:[%s886 + $0x830] sm:$0xf]
        %v8398 = vld [vmem:[%s886 + $0x834] sm:$0xff]
        %v8399 = vld [vmem:[%s886 + $0x83c] sm:$0xf]
        %v8400 = vld [vmem:[%s886 + $0x840] sm:$0xff]
        %v8401 = vld [vmem:[%s886 + $0x848] sm:$0xf]
        %v8402 = vld [vmem:[%s886 + $0x84c] sm:$0xff]
        %v8403 = vld [vmem:[%s886 + $0x854] sm:$0xf]
        %v8404 = vld [vmem:[%s886 + $0x858] sm:$0xff]
        %v8405 = vld [vmem:[%s886 + $0x860] sm:$0xf]
        %v8406 = vld [vmem:[%s886 + $0x864] sm:$0xff]
        %v8407 = vld [vmem:[%s886 + $0x86c] sm:$0xf]
        %v8408 = vld [vmem:[%s886 + $0x870] sm:$0xff]
        %v8409 = vld [vmem:[%s886 + $0x878] sm:$0xf]
        %v8410 = vld [vmem:[%s886 + $0x87c] sm:$0xff]
        %v8411 = vld [vmem:[%s886 + $0x884] sm:$0xf]
        %v8412 = vld [vmem:[%s886 + $0x888] sm:$0xff]
        %v8413 = vld [vmem:[%s886 + $0x890] sm:$0xf]
        %v8414 = vld [vmem:[%s886 + $0x894] sm:$0xff]
        %v8415 = vld [vmem:[%s886 + $0x89c] sm:$0xf]
        %v8416 = vld [vmem:[%s886 + $0x8a0] sm:$0xff]
        %v8417 = vld [vmem:[%s886 + $0x8a8] sm:$0xf]
        %v8418 = vld [vmem:[%s886 + $0x8ac] sm:$0xff]
        %v8419 = vld [vmem:[%s886 + $0x8b4] sm:$0xf]
        %v8420 = vld [vmem:[%s886 + $0x8b8] sm:$0xff]
        %v8421 = vld [vmem:[%s886 + $0x8c0] sm:$0xf]
        %v8422 = vld [vmem:[%s886 + $0x8c4] sm:$0xff]
        %v8423 = vld [vmem:[%s886 + $0x8cc] sm:$0xf]
        %v8424 = vld [vmem:[%s886 + $0x8d0] sm:$0xff]
        %v8425 = vld [vmem:[%s886 + $0x8d8] sm:$0xf]
        %v8426 = vld [vmem:[%s886 + $0x8dc] sm:$0xff]
        %v8427 = vld [vmem:[%s886 + $0x8e4] sm:$0xf]
        %v8428 = vld [vmem:[%s886 + $0x8e8] sm:$0xff]
        %v8429 = vld [vmem:[%s886 + $0x8f0] sm:$0xf]
        %v8430 = vld [vmem:[%s886 + $0x8f4] sm:$0xff]
        %v8431 = vld [vmem:[%s886 + $0x8fc] sm:$0xf]
        %v8432 = vld [vmem:[%s895] sm:$0x7]
        %v8434 = vlaneseq
        %v8435 = vshrl.u32 %v8434, 7
        %v8436 = vsub.s32 0, %v8435
        %v8437 = vrot.slane %v8432, %v8436
        %v8438 = vlaneseq
        %v8439 = vshrl.u32 %v8438, 7
        %v8440 = vsub.s32 1, %v8439
        %v8441 = vrot.slane %v8432, %v8440
        %v8442 = vlaneseq
        %v8443 = vshrl.u32 %v8442, 7
        %v8444 = vsub.s32 2, %v8443
        %v8445 = vrot.slane %v8432, %v8444
        %v8833 = vunpack.c.l.b16 %v8048
        %v8834 = vunpack.c.h.b16 %v8048
        %v8835 = vunpack.c.l.b16 %v8049
        %v8836 = vunpack.c.l.b16 %v8050
        %v8837 = vunpack.c.h.b16 %v8050
        %v8838 = vunpack.c.l.b16 %v8051
        %v8839 = vunpack.c.l.b16 %v8052
        %v8840 = vunpack.c.h.b16 %v8052
        %v8841 = vunpack.c.l.b16 %v8053
        %v8842 = vunpack.c.l.b16 %v8054
        %v8843 = vunpack.c.h.b16 %v8054
        %v8844 = vunpack.c.l.b16 %v8055
        %v8845 = vunpack.c.l.b16 %v8056
        %v8846 = vunpack.c.h.b16 %v8056
        %v8847 = vunpack.c.l.b16 %v8057
        %v8848 = vunpack.c.l.b16 %v8058
        %v8849 = vunpack.c.h.b16 %v8058
        %v8850 = vunpack.c.l.b16 %v8059
        %v8851 = vunpack.c.l.b16 %v8060
        %v8852 = vunpack.c.h.b16 %v8060
        %v8853 = vunpack.c.l.b16 %v8061
        %v8854 = vunpack.c.l.b16 %v8062
        %v8855 = vunpack.c.h.b16 %v8062
        %v8856 = vunpack.c.l.b16 %v8063
        %v8857 = vunpack.c.l.b16 %v8064
        %v8858 = vunpack.c.h.b16 %v8064
        %v8859 = vunpack.c.l.b16 %v8065
        %v8860 = vunpack.c.l.b16 %v8066
        %v8861 = vunpack.c.h.b16 %v8066
        %v8862 = vunpack.c.l.b16 %v8067
        %v8863 = vunpack.c.l.b16 %v8068
        %v8864 = vunpack.c.h.b16 %v8068
        %v8865 = vunpack.c.l.b16 %v8069
        %v8866 = vunpack.c.l.b16 %v8070
        %v8867 = vunpack.c.h.b16 %v8070
        %v8868 = vunpack.c.l.b16 %v8071
        %v8869 = vunpack.c.l.b16 %v8072
        %v8870 = vunpack.c.h.b16 %v8072
        %v8871 = vunpack.c.l.b16 %v8073
        %v8872 = vunpack.c.l.b16 %v8074
        %v8873 = vunpack.c.h.b16 %v8074
        %v8874 = vunpack.c.l.b16 %v8075
        %v8875 = vunpack.c.l.b16 %v8076
        %v8876 = vunpack.c.h.b16 %v8076
        %v8877 = vunpack.c.l.b16 %v8077
        %v8878 = vunpack.c.l.b16 %v8078
        %v8879 = vunpack.c.h.b16 %v8078
        %v8880 = vunpack.c.l.b16 %v8079
        %v8881 = vunpack.c.l.b16 %v8080
        %v8882 = vunpack.c.h.b16 %v8080
        %v8883 = vunpack.c.l.b16 %v8081
        %v8884 = vunpack.c.l.b16 %v8082
        %v8885 = vunpack.c.h.b16 %v8082
        %v8886 = vunpack.c.l.b16 %v8083
        %v8887 = vunpack.c.l.b16 %v8084
        %v8888 = vunpack.c.h.b16 %v8084
        %v8889 = vunpack.c.l.b16 %v8085
        %v8890 = vunpack.c.l.b16 %v8086
        %v8891 = vunpack.c.h.b16 %v8086
        %v8892 = vunpack.c.l.b16 %v8087
        %v8893 = vunpack.c.l.b16 %v8088
        %v8894 = vunpack.c.h.b16 %v8088
        %v8895 = vunpack.c.l.b16 %v8089
        %v8896 = vunpack.c.l.b16 %v8090
        %v8897 = vunpack.c.h.b16 %v8090
        %v8898 = vunpack.c.l.b16 %v8091
        %v8899 = vunpack.c.l.b16 %v8092
        %v8900 = vunpack.c.h.b16 %v8092
        %v8901 = vunpack.c.l.b16 %v8093
        %v8902 = vunpack.c.l.b16 %v8094
        %v8903 = vunpack.c.h.b16 %v8094
        %v8904 = vunpack.c.l.b16 %v8095
        %v8905 = vunpack.c.l.b16 %v8096
        %v8906 = vunpack.c.h.b16 %v8096
        %v8907 = vunpack.c.l.b16 %v8097
        %v8908 = vunpack.c.l.b16 %v8098
        %v8909 = vunpack.c.h.b16 %v8098
        %v8910 = vunpack.c.l.b16 %v8099
        %v8911 = vunpack.c.l.b16 %v8100
        %v8912 = vunpack.c.h.b16 %v8100
        %v8913 = vunpack.c.l.b16 %v8101
        %v8914 = vunpack.c.l.b16 %v8102
        %v8915 = vunpack.c.h.b16 %v8102
        %v8916 = vunpack.c.l.b16 %v8103
        %v8917 = vunpack.c.l.b16 %v8104
        %v8918 = vunpack.c.h.b16 %v8104
        %v8919 = vunpack.c.l.b16 %v8105
        %v8920 = vunpack.c.l.b16 %v8106
        %v8921 = vunpack.c.h.b16 %v8106
        %v8922 = vunpack.c.l.b16 %v8107
        %v8923 = vunpack.c.l.b16 %v8108
        %v8924 = vunpack.c.h.b16 %v8108
        %v8925 = vunpack.c.l.b16 %v8109
        %v8926 = vunpack.c.l.b16 %v8110
        %v8927 = vunpack.c.h.b16 %v8110
        %v8928 = vunpack.c.l.b16 %v8111
        %v8929 = vunpack.c.l.b16 %v8112
        %v8930 = vunpack.c.h.b16 %v8112
        %v8931 = vunpack.c.l.b16 %v8113
        %v8932 = vunpack.c.l.b16 %v8114
        %v8933 = vunpack.c.h.b16 %v8114
        %v8934 = vunpack.c.l.b16 %v8115
        %v8935 = vunpack.c.l.b16 %v8116
        %v8936 = vunpack.c.h.b16 %v8116
        %v8937 = vunpack.c.l.b16 %v8117
        %v8938 = vunpack.c.l.b16 %v8118
        %v8939 = vunpack.c.h.b16 %v8118
        %v8940 = vunpack.c.l.b16 %v8119
        %v8941 = vunpack.c.l.b16 %v8120
        %v8942 = vunpack.c.h.b16 %v8120
        %v8943 = vunpack.c.l.b16 %v8121
        %v8944 = vunpack.c.l.b16 %v8122
        %v8945 = vunpack.c.h.b16 %v8122
        %v8946 = vunpack.c.l.b16 %v8123
        %v8947 = vunpack.c.l.b16 %v8124
        %v8948 = vunpack.c.h.b16 %v8124
        %v8949 = vunpack.c.l.b16 %v8125
        %v8950 = vunpack.c.l.b16 %v8126
        %v8951 = vunpack.c.h.b16 %v8126
        %v8952 = vunpack.c.l.b16 %v8127
        %v8953 = vunpack.c.l.b16 %v8128
        %v8954 = vunpack.c.h.b16 %v8128
        %v8955 = vunpack.c.l.b16 %v8129
        %v8956 = vunpack.c.l.b16 %v8130
        %v8957 = vunpack.c.h.b16 %v8130
        %v8958 = vunpack.c.l.b16 %v8131
        %v8959 = vunpack.c.l.b16 %v8132
        %v8960 = vunpack.c.h.b16 %v8132
        %v8961 = vunpack.c.l.b16 %v8133
        %v8962 = vunpack.c.l.b16 %v8134
        %v8963 = vunpack.c.h.b16 %v8134
        %v8964 = vunpack.c.l.b16 %v8135
        %v8965 = vunpack.c.l.b16 %v8136
        %v8966 = vunpack.c.h.b16 %v8136
        %v8967 = vunpack.c.l.b16 %v8137
        %v8968 = vunpack.c.l.b16 %v8138
        %v8969 = vunpack.c.h.b16 %v8138
        %v8970 = vunpack.c.l.b16 %v8139
        %v8971 = vunpack.c.l.b16 %v8140
        %v8972 = vunpack.c.h.b16 %v8140
        %v8973 = vunpack.c.l.b16 %v8141
        %v8974 = vunpack.c.l.b16 %v8142
        %v8975 = vunpack.c.h.b16 %v8142
        %v8976 = vunpack.c.l.b16 %v8143
        %v8977 = vunpack.c.l.b16 %v8144
        %v8978 = vunpack.c.h.b16 %v8144
        %v8979 = vunpack.c.l.b16 %v8145
        %v8980 = vunpack.c.l.b16 %v8146
        %v8981 = vunpack.c.h.b16 %v8146
        %v8982 = vunpack.c.l.b16 %v8147
        %v8983 = vunpack.c.l.b16 %v8148
        %v8984 = vunpack.c.h.b16 %v8148
        %v8985 = vunpack.c.l.b16 %v8149
        %v8986 = vunpack.c.l.b16 %v8150
        %v8987 = vunpack.c.h.b16 %v8150
        %v8988 = vunpack.c.l.b16 %v8151
        %v8989 = vunpack.c.l.b16 %v8152
        %v8990 = vunpack.c.h.b16 %v8152
        %v8991 = vunpack.c.l.b16 %v8153
        %v8992 = vunpack.c.l.b16 %v8154
        %v8993 = vunpack.c.h.b16 %v8154
        %v8994 = vunpack.c.l.b16 %v8155
        %v8995 = vunpack.c.l.b16 %v8156
        %v8996 = vunpack.c.h.b16 %v8156
        %v8997 = vunpack.c.l.b16 %v8157
        %v8998 = vunpack.c.l.b16 %v8158
        %v8999 = vunpack.c.h.b16 %v8158
        %v9000 = vunpack.c.l.b16 %v8159
        %v9001 = vunpack.c.l.b16 %v8160
        %v9002 = vunpack.c.h.b16 %v8160
        %v9003 = vunpack.c.l.b16 %v8161
        %v9004 = vunpack.c.l.b16 %v8162
        %v9005 = vunpack.c.h.b16 %v8162
        %v9006 = vunpack.c.l.b16 %v8163
        %v9007 = vunpack.c.l.b16 %v8164
        %v9008 = vunpack.c.h.b16 %v8164
        %v9009 = vunpack.c.l.b16 %v8165
        %v9010 = vunpack.c.l.b16 %v8166
        %v9011 = vunpack.c.h.b16 %v8166
        %v9012 = vunpack.c.l.b16 %v8167
        %v9013 = vunpack.c.l.b16 %v8168
        %v9014 = vunpack.c.h.b16 %v8168
        %v9015 = vunpack.c.l.b16 %v8169
        %v9016 = vunpack.c.l.b16 %v8170
        %v9017 = vunpack.c.h.b16 %v8170
        %v9018 = vunpack.c.l.b16 %v8171
        %v9019 = vunpack.c.l.b16 %v8172
        %v9020 = vunpack.c.h.b16 %v8172
        %v9021 = vunpack.c.l.b16 %v8173
        %v9022 = vunpack.c.l.b16 %v8174
        %v9023 = vunpack.c.h.b16 %v8174
        %v9024 = vunpack.c.l.b16 %v8175
        %v9025 = vunpack.c.l.b16 %v8176
        %v9026 = vunpack.c.h.b16 %v8176
        %v9027 = vunpack.c.l.b16 %v8177
        %v9028 = vunpack.c.l.b16 %v8178
        %v9029 = vunpack.c.h.b16 %v8178
        %v9030 = vunpack.c.l.b16 %v8179
        %v9031 = vunpack.c.l.b16 %v8180
        %v9032 = vunpack.c.h.b16 %v8180
        %v9033 = vunpack.c.l.b16 %v8181
        %v9034 = vunpack.c.l.b16 %v8182
        %v9035 = vunpack.c.h.b16 %v8182
        %v9036 = vunpack.c.l.b16 %v8183
        %v9037 = vunpack.c.l.b16 %v8184
        %v9038 = vunpack.c.h.b16 %v8184
        %v9039 = vunpack.c.l.b16 %v8185
        %v9040 = vunpack.c.l.b16 %v8186
        %v9041 = vunpack.c.h.b16 %v8186
        %v9042 = vunpack.c.l.b16 %v8187
        %v9043 = vunpack.c.l.b16 %v8188
        %v9044 = vunpack.c.h.b16 %v8188
        %v9045 = vunpack.c.l.b16 %v8189
        %v9046 = vunpack.c.l.b16 %v8190
        %v9047 = vunpack.c.h.b16 %v8190
        %v9048 = vunpack.c.l.b16 %v8191
        %v9049 = vunpack.c.l.b16 %v8192
        %v9050 = vunpack.c.h.b16 %v8192
        %v9051 = vunpack.c.l.b16 %v8193
        %v9052 = vunpack.c.l.b16 %v8194
        %v9053 = vunpack.c.h.b16 %v8194
        %v9054 = vunpack.c.l.b16 %v8195
        %v9055 = vunpack.c.l.b16 %v8196
        %v9056 = vunpack.c.h.b16 %v8196
        %v9057 = vunpack.c.l.b16 %v8197
        %v9058 = vunpack.c.l.b16 %v8198
        %v9059 = vunpack.c.h.b16 %v8198
        %v9060 = vunpack.c.l.b16 %v8199
        %v9061 = vunpack.c.l.b16 %v8200
        %v9062 = vunpack.c.h.b16 %v8200
        %v9063 = vunpack.c.l.b16 %v8201
        %v9064 = vunpack.c.l.b16 %v8202
        %v9065 = vunpack.c.h.b16 %v8202
        %v9066 = vunpack.c.l.b16 %v8203
        %v9067 = vunpack.c.l.b16 %v8204
        %v9068 = vunpack.c.h.b16 %v8204
        %v9069 = vunpack.c.l.b16 %v8205
        %v9070 = vunpack.c.l.b16 %v8206
        %v9071 = vunpack.c.h.b16 %v8206
        %v9072 = vunpack.c.l.b16 %v8207
        %v9073 = vunpack.c.l.b16 %v8208
        %v9074 = vunpack.c.h.b16 %v8208
        %v9075 = vunpack.c.l.b16 %v8209
        %v9076 = vunpack.c.l.b16 %v8210
        %v9077 = vunpack.c.h.b16 %v8210
        %v9078 = vunpack.c.l.b16 %v8211
        %v9079 = vunpack.c.l.b16 %v8212
        %v9080 = vunpack.c.h.b16 %v8212
        %v9081 = vunpack.c.l.b16 %v8213
        %v9082 = vunpack.c.l.b16 %v8214
        %v9083 = vunpack.c.h.b16 %v8214
        %v9084 = vunpack.c.l.b16 %v8215
        %v9085 = vunpack.c.l.b16 %v8216
        %v9086 = vunpack.c.h.b16 %v8216
        %v9087 = vunpack.c.l.b16 %v8217
        %v9088 = vunpack.c.l.b16 %v8218
        %v9089 = vunpack.c.h.b16 %v8218
        %v9090 = vunpack.c.l.b16 %v8219
        %v9091 = vunpack.c.l.b16 %v8220
        %v9092 = vunpack.c.h.b16 %v8220
        %v9093 = vunpack.c.l.b16 %v8221
        %v9094 = vunpack.c.l.b16 %v8222
        %v9095 = vunpack.c.h.b16 %v8222
        %v9096 = vunpack.c.l.b16 %v8223
        %v9097 = vunpack.c.l.b16 %v8224
        %v9098 = vunpack.c.h.b16 %v8224
        %v9099 = vunpack.c.l.b16 %v8225
        %v9100 = vunpack.c.l.b16 %v8226
        %v9101 = vunpack.c.h.b16 %v8226
        %v9102 = vunpack.c.l.b16 %v8227
        %v9103 = vunpack.c.l.b16 %v8228
        %v9104 = vunpack.c.h.b16 %v8228
        %v9105 = vunpack.c.l.b16 %v8229
        %v9106 = vunpack.c.l.b16 %v8230
        %v9107 = vunpack.c.h.b16 %v8230
        %v9108 = vunpack.c.l.b16 %v8231
        %v9109 = vunpack.c.l.b16 %v8232
        %v9110 = vunpack.c.h.b16 %v8232
        %v9111 = vunpack.c.l.b16 %v8233
        %v9112 = vunpack.c.l.b16 %v8234
        %v9113 = vunpack.c.h.b16 %v8234
        %v9114 = vunpack.c.l.b16 %v8235
        %v9115 = vunpack.c.l.b16 %v8236
        %v9116 = vunpack.c.h.b16 %v8236
        %v9117 = vunpack.c.l.b16 %v8237
        %v9118 = vunpack.c.l.b16 %v8238
        %v9119 = vunpack.c.h.b16 %v8238
        %v9120 = vunpack.c.l.b16 %v8239
        %v9121 = vunpack.c.l.b16 %v8240
        %v9122 = vunpack.c.h.b16 %v8240
        %v9123 = vunpack.c.l.b16 %v8241
        %v9124 = vunpack.c.l.b16 %v8242
        %v9125 = vunpack.c.h.b16 %v8242
        %v9126 = vunpack.c.l.b16 %v8243
        %v9127 = vunpack.c.l.b16 %v8244
        %v9128 = vunpack.c.h.b16 %v8244
        %v9129 = vunpack.c.l.b16 %v8245
        %v9130 = vunpack.c.l.b16 %v8246
        %v9131 = vunpack.c.h.b16 %v8246
        %v9132 = vunpack.c.l.b16 %v8247
        %v9133 = vunpack.c.l.b16 %v8248
        %v9134 = vunpack.c.h.b16 %v8248
        %v9135 = vunpack.c.l.b16 %v8249
        %v9136 = vunpack.c.l.b16 %v8250
        %v9137 = vunpack.c.h.b16 %v8250
        %v9138 = vunpack.c.l.b16 %v8251
        %v9139 = vunpack.c.l.b16 %v8252
        %v9140 = vunpack.c.h.b16 %v8252
        %v9141 = vunpack.c.l.b16 %v8253
        %v9142 = vunpack.c.l.b16 %v8254
        %v9143 = vunpack.c.h.b16 %v8254
        %v9144 = vunpack.c.l.b16 %v8255
        %v9145 = vunpack.c.l.b16 %v8256
        %v9146 = vunpack.c.h.b16 %v8256
        %v9147 = vunpack.c.l.b16 %v8257
        %v9148 = vunpack.c.l.b16 %v8258
        %v9149 = vunpack.c.h.b16 %v8258
        %v9150 = vunpack.c.l.b16 %v8259
        %v9151 = vunpack.c.l.b16 %v8260
        %v9152 = vunpack.c.h.b16 %v8260
        %v9153 = vunpack.c.l.b16 %v8261
        %v9154 = vunpack.c.l.b16 %v8262
        %v9155 = vunpack.c.h.b16 %v8262
        %v9156 = vunpack.c.l.b16 %v8263
        %v9157 = vunpack.c.l.b16 %v8264
        %v9158 = vunpack.c.h.b16 %v8264
        %v9159 = vunpack.c.l.b16 %v8265
        %v9160 = vunpack.c.l.b16 %v8266
        %v9161 = vunpack.c.h.b16 %v8266
        %v9162 = vunpack.c.l.b16 %v8267
        %v9163 = vunpack.c.l.b16 %v8268
        %v9164 = vunpack.c.h.b16 %v8268
        %v9165 = vunpack.c.l.b16 %v8269
        %v9166 = vunpack.c.l.b16 %v8270
        %v9167 = vunpack.c.h.b16 %v8270
        %v9168 = vunpack.c.l.b16 %v8271
        %v9169 = vunpack.c.l.b16 %v8272
        %v9170 = vunpack.c.h.b16 %v8272
        %v9171 = vunpack.c.l.b16 %v8273
        %v9172 = vunpack.c.l.b16 %v8274
        %v9173 = vunpack.c.h.b16 %v8274
        %v9174 = vunpack.c.l.b16 %v8275
        %v9175 = vunpack.c.l.b16 %v8276
        %v9176 = vunpack.c.h.b16 %v8276
        %v9177 = vunpack.c.l.b16 %v8277
        %v9178 = vunpack.c.l.b16 %v8278
        %v9179 = vunpack.c.h.b16 %v8278
        %v9180 = vunpack.c.l.b16 %v8279
        %v9181 = vunpack.c.l.b16 %v8280
        %v9182 = vunpack.c.h.b16 %v8280
        %v9183 = vunpack.c.l.b16 %v8281
        %v9184 = vunpack.c.l.b16 %v8282
        %v9185 = vunpack.c.h.b16 %v8282
        %v9186 = vunpack.c.l.b16 %v8283
        %v9187 = vunpack.c.l.b16 %v8284
        %v9188 = vunpack.c.h.b16 %v8284
        %v9189 = vunpack.c.l.b16 %v8285
        %v9190 = vunpack.c.l.b16 %v8286
        %v9191 = vunpack.c.h.b16 %v8286
        %v9192 = vunpack.c.l.b16 %v8287
        %v9193 = vunpack.c.l.b16 %v8288
        %v9194 = vunpack.c.h.b16 %v8288
        %v9195 = vunpack.c.l.b16 %v8289
        %v9196 = vunpack.c.l.b16 %v8290
        %v9197 = vunpack.c.h.b16 %v8290
        %v9198 = vunpack.c.l.b16 %v8291
        %v9199 = vunpack.c.l.b16 %v8292
        %v9200 = vunpack.c.h.b16 %v8292
        %v9201 = vunpack.c.l.b16 %v8293
        %v9202 = vunpack.c.l.b16 %v8294
        %v9203 = vunpack.c.h.b16 %v8294
        %v9204 = vunpack.c.l.b16 %v8295
        %v9205 = vunpack.c.l.b16 %v8296
        %v9206 = vunpack.c.h.b16 %v8296
        %v9207 = vunpack.c.l.b16 %v8297
        %v9208 = vunpack.c.l.b16 %v8298
        %v9209 = vunpack.c.h.b16 %v8298
        %v9210 = vunpack.c.l.b16 %v8299
        %v9211 = vunpack.c.l.b16 %v8300
        %v9212 = vunpack.c.h.b16 %v8300
        %v9213 = vunpack.c.l.b16 %v8301
        %v9214 = vunpack.c.l.b16 %v8302
        %v9215 = vunpack.c.h.b16 %v8302
        %v9216 = vunpack.c.l.b16 %v8303
        %v9217 = vunpack.c.l.b16 %v8304
        %v9218 = vunpack.c.h.b16 %v8304
        %v9219 = vunpack.c.l.b16 %v8305
        %v9220 = vunpack.c.l.b16 %v8306
        %v9221 = vunpack.c.h.b16 %v8306
        %v9222 = vunpack.c.l.b16 %v8307
        %v9223 = vunpack.c.l.b16 %v8308
        %v9224 = vunpack.c.h.b16 %v8308
        %v9225 = vunpack.c.l.b16 %v8309
        %v9226 = vunpack.c.l.b16 %v8310
        %v9227 = vunpack.c.h.b16 %v8310
        %v9228 = vunpack.c.l.b16 %v8311
        %v9229 = vunpack.c.l.b16 %v8312
        %v9230 = vunpack.c.h.b16 %v8312
        %v9231 = vunpack.c.l.b16 %v8313
        %v9232 = vunpack.c.l.b16 %v8314
        %v9233 = vunpack.c.h.b16 %v8314
        %v9234 = vunpack.c.l.b16 %v8315
        %v9235 = vunpack.c.l.b16 %v8316
        %v9236 = vunpack.c.h.b16 %v8316
        %v9237 = vunpack.c.l.b16 %v8317
        %v9238 = vunpack.c.l.b16 %v8318
        %v9239 = vunpack.c.h.b16 %v8318
        %v9240 = vunpack.c.l.b16 %v8319
        %v9241 = vunpack.c.l.b16 %v8320
        %v9242 = vunpack.c.h.b16 %v8320
        %v9243 = vunpack.c.l.b16 %v8321
        %v9244 = vunpack.c.l.b16 %v8322
        %v9245 = vunpack.c.h.b16 %v8322
        %v9246 = vunpack.c.l.b16 %v8323
        %v9247 = vunpack.c.l.b16 %v8324
        %v9248 = vunpack.c.h.b16 %v8324
        %v9249 = vunpack.c.l.b16 %v8325
        %v9250 = vunpack.c.l.b16 %v8326
        %v9251 = vunpack.c.h.b16 %v8326
        %v9252 = vunpack.c.l.b16 %v8327
        %v9253 = vunpack.c.l.b16 %v8328
        %v9254 = vunpack.c.h.b16 %v8328
        %v9255 = vunpack.c.l.b16 %v8329
        %v9256 = vunpack.c.l.b16 %v8330
        %v9257 = vunpack.c.h.b16 %v8330
        %v9258 = vunpack.c.l.b16 %v8331
        %v9259 = vunpack.c.l.b16 %v8332
        %v9260 = vunpack.c.h.b16 %v8332
        %v9261 = vunpack.c.l.b16 %v8333
        %v9262 = vunpack.c.l.b16 %v8334
        %v9263 = vunpack.c.h.b16 %v8334
        %v9264 = vunpack.c.l.b16 %v8335
        %v9265 = vunpack.c.l.b16 %v8336
        %v9266 = vunpack.c.h.b16 %v8336
        %v9267 = vunpack.c.l.b16 %v8337
        %v9268 = vunpack.c.l.b16 %v8338
        %v9269 = vunpack.c.h.b16 %v8338
        %v9270 = vunpack.c.l.b16 %v8339
        %v9271 = vunpack.c.l.b16 %v8340
        %v9272 = vunpack.c.h.b16 %v8340
        %v9273 = vunpack.c.l.b16 %v8341
        %v9274 = vunpack.c.l.b16 %v8342
        %v9275 = vunpack.c.h.b16 %v8342
        %v9276 = vunpack.c.l.b16 %v8343
        %v9277 = vunpack.c.l.b16 %v8344
        %v9278 = vunpack.c.h.b16 %v8344
        %v9279 = vunpack.c.l.b16 %v8345
        %v9280 = vunpack.c.l.b16 %v8346
        %v9281 = vunpack.c.h.b16 %v8346
        %v9282 = vunpack.c.l.b16 %v8347
        %v9283 = vunpack.c.l.b16 %v8348
        %v9284 = vunpack.c.h.b16 %v8348
        %v9285 = vunpack.c.l.b16 %v8349
        %v9286 = vunpack.c.l.b16 %v8350
        %v9287 = vunpack.c.h.b16 %v8350
        %v9288 = vunpack.c.l.b16 %v8351
        %v9289 = vunpack.c.l.b16 %v8352
        %v9290 = vunpack.c.h.b16 %v8352
        %v9291 = vunpack.c.l.b16 %v8353
        %v9292 = vunpack.c.l.b16 %v8354
        %v9293 = vunpack.c.h.b16 %v8354
        %v9294 = vunpack.c.l.b16 %v8355
        %v9295 = vunpack.c.l.b16 %v8356
        %v9296 = vunpack.c.h.b16 %v8356
        %v9297 = vunpack.c.l.b16 %v8357
        %v9298 = vunpack.c.l.b16 %v8358
        %v9299 = vunpack.c.h.b16 %v8358
        %v9300 = vunpack.c.l.b16 %v8359
        %v9301 = vunpack.c.l.b16 %v8360
        %v9302 = vunpack.c.h.b16 %v8360
        %v9303 = vunpack.c.l.b16 %v8361
        %v9304 = vunpack.c.l.b16 %v8362
        %v9305 = vunpack.c.h.b16 %v8362
        %v9306 = vunpack.c.l.b16 %v8363
        %v9307 = vunpack.c.l.b16 %v8364
        %v9308 = vunpack.c.h.b16 %v8364
        %v9309 = vunpack.c.l.b16 %v8365
        %v9310 = vunpack.c.l.b16 %v8366
        %v9311 = vunpack.c.h.b16 %v8366
        %v9312 = vunpack.c.l.b16 %v8367
        %v9313 = vunpack.c.l.b16 %v8368
        %v9314 = vunpack.c.h.b16 %v8368
        %v9315 = vunpack.c.l.b16 %v8369
        %v9316 = vunpack.c.l.b16 %v8370
        %v9317 = vunpack.c.h.b16 %v8370
        %v9318 = vunpack.c.l.b16 %v8371
        %v9319 = vunpack.c.l.b16 %v8372
        %v9320 = vunpack.c.h.b16 %v8372
        %v9321 = vunpack.c.l.b16 %v8373
        %v9322 = vunpack.c.l.b16 %v8374
        %v9323 = vunpack.c.h.b16 %v8374
        %v9324 = vunpack.c.l.b16 %v8375
        %v9325 = vunpack.c.l.b16 %v8376
        %v9326 = vunpack.c.h.b16 %v8376
        %v9327 = vunpack.c.l.b16 %v8377
        %v9328 = vunpack.c.l.b16 %v8378
        %v9329 = vunpack.c.h.b16 %v8378
        %v9330 = vunpack.c.l.b16 %v8379
        %v9331 = vunpack.c.l.b16 %v8380
        %v9332 = vunpack.c.h.b16 %v8380
        %v9333 = vunpack.c.l.b16 %v8381
        %v9334 = vunpack.c.l.b16 %v8382
        %v9335 = vunpack.c.h.b16 %v8382
        %v9336 = vunpack.c.l.b16 %v8383
        %v9337 = vunpack.c.l.b16 %v8384
        %v9338 = vunpack.c.h.b16 %v8384
        %v9339 = vunpack.c.l.b16 %v8385
        %v9340 = vunpack.c.l.b16 %v8386
        %v9341 = vunpack.c.h.b16 %v8386
        %v9342 = vunpack.c.l.b16 %v8387
        %v9343 = vunpack.c.l.b16 %v8388
        %v9344 = vunpack.c.h.b16 %v8388
        %v9345 = vunpack.c.l.b16 %v8389
        %v9346 = vunpack.c.l.b16 %v8390
        %v9347 = vunpack.c.h.b16 %v8390
        %v9348 = vunpack.c.l.b16 %v8391
        %v9349 = vunpack.c.l.b16 %v8392
        %v9350 = vunpack.c.h.b16 %v8392
        %v9351 = vunpack.c.l.b16 %v8393
        %v9352 = vunpack.c.l.b16 %v8394
        %v9353 = vunpack.c.h.b16 %v8394
        %v9354 = vunpack.c.l.b16 %v8395
        %v9355 = vunpack.c.l.b16 %v8396
        %v9356 = vunpack.c.h.b16 %v8396
        %v9357 = vunpack.c.l.b16 %v8397
        %v9358 = vunpack.c.l.b16 %v8398
        %v9359 = vunpack.c.h.b16 %v8398
        %v9360 = vunpack.c.l.b16 %v8399
        %v9361 = vunpack.c.l.b16 %v8400
        %v9362 = vunpack.c.h.b16 %v8400
        %v9363 = vunpack.c.l.b16 %v8401
        %v9364 = vunpack.c.l.b16 %v8402
        %v9365 = vunpack.c.h.b16 %v8402
        %v9366 = vunpack.c.l.b16 %v8403
        %v9367 = vunpack.c.l.b16 %v8404
        %v9368 = vunpack.c.h.b16 %v8404
        %v9369 = vunpack.c.l.b16 %v8405
        %v9370 = vunpack.c.l.b16 %v8406
        %v9371 = vunpack.c.h.b16 %v8406
        %v9372 = vunpack.c.l.b16 %v8407
        %v9373 = vunpack.c.l.b16 %v8408
        %v9374 = vunpack.c.h.b16 %v8408
        %v9375 = vunpack.c.l.b16 %v8409
        %v9376 = vunpack.c.l.b16 %v8410
        %v9377 = vunpack.c.h.b16 %v8410
        %v9378 = vunpack.c.l.b16 %v8411
        %v9379 = vunpack.c.l.b16 %v8412
        %v9380 = vunpack.c.h.b16 %v8412
        %v9381 = vunpack.c.l.b16 %v8413
        %v9382 = vunpack.c.l.b16 %v8414
        %v9383 = vunpack.c.h.b16 %v8414
        %v9384 = vunpack.c.l.b16 %v8415
        %v9385 = vunpack.c.l.b16 %v8416
        %v9386 = vunpack.c.h.b16 %v8416
        %v9387 = vunpack.c.l.b16 %v8417
        %v9388 = vunpack.c.l.b16 %v8418
        %v9389 = vunpack.c.h.b16 %v8418
        %v9390 = vunpack.c.l.b16 %v8419
        %v9391 = vunpack.c.l.b16 %v8420
        %v9392 = vunpack.c.h.b16 %v8420
        %v9393 = vunpack.c.l.b16 %v8421
        %v9394 = vunpack.c.l.b16 %v8422
        %v9395 = vunpack.c.h.b16 %v8422
        %v9396 = vunpack.c.l.b16 %v8423
        %v9397 = vunpack.c.l.b16 %v8424
        %v9398 = vunpack.c.h.b16 %v8424
        %v9399 = vunpack.c.l.b16 %v8425
        %v9400 = vunpack.c.l.b16 %v8426
        %v9401 = vunpack.c.h.b16 %v8426
        %v9402 = vunpack.c.l.b16 %v8427
        %v9403 = vunpack.c.l.b16 %v8428
        %v9404 = vunpack.c.h.b16 %v8428
        %v9405 = vunpack.c.l.b16 %v8429
        %v9406 = vunpack.c.l.b16 %v8430
        %v9407 = vunpack.c.h.b16 %v8430
        %v9408 = vunpack.c.l.b16 %v8431
        %v9409 = vpack.c.b16 %v8836, %v8833
        %v9410 = vpack.c.b16 %v8837, %v8834
        %v9411 = vpack.c.b16 %v8838, %v8835
        %v9412 = vpack.c.b16 %v8842, %v8839
        %v9413 = vpack.c.b16 %v8843, %v8840
        %v9414 = vpack.c.b16 %v8844, %v8841
        %v9415 = vpack.c.b16 %v8848, %v8845
        %v9416 = vpack.c.b16 %v8849, %v8846
        %v9417 = vpack.c.b16 %v8850, %v8847
        %v9418 = vpack.c.b16 %v8854, %v8851
        %v9419 = vpack.c.b16 %v8855, %v8852
        %v9420 = vpack.c.b16 %v8856, %v8853
        %v9421 = vpack.c.b16 %v8860, %v8857
        %v9422 = vpack.c.b16 %v8861, %v8858
        %v9423 = vpack.c.b16 %v8862, %v8859
        %v9424 = vpack.c.b16 %v8866, %v8863
        %v9425 = vpack.c.b16 %v8867, %v8864
        %v9426 = vpack.c.b16 %v8868, %v8865
        %v9427 = vpack.c.b16 %v8872, %v8869
        %v9428 = vpack.c.b16 %v8873, %v8870
        %v9429 = vpack.c.b16 %v8874, %v8871
        %v9430 = vpack.c.b16 %v8878, %v8875
        %v9431 = vpack.c.b16 %v8879, %v8876
        %v9432 = vpack.c.b16 %v8880, %v8877
        %v9433 = vpack.c.b16 %v8884, %v8881
        %v9434 = vpack.c.b16 %v8885, %v8882
        %v9435 = vpack.c.b16 %v8886, %v8883
        %v9436 = vpack.c.b16 %v8890, %v8887
        %v9437 = vpack.c.b16 %v8891, %v8888
        %v9438 = vpack.c.b16 %v8892, %v8889
        %v9439 = vpack.c.b16 %v8896, %v8893
        %v9440 = vpack.c.b16 %v8897, %v8894
        %v9441 = vpack.c.b16 %v8898, %v8895
        %v9442 = vpack.c.b16 %v8902, %v8899
        %v9443 = vpack.c.b16 %v8903, %v8900
        %v9444 = vpack.c.b16 %v8904, %v8901
        %v9445 = vpack.c.b16 %v8908, %v8905
        %v9446 = vpack.c.b16 %v8909, %v8906
        %v9447 = vpack.c.b16 %v8910, %v8907
        %v9448 = vpack.c.b16 %v8914, %v8911
        %v9449 = vpack.c.b16 %v8915, %v8912
        %v9450 = vpack.c.b16 %v8916, %v8913
        %v9451 = vpack.c.b16 %v8920, %v8917
        %v9452 = vpack.c.b16 %v8921, %v8918
        %v9453 = vpack.c.b16 %v8922, %v8919
        %v9454 = vpack.c.b16 %v8926, %v8923
        %v9455 = vpack.c.b16 %v8927, %v8924
        %v9456 = vpack.c.b16 %v8928, %v8925
        %v9457 = vpack.c.b16 %v8932, %v8929
        %v9458 = vpack.c.b16 %v8933, %v8930
        %v9459 = vpack.c.b16 %v8934, %v8931
        %v9460 = vpack.c.b16 %v8938, %v8935
        %v9461 = vpack.c.b16 %v8939, %v8936
        %v9462 = vpack.c.b16 %v8940, %v8937
        %v9463 = vpack.c.b16 %v8944, %v8941
        %v9464 = vpack.c.b16 %v8945, %v8942
        %v9465 = vpack.c.b16 %v8946, %v8943
        %v9466 = vpack.c.b16 %v8950, %v8947
        %v9467 = vpack.c.b16 %v8951, %v8948
        %v9468 = vpack.c.b16 %v8952, %v8949
        %v9469 = vpack.c.b16 %v8956, %v8953
        %v9470 = vpack.c.b16 %v8957, %v8954
        %v9471 = vpack.c.b16 %v8958, %v8955
        %v9472 = vpack.c.b16 %v8962, %v8959
        %v9473 = vpack.c.b16 %v8963, %v8960
        %v9474 = vpack.c.b16 %v8964, %v8961
        %v9475 = vpack.c.b16 %v8968, %v8965
        %v9476 = vpack.c.b16 %v8969, %v8966
        %v9477 = vpack.c.b16 %v8970, %v8967
        %v9478 = vpack.c.b16 %v8974, %v8971
        %v9479 = vpack.c.b16 %v8975, %v8972
        %v9480 = vpack.c.b16 %v8976, %v8973
        %v9481 = vpack.c.b16 %v8980, %v8977
        %v9482 = vpack.c.b16 %v8981, %v8978
        %v9483 = vpack.c.b16 %v8982, %v8979
        %v9484 = vpack.c.b16 %v8986, %v8983
        %v9485 = vpack.c.b16 %v8987, %v8984
        %v9486 = vpack.c.b16 %v8988, %v8985
        %v9487 = vpack.c.b16 %v8992, %v8989
        %v9488 = vpack.c.b16 %v8993, %v8990
        %v9489 = vpack.c.b16 %v8994, %v8991
        %v9490 = vpack.c.b16 %v8998, %v8995
        %v9491 = vpack.c.b16 %v8999, %v8996
        %v9492 = vpack.c.b16 %v9000, %v8997
        %v9493 = vpack.c.b16 %v9004, %v9001
        %v9494 = vpack.c.b16 %v9005, %v9002
        %v9495 = vpack.c.b16 %v9006, %v9003
        %v9496 = vpack.c.b16 %v9010, %v9007
        %v9497 = vpack.c.b16 %v9011, %v9008
        %v9498 = vpack.c.b16 %v9012, %v9009
        %v9499 = vpack.c.b16 %v9016, %v9013
        %v9500 = vpack.c.b16 %v9017, %v9014
        %v9501 = vpack.c.b16 %v9018, %v9015
        %v9502 = vpack.c.b16 %v9022, %v9019
        %v9503 = vpack.c.b16 %v9023, %v9020
        %v9504 = vpack.c.b16 %v9024, %v9021
        %v9505 = vpack.c.b16 %v9028, %v9025
        %v9506 = vpack.c.b16 %v9029, %v9026
        %v9507 = vpack.c.b16 %v9030, %v9027
        %v9508 = vpack.c.b16 %v9034, %v9031
        %v9509 = vpack.c.b16 %v9035, %v9032
        %v9510 = vpack.c.b16 %v9036, %v9033
        %v9511 = vpack.c.b16 %v9040, %v9037
        %v9512 = vpack.c.b16 %v9041, %v9038
        %v9513 = vpack.c.b16 %v9042, %v9039
        %v9514 = vpack.c.b16 %v9046, %v9043
        %v9515 = vpack.c.b16 %v9047, %v9044
        %v9516 = vpack.c.b16 %v9048, %v9045
        %v9517 = vpack.c.b16 %v9052, %v9049
        %v9518 = vpack.c.b16 %v9053, %v9050
        %v9519 = vpack.c.b16 %v9054, %v9051
        %v9520 = vpack.c.b16 %v9058, %v9055
        %v9521 = vpack.c.b16 %v9059, %v9056
        %v9522 = vpack.c.b16 %v9060, %v9057
        %v9523 = vpack.c.b16 %v9064, %v9061
        %v9524 = vpack.c.b16 %v9065, %v9062
        %v9525 = vpack.c.b16 %v9066, %v9063
        %v9526 = vpack.c.b16 %v9070, %v9067
        %v9527 = vpack.c.b16 %v9071, %v9068
        %v9528 = vpack.c.b16 %v9072, %v9069
        %v9529 = vpack.c.b16 %v9076, %v9073
        %v9530 = vpack.c.b16 %v9077, %v9074
        %v9531 = vpack.c.b16 %v9078, %v9075
        %v9532 = vpack.c.b16 %v9082, %v9079
        %v9533 = vpack.c.b16 %v9083, %v9080
        %v9534 = vpack.c.b16 %v9084, %v9081
        %v9535 = vpack.c.b16 %v9088, %v9085
        %v9536 = vpack.c.b16 %v9089, %v9086
        %v9537 = vpack.c.b16 %v9090, %v9087
        %v9538 = vpack.c.b16 %v9094, %v9091
        %v9539 = vpack.c.b16 %v9095, %v9092
        %v9540 = vpack.c.b16 %v9096, %v9093
        %v9541 = vpack.c.b16 %v9100, %v9097
        %v9542 = vpack.c.b16 %v9101, %v9098
        %v9543 = vpack.c.b16 %v9102, %v9099
        %v9544 = vpack.c.b16 %v9106, %v9103
        %v9545 = vpack.c.b16 %v9107, %v9104
        %v9546 = vpack.c.b16 %v9108, %v9105
        %v9547 = vpack.c.b16 %v9112, %v9109
        %v9548 = vpack.c.b16 %v9113, %v9110
        %v9549 = vpack.c.b16 %v9114, %v9111
        %v9550 = vpack.c.b16 %v9118, %v9115
        %v9551 = vpack.c.b16 %v9119, %v9116
        %v9552 = vpack.c.b16 %v9120, %v9117
        %v9553 = vpack.c.b16 %v9124, %v9121
        %v9554 = vpack.c.b16 %v9125, %v9122
        %v9555 = vpack.c.b16 %v9126, %v9123
        %v9556 = vpack.c.b16 %v9130, %v9127
        %v9557 = vpack.c.b16 %v9131, %v9128
        %v9558 = vpack.c.b16 %v9132, %v9129
        %v9559 = vpack.c.b16 %v9136, %v9133
        %v9560 = vpack.c.b16 %v9137, %v9134
        %v9561 = vpack.c.b16 %v9138, %v9135
        %v9562 = vpack.c.b16 %v9142, %v9139
        %v9563 = vpack.c.b16 %v9143, %v9140
        %v9564 = vpack.c.b16 %v9144, %v9141
        %v9565 = vpack.c.b16 %v9148, %v9145
        %v9566 = vpack.c.b16 %v9149, %v9146
        %v9567 = vpack.c.b16 %v9150, %v9147
        %v9568 = vpack.c.b16 %v9154, %v9151
        %v9569 = vpack.c.b16 %v9155, %v9152
        %v9570 = vpack.c.b16 %v9156, %v9153
        %v9571 = vpack.c.b16 %v9160, %v9157
        %v9572 = vpack.c.b16 %v9161, %v9158
        %v9573 = vpack.c.b16 %v9162, %v9159
        %v9574 = vpack.c.b16 %v9166, %v9163
        %v9575 = vpack.c.b16 %v9167, %v9164
        %v9576 = vpack.c.b16 %v9168, %v9165
        %v9577 = vpack.c.b16 %v9172, %v9169
        %v9578 = vpack.c.b16 %v9173, %v9170
        %v9579 = vpack.c.b16 %v9174, %v9171
        %v9580 = vpack.c.b16 %v9178, %v9175
        %v9581 = vpack.c.b16 %v9179, %v9176
        %v9582 = vpack.c.b16 %v9180, %v9177
        %v9583 = vpack.c.b16 %v9184, %v9181
        %v9584 = vpack.c.b16 %v9185, %v9182
        %v9585 = vpack.c.b16 %v9186, %v9183
        %v9586 = vpack.c.b16 %v9190, %v9187
        %v9587 = vpack.c.b16 %v9191, %v9188
        %v9588 = vpack.c.b16 %v9192, %v9189
        %v9589 = vpack.c.b16 %v9196, %v9193
        %v9590 = vpack.c.b16 %v9197, %v9194
        %v9591 = vpack.c.b16 %v9198, %v9195
        %v9592 = vpack.c.b16 %v9202, %v9199
        %v9593 = vpack.c.b16 %v9203, %v9200
        %v9594 = vpack.c.b16 %v9204, %v9201
        %v9595 = vpack.c.b16 %v9208, %v9205
        %v9596 = vpack.c.b16 %v9209, %v9206
        %v9597 = vpack.c.b16 %v9210, %v9207
        %v9598 = vpack.c.b16 %v9214, %v9211
        %v9599 = vpack.c.b16 %v9215, %v9212
        %v9600 = vpack.c.b16 %v9216, %v9213
        %v9601 = vpack.c.b16 %v9220, %v9217
        %v9602 = vpack.c.b16 %v9221, %v9218
        %v9603 = vpack.c.b16 %v9222, %v9219
        %v9604 = vpack.c.b16 %v9226, %v9223
        %v9605 = vpack.c.b16 %v9227, %v9224
        %v9606 = vpack.c.b16 %v9228, %v9225
        %v9607 = vpack.c.b16 %v9232, %v9229
        %v9608 = vpack.c.b16 %v9233, %v9230
        %v9609 = vpack.c.b16 %v9234, %v9231
        %v9610 = vpack.c.b16 %v9238, %v9235
        %v9611 = vpack.c.b16 %v9239, %v9236
        %v9612 = vpack.c.b16 %v9240, %v9237
        %v9613 = vpack.c.b16 %v9244, %v9241
        %v9614 = vpack.c.b16 %v9245, %v9242
        %v9615 = vpack.c.b16 %v9246, %v9243
        %v9616 = vpack.c.b16 %v9250, %v9247
        %v9617 = vpack.c.b16 %v9251, %v9248
        %v9618 = vpack.c.b16 %v9252, %v9249
        %v9619 = vpack.c.b16 %v9256, %v9253
        %v9620 = vpack.c.b16 %v9257, %v9254
        %v9621 = vpack.c.b16 %v9258, %v9255
        %v9622 = vpack.c.b16 %v9262, %v9259
        %v9623 = vpack.c.b16 %v9263, %v9260
        %v9624 = vpack.c.b16 %v9264, %v9261
        %v9625 = vpack.c.b16 %v9268, %v9265
        %v9626 = vpack.c.b16 %v9269, %v9266
        %v9627 = vpack.c.b16 %v9270, %v9267
        %v9628 = vpack.c.b16 %v9274, %v9271
        %v9629 = vpack.c.b16 %v9275, %v9272
        %v9630 = vpack.c.b16 %v9276, %v9273
        %v9631 = vpack.c.b16 %v9280, %v9277
        %v9632 = vpack.c.b16 %v9281, %v9278
        %v9633 = vpack.c.b16 %v9282, %v9279
        %v9634 = vpack.c.b16 %v9286, %v9283
        %v9635 = vpack.c.b16 %v9287, %v9284
        %v9636 = vpack.c.b16 %v9288, %v9285
        %v9637 = vpack.c.b16 %v9292, %v9289
        %v9638 = vpack.c.b16 %v9293, %v9290
        %v9639 = vpack.c.b16 %v9294, %v9291
        %v9640 = vpack.c.b16 %v9298, %v9295
        %v9641 = vpack.c.b16 %v9299, %v9296
        %v9642 = vpack.c.b16 %v9300, %v9297
        %v9643 = vpack.c.b16 %v9304, %v9301
        %v9644 = vpack.c.b16 %v9305, %v9302
        %v9645 = vpack.c.b16 %v9306, %v9303
        %v9646 = vpack.c.b16 %v9310, %v9307
        %v9647 = vpack.c.b16 %v9311, %v9308
        %v9648 = vpack.c.b16 %v9312, %v9309
        %v9649 = vpack.c.b16 %v9316, %v9313
        %v9650 = vpack.c.b16 %v9317, %v9314
        %v9651 = vpack.c.b16 %v9318, %v9315
        %v9652 = vpack.c.b16 %v9322, %v9319
        %v9653 = vpack.c.b16 %v9323, %v9320
        %v9654 = vpack.c.b16 %v9324, %v9321
        %v9655 = vpack.c.b16 %v9328, %v9325
        %v9656 = vpack.c.b16 %v9329, %v9326
        %v9657 = vpack.c.b16 %v9330, %v9327
        %v9658 = vpack.c.b16 %v9334, %v9331
        %v9659 = vpack.c.b16 %v9335, %v9332
        %v9660 = vpack.c.b16 %v9336, %v9333
        %v9661 = vpack.c.b16 %v9340, %v9337
        %v9662 = vpack.c.b16 %v9341, %v9338
        %v9663 = vpack.c.b16 %v9342, %v9339
        %v9664 = vpack.c.b16 %v9346, %v9343
        %v9665 = vpack.c.b16 %v9347, %v9344
        %v9666 = vpack.c.b16 %v9348, %v9345
        %v9667 = vpack.c.b16 %v9352, %v9349
        %v9668 = vpack.c.b16 %v9353, %v9350
        %v9669 = vpack.c.b16 %v9354, %v9351
        %v9670 = vpack.c.b16 %v9358, %v9355
        %v9671 = vpack.c.b16 %v9359, %v9356
        %v9672 = vpack.c.b16 %v9360, %v9357
        %v9673 = vpack.c.b16 %v9364, %v9361
        %v9674 = vpack.c.b16 %v9365, %v9362
        %v9675 = vpack.c.b16 %v9366, %v9363
        %v9676 = vpack.c.b16 %v9370, %v9367
        %v9677 = vpack.c.b16 %v9371, %v9368
        %v9678 = vpack.c.b16 %v9372, %v9369
        %v9679 = vpack.c.b16 %v9376, %v9373
        %v9680 = vpack.c.b16 %v9377, %v9374
        %v9681 = vpack.c.b16 %v9378, %v9375
        %v9682 = vpack.c.b16 %v9382, %v9379
        %v9683 = vpack.c.b16 %v9383, %v9380
        %v9684 = vpack.c.b16 %v9384, %v9381
        %v9685 = vpack.c.b16 %v9388, %v9385
        %v9686 = vpack.c.b16 %v9389, %v9386
        %v9687 = vpack.c.b16 %v9390, %v9387
        %v9688 = vpack.c.b16 %v9394, %v9391
        %v9689 = vpack.c.b16 %v9395, %v9392
        %v9690 = vpack.c.b16 %v9396, %v9393
        %v9691 = vpack.c.b16 %v9400, %v9397
        %v9692 = vpack.c.b16 %v9401, %v9398
        %v9693 = vpack.c.b16 %v9402, %v9399
        %v9694 = vpack.c.b16 %v9406, %v9403
        %v9695 = vpack.c.b16 %v9407, %v9404
        %v9696 = vpack.c.b16 %v9408, %v9405
        %9985 = vmatprep.subr.bf16.mxu0 %v9431
        %9986 = vmatpush1.bf16.msra.mxu0 %v9430
        %9987 = vmatprep.subr.bf16.mxu0 %v9428
        %9988 = vmatpush1.bf16.msra.mxu0 %v9427
        %9989 = vmatprep.subr.bf16.mxu0 %v9425
        %9990 = vmatpush1.bf16.msra.mxu0 %v9424
        %9991 = vmatprep.subr.bf16.mxu0 %v9422
        %9992 = vmatpush1.bf16.msra.mxu0 %v9421
        %9993 = vmatprep.subr.bf16.mxu0 %v9419
        %9994 = vmatpush1.bf16.msra.mxu0 %v9418
        %9995 = vmatprep.subr.bf16.mxu0 %v9416
        %9996 = vmatpush1.bf16.msra.mxu0 %v9415
        %9997 = vmatprep.subr.bf16.mxu0 %v9413
        %9998 = vmatpush1.bf16.msra.mxu0 %v9412
        %9999 = vmatprep.subr.bf16.mxu0 %v9410
        %10000 = vmatpush1.bf16.msra.mxu0 %v9409
        %10001 = vmatprep.subr.bf16.mxu0 %v9455
        %10002 = vmatpush2.bf16.msra.mxu0 %v9454
        %10003 = vmatprep.subr.bf16.mxu0 %v9452
        %10004 = vmatpush2.bf16.msra.mxu0 %v9451
        %10005 = vmatprep.subr.bf16.mxu0 %v9449
        %10006 = vmatpush2.bf16.msra.mxu0 %v9448
        %10007 = vmatprep.subr.bf16.mxu0 %v9446
        %10008 = vmatpush2.bf16.msra.mxu0 %v9445
        %10009 = vmatprep.subr.bf16.mxu0 %v9443
        %10010 = vmatpush2.bf16.msra.mxu0 %v9442
        %10011 = vmatprep.subr.bf16.mxu0 %v9440
        %10012 = vmatpush2.bf16.msra.mxu0 %v9439
        %10013 = vmatprep.subr.bf16.mxu0 %v9437
        %10014 = vmatpush2.bf16.msra.mxu0 %v9436
        %10015 = vmatprep.subr.bf16.mxu0 %v9434
        %10016 = vmatpush2.bf16.msra.mxu0 %v9433
        %10017 = vmatprep.mubr.bf16.mxu0 %v8025
        %10018 = vmatmul.mubr.bf16.gmra.mxu0 %v8024
        %v10019 = vpop.f32.mrf.mxu0
        %v10020 = vadd.f32 %v8437, %v10019
        %v10021 = vpop.f32.mrf.mxu0
        %v10022 = vadd.f32 %v8441, %v10021
        %v10023 = vpop.f32.mrf.mxu0
        %v10024 = vadd.f32 %v8437, %v10023
        %v10025 = vpop.f32.mrf.mxu0
        %v10026 = vadd.f32 %v8441, %v10025
        %10027 = vmatprep.mubr.bf16.mxu0 %v8037
        %10028 = vmatmul.mubr.bf16.gmra.mxu0 %v8036
        %v10029 = vpop.f32.mrf.mxu0
        %v10030 = vadd.f32 %v8437, %v10029
        %v10031 = vpop.f32.mrf.mxu0
        %v10032 = vadd.f32 %v8441, %v10031
        %v10033 = vpop.f32.mrf.mxu0
        %v10034 = vadd.f32 %v8437, %v10033
        %v10035 = vpop.f32.mrf.mxu0
        %v10036 = vadd.f32 %v8441, %v10035
        %10037 = vdwg.mxu0
        %10038 = vmatprep.subr.bf16.mxu0 %v9479
        %10039 = vmatpush1.bf16.msra.mxu0 %v9478
        %10040 = vmatprep.subr.bf16.mxu0 %v9476
        %10041 = vmatpush1.bf16.msra.mxu0 %v9475
        %10042 = vmatprep.subr.bf16.mxu0 %v9473
        %10043 = vmatpush1.bf16.msra.mxu0 %v9472
        %10044 = vmatprep.subr.bf16.mxu0 %v9470
        %10045 = vmatpush1.bf16.msra.mxu0 %v9469
        %10046 = vmatprep.subr.bf16.mxu0 %v9467
        %10047 = vmatpush1.bf16.msra.mxu0 %v9466
        %10048 = vmatprep.subr.bf16.mxu0 %v9464
        %10049 = vmatpush1.bf16.msra.mxu0 %v9463
        %10050 = vmatprep.subr.bf16.mxu0 %v9461
        %10051 = vmatpush1.bf16.msra.mxu0 %v9460
        %10052 = vmatprep.subr.bf16.mxu0 %v9458
        %10053 = vmatpush1.bf16.msra.mxu0 %v9457
        %10054 = vmatprep.subr.bf16.mxu0 %v9503
        %10055 = vmatpush2.bf16.msra.mxu0 %v9502
        %10056 = vmatprep.subr.bf16.mxu0 %v9500
        %10057 = vmatpush2.bf16.msra.mxu0 %v9499
        %10058 = vmatprep.subr.bf16.mxu0 %v9497
        %10059 = vmatpush2.bf16.msra.mxu0 %v9496
        %10060 = vmatprep.subr.bf16.mxu0 %v9494
        %10061 = vmatpush2.bf16.msra.mxu0 %v9493
        %10062 = vmatprep.subr.bf16.mxu0 %v9491
        %10063 = vmatpush2.bf16.msra.mxu0 %v9490
        %10064 = vmatprep.subr.bf16.mxu0 %v9488
        %10065 = vmatpush2.bf16.msra.mxu0 %v9487
        %10066 = vmatprep.subr.bf16.mxu0 %v9485
        %10067 = vmatpush2.bf16.msra.mxu0 %v9484
        %10068 = vmatprep.subr.bf16.mxu0 %v9482
        %10069 = vmatpush2.bf16.msra.mxu0 %v9481
        %10070 = vmatprep.mubr.bf16.mxu0 %v8027
        %10071 = vmatmul.mubr.bf16.gmra.mxu0 %v8026
        %v10072 = vpop.f32.mrf.mxu0
        %v10073 = vadd.f32 %v10020, %v10072
        %v10074 = vpop.f32.mrf.mxu0
        %v10075 = vadd.f32 %v10022, %v10074
        %v10076 = vpop.f32.mrf.mxu0
        %v10077 = vadd.f32 %v10024, %v10076
        %v10078 = vpop.f32.mrf.mxu0
        %v10079 = vadd.f32 %v10026, %v10078
        %10080 = vmatprep.mubr.bf16.mxu0 %v8039
        %10081 = vmatmul.mubr.bf16.gmra.mxu0 %v8038
        %v10082 = vpop.f32.mrf.mxu0
        %v10083 = vadd.f32 %v10030, %v10082
        %v10084 = vpop.f32.mrf.mxu0
        %v10085 = vadd.f32 %v10032, %v10084
        %v10086 = vpop.f32.mrf.mxu0
        %v10087 = vadd.f32 %v10034, %v10086
        %v10088 = vpop.f32.mrf.mxu0
        %v10089 = vadd.f32 %v10036, %v10088
        %10090 = vdwg.mxu0
        %10091 = vmatprep.subr.bf16.mxu0 %v9527
        %10092 = vmatpush1.bf16.msra.mxu0 %v9526
        %10093 = vmatprep.subr.bf16.mxu0 %v9524
        %10094 = vmatpush1.bf16.msra.mxu0 %v9523
        %10095 = vmatprep.subr.bf16.mxu0 %v9521
        %10096 = vmatpush1.bf16.msra.mxu0 %v9520
        %10097 = vmatprep.subr.bf16.mxu0 %v9518
        %10098 = vmatpush1.bf16.msra.mxu0 %v9517
        %10099 = vmatprep.subr.bf16.mxu0 %v9515
        %10100 = vmatpush1.bf16.msra.mxu0 %v9514
        %10101 = vmatprep.subr.bf16.mxu0 %v9512
        %10102 = vmatpush1.bf16.msra.mxu0 %v9511
        %10103 = vmatprep.subr.bf16.mxu0 %v9509
        %10104 = vmatpush1.bf16.msra.mxu0 %v9508
        %10105 = vmatprep.subr.bf16.mxu0 %v9506
        %10106 = vmatpush1.bf16.msra.mxu0 %v9505
        %10107 = vmatprep.subr.bf16.mxu0 %v9551
        %10108 = vmatpush2.bf16.msra.mxu0 %v9550
        %10109 = vmatprep.subr.bf16.mxu0 %v9548
        %10110 = vmatpush2.bf16.msra.mxu0 %v9547
        %10111 = vmatprep.subr.bf16.mxu0 %v9545
        %10112 = vmatpush2.bf16.msra.mxu0 %v9544
        %10113 = vmatprep.subr.bf16.mxu0 %v9542
        %10114 = vmatpush2.bf16.msra.mxu0 %v9541
        %10115 = vmatprep.subr.bf16.mxu0 %v9539
        %10116 = vmatpush2.bf16.msra.mxu0 %v9538
        %10117 = vmatprep.subr.bf16.mxu0 %v9536
        %10118 = vmatpush2.bf16.msra.mxu0 %v9535
        %10119 = vmatprep.subr.bf16.mxu0 %v9533
        %10120 = vmatpush2.bf16.msra.mxu0 %v9532
        %10121 = vmatprep.subr.bf16.mxu0 %v9530
        %10122 = vmatpush2.bf16.msra.mxu0 %v9529
        %10123 = vmatprep.mubr.bf16.mxu0 %v8029
        %10124 = vmatmul.mubr.bf16.gmra.mxu0 %v8028
        %v10125 = vpop.f32.mrf.mxu0
        %v10126 = vadd.f32 %v10073, %v10125
        %v10127 = vpop.f32.mrf.mxu0
        %v10128 = vadd.f32 %v10075, %v10127
        %v10129 = vpop.f32.mrf.mxu0
        %v10130 = vadd.f32 %v10077, %v10129
        %v10131 = vpop.f32.mrf.mxu0
        %v10132 = vadd.f32 %v10079, %v10131
        %10133 = vmatprep.mubr.bf16.mxu0 %v8041
        %10134 = vmatmul.mubr.bf16.gmra.mxu0 %v8040
        %v10135 = vpop.f32.mrf.mxu0
        %v10136 = vadd.f32 %v10083, %v10135
        %v10137 = vpop.f32.mrf.mxu0
        %v10138 = vadd.f32 %v10085, %v10137
        %v10139 = vpop.f32.mrf.mxu0
        %v10140 = vadd.f32 %v10087, %v10139
        %v10141 = vpop.f32.mrf.mxu0
        %v10142 = vadd.f32 %v10089, %v10141
        %10143 = vdwg.mxu0
        %10144 = vmatprep.subr.bf16.mxu0 %v9575
        %10145 = vmatpush1.bf16.msra.mxu0 %v9574
        %10146 = vmatprep.subr.bf16.mxu0 %v9572
        %10147 = vmatpush1.bf16.msra.mxu0 %v9571
        %10148 = vmatprep.subr.bf16.mxu0 %v9569
        %10149 = vmatpush1.bf16.msra.mxu0 %v9568
        %10150 = vmatprep.subr.bf16.mxu0 %v9566
        %10151 = vmatpush1.bf16.msra.mxu0 %v9565
        %10152 = vmatprep.subr.bf16.mxu0 %v9563
        %10153 = vmatpush1.bf16.msra.mxu0 %v9562
        %10154 = vmatprep.subr.bf16.mxu0 %v9560
        %10155 = vmatpush1.bf16.msra.mxu0 %v9559
        %10156 = vmatprep.subr.bf16.mxu0 %v9557
        %10157 = vmatpush1.bf16.msra.mxu0 %v9556
        %10158 = vmatprep.subr.bf16.mxu0 %v9554
        %10159 = vmatpush1.bf16.msra.mxu0 %v9553
        %10160 = vmatprep.subr.bf16.mxu0 %v9599
        %10161 = vmatpush2.bf16.msra.mxu0 %v9598
        %10162 = vmatprep.subr.bf16.mxu0 %v9596
        %10163 = vmatpush2.bf16.msra.mxu0 %v9595
        %10164 = vmatprep.subr.bf16.mxu0 %v9593
        %10165 = vmatpush2.bf16.msra.mxu0 %v9592
        %10166 = vmatprep.subr.bf16.mxu0 %v9590
        %10167 = vmatpush2.bf16.msra.mxu0 %v9589
        %10168 = vmatprep.subr.bf16.mxu0 %v9587
        %10169 = vmatpush2.bf16.msra.mxu0 %v9586
        %10170 = vmatprep.subr.bf16.mxu0 %v9584
        %10171 = vmatpush2.bf16.msra.mxu0 %v9583
        %10172 = vmatprep.subr.bf16.mxu0 %v9581
        %10173 = vmatpush2.bf16.msra.mxu0 %v9580
        %10174 = vmatprep.subr.bf16.mxu0 %v9578
        %10175 = vmatpush2.bf16.msra.mxu0 %v9577
        %10176 = vmatprep.mubr.bf16.mxu0 %v8031
        %10177 = vmatmul.mubr.bf16.gmra.mxu0 %v8030
        %v10178 = vpop.f32.mrf.mxu0
        %v10179 = vadd.f32 %v10126, %v10178
        %v10180 = vpop.f32.mrf.mxu0
        %v10181 = vadd.f32 %v10128, %v10180
        %v10182 = vpop.f32.mrf.mxu0
        %v10183 = vadd.f32 %v10130, %v10182
        %v10184 = vpop.f32.mrf.mxu0
        %v10185 = vadd.f32 %v10132, %v10184
        %10186 = vmatprep.mubr.bf16.mxu0 %v8043
        %10187 = vmatmul.mubr.bf16.gmra.mxu0 %v8042
        %v10188 = vpop.f32.mrf.mxu0
        %v10189 = vadd.f32 %v10136, %v10188
        %v10190 = vpop.f32.mrf.mxu0
        %v10191 = vadd.f32 %v10138, %v10190
        %v10192 = vpop.f32.mrf.mxu0
        %v10193 = vadd.f32 %v10140, %v10192
        %v10194 = vpop.f32.mrf.mxu0
        %v10195 = vadd.f32 %v10142, %v10194
        %10196 = vdwg.mxu0
        %10197 = vmatprep.subr.bf16.mxu0 %v9623
        %10198 = vmatpush1.bf16.msra.mxu0 %v9622
        %10199 = vmatprep.subr.bf16.mxu0 %v9620
        %10200 = vmatpush1.bf16.msra.mxu0 %v9619
        %10201 = vmatprep.subr.bf16.mxu0 %v9617
        %10202 = vmatpush1.bf16.msra.mxu0 %v9616
        %10203 = vmatprep.subr.bf16.mxu0 %v9614
        %10204 = vmatpush1.bf16.msra.mxu0 %v9613
        %10205 = vmatprep.subr.bf16.mxu0 %v9611
        %10206 = vmatpush1.bf16.msra.mxu0 %v9610
        %10207 = vmatprep.subr.bf16.mxu0 %v9608
        %10208 = vmatpush1.bf16.msra.mxu0 %v9607
        %10209 = vmatprep.subr.bf16.mxu0 %v9605
        %10210 = vmatpush1.bf16.msra.mxu0 %v9604
        %10211 = vmatprep.subr.bf16.mxu0 %v9602
        %10212 = vmatpush1.bf16.msra.mxu0 %v9601
        %10213 = vmatprep.subr.bf16.mxu0 %v9647
        %10214 = vmatpush2.bf16.msra.mxu0 %v9646
        %10215 = vmatprep.subr.bf16.mxu0 %v9644
        %10216 = vmatpush2.bf16.msra.mxu0 %v9643
        %10217 = vmatprep.subr.bf16.mxu0 %v9641
        %10218 = vmatpush2.bf16.msra.mxu0 %v9640
        %10219 = vmatprep.subr.bf16.mxu0 %v9638
        %10220 = vmatpush2.bf16.msra.mxu0 %v9637
        %10221 = vmatprep.subr.bf16.mxu0 %v9635
        %10222 = vmatpush2.bf16.msra.mxu0 %v9634
        %10223 = vmatprep.subr.bf16.mxu0 %v9632
        %10224 = vmatpush2.bf16.msra.mxu0 %v9631
        %10225 = vmatprep.subr.bf16.mxu0 %v9629
        %10226 = vmatpush2.bf16.msra.mxu0 %v9628
        %10227 = vmatprep.subr.bf16.mxu0 %v9626
        %10228 = vmatpush2.bf16.msra.mxu0 %v9625
        %10229 = vmatprep.mubr.bf16.mxu0 %v8033
        %10230 = vmatmul.mubr.bf16.gmra.mxu0 %v8032
        %v10231 = vpop.f32.mrf.mxu0
        %v10232 = vadd.f32 %v10179, %v10231
        %v10233 = vpop.f32.mrf.mxu0
        %v10234 = vadd.f32 %v10181, %v10233
        %v10235 = vpop.f32.mrf.mxu0
        %v10236 = vadd.f32 %v10183, %v10235
        %v10237 = vpop.f32.mrf.mxu0
        %v10238 = vadd.f32 %v10185, %v10237
        %10239 = vmatprep.mubr.bf16.mxu0 %v8045
        %10240 = vmatmul.mubr.bf16.gmra.mxu0 %v8044
        %v10241 = vpop.f32.mrf.mxu0
        %v10242 = vadd.f32 %v10189, %v10241
        %v10243 = vpop.f32.mrf.mxu0
        %v10244 = vadd.f32 %v10191, %v10243
        %v10245 = vpop.f32.mrf.mxu0
        %v10246 = vadd.f32 %v10193, %v10245
        %v10247 = vpop.f32.mrf.mxu0
        %v10248 = vadd.f32 %v10195, %v10247
        %10249 = vdwg.mxu0
        %10250 = vmatprep.subr.bf16.mxu0 %v9671
        %10251 = vmatpush1.bf16.msra.mxu0 %v9670
        %10252 = vmatprep.subr.bf16.mxu0 %v9668
        %10253 = vmatpush1.bf16.msra.mxu0 %v9667
        %10254 = vmatprep.subr.bf16.mxu0 %v9665
        %10255 = vmatpush1.bf16.msra.mxu0 %v9664
        %10256 = vmatprep.subr.bf16.mxu0 %v9662
        %10257 = vmatpush1.bf16.msra.mxu0 %v9661
        %10258 = vmatprep.subr.bf16.mxu0 %v9659
        %10259 = vmatpush1.bf16.msra.mxu0 %v9658
        %10260 = vmatprep.subr.bf16.mxu0 %v9656
        %10261 = vmatpush1.bf16.msra.mxu0 %v9655
        %10262 = vmatprep.subr.bf16.mxu0 %v9653
        %10263 = vmatpush1.bf16.msra.mxu0 %v9652
        %10264 = vmatprep.subr.bf16.mxu0 %v9650
        %10265 = vmatpush1.bf16.msra.mxu0 %v9649
        %10266 = vmatprep.subr.bf16.mxu0 %v9695
        %10267 = vmatpush2.bf16.msra.mxu0 %v9694
        %10268 = vmatprep.subr.bf16.mxu0 %v9692
        %10269 = vmatpush2.bf16.msra.mxu0 %v9691
        %10270 = vmatprep.subr.bf16.mxu0 %v9689
        %10271 = vmatpush2.bf16.msra.mxu0 %v9688
        %10272 = vmatprep.subr.bf16.mxu0 %v9686
        %10273 = vmatpush2.bf16.msra.mxu0 %v9685
        %10274 = vmatprep.subr.bf16.mxu0 %v9683
        %10275 = vmatpush2.bf16.msra.mxu0 %v9682
        %10276 = vmatprep.subr.bf16.mxu0 %v9680
        %10277 = vmatpush2.bf16.msra.mxu0 %v9679
        %10278 = vmatprep.subr.bf16.mxu0 %v9677
        %10279 = vmatpush2.bf16.msra.mxu0 %v9676
        %10280 = vmatprep.subr.bf16.mxu0 %v9674
        %10281 = vmatpush2.bf16.msra.mxu0 %v9673
        %10282 = vmatprep.mubr.bf16.mxu0 %v8035
        %10283 = vmatmul.mubr.bf16.gmra.mxu0 %v8034
        %v10284 = vpop.f32.mrf.mxu0
        %v10285 = vadd.f32 %v10232, %v10284
        %v10286 = vpop.f32.mrf.mxu0
        %v10287 = vadd.f32 %v10234, %v10286
        %v10288 = vpop.f32.mrf.mxu0
        %v10289 = vadd.f32 %v10236, %v10288
        %v10290 = vpop.f32.mrf.mxu0
        %v10291 = vadd.f32 %v10238, %v10290
        %10292 = vmatprep.mubr.bf16.mxu0 %v8047
        %10293 = vmatmul.mubr.bf16.gmra.mxu0 %v8046
        %v10294 = vpop.f32.mrf.mxu0
        %v10295 = vadd.f32 %v10242, %v10294
        %v10296 = vpop.f32.mrf.mxu0
        %v10297 = vadd.f32 %v10244, %v10296
        %v10298 = vpop.f32.mrf.mxu0
        %v10299 = vadd.f32 %v10246, %v10298
        %v10300 = vpop.f32.mrf.mxu0
        %v10301 = vadd.f32 %v10248, %v10300
        %10302 = vdwg.mxu0
        %10303 = vmatprep.subr.bf16.mxu0 0
        %10304 = vmatpush1.bf16.msra.mxu0 %v9432
        %10305 = vmatprep.subr.bf16.mxu0 0
        %10306 = vmatpush1.bf16.msra.mxu0 %v9429
        %10307 = vmatprep.subr.bf16.mxu0 0
        %10308 = vmatpush1.bf16.msra.mxu0 %v9426
        %10309 = vmatprep.subr.bf16.mxu0 0
        %10310 = vmatpush1.bf16.msra.mxu0 %v9423
        %10311 = vmatprep.subr.bf16.mxu0 0
        %10312 = vmatpush1.bf16.msra.mxu0 %v9420
        %10313 = vmatprep.subr.bf16.mxu0 0
        %10314 = vmatpush1.bf16.msra.mxu0 %v9417
        %10315 = vmatprep.subr.bf16.mxu0 0
        %10316 = vmatpush1.bf16.msra.mxu0 %v9414
        %10317 = vmatprep.subr.bf16.mxu0 0
        %10318 = vmatpush1.bf16.msra.mxu0 %v9411
        %10319 = vmatprep.subr.bf16.mxu0 0
        %10320 = vmatpush2.bf16.msra.mxu0 %v9456
        %10321 = vmatprep.subr.bf16.mxu0 0
        %10322 = vmatpush2.bf16.msra.mxu0 %v9453
        %10323 = vmatprep.subr.bf16.mxu0 0
        %10324 = vmatpush2.bf16.msra.mxu0 %v9450
        %10325 = vmatprep.subr.bf16.mxu0 0
        %10326 = vmatpush2.bf16.msra.mxu0 %v9447
        %10327 = vmatprep.subr.bf16.mxu0 0
        %10328 = vmatpush2.bf16.msra.mxu0 %v9444
        %10329 = vmatprep.subr.bf16.mxu0 0
        %10330 = vmatpush2.bf16.msra.mxu0 %v9441
        %10331 = vmatprep.subr.bf16.mxu0 0
        %10332 = vmatpush2.bf16.msra.mxu0 %v9438
        %10333 = vmatprep.subr.bf16.mxu0 0
        %10334 = vmatpush2.bf16.msra.mxu0 %v9435
        %10335 = vmatprep.mubr.bf16.mxu0 %v8025
        %10336 = vmatmul.mubr.bf16.gmra.mxu0 %v8024
        %v10337 = vpop.f32.mrf.mxu0
        %v10338 = vadd.f32 %v8445, %v10337
        %v10339 = vpop.f32.mrf.mxu0
        %v10340 = vpop.f32.mrf.mxu0
        %v10341 = vadd.f32 %v8445, %v10340
        %v10342 = vpop.f32.mrf.mxu0
        %10343 = vmatprep.mubr.bf16.mxu0 %v8037
        %10344 = vmatmul.mubr.bf16.gmra.mxu0 %v8036
        %v10345 = vpop.f32.mrf.mxu0
        %v10346 = vadd.f32 %v8445, %v10345
        %v10347 = vpop.f32.mrf.mxu0
        %v10348 = vpop.f32.mrf.mxu0
        %v10349 = vadd.f32 %v8445, %v10348
        %v10350 = vpop.f32.mrf.mxu0
        %10351 = vdwg.mxu0
        %10352 = vmatprep.subr.bf16.mxu0 0
        %10353 = vmatpush1.bf16.msra.mxu0 %v9480
        %10354 = vmatprep.subr.bf16.mxu0 0
        %10355 = vmatpush1.bf16.msra.mxu0 %v9477
        %10356 = vmatprep.subr.bf16.mxu0 0
        %10357 = vmatpush1.bf16.msra.mxu0 %v9474
        %10358 = vmatprep.subr.bf16.mxu0 0
        %10359 = vmatpush1.bf16.msra.mxu0 %v9471
        %10360 = vmatprep.subr.bf16.mxu0 0
        %10361 = vmatpush1.bf16.msra.mxu0 %v9468
        %10362 = vmatprep.subr.bf16.mxu0 0
        %10363 = vmatpush1.bf16.msra.mxu0 %v9465
        %10364 = vmatprep.subr.bf16.mxu0 0
        %10365 = vmatpush1.bf16.msra.mxu0 %v9462
        %10366 = vmatprep.subr.bf16.mxu0 0
        %10367 = vmatpush1.bf16.msra.mxu0 %v9459
        %10368 = vmatprep.subr.bf16.mxu0 0
        %10369 = vmatpush2.bf16.msra.mxu0 %v9504
        %10370 = vmatprep.subr.bf16.mxu0 0
        %10371 = vmatpush2.bf16.msra.mxu0 %v9501
        %10372 = vmatprep.subr.bf16.mxu0 0
        %10373 = vmatpush2.bf16.msra.mxu0 %v9498
        %10374 = vmatprep.subr.bf16.mxu0 0
        %10375 = vmatpush2.bf16.msra.mxu0 %v9495
        %10376 = vmatprep.subr.bf16.mxu0 0
        %10377 = vmatpush2.bf16.msra.mxu0 %v9492
        %10378 = vmatprep.subr.bf16.mxu0 0
        %10379 = vmatpush2.bf16.msra.mxu0 %v9489
        %10380 = vmatprep.subr.bf16.mxu0 0
        %10381 = vmatpush2.bf16.msra.mxu0 %v9486
        %10382 = vmatprep.subr.bf16.mxu0 0
        %10383 = vmatpush2.bf16.msra.mxu0 %v9483
        %10384 = vmatprep.mubr.bf16.mxu0 %v8027
        %10385 = vmatmul.mubr.bf16.gmra.mxu0 %v8026
        %v10386 = vpop.f32.mrf.mxu0
        %v10387 = vadd.f32 %v10338, %v10386
        %v10388 = vpop.f32.mrf.mxu0
        %v10389 = vpop.f32.mrf.mxu0
        %v10390 = vadd.f32 %v10341, %v10389
        %v10391 = vpop.f32.mrf.mxu0
        %10392 = vmatprep.mubr.bf16.mxu0 %v8039
        %10393 = vmatmul.mubr.bf16.gmra.mxu0 %v8038
        %v10394 = vpop.f32.mrf.mxu0
        %v10395 = vadd.f32 %v10346, %v10394
        %v10396 = vpop.f32.mrf.mxu0
        %v10397 = vpop.f32.mrf.mxu0
        %v10398 = vadd.f32 %v10349, %v10397
        %v10399 = vpop.f32.mrf.mxu0
        %10400 = vdwg.mxu0
        %10401 = vmatprep.subr.bf16.mxu0 0
        %10402 = vmatpush1.bf16.msra.mxu0 %v9528
        %10403 = vmatprep.subr.bf16.mxu0 0
        %10404 = vmatpush1.bf16.msra.mxu0 %v9525
        %10405 = vmatprep.subr.bf16.mxu0 0
        %10406 = vmatpush1.bf16.msra.mxu0 %v9522
        %10407 = vmatprep.subr.bf16.mxu0 0
        %10408 = vmatpush1.bf16.msra.mxu0 %v9519
        %10409 = vmatprep.subr.bf16.mxu0 0
        %10410 = vmatpush1.bf16.msra.mxu0 %v9516
        %10411 = vmatprep.subr.bf16.mxu0 0
        %10412 = vmatpush1.bf16.msra.mxu0 %v9513
        %10413 = vmatprep.subr.bf16.mxu0 0
        %10414 = vmatpush1.bf16.msra.mxu0 %v9510
        %10415 = vmatprep.subr.bf16.mxu0 0
        %10416 = vmatpush1.bf16.msra.mxu0 %v9507
        %10417 = vmatprep.subr.bf16.mxu0 0
        %10418 = vmatpush2.bf16.msra.mxu0 %v9552
        %10419 = vmatprep.subr.bf16.mxu0 0
        %10420 = vmatpush2.bf16.msra.mxu0 %v9549
        %10421 = vmatprep.subr.bf16.mxu0 0
        %10422 = vmatpush2.bf16.msra.mxu0 %v9546
        %10423 = vmatprep.subr.bf16.mxu0 0
        %10424 = vmatpush2.bf16.msra.mxu0 %v9543
        %10425 = vmatprep.subr.bf16.mxu0 0
        %10426 = vmatpush2.bf16.msra.mxu0 %v9540
        %10427 = vmatprep.subr.bf16.mxu0 0
        %10428 = vmatpush2.bf16.msra.mxu0 %v9537
        %10429 = vmatprep.subr.bf16.mxu0 0
        %10430 = vmatpush2.bf16.msra.mxu0 %v9534
        %10431 = vmatprep.subr.bf16.mxu0 0
        %10432 = vmatpush2.bf16.msra.mxu0 %v9531
        %10433 = vmatprep.mubr.bf16.mxu0 %v8029
        %10434 = vmatmul.mubr.bf16.gmra.mxu0 %v8028
        %v10435 = vpop.f32.mrf.mxu0
        %v10436 = vadd.f32 %v10387, %v10435
        %v10437 = vpop.f32.mrf.mxu0
        %v10438 = vpop.f32.mrf.mxu0
        %v10439 = vadd.f32 %v10390, %v10438
        %v10440 = vpop.f32.mrf.mxu0
        %10441 = vmatprep.mubr.bf16.mxu0 %v8041
        %10442 = vmatmul.mubr.bf16.gmra.mxu0 %v8040
        %v10443 = vpop.f32.mrf.mxu0
        %v10444 = vadd.f32 %v10395, %v10443
        %v10445 = vpop.f32.mrf.mxu0
        %v10446 = vpop.f32.mrf.mxu0
        %v10447 = vadd.f32 %v10398, %v10446
        %v10448 = vpop.f32.mrf.mxu0
        %10449 = vdwg.mxu0
        %10450 = vmatprep.subr.bf16.mxu0 0
        %10451 = vmatpush1.bf16.msra.mxu0 %v9576
        %10452 = vmatprep.subr.bf16.mxu0 0
        %10453 = vmatpush1.bf16.msra.mxu0 %v9573
        %10454 = vmatprep.subr.bf16.mxu0 0
        %10455 = vmatpush1.bf16.msra.mxu0 %v9570
        %10456 = vmatprep.subr.bf16.mxu0 0
        %10457 = vmatpush1.bf16.msra.mxu0 %v9567
        %10458 = vmatprep.subr.bf16.mxu0 0
        %10459 = vmatpush1.bf16.msra.mxu0 %v9564
        %10460 = vmatprep.subr.bf16.mxu0 0
        %10461 = vmatpush1.bf16.msra.mxu0 %v9561
        %10462 = vmatprep.subr.bf16.mxu0 0
        %10463 = vmatpush1.bf16.msra.mxu0 %v9558
        %10464 = vmatprep.subr.bf16.mxu0 0
        %10465 = vmatpush1.bf16.msra.mxu0 %v9555
        %10466 = vmatprep.subr.bf16.mxu0 0
        %10467 = vmatpush2.bf16.msra.mxu0 %v9600
        %10468 = vmatprep.subr.bf16.mxu0 0
        %10469 = vmatpush2.bf16.msra.mxu0 %v9597
        %10470 = vmatprep.subr.bf16.mxu0 0
        %10471 = vmatpush2.bf16.msra.mxu0 %v9594
        %10472 = vmatprep.subr.bf16.mxu0 0
        %10473 = vmatpush2.bf16.msra.mxu0 %v9591
        %10474 = vmatprep.subr.bf16.mxu0 0
        %10475 = vmatpush2.bf16.msra.mxu0 %v9588
        %10476 = vmatprep.subr.bf16.mxu0 0
        %10477 = vmatpush2.bf16.msra.mxu0 %v9585
        %10478 = vmatprep.subr.bf16.mxu0 0
        %10479 = vmatpush2.bf16.msra.mxu0 %v9582
        %10480 = vmatprep.subr.bf16.mxu0 0
        %10481 = vmatpush2.bf16.msra.mxu0 %v9579
        %10482 = vmatprep.mubr.bf16.mxu0 %v8031
        %10483 = vmatmul.mubr.bf16.gmra.mxu0 %v8030
        %v10484 = vpop.f32.mrf.mxu0
        %v10485 = vadd.f32 %v10436, %v10484
        %v10486 = vpop.f32.mrf.mxu0
        %v10487 = vpop.f32.mrf.mxu0
        %v10488 = vadd.f32 %v10439, %v10487
        %v10489 = vpop.f32.mrf.mxu0
        %10490 = vmatprep.mubr.bf16.mxu0 %v8043
        %10491 = vmatmul.mubr.bf16.gmra.mxu0 %v8042
        %v10492 = vpop.f32.mrf.mxu0
        %v10493 = vadd.f32 %v10444, %v10492
        %v10494 = vpop.f32.mrf.mxu0
        %v10495 = vpop.f32.mrf.mxu0
        %v10496 = vadd.f32 %v10447, %v10495
        %v10497 = vpop.f32.mrf.mxu0
        %10498 = vdwg.mxu0
        %10499 = vmatprep.subr.bf16.mxu0 0
        %10500 = vmatpush1.bf16.msra.mxu0 %v9624
        %10501 = vmatprep.subr.bf16.mxu0 0
        %10502 = vmatpush1.bf16.msra.mxu0 %v9621
        %10503 = vmatprep.subr.bf16.mxu0 0
        %10504 = vmatpush1.bf16.msra.mxu0 %v9618
        %10505 = vmatprep.subr.bf16.mxu0 0
        %10506 = vmatpush1.bf16.msra.mxu0 %v9615
        %10507 = vmatprep.subr.bf16.mxu0 0
        %10508 = vmatpush1.bf16.msra.mxu0 %v9612
        %10509 = vmatprep.subr.bf16.mxu0 0
        %10510 = vmatpush1.bf16.msra.mxu0 %v9609
        %10511 = vmatprep.subr.bf16.mxu0 0
        %10512 = vmatpush1.bf16.msra.mxu0 %v9606
        %10513 = vmatprep.subr.bf16.mxu0 0
        %10514 = vmatpush1.bf16.msra.mxu0 %v9603
        %10515 = vmatprep.subr.bf16.mxu0 0
        %10516 = vmatpush2.bf16.msra.mxu0 %v9648
        %10517 = vmatprep.subr.bf16.mxu0 0
        %10518 = vmatpush2.bf16.msra.mxu0 %v9645
        %10519 = vmatprep.subr.bf16.mxu0 0
        %10520 = vmatpush2.bf16.msra.mxu0 %v9642
        %10521 = vmatprep.subr.bf16.mxu0 0
        %10522 = vmatpush2.bf16.msra.mxu0 %v9639
        %10523 = vmatprep.subr.bf16.mxu0 0
        %10524 = vmatpush2.bf16.msra.mxu0 %v9636
        %10525 = vmatprep.subr.bf16.mxu0 0
        %10526 = vmatpush2.bf16.msra.mxu0 %v9633
        %10527 = vmatprep.subr.bf16.mxu0 0
        %10528 = vmatpush2.bf16.msra.mxu0 %v9630
        %10529 = vmatprep.subr.bf16.mxu0 0
        %10530 = vmatpush2.bf16.msra.mxu0 %v9627
        %10531 = vmatprep.mubr.bf16.mxu0 %v8033
        %10532 = vmatmul.mubr.bf16.gmra.mxu0 %v8032
        %v10533 = vpop.f32.mrf.mxu0
        %v10534 = vadd.f32 %v10485, %v10533
        %v10535 = vpop.f32.mrf.mxu0
        %v10536 = vpop.f32.mrf.mxu0
        %v10537 = vadd.f32 %v10488, %v10536
        %v10538 = vpop.f32.mrf.mxu0
        %10539 = vmatprep.mubr.bf16.mxu0 %v8045
        %10540 = vmatmul.mubr.bf16.gmra.mxu0 %v8044
        %v10541 = vpop.f32.mrf.mxu0
        %v10542 = vadd.f32 %v10493, %v10541
        %v10543 = vpop.f32.mrf.mxu0
        %v10544 = vpop.f32.mrf.mxu0
        %v10545 = vadd.f32 %v10496, %v10544
        %v10546 = vpop.f32.mrf.mxu0
        %10547 = vdwg.mxu0
        %10548 = vmatprep.subr.bf16.mxu0 0
        %10549 = vmatpush1.bf16.msra.mxu0 %v9672
        %10550 = vmatprep.subr.bf16.mxu0 0
        %10551 = vmatpush1.bf16.msra.mxu0 %v9669
        %10552 = vmatprep.subr.bf16.mxu0 0
        %10553 = vmatpush1.bf16.msra.mxu0 %v9666
        %10554 = vmatprep.subr.bf16.mxu0 0
        %10555 = vmatpush1.bf16.msra.mxu0 %v9663
        %10556 = vmatprep.subr.bf16.mxu0 0
        %10557 = vmatpush1.bf16.msra.mxu0 %v9660
        %10558 = vmatprep.subr.bf16.mxu0 0
        %10559 = vmatpush1.bf16.msra.mxu0 %v9657
        %10560 = vmatprep.subr.bf16.mxu0 0
        %10561 = vmatpush1.bf16.msra.mxu0 %v9654
        %10562 = vmatprep.subr.bf16.mxu0 0
        %10563 = vmatpush1.bf16.msra.mxu0 %v9651
        %10564 = vmatprep.subr.bf16.mxu0 0
        %10565 = vmatpush2.bf16.msra.mxu0 %v9696
        %10566 = vmatprep.subr.bf16.mxu0 0
        %10567 = vmatpush2.bf16.msra.mxu0 %v9693
        %10568 = vmatprep.subr.bf16.mxu0 0
        %10569 = vmatpush2.bf16.msra.mxu0 %v9690
        %10570 = vmatprep.subr.bf16.mxu0 0
        %10571 = vmatpush2.bf16.msra.mxu0 %v9687
        %10572 = vmatprep.subr.bf16.mxu0 0
        %10573 = vmatpush2.bf16.msra.mxu0 %v9684
        %10574 = vmatprep.subr.bf16.mxu0 0
        %10575 = vmatpush2.bf16.msra.mxu0 %v9681
        %10576 = vmatprep.subr.bf16.mxu0 0
        %10577 = vmatpush2.bf16.msra.mxu0 %v9678
        %10578 = vmatprep.subr.bf16.mxu0 0
        %10579 = vmatpush2.bf16.msra.mxu0 %v9675
        %10580 = vmatprep.mubr.bf16.mxu0 %v8035
        %10581 = vmatmul.mubr.bf16.gmra.mxu0 %v8034
        %v10582 = vpop.f32.mrf.mxu0
        %v10583 = vadd.f32 %v10534, %v10582
        %v10584 = vpop.f32.mrf.mxu0
        %v10585 = vpop.f32.mrf.mxu0
        %v10586 = vadd.f32 %v10537, %v10585
        %v10587 = vpop.f32.mrf.mxu0
        %10588 = vmatprep.mubr.bf16.mxu0 %v8047
        %10589 = vmatmul.mubr.bf16.gmra.mxu0 %v8046
        %v10590 = vpop.f32.mrf.mxu0
        %v10591 = vadd.f32 %v10542, %v10590
        %v10592 = vpop.f32.mrf.mxu0
        %v10593 = vpop.f32.mrf.mxu0
        %v10594 = vadd.f32 %v10545, %v10593
        %v10595 = vpop.f32.mrf.mxu0
        %10596 = vdwg.mxu0
        %v10597 = vadd.f32 %v5388, %v10285
        %v10598 = vadd.f32 %v5389, %v10287
        %v10599 = vadd.f32 %v5390, %v10583
        %v10600 = vadd.f32 %v5391, %v10289
        %v10601 = vadd.f32 %v5392, %v10291
        %v10602 = vadd.f32 %v5393, %v10586
        %v10603 = vadd.f32 %v5394, %v10295
        %v10604 = vadd.f32 %v5395, %v10297
        %v10605 = vadd.f32 %v5396, %v10591
        %v10606 = vadd.f32 %v5397, %v10299
        %v10607 = vadd.f32 %v5398, %v10301
        %v10608 = vadd.f32 %v5399, %v10594
        %10609 = vst [vmem:[#allocation2] sm:$0xff] %v10597
        %10610 = vst [vmem:[#allocation2 + $0x8] sm:$0xff] %v10598
        %10611 = vst [vmem:[#allocation2 + $0x10] sm:$0xff] %v10599
        %10612 = vst [vmem:[#allocation2 + $0x18] sm:$0xff] %v10600
        %10613 = vst [vmem:[#allocation2 + $0x20] sm:$0xff] %v10601
        %10614 = vst [vmem:[#allocation2 + $0x28] sm:$0xff] %v10602
        %10615 = vst [vmem:[#allocation2 + $0x30] sm:$0xff] %v10603
        %10616 = vst [vmem:[#allocation2 + $0x38] sm:$0xff] %v10604
        %10617 = vst [vmem:[#allocation2 + $0x40] sm:$0xff] %v10605
        %10618 = vst [vmem:[#allocation2 + $0x48] sm:$0xff] %v10606
        %10619 = vst [vmem:[#allocation2 + $0x50] sm:$0xff] %v10607
        %10620 = vst [vmem:[#allocation2 + $0x58] sm:$0xff] %v10608
        %p10621 = scmp.eq.s32.totalorder %s54, 5
        // Predicated region
        $region153: #{bigram_forward.1} parent=87 // pred_check
          %p10622 = pneg %p10621
        $region154: #{bigram_forward.1} parent=87 // pred_check_branch
          %10624 = sbr.rel (%p10622) target = $region156
        $region155: #{bigram_forward.1} parent=87 // pred_region
          %v10625 = vld [vmem:[#allocation22] sm:$0x7]
          %v10626 = vld [vmem:[#allocation24] sm:$0x7]
          %v10627 = vadd.f32 %v10597, %v10598
          %v10628 = vadd.f32 %v10627, %v10599
          %10629 = vadd.xlane.f32.xlu0 %v10628
          %v10630 = vpop.xlane.xlu0 %10629
          %v10631 = vadd.f32 %v10600, %v10601
          %v10632 = vadd.f32 %v10631, %v10602
          %10633 = vadd.xlane.f32.xlu0 %v10632
          %v10634 = vpop.xlane.xlu0 %10633
          %v10635 = vadd.f32 %v10603, %v10604
          %v10636 = vadd.f32 %v10635, %v10605
          %10637 = vadd.xlane.f32.xlu0 %v10636
          %v10638 = vpop.xlane.xlu0 %10637
          %v10639 = vadd.f32 %v10606, %v10607
          %v10640 = vadd.f32 %v10639, %v10608
          %10641 = vadd.xlane.f32.xlu0 %v10640
          %v10642 = vpop.xlane.xlu0 %10641
          %v10643 = vmul.f32 %v10630, %v1082
          %v10644 = vmul.f32 %v10634, %v1082
          %v10645 = vmul.f32 %v10638, %v1082
          %v10646 = vmul.f32 %v10642, %v1082
          %v10647 = vsub.f32 %v10597, %v10643
          %v10648 = vsub.f32 %v10598, %v10643
          %v10649 = vsub.f32 %v10599, %v10643
          %v10650 = vsub.f32 %v10600, %v10644
          %v10651 = vsub.f32 %v10601, %v10644
          %v10652 = vsub.f32 %v10602, %v10644
          %v10653 = vsub.f32 %v10603, %v10645
          %v10654 = vsub.f32 %v10604, %v10645
          %v10655 = vsub.f32 %v10605, %v10645
          %v10656 = vsub.f32 %v10606, %v10646
          %v10657 = vsub.f32 %v10607, %v10646
          %v10658 = vsub.f32 %v10608, %v10646
          %v10659 = vmul.f32 %v10647, %v10647
          %v10660 = vmul.f32 %v10648, %v10648
          %v10661 = vmul.f32 %v10649, %v10649
          %v10662 = vmul.f32 %v10650, %v10650
          %v10663 = vmul.f32 %v10651, %v10651
          %v10664 = vmul.f32 %v10652, %v10652
          %v10665 = vmul.f32 %v10653, %v10653
          %v10666 = vmul.f32 %v10654, %v10654
          %v10667 = vmul.f32 %v10655, %v10655
          %v10668 = vmul.f32 %v10656, %v10656
          %v10669 = vmul.f32 %v10657, %v10657
          %v10670 = vmul.f32 %v10658, %v10658
          %v10671 = vadd.f32 %v10659, %v10660
          %v10672 = vadd.f32 %v10671, %v10661
          %10673 = vadd.xlane.f32.xlu0 %v10672
          %v10674 = vpop.xlane.xlu0 %10673
          %v10675 = vadd.f32 %v10662, %v10663
          %v10676 = vadd.f32 %v10675, %v10664
          %10677 = vadd.xlane.f32.xlu0 %v10676
          %v10678 = vpop.xlane.xlu0 %10677
          %v10679 = vadd.f32 %v10665, %v10666
          %v10680 = vadd.f32 %v10679, %v10667
          %10681 = vadd.xlane.f32.xlu0 %v10680
          %v10682 = vpop.xlane.xlu0 %10681
          %v10683 = vadd.f32 %v10668, %v10669
          %v10684 = vadd.f32 %v10683, %v10670
          %10685 = vadd.xlane.f32.xlu0 %v10684
          %v10686 = vpop.xlane.xlu0 %10685
          %v10687 = vmul.f32 %v10674, %v1082
          %v10688 = vmul.f32 %v10678, %v1082
          %v10689 = vmul.f32 %v10682, %v1082
          %v10690 = vmul.f32 %v10686, %v1082
          %v10691 = vadd.f32 %v10687, 1e-05
          %v10692 = vadd.f32 %v10688, 1e-05
          %v10693 = vadd.f32 %v10689, 1e-05
          %v10694 = vadd.f32 %v10690, 1e-05
          %v10695 = vrsqrt.pop %v10691
          %v10696 = vrsqrt.pop %v10692
          %v10697 = vrsqrt.pop %v10693
          %v10698 = vrsqrt.pop %v10694
          %v10699 = vmul.f32 %v10647, %v10695
          %v10700 = vmul.f32 %v10648, %v10695
          %v10701 = vmul.f32 %v10649, %v10695
          %v10702 = vmul.f32 %v10650, %v10696
          %v10703 = vmul.f32 %v10651, %v10696
          %v10704 = vmul.f32 %v10652, %v10696
          %v10705 = vmul.f32 %v10653, %v10697
          %v10706 = vmul.f32 %v10654, %v10697
          %v10707 = vmul.f32 %v10655, %v10697
          %v10708 = vmul.f32 %v10656, %v10698
          %v10709 = vmul.f32 %v10657, %v10698
          %v10710 = vmul.f32 %v10658, %v10698
          %v10712 = vlaneseq
          %v10713 = vshrl.u32 %v10712, 7
          %v10714 = vsub.s32 0, %v10713
          %v10715 = vrot.slane %v10625, %v10714
          %v10716 = vlaneseq
          %v10717 = vshrl.u32 %v10716, 7
          %v10718 = vsub.s32 1, %v10717
          %v10719 = vrot.slane %v10625, %v10718
          %v10720 = vlaneseq
          %v10721 = vshrl.u32 %v10720, 7
          %v10722 = vsub.s32 2, %v10721
          %v10723 = vrot.slane %v10625, %v10722
          %v10727 = vmul.f32 %v10699, %v10715
          %v10728 = vmul.f32 %v10700, %v10719
          %v10729 = vmul.f32 %v10701, %v10723
          %v10730 = vmul.f32 %v10702, %v10715
          %v10731 = vmul.f32 %v10703, %v10719
          %v10732 = vmul.f32 %v10704, %v10723
          %v10733 = vmul.f32 %v10705, %v10715
          %v10734 = vmul.f32 %v10706, %v10719
          %v10735 = vmul.f32 %v10707, %v10723
          %v10736 = vmul.f32 %v10708, %v10715
          %v10737 = vmul.f32 %v10709, %v10719
          %v10738 = vmul.f32 %v10710, %v10723
          %v10740 = vlaneseq
          %v10741 = vshrl.u32 %v10740, 7
          %v10742 = vsub.s32 0, %v10741
          %v10743 = vrot.slane %v10626, %v10742
          %v10744 = vlaneseq
          %v10745 = vshrl.u32 %v10744, 7
          %v10746 = vsub.s32 1, %v10745
          %v10747 = vrot.slane %v10626, %v10746
          %v10748 = vlaneseq
          %v10749 = vshrl.u32 %v10748, 7
          %v10750 = vsub.s32 2, %v10749
          %v10751 = vrot.slane %v10626, %v10750
          %v10755 = vadd.f32 %v10727, %v10743
          %v10756 = vadd.f32 %v10728, %v10747
          %v10757 = vadd.f32 %v10729, %v10751
          %v10758 = vadd.f32 %v10730, %v10743
          %v10759 = vadd.f32 %v10731, %v10747
          %v10760 = vadd.f32 %v10732, %v10751
          %v10761 = vadd.f32 %v10733, %v10743
          %v10762 = vadd.f32 %v10734, %v10747
          %v10763 = vadd.f32 %v10735, %v10751
          %v10764 = vadd.f32 %v10736, %v10743
          %v10765 = vadd.f32 %v10737, %v10747
          %v10766 = vadd.f32 %v10738, %v10751
          %v10767 = vpack.c.bf16 %v10758, %v10755
          %v10768 = vpack.c.bf16 %v10759, %v10756
          %v10769 = vpack.c.bf16 %v10760, %v10757
          %v10770 = vpack.c.bf16 %v10764, %v10761
          %v10771 = vpack.c.bf16 %v10765, %v10762
          %v10772 = vpack.c.bf16 %v10766, %v10763
          %v10773 = vld [vmem:[#allocation25] sm:$0xf]
          %v10774 = vld [vmem:[#allocation25 + $0x4] sm:$0xf]
          %v10775 = vld [vmem:[#allocation25 + $0x8] sm:$0xf]
          %v10776 = vld [vmem:[#allocation25 + $0xc] sm:$0xf]
          %v10777 = vld [vmem:[#allocation25 + $0x10] sm:$0xf]
          %v10778 = vld [vmem:[#allocation25 + $0x14] sm:$0xf]
          %v10779 = vld [vmem:[#allocation25 + $0x18] sm:$0xf]
          %v10780 = vld [vmem:[#allocation25 + $0x1c] sm:$0xf]
          %v10781 = vld [vmem:[#allocation25 + $0x20] sm:$0xf]
          %v10782 = vld [vmem:[#allocation25 + $0x24] sm:$0xf]
          %v10783 = vld [vmem:[#allocation25 + $0x28] sm:$0xf]
          %v10784 = vld [vmem:[#allocation25 + $0x2c] sm:$0xf]
          %v10785 = vld [vmem:[#allocation25 + $0x30] sm:$0xf]
          %v10786 = vld [vmem:[#allocation25 + $0x34] sm:$0xf]
          %v10787 = vld [vmem:[#allocation25 + $0x38] sm:$0xf]
          %v10788 = vld [vmem:[#allocation25 + $0x3c] sm:$0xf]
          %v10789 = vld [vmem:[#allocation25 + $0x40] sm:$0xf]
          %v10790 = vld [vmem:[#allocation25 + $0x44] sm:$0xf]
          %v10791 = vld [vmem:[#allocation25 + $0x48] sm:$0xf]
          %v10792 = vld [vmem:[#allocation25 + $0x4c] sm:$0xf]
          %v10793 = vld [vmem:[#allocation25 + $0x50] sm:$0xf]
          %v10794 = vld [vmem:[#allocation25 + $0x54] sm:$0xf]
          %v10795 = vld [vmem:[#allocation25 + $0x58] sm:$0xf]
          %v10796 = vld [vmem:[#allocation25 + $0x5c] sm:$0xf]
          %v10797 = vld [vmem:[#allocation25 + $0x60] sm:$0xf]
          %v10798 = vld [vmem:[#allocation25 + $0x64] sm:$0xf]
          %v10799 = vld [vmem:[#allocation25 + $0x68] sm:$0xf]
          %v10800 = vld [vmem:[#allocation25 + $0x6c] sm:$0xf]
          %v10801 = vld [vmem:[#allocation25 + $0x70] sm:$0xf]
          %v10802 = vld [vmem:[#allocation25 + $0x74] sm:$0xf]
          %v10803 = vld [vmem:[#allocation25 + $0x78] sm:$0xf]
          %v10804 = vld [vmem:[#allocation25 + $0x7c] sm:$0xf]
          %v10805 = vld [vmem:[#allocation25 + $0x80] sm:$0xf]
          %v10806 = vld [vmem:[#allocation25 + $0x84] sm:$0xf]
          %v10807 = vld [vmem:[#allocation25 + $0x88] sm:$0xf]
          %v10808 = vld [vmem:[#allocation25 + $0x8c] sm:$0xf]
          %v10809 = vld [vmem:[#allocation25 + $0x90] sm:$0xf]
          %v10810 = vld [vmem:[#allocation25 + $0x94] sm:$0xf]
          %v10811 = vld [vmem:[#allocation25 + $0x98] sm:$0xf]
          %v10812 = vld [vmem:[#allocation25 + $0x9c] sm:$0xf]
          %v10813 = vld [vmem:[#allocation25 + $0xa0] sm:$0xf]
          %v10814 = vld [vmem:[#allocation25 + $0xa4] sm:$0xf]
          %v10815 = vld [vmem:[#allocation25 + $0xa8] sm:$0xf]
          %v10816 = vld [vmem:[#allocation25 + $0xac] sm:$0xf]
          %v10817 = vld [vmem:[#allocation25 + $0xb0] sm:$0xf]
          %v10818 = vld [vmem:[#allocation25 + $0xb4] sm:$0xf]
          %v10819 = vld [vmem:[#allocation25 + $0xb8] sm:$0xf]
          %v10820 = vld [vmem:[#allocation25 + $0xbc] sm:$0xf]
          %v10821 = vld [vmem:[#allocation27] sm:$0x1]
          %v10823 = vlaneseq
          %v10824 = vshrl.u32 %v10823, 7
          %v10825 = vsub.s32 0, %v10824
          %v10826 = vrot.slane %v10821, %v10825
          %v10876 = vunpack.c.l.b16 %v10773
          %v10877 = vunpack.c.l.b16 %v10774
          %v10878 = vunpack.c.l.b16 %v10775
          %v10879 = vunpack.c.l.b16 %v10776
          %v10880 = vunpack.c.l.b16 %v10777
          %v10881 = vunpack.c.l.b16 %v10778
          %v10882 = vunpack.c.l.b16 %v10779
          %v10883 = vunpack.c.l.b16 %v10780
          %v10884 = vunpack.c.l.b16 %v10781
          %v10885 = vunpack.c.l.b16 %v10782
          %v10886 = vunpack.c.l.b16 %v10783
          %v10887 = vunpack.c.l.b16 %v10784
          %v10888 = vunpack.c.l.b16 %v10785
          %v10889 = vunpack.c.l.b16 %v10786
          %v10890 = vunpack.c.l.b16 %v10787
          %v10891 = vunpack.c.l.b16 %v10788
          %v10892 = vunpack.c.l.b16 %v10789
          %v10893 = vunpack.c.l.b16 %v10790
          %v10894 = vunpack.c.l.b16 %v10791
          %v10895 = vunpack.c.l.b16 %v10792
          %v10896 = vunpack.c.l.b16 %v10793
          %v10897 = vunpack.c.l.b16 %v10794
          %v10898 = vunpack.c.l.b16 %v10795
          %v10899 = vunpack.c.l.b16 %v10796
          %v10900 = vunpack.c.l.b16 %v10797
          %v10901 = vunpack.c.l.b16 %v10798
          %v10902 = vunpack.c.l.b16 %v10799
          %v10903 = vunpack.c.l.b16 %v10800
          %v10904 = vunpack.c.l.b16 %v10801
          %v10905 = vunpack.c.l.b16 %v10802
          %v10906 = vunpack.c.l.b16 %v10803
          %v10907 = vunpack.c.l.b16 %v10804
          %v10908 = vunpack.c.l.b16 %v10805
          %v10909 = vunpack.c.l.b16 %v10806
          %v10910 = vunpack.c.l.b16 %v10807
          %v10911 = vunpack.c.l.b16 %v10808
          %v10912 = vunpack.c.l.b16 %v10809
          %v10913 = vunpack.c.l.b16 %v10810
          %v10914 = vunpack.c.l.b16 %v10811
          %v10915 = vunpack.c.l.b16 %v10812
          %v10916 = vunpack.c.l.b16 %v10813
          %v10917 = vunpack.c.l.b16 %v10814
          %v10918 = vunpack.c.l.b16 %v10815
          %v10919 = vunpack.c.l.b16 %v10816
          %v10920 = vunpack.c.l.b16 %v10817
          %v10921 = vunpack.c.l.b16 %v10818
          %v10922 = vunpack.c.l.b16 %v10819
          %v10923 = vunpack.c.l.b16 %v10820
          %v10924 = vpack.c.b16 %v10877, %v10876
          %v10925 = vpack.c.b16 %v10879, %v10878
          %v10926 = vpack.c.b16 %v10881, %v10880
          %v10927 = vpack.c.b16 %v10883, %v10882
          %v10928 = vpack.c.b16 %v10885, %v10884
          %v10929 = vpack.c.b16 %v10887, %v10886
          %v10930 = vpack.c.b16 %v10889, %v10888
          %v10931 = vpack.c.b16 %v10891, %v10890
          %v10932 = vpack.c.b16 %v10893, %v10892
          %v10933 = vpack.c.b16 %v10895, %v10894
          %v10934 = vpack.c.b16 %v10897, %v10896
          %v10935 = vpack.c.b16 %v10899, %v10898
          %v10936 = vpack.c.b16 %v10901, %v10900
          %v10937 = vpack.c.b16 %v10903, %v10902
          %v10938 = vpack.c.b16 %v10905, %v10904
          %v10939 = vpack.c.b16 %v10907, %v10906
          %v10940 = vpack.c.b16 %v10909, %v10908
          %v10941 = vpack.c.b16 %v10911, %v10910
          %v10942 = vpack.c.b16 %v10913, %v10912
          %v10943 = vpack.c.b16 %v10915, %v10914
          %v10944 = vpack.c.b16 %v10917, %v10916
          %v10945 = vpack.c.b16 %v10919, %v10918
          %v10946 = vpack.c.b16 %v10921, %v10920
          %v10947 = vpack.c.b16 %v10923, %v10922
          %10972 = vmatprep.subr.bf16.mxu0 0
          %10973 = vmatpush1.bf16.msra.mxu0 %v10931
          %10974 = vmatprep.subr.bf16.mxu0 0
          %10975 = vmatpush1.bf16.msra.mxu0 %v10930
          %10976 = vmatprep.subr.bf16.mxu0 0
          %10977 = vmatpush1.bf16.msra.mxu0 %v10929
          %10978 = vmatprep.subr.bf16.mxu0 0
          %10979 = vmatpush1.bf16.msra.mxu0 %v10928
          %10980 = vmatprep.subr.bf16.mxu0 0
          %10981 = vmatpush1.bf16.msra.mxu0 %v10927
          %10982 = vmatprep.subr.bf16.mxu0 0
          %10983 = vmatpush1.bf16.msra.mxu0 %v10926
          %10984 = vmatprep.subr.bf16.mxu0 0
          %10985 = vmatpush1.bf16.msra.mxu0 %v10925
          %10986 = vmatprep.subr.bf16.mxu0 0
          %10987 = vmatpush1.bf16.msra.mxu0 %v10924
          %10988 = vmatprep.subr.bf16.mxu0 0
          %10989 = vmatpush2.bf16.msra.mxu0 %v10939
          %10990 = vmatprep.subr.bf16.mxu0 0
          %10991 = vmatpush2.bf16.msra.mxu0 %v10938
          %10992 = vmatprep.subr.bf16.mxu0 0
          %10993 = vmatpush2.bf16.msra.mxu0 %v10937
          %10994 = vmatprep.subr.bf16.mxu0 0
          %10995 = vmatpush2.bf16.msra.mxu0 %v10936
          %10996 = vmatprep.subr.bf16.mxu0 0
          %10997 = vmatpush2.bf16.msra.mxu0 %v10935
          %10998 = vmatprep.subr.bf16.mxu0 0
          %10999 = vmatpush2.bf16.msra.mxu0 %v10934
          %11000 = vmatprep.subr.bf16.mxu0 0
          %11001 = vmatpush2.bf16.msra.mxu0 %v10933
          %11002 = vmatprep.subr.bf16.mxu0 0
          %11003 = vmatpush2.bf16.msra.mxu0 %v10932
          %11004 = vmatprep.mubr.bf16.mxu0 %v10768
          %11005 = vmatmul.mubr.bf16.gmra.mxu0 %v10767
          %v11006 = vpop.f32.mrf.mxu0
          %v11007 = vadd.f32 %v10826, %v11006
          %v11008 = vpop.f32.mrf.mxu0
          %v11009 = vpop.f32.mrf.mxu0
          %v11010 = vadd.f32 %v10826, %v11009
          %v11011 = vpop.f32.mrf.mxu0
          %11012 = vmatprep.mubr.bf16.mxu0 %v10771
          %11013 = vmatmul.mubr.bf16.gmra.mxu0 %v10770
          %v11014 = vpop.f32.mrf.mxu0
          %v11015 = vadd.f32 %v10826, %v11014
          %v11016 = vpop.f32.mrf.mxu0
          %v11017 = vpop.f32.mrf.mxu0
          %v11018 = vadd.f32 %v10826, %v11017
          %v11019 = vpop.f32.mrf.mxu0
          %11020 = vdwg.mxu0
          %11021 = vmatprep.subr.bf16.mxu0 0
          %11022 = vmatpush1.bf16.msra.mxu0 %v10947
          %11023 = vmatprep.subr.bf16.mxu0 0
          %11024 = vmatpush1.bf16.msra.mxu0 %v10946
          %11025 = vmatprep.subr.bf16.mxu0 0
          %11026 = vmatpush1.bf16.msra.mxu0 %v10945
          %11027 = vmatprep.subr.bf16.mxu0 0
          %11028 = vmatpush1.bf16.msra.mxu0 %v10944
          %11029 = vmatprep.subr.bf16.mxu0 0
          %11030 = vmatpush1.bf16.msra.mxu0 %v10943
          %11031 = vmatprep.subr.bf16.mxu0 0
          %11032 = vmatpush1.bf16.msra.mxu0 %v10942
          %11033 = vmatprep.subr.bf16.mxu0 0
          %11034 = vmatpush1.bf16.msra.mxu0 %v10941
          %11035 = vmatprep.subr.bf16.mxu0 0
          %11036 = vmatpush1.bf16.msra.mxu0 %v10940
          %11037 = vmatprep.subr.bf16.mxu0 0
          %11038 = vmatpush2.bf16.msra.mxu0 0
          %11039 = vmatprep.subr.bf16.mxu0 0
          %11040 = vmatpush2.bf16.msra.mxu0 0
          %11041 = vmatprep.subr.bf16.mxu0 0
          %11042 = vmatpush2.bf16.msra.mxu0 0
          %11043 = vmatprep.subr.bf16.mxu0 0
          %11044 = vmatpush2.bf16.msra.mxu0 0
          %11045 = vmatprep.subr.bf16.mxu0 0
          %11046 = vmatpush2.bf16.msra.mxu0 0
          %11047 = vmatprep.subr.bf16.mxu0 0
          %11048 = vmatpush2.bf16.msra.mxu0 0
          %11049 = vmatprep.subr.bf16.mxu0 0
          %11050 = vmatpush2.bf16.msra.mxu0 0
          %11051 = vmatprep.subr.bf16.mxu0 0
          %11052 = vmatpush2.bf16.msra.mxu0 0
          %11053 = vmatprep.mubr.bf16.mxu0 0
          %11054 = vmatmul.mubr.bf16.gmra.mxu0 %v10769
          %v11055 = vpop.f32.mrf.mxu0
          %v11056 = vadd.f32 %v11007, %v11055
          %v11057 = vpop.f32.mrf.mxu0
          %v11058 = vpop.f32.mrf.mxu0
          %v11059 = vadd.f32 %v11010, %v11058
          %v11060 = vpop.f32.mrf.mxu0
          %11061 = vmatprep.mubr.bf16.mxu0 0
          %11062 = vmatmul.mubr.bf16.gmra.mxu0 %v10772
          %v11063 = vpop.f32.mrf.mxu0
          %v11064 = vadd.f32 %v11015, %v11063
          %v11065 = vpop.f32.mrf.mxu0
          %v11066 = vpop.f32.mrf.mxu0
          %v11067 = vadd.f32 %v11018, %v11066
          %v11068 = vpop.f32.mrf.mxu0
          %11069 = vdwg.mxu0
          %11070 = vst [vmem:[#allocation28] sm:$0xff] %v11056
          %11071 = vst [vmem:[#allocation28 + $0x8] sm:$0xff] %v11059
          %11072 = vst [vmem:[#allocation28 + $0x10] sm:$0xff] %v11064
          %11073 = vst [vmem:[#allocation28 + $0x18] sm:$0xff] %v11067
        $region156: #{bigram_forward.1} parent=87 // pred_fallthru
          _
        // Predicated region
        $region157: #{bigram_forward.1} parent=87 // pred_check
          %p11074 = pneg %p496
        $region158: #{bigram_forward.1} parent=87 // pred_check_branch
          %11076 = sbr.rel (%p11074) target = $region160
        $region159: #{bigram_forward.1} parent=87 // pred_region
          %s11077 = smul.u32 2, %s53
          %s11079 = ssub.s32 512, 512
          %11080 = vsyncadd [#allocation6], %s11079
          %s11081 = smul.addr %s11077, 2
          %s11082 = smul.addr %s11081, 128
          %s11083 = scalar_lea.hbm %s17, %s11082
          %s11084 = sshll.u32 [#allocation28], 4
          %s11085 = int_to_ptr.vmem [resolvable:$true] %s11084
          %11090 = dma.vmem_to_hbm [thread:$0]  %s11085, 512, %s11083, [#allocation6], 128, 128, 8
        $region160: #{bigram_forward.1} parent=87 // pred_fallthru
          _
        // Predicated region
        $region161: #{bigram_forward.1} parent=87 // pred_check
          %p11091 = pneg %p496
        $region162: #{bigram_forward.1} parent=87 // pred_check_branch
          %11093 = sbr.rel (%p11091) target = $region164
        $region163: #{bigram_forward.1} parent=87 // pred_region
          %11094 = dma.done [#allocation6], 512
        $region164: #{bigram_forward.1} parent=87 // pred_fallthru
          _
      $region88: #{bigram_forward.1} parent=5 // pred_fallthru
        _
      %p11095 = scmp.le.s32.totalorder 2, %s44
      // Predicated region
      $region165: #{bigram_forward.1} parent=5 // pred_check
        %p11096 = pneg %p11095
      $region166: #{bigram_forward.1} parent=5 // pred_check_branch
        %11098 = sbr.rel (%p11096) target = $region168
      $region167: #{bigram_forward.1} parent=5 // pred_region
        %s11099 = ssub.s32 %s44, 2
      $region168: #{bigram_forward.1} parent=5 // pred_fallthru
        _
    $region6: #{bigram_forward.1} parent=1 // loop_footer
      %s48 = sadd.s32 1, %s44
    $region7: #{bigram_forward.1} parent=1 // loop_footer_branch
      %43 = sbr.rel target = $region3
    $region8: #{bigram_forward.1} parent=1 // loop_exit
      _
    %11100 = vsyncpa [#allocation5], 1
    %s11101 = scalar_lea.sflag [#allocation5], 1
    %11102 = vsyncpa %s11101, 1
    %11103 = vsyncpa [#allocation8], 1
    %s11104 = scalar_lea.sflag [#allocation8], 1
    %11105 = vsyncpa %s11104, 1
    %11106 = vsyncpa [#allocation11], 1
    %s11107 = scalar_lea.sflag [#allocation11], 1
    %11108 = vsyncpa %s11107, 1
    %11109 = vsyncpa [#allocation14], 1
    %s11110 = scalar_lea.sflag [#allocation14], 1
    %11111 = vsyncpa %s11110, 1
    %11112 = vsyncpa [#allocation17], 1
    %s11113 = scalar_lea.sflag [#allocation17], 1
    %11114 = vsyncpa %s11113, 1
    %11115 = vsyncpa [#allocation20], 1
    %s11116 = scalar_lea.sflag [#allocation20], 1
    %11117 = vsyncpa %s11116, 1
    %11118 = vsyncpa [#allocation23], 1
    %11119 = vsyncpa [#allocation26], 1
    %11120 = vsyncpa [#allocation6], 1
    %s11121 = scalar_lea.sflag [#allocation6], 1
    %11122 = vsyncpa %s11121, 1

</llo_original>
